<compile_context>
chip_gen: v5e
topology: v5e:2x2
jax: 0.10.0
libtpu: 0.0.40
codegen_flags: <defaults>
</compile_context>

<pallas_src>
import jax
import jax.numpy as jnp
import numpy as np
from jax import lax
from jax.experimental import pallas as pl
from jax.experimental.pallas import tpu as pltpu


# ---------------------------------------------------------------------------
# Per-batch stage geometry.  Activations are stored flat: row = padded spatial
# position (i * PITCH + j), lane = channel.  PITCH is the padded width rounded
# up to a multiple of 8 so row chunks stay sublane-tile aligned; the extra
# columns are dead (always zero, never read by valid outputs).
#   stage 1: 24x24x1  -> conv 16 -> pool -> 12x12x16
#   stage 2: 12x12x16 -> conv 32 -> pool -> 6x6x32
#   stage 3: 6x6x32   -> conv 64 -> pool -> 3x3x64 -> fc
# ---------------------------------------------------------------------------
HPAD1, PITCH1, N1 = 26, 32, 26 * 32      # 832 rows / batch element
HPAD2, PITCH2, N2 = 14, 16, 14 * 16      # 224
HPAD3, PITCH3, N3 = 8, 8, 8 * 8          # 64


def _conv_stage(xin_ref, w_ref, b_ref, yout_ref, pitch, hpad):
    """conv3x3(pad=1) + bias + ReLU on a flat padded activation buffer.

    Output row r (= padded position) is sum_d W[d] . X[r + off_d]; im2col is 9
    constant row-offset slices lane-concatenated -> one (L, 9*Cin) bf16 MXU dot.
    """
    s0 = pitch + 1
    L = hpad * pitch - 2 * s0
    pieces = []
    for kh in range(3):
        for kw in range(3):
            o = s0 + (kh - 1) * pitch + (kw - 1)
            pieces.append(xin_ref[o:o + L, :])
    patches = jnp.concatenate(pieces, axis=1).astype(jnp.bfloat16)
    acc = jnp.dot(patches, w_ref[...], preferred_element_type=jnp.float32)
    yout_ref[s0:s0 + L, :] = jnp.maximum(acc + b_ref[...], 0.0)


def _pool_rows(y_ref, pitch, hp, w):
    """Yield (pi, hv): hv[k] = max of the 2x2 window with top-left conv column
    k+1, for the conv row pair (2*pi+1, 2*pi+2).  Valid pooled pj uses hv[2*pj]."""
    for pi in range(hp):
        base = (2 * pi + 1) * pitch
        top = jnp.maximum(y_ref[base + 1:base + 1 + w, :],
                          y_ref[base + 2:base + 2 + w, :])
        bot = jnp.maximum(y_ref[base + pitch + 1:base + pitch + 1 + w, :],
                          y_ref[base + pitch + 2:base + pitch + 2 + w, :])
        yield pi, jnp.maximum(top, bot)


def _decim_matrix(wp, w):
    """(wp, w) 0/1 matrix selecting even columns: out[pj] = in[2*pj]."""
    r = lax.broadcasted_iota(jnp.int32, (wp, w), 0)
    c = lax.broadcasted_iota(jnp.int32, (wp, w), 1)
    return (c == 2 * r).astype(jnp.float32)


def net_kernel(x_ref, w1_ref, b1_ref, w2_ref, b2_ref, w3_ref, b3_ref,
               fc1w_ref, fc1b_ref, fc2w_ref, fc2b_ref, o_ref,
               y1_ref, x2_ref, y2_ref, x3_ref, y3_ref, fc_ref):
    f32 = jnp.float32

    # Zero the buffers whose untouched rows/cols act as conv zero padding
    # (scratch persists across grid steps, so re-zero every step).
    x2_ref[...] = jnp.zeros_like(x2_ref)
    x3_ref[...] = jnp.zeros_like(x3_ref)
    y3_ref[...] = jnp.zeros_like(y3_ref)

    # ----- stage 1: conv1 1->16 on the VPU (9 shifted FMAs), ReLU ------------
    s0, L = PITCH1 + 1, N1 - 2 * (PITCH1 + 1)          # 33, 766
    acc = None
    for kh in range(3):
        for kw in range(3):
            o = s0 + (kh - 1) * PITCH1 + (kw - 1)
            t = x_ref[o:o + L, :] * w1_ref[kh * 3 + kw:kh * 3 + kw + 1, :]
            acc = t if acc is None else acc + t
    y1_ref[s0:s0 + L, :] = jnp.maximum(acc + b1_ref[...], 0.0)

    # ----- pool 1 (24x24 -> 12x12), write into stage-2 padded buffer ---------
    sel = _decim_matrix(12, 24)
    for pi, hv in _pool_rows(y1_ref, PITCH1, 12, 24):
        dst = (pi + 1) * PITCH2 + 1
        x2_ref[dst:dst + 12, :] = jnp.dot(sel, hv, preferred_element_type=f32)

    # ----- stage 2: conv2 16->32 (single K=144 MXU dot), ReLU; pool ----------
    _conv_stage(x2_ref, w2_ref, b2_ref, y2_ref, PITCH2, HPAD2)
    sel = _decim_matrix(6, 12)
    for pi, hv in _pool_rows(y2_ref, PITCH2, 6, 12):
        dst = (pi + 1) * PITCH3 + 1
        x3_ref[dst:dst + 6, :] = jnp.dot(sel, hv, preferred_element_type=f32)

    # ----- stage 3: conv3 32->64 (single K=288 MXU dot), ReLU; pool ----------
    _conv_stage(x3_ref, w3_ref, b3_ref, y3_ref, PITCH3, HPAD3)
    for pi, hv in _pool_rows(y3_ref, PITCH3, 3, 6):
        # pooled pj = 0,1,2 laid out along lanes as (pj, c) -> row pi of fc_ref
        fc_ref[pi:pi + 1, :] = jnp.concatenate(
            [hv[0:1, :], hv[2:3, :], hv[4:5, :]], axis=1)

    # ----- fc1 + ReLU + fc2 + softmax (dim=1) --------------------------------
    # TODO(synk): both Dropout(0.2) applications are eval-mode identities.
    h = None
    for pi in range(3):
        t = jnp.dot(fc_ref[pi:pi + 1, :].astype(jnp.bfloat16),
                    fc1w_ref[pi * 192:(pi + 1) * 192, :],
                    preferred_element_type=f32)
        h = t if h is None else h + t
    h = jnp.maximum(h + fc1b_ref[...], 0.0)
    logits = jnp.dot(h.astype(jnp.bfloat16), fc2w_ref[...],
                     preferred_element_type=f32) + fc2b_ref[...]
    z = logits - jnp.max(logits, axis=-1, keepdims=True)
    e = jnp.exp(z)
    o_ref[0] = e / jnp.sum(e, axis=-1, keepdims=True)   # exact division


# ------------------------------ JAX wrapper --------------------------------- #

def net_forward(x_nchw, kp):
    B = x_nchw.shape[0]
    # One-time input prep: (B,1,24,24) -> zero-padded flat rows (B*832, 1).
    x = x_nchw[:, 0]                                   # (B, 24, 24)
    x = jnp.pad(x, ((0, 0), (1, 1), (1, 7)))           # (B, 26, 32); cols >=25 are zero
    x = x.reshape(B * N1, 1)

    out = pl.pallas_call(
        net_kernel,
        out_shape=jax.ShapeDtypeStruct((B, 1, 10), jnp.float32),
        grid=(B,),
        in_specs=[
            pl.BlockSpec((N1, 1), lambda b: (b, 0)),          # image (per batch)
            pl.BlockSpec((9, 16), lambda b: (0, 0)),          # conv1 W (f32, VPU)
            pl.BlockSpec((1, 16), lambda b: (0, 0)),
            pl.BlockSpec((144, 32), lambda b: (0, 0)),        # conv2 W (bf16)
            pl.BlockSpec((1, 32), lambda b: (0, 0)),
            pl.BlockSpec((288, 64), lambda b: (0, 0)),        # conv3 W (bf16)
            pl.BlockSpec((1, 64), lambda b: (0, 0)),
            pl.BlockSpec((576, 256), lambda b: (0, 0)),       # fc1 W (bf16, permuted rows)
            pl.BlockSpec((1, 256), lambda b: (0, 0)),
            pl.BlockSpec((256, 10), lambda b: (0, 0)),        # fc2 W (bf16)
            pl.BlockSpec((1, 10), lambda b: (0, 0)),
        ],
        out_specs=pl.BlockSpec((1, 1, 10), lambda b: (b, 0, 0)),
        scratch_shapes=[
            pltpu.VMEM((N1, 16), jnp.float32),   # y1: conv1+relu output
            pltpu.VMEM((N2, 16), jnp.float32),   # x2: padded input of stage 2
            pltpu.VMEM((N2, 32), jnp.float32),   # y2
            pltpu.VMEM((N3, 32), jnp.float32),   # x3
            pltpu.VMEM((N3, 64), jnp.float32),   # y3
            pltpu.VMEM((3, 192), jnp.float32),   # fc input, rows=pi, lanes=(pj,c)
        ],
        compiler_params=pltpu.CompilerParams(
            dimension_semantics=("parallel",),          # batch across v7x cores
            vmem_limit_bytes=32 * 1024 * 1024),
    )(x, kp["w1"], kp["b1"], kp["w2"], kp["b2"], kp["w3"], kp["b3"],
      kp["fc1_w"], kp["fc1_b"], kp["fc2_w"], kp["fc2_b"])
    return out.reshape(B, 10)


net_forward_jit = jax.jit(net_forward)


# ------------------------- params / weight prep ----------------------------- #

def _conv_w_to_mat(w_pt):
    # PyTorch conv weight (Cout, Cin, kh, kw) -> (9*Cin, Cout), row order (kh, kw, cin)
    cout, cin, kh, kw = w_pt.shape
    return jnp.transpose(w_pt, (2, 3, 1, 0)).reshape(kh * kw * cin, cout)


def prepare_params(params):
    """One-time host-side repack of PyTorch-layout weights into kernel layout."""
    # fc1 rows are in PyTorch NCHW-flatten order (c, pi, pj); permute once to the
    # kernel's (pi, pj, c) order so no runtime transpose is needed.
    perm = np.arange(576).reshape(64, 3, 3).transpose(1, 2, 0).reshape(576)
    return {
        "w1": _conv_w_to_mat(params["conv1_w"]).astype(jnp.float32),
        "b1": params["conv1_b"].reshape(1, -1).astype(jnp.float32),
        "w2": _conv_w_to_mat(params["conv2_w"]).astype(jnp.bfloat16),
        "b2": params["conv2_b"].reshape(1, -1).astype(jnp.float32),
        "w3": _conv_w_to_mat(params["conv3_w"]).astype(jnp.bfloat16),
        "b3": params["conv3_b"].reshape(1, -1).astype(jnp.float32),
        "fc1_w": params["fc1_w"][perm].astype(jnp.bfloat16),
        "fc1_b": params["fc1_b"].reshape(1, -1).astype(jnp.float32),
        "fc2_w": params["fc2_w"].astype(jnp.bfloat16),
        "fc2_b": params["fc2_b"].reshape(1, -1).astype(jnp.float32),
    }


def init_params(key):
    ks = jax.random.split(key, 10)

    def conv_w(k, cout, cin):
        return jax.random.normal(k, (cout, cin, 3, 3), jnp.float32) * (2.0 / (cin * 9)) ** 0.5

    return {
        "conv1_w": conv_w(ks[0], 16, 1),
        "conv1_b": jax.random.normal(ks[1], (16,), jnp.float32) * 0.01,
        "conv2_w": conv_w(ks[2], 32, 16),
        "conv2_b": jax.random.normal(ks[3], (32,), jnp.float32) * 0.01,
        "conv3_w": conv_w(ks[4], 64, 32),
        "conv3_b": jax.random.normal(ks[5], (64,), jnp.float32) * 0.01,
        "fc1_w": jax.random.normal(ks[6], (576, 256), jnp.float32) * (2.0 / 576) ** 0.5,
        "fc1_b": jax.random.normal(ks[7], (256,), jnp.float32) * 0.01,
        "fc2_w": jax.random.normal(ks[8], (256, 10), jnp.float32) * (1.0 / 256) ** 0.5,
        "fc2_b": jax.random.normal(ks[9], (10,), jnp.float32) * 0.01,
    }


def reference_forward(x_nchw, params):
    # Full-f32 reference (HIGHEST precision) for correctness checking.
    x = x_nchw
    for name in ("conv1", "conv2", "conv3"):
        w, b = params[f"{name}_w"], params[f"{name}_b"]
        x = lax.conv_general_dilated(x, w, (1, 1), ((1, 1), (1, 1)),
                                     dimension_numbers=("NCHW", "OIHW", "NCHW"),
                                     precision=lax.Precision.HIGHEST)
        x = jnp.maximum(x + b.reshape(1, -1, 1, 1), 0.0)
        B, C, H, W = x.shape
        x = x.reshape(B, C, H // 2, 2, W // 2, 2).max(axis=(3, 5))
    B = x.shape[0]
    x = x.reshape(B, -1)
    x = jnp.maximum(jnp.dot(x, params["fc1_w"], precision=lax.Precision.HIGHEST)
                    + params["fc1_b"], 0.0)
    z = jnp.dot(x, params["fc2_w"], precision=lax.Precision.HIGHEST) + params["fc2_b"]
    return jax.nn.softmax(z, axis=1)


if __name__ == "__main__":
    key = jax.random.PRNGKey(0)
    pkey, xkey = jax.random.split(key)
    params = init_params(pkey)
    kparams = prepare_params(params)   # one-time weight repack (host side)
    # fc1 expects 576 = 64*3*3 -> input spatial 24x24, 1 channel (NCHW like PyTorch)
    x = jax.random.normal(xkey, (2, 1, 24, 24), jnp.float32)

    out = jax.block_until_ready(net_forward_jit(x, kparams))
    ref = jax.block_until_ready(reference_forward(x, params))

    assert out.shape == (2, 10)
    # Kernel uses bf16 MXU operands with f32 accumulation vs the f32 HIGHEST
    # reference; softmax-probability outputs compared with loose tolerance.
    np.testing.assert_allclose(np.asarray(out), np.asarray(ref), rtol=5e-2, atol=2e-2)
    print("KERNEL_OK")
</pallas_src>

<mosaic_0001>
module attributes {stable_mosaic.version = 11 : i64} {
  func.func @net_kernel(%arg0: i32, %arg1: memref<832x1xf32, #tpu.memory_space<vmem>>, %arg2: memref<9x16xf32, #tpu.memory_space<vmem>>, %arg3: memref<1x16xf32, #tpu.memory_space<vmem>>, %arg4: memref<144x32xbf16, #tpu.memory_space<vmem>>, %arg5: memref<1x32xf32, #tpu.memory_space<vmem>>, %arg6: memref<288x64xbf16, #tpu.memory_space<vmem>>, %arg7: memref<1x64xf32, #tpu.memory_space<vmem>>, %arg8: memref<576x256xbf16, #tpu.memory_space<vmem>>, %arg9: memref<1x256xf32, #tpu.memory_space<vmem>>, %arg10: memref<256x10xbf16, #tpu.memory_space<vmem>>, %arg11: memref<1x10xf32, #tpu.memory_space<vmem>>, %arg12: memref<1x1x10xf32, #tpu.memory_space<vmem>>, %arg13: memref<832x16xf32, #tpu.memory_space<vmem>>, %arg14: memref<224x16xf32, #tpu.memory_space<vmem>>, %arg15: memref<224x32xf32, #tpu.memory_space<vmem>>, %arg16: memref<64x32xf32, #tpu.memory_space<vmem>>, %arg17: memref<64x64xf32, #tpu.memory_space<vmem>>, %arg18: memref<3x192xf32, #tpu.memory_space<vmem>>) attributes {dimension_semantics = [#tpu.dimension_semantics<parallel>], iteration_bounds = array<i64: 2>, scalar_prefetch = 0 : i64, scratch_operands = 6 : i64, tpu.core_type = #tpu.core_type<tc>, window_params = [{transform_indices = @transform_0, window_bounds = array<i64: 832, 1>}, {pipeline_mode = #tpu.pipeline_mode<synchronous>, transform_indices = @transform_1, window_bounds = array<i64: 9, 16>}, {pipeline_mode = #tpu.pipeline_mode<synchronous>, transform_indices = @transform_2, window_bounds = array<i64: 1, 16>}, {pipeline_mode = #tpu.pipeline_mode<synchronous>, transform_indices = @transform_3, window_bounds = array<i64: 144, 32>}, {pipeline_mode = #tpu.pipeline_mode<synchronous>, transform_indices = @transform_4, window_bounds = array<i64: 1, 32>}, {pipeline_mode = #tpu.pipeline_mode<synchronous>, transform_indices = @transform_5, window_bounds = array<i64: 288, 64>}, {pipeline_mode = #tpu.pipeline_mode<synchronous>, transform_indices = @transform_6, window_bounds = array<i64: 1, 64>}, {pipeline_mode = #tpu.pipeline_mode<synchronous>, transform_indices = @transform_7, window_bounds = array<i64: 576, 256>}, {pipeline_mode = #tpu.pipeline_mode<synchronous>, transform_indices = @transform_8, window_bounds = array<i64: 1, 256>}, {pipeline_mode = #tpu.pipeline_mode<synchronous>, transform_indices = @transform_9, window_bounds = array<i64: 256, 10>}, {pipeline_mode = #tpu.pipeline_mode<synchronous>, transform_indices = @transform_10, window_bounds = array<i64: 1, 10>}, {transform_indices = @transform_11, window_bounds = array<i64: 1, 1, 10>}]} {
    %cst = arith.constant 0.000000e+00 : f32
    %0 = vector.broadcast %cst : f32 to vector<224x16xf32>
    %c0 = arith.constant 0 : index
    %c0_0 = arith.constant 0 : index
    %1 = vector.load %arg14[%c0, %c0_0] : memref<224x16xf32, #tpu.memory_space<vmem>>, vector<224x16xf32>
    tpu.vector_store %arg14[%c0, %c0_0], %0 {strides = array<i32>} : memref<224x16xf32, #tpu.memory_space<vmem>>, vector<224x16xf32>,
    %cst_1 = arith.constant 0.000000e+00 : f32
    %2 = vector.broadcast %cst_1 : f32 to vector<64x32xf32>
    %c0_2 = arith.constant 0 : index
    %c0_3 = arith.constant 0 : index
    %3 = vector.load %arg16[%c0_2, %c0_3] : memref<64x32xf32, #tpu.memory_space<vmem>>, vector<64x32xf32>
    tpu.vector_store %arg16[%c0_2, %c0_3], %2 {strides = array<i32>} : memref<64x32xf32, #tpu.memory_space<vmem>>, vector<64x32xf32>,
    %cst_4 = arith.constant 0.000000e+00 : f32
    %4 = vector.broadcast %cst_4 : f32 to vector<64x64xf32>
    %c0_5 = arith.constant 0 : index
    %c0_6 = arith.constant 0 : index
    %5 = vector.load %arg17[%c0_5, %c0_6] : memref<64x64xf32, #tpu.memory_space<vmem>>, vector<64x64xf32>
    tpu.vector_store %arg17[%c0_5, %c0_6], %4 {strides = array<i32>} : memref<64x64xf32, #tpu.memory_space<vmem>>, vector<64x64xf32>,
    %c0_7 = arith.constant 0 : index
    %c0_8 = arith.constant 0 : index
    %6 = vector.load %arg1[%c0_7, %c0_8] : memref<832x1xf32, #tpu.memory_space<vmem>>, vector<766x1xf32>
    %c0_9 = arith.constant 0 : index
    %c0_10 = arith.constant 0 : index
    %7 = vector.load %arg2[%c0_9, %c0_10] : memref<9x16xf32, #tpu.memory_space<vmem>>, vector<1x16xf32>
    %8 = vector.broadcast %6 : vector<766x1xf32> to vector<766x16xf32>
    %9 = vector.broadcast %7 : vector<1x16xf32> to vector<766x16xf32>
    %10 = arith.mulf %8, %9 : vector<766x16xf32>
    %c1 = arith.constant 1 : index
    %c0_11 = arith.constant 0 : index
    %11 = vector.load %arg1[%c1, %c0_11] : memref<832x1xf32, #tpu.memory_space<vmem>>, vector<766x1xf32>
    %c1_12 = arith.constant 1 : index
    %c0_13 = arith.constant 0 : index
    %12 = vector.load %arg2[%c1_12, %c0_13] : memref<9x16xf32, #tpu.memory_space<vmem>>, vector<1x16xf32>
    %13 = vector.broadcast %11 : vector<766x1xf32> to vector<766x16xf32>
    %14 = vector.broadcast %12 : vector<1x16xf32> to vector<766x16xf32>
    %15 = arith.mulf %13, %14 : vector<766x16xf32>
    %16 = arith.addf %10, %15 : vector<766x16xf32>
    %c2 = arith.constant 2 : index
    %c0_14 = arith.constant 0 : index
    %17 = vector.load %arg1[%c2, %c0_14] : memref<832x1xf32, #tpu.memory_space<vmem>>, vector<766x1xf32>
    %c2_15 = arith.constant 2 : index
    %c0_16 = arith.constant 0 : index
    %18 = vector.load %arg2[%c2_15, %c0_16] : memref<9x16xf32, #tpu.memory_space<vmem>>, vector<1x16xf32>
    %19 = vector.broadcast %17 : vector<766x1xf32> to vector<766x16xf32>
    %20 = vector.broadcast %18 : vector<1x16xf32> to vector<766x16xf32>
    %21 = arith.mulf %19, %20 : vector<766x16xf32>
    %22 = arith.addf %16, %21 : vector<766x16xf32>
    %c32 = arith.constant 32 : index
    %c0_17 = arith.constant 0 : index
    %23 = vector.load %arg1[%c32, %c0_17] : memref<832x1xf32, #tpu.memory_space<vmem>>, vector<766x1xf32>
    %c3 = arith.constant 3 : index
    %c0_18 = arith.constant 0 : index
    %24 = vector.load %arg2[%c3, %c0_18] : memref<9x16xf32, #tpu.memory_space<vmem>>, vector<1x16xf32>
    %25 = vector.broadcast %23 : vector<766x1xf32> to vector<766x16xf32>
    %26 = vector.broadcast %24 : vector<1x16xf32> to vector<766x16xf32>
    %27 = arith.mulf %25, %26 : vector<766x16xf32>
    %28 = arith.addf %22, %27 : vector<766x16xf32>
    %c33 = arith.constant 33 : index
    %c0_19 = arith.constant 0 : index
    %29 = vector.load %arg1[%c33, %c0_19] : memref<832x1xf32, #tpu.memory_space<vmem>>, vector<766x1xf32>
    %c4 = arith.constant 4 : index
    %c0_20 = arith.constant 0 : index
    %30 = vector.load %arg2[%c4, %c0_20] : memref<9x16xf32, #tpu.memory_space<vmem>>, vector<1x16xf32>
    %31 = vector.broadcast %29 : vector<766x1xf32> to vector<766x16xf32>
    %32 = vector.broadcast %30 : vector<1x16xf32> to vector<766x16xf32>
    %33 = arith.mulf %31, %32 : vector<766x16xf32>
    %34 = arith.addf %28, %33 : vector<766x16xf32>
    %c34 = arith.constant 34 : index
    %c0_21 = arith.constant 0 : index
    %35 = vector.load %arg1[%c34, %c0_21] : memref<832x1xf32, #tpu.memory_space<vmem>>, vector<766x1xf32>
    %c5 = arith.constant 5 : index
    %c0_22 = arith.constant 0 : index
    %36 = vector.load %arg2[%c5, %c0_22] : memref<9x16xf32, #tpu.memory_space<vmem>>, vector<1x16xf32>
    %37 = vector.broadcast %35 : vector<766x1xf32> to vector<766x16xf32>
    %38 = vector.broadcast %36 : vector<1x16xf32> to vector<766x16xf32>
    %39 = arith.mulf %37, %38 : vector<766x16xf32>
    %40 = arith.addf %34, %39 : vector<766x16xf32>
    %c64 = arith.constant 64 : index
    %c0_23 = arith.constant 0 : index
    %41 = vector.load %arg1[%c64, %c0_23] : memref<832x1xf32, #tpu.memory_space<vmem>>, vector<766x1xf32>
    %c6 = arith.constant 6 : index
    %c0_24 = arith.constant 0 : index
    %42 = vector.load %arg2[%c6, %c0_24] : memref<9x16xf32, #tpu.memory_space<vmem>>, vector<1x16xf32>
    %43 = vector.broadcast %41 : vector<766x1xf32> to vector<766x16xf32>
    %44 = vector.broadcast %42 : vector<1x16xf32> to vector<766x16xf32>
    %45 = arith.mulf %43, %44 : vector<766x16xf32>
    %46 = arith.addf %40, %45 : vector<766x16xf32>
    %c65 = arith.constant 65 : index
    %c0_25 = arith.constant 0 : index
    %47 = vector.load %arg1[%c65, %c0_25] : memref<832x1xf32, #tpu.memory_space<vmem>>, vector<766x1xf32>
    %c7 = arith.constant 7 : index
    %c0_26 = arith.constant 0 : index
    %48 = vector.load %arg2[%c7, %c0_26] : memref<9x16xf32, #tpu.memory_space<vmem>>, vector<1x16xf32>
    %49 = vector.broadcast %47 : vector<766x1xf32> to vector<766x16xf32>
    %50 = vector.broadcast %48 : vector<1x16xf32> to vector<766x16xf32>
    %51 = arith.mulf %49, %50 : vector<766x16xf32>
    %52 = arith.addf %46, %51 : vector<766x16xf32>
    %c66 = arith.constant 66 : index
    %c0_27 = arith.constant 0 : index
    %53 = vector.load %arg1[%c66, %c0_27] : memref<832x1xf32, #tpu.memory_space<vmem>>, vector<766x1xf32>
    %c8 = arith.constant 8 : index
    %c0_28 = arith.constant 0 : index
    %54 = vector.load %arg2[%c8, %c0_28] : memref<9x16xf32, #tpu.memory_space<vmem>>, vector<1x16xf32>
    %55 = vector.broadcast %53 : vector<766x1xf32> to vector<766x16xf32>
    %56 = vector.broadcast %54 : vector<1x16xf32> to vector<766x16xf32>
    %57 = arith.mulf %55, %56 : vector<766x16xf32>
    %58 = arith.addf %52, %57 : vector<766x16xf32>
    %c0_29 = arith.constant 0 : index
    %c0_30 = arith.constant 0 : index
    %59 = vector.load %arg3[%c0_29, %c0_30] : memref<1x16xf32, #tpu.memory_space<vmem>>, vector<1x16xf32>
    %60 = vector.broadcast %59 : vector<1x16xf32> to vector<766x16xf32>
    %61 = arith.addf %58, %60 : vector<766x16xf32>
    %cst_31 = arith.constant 0.000000e+00 : f32
    %62 = vector.broadcast %cst_31 : f32 to vector<766x16xf32>
    %63 = arith.maximumf %61, %62 : vector<766x16xf32>
    %c33_32 = arith.constant 33 : index
    %c0_33 = arith.constant 0 : index
    %64 = vector.load %arg13[%c33_32, %c0_33] : memref<832x16xf32, #tpu.memory_space<vmem>>, vector<766x16xf32>
    tpu.vector_store %arg13[%c33_32, %c0_33], %63 {strides = array<i32>} : memref<832x16xf32, #tpu.memory_space<vmem>>, vector<766x16xf32>,
    %65 = tpu.iota {dimensions = array<i32: 0>} : vector<12x24xi32>
    %66 = tpu.iota {dimensions = array<i32: 1>} : vector<12x24xi32>
    %c2_i32 = arith.constant 2 : i32
    %67 = vector.broadcast %c2_i32 : i32 to vector<12x24xi32>
    %68 = arith.muli %67, %65 : vector<12x24xi32>
    %69 = arith.cmpi eq, %66, %68 : vector<12x24xi32>
    %70 = arith.extui %69 : vector<12x24xi1> to vector<12x24xi32>
    %71 = arith.sitofp %70 : vector<12x24xi32> to vector<12x24xf32>
    %c33_34 = arith.constant 33 : index
    %c0_35 = arith.constant 0 : index
    %72 = vector.load %arg13[%c33_34, %c0_35] : memref<832x16xf32, #tpu.memory_space<vmem>>, vector<24x16xf32>
    %c34_36 = arith.constant 34 : index
    %c0_37 = arith.constant 0 : index
    %73 = vector.load %arg13[%c34_36, %c0_37] : memref<832x16xf32, #tpu.memory_space<vmem>>, vector<24x16xf32>
    %74 = arith.maximumf %72, %73 : vector<24x16xf32>
    %c65_38 = arith.constant 65 : index
    %c0_39 = arith.constant 0 : index
    %75 = vector.load %arg13[%c65_38, %c0_39] : memref<832x16xf32, #tpu.memory_space<vmem>>, vector<24x16xf32>
    %c66_40 = arith.constant 66 : index
    %c0_41 = arith.constant 0 : index
    %76 = vector.load %arg13[%c66_40, %c0_41] : memref<832x16xf32, #tpu.memory_space<vmem>>, vector<24x16xf32>
    %77 = arith.maximumf %75, %76 : vector<24x16xf32>
    %78 = arith.maximumf %74, %77 : vector<24x16xf32>
    %cst_42 = arith.constant dense<0.000000e+00> : vector<12x16xf32>
    %79 = tpu.matmul %71, %78, %cst_42 {dimension_numbers = #tpu.dot_dimension_numbers<[1], [0], [0], [1], [0, 0, 1, 1], [], []>} : vector<12x24xf32>, vector<24x16xf32>, vector<12x16xf32> -> vector<12x16xf32>
    %c17 = arith.constant 17 : index
    %c0_43 = arith.constant 0 : index
    %80 = vector.load %arg14[%c17, %c0_43] : memref<224x16xf32, #tpu.memory_space<vmem>>, vector<12x16xf32>
    tpu.vector_store %arg14[%c17, %c0_43], %79 {strides = array<i32>} : memref<224x16xf32, #tpu.memory_space<vmem>>, vector<12x16xf32>,
    %c97 = arith.constant 97 : index
    %c0_44 = arith.constant 0 : index
    %81 = vector.load %arg13[%c97, %c0_44] : memref<832x16xf32, #tpu.memory_space<vmem>>, vector<24x16xf32>
    %c98 = arith.constant 98 : index
    %c0_45 = arith.constant 0 : index
    %82 = vector.load %arg13[%c98, %c0_45] : memref<832x16xf32, #tpu.memory_space<vmem>>, vector<24x16xf32>
    %83 = arith.maximumf %81, %82 : vector<24x16xf32>
    %c129 = arith.constant 129 : index
    %c0_46 = arith.constant 0 : index
    %84 = vector.load %arg13[%c129, %c0_46] : memref<832x16xf32, #tpu.memory_space<vmem>>, vector<24x16xf32>
    %c130 = arith.constant 130 : index
    %c0_47 = arith.constant 0 : index
    %85 = vector.load %arg13[%c130, %c0_47] : memref<832x16xf32, #tpu.memory_space<vmem>>, vector<24x16xf32>
    %86 = arith.maximumf %84, %85 : vector<24x16xf32>
    %87 = arith.maximumf %83, %86 : vector<24x16xf32>
    %cst_48 = arith.constant dense<0.000000e+00> : vector<12x16xf32>
    %88 = tpu.matmul %71, %87, %cst_48 {dimension_numbers = #tpu.dot_dimension_numbers<[1], [0], [0], [1], [0, 0, 1, 1], [], []>} : vector<12x24xf32>, vector<24x16xf32>, vector<12x16xf32> -> vector<12x16xf32>
    %c33_49 = arith.constant 33 : index
    %c0_50 = arith.constant 0 : index
    %89 = vector.load %arg14[%c33_49, %c0_50] : memref<224x16xf32, #tpu.memory_space<vmem>>, vector<12x16xf32>
    tpu.vector_store %arg14[%c33_49, %c0_50], %88 {strides = array<i32>} : memref<224x16xf32, #tpu.memory_space<vmem>>, vector<12x16xf32>,
    %c161 = arith.constant 161 : index
    %c0_51 = arith.constant 0 : index
    %90 = vector.load %arg13[%c161, %c0_51] : memref<832x16xf32, #tpu.memory_space<vmem>>, vector<24x16xf32>
    %c162 = arith.constant 162 : index
    %c0_52 = arith.constant 0 : index
    %91 = vector.load %arg13[%c162, %c0_52] : memref<832x16xf32, #tpu.memory_space<vmem>>, vector<24x16xf32>
    %92 = arith.maximumf %90, %91 : vector<24x16xf32>
    %c193 = arith.constant 193 : index
    %c0_53 = arith.constant 0 : index
    %93 = vector.load %arg13[%c193, %c0_53] : memref<832x16xf32, #tpu.memory_space<vmem>>, vector<24x16xf32>
    %c194 = arith.constant 194 : index
    %c0_54 = arith.constant 0 : index
    %94 = vector.load %arg13[%c194, %c0_54] : memref<832x16xf32, #tpu.memory_space<vmem>>, vector<24x16xf32>
    %95 = arith.maximumf %93, %94 : vector<24x16xf32>
    %96 = arith.maximumf %92, %95 : vector<24x16xf32>
    %cst_55 = arith.constant dense<0.000000e+00> : vector<12x16xf32>
    %97 = tpu.matmul %71, %96, %cst_55 {dimension_numbers = #tpu.dot_dimension_numbers<[1], [0], [0], [1], [0, 0, 1, 1], [], []>} : vector<12x24xf32>, vector<24x16xf32>, vector<12x16xf32> -> vector<12x16xf32>
    %c49 = arith.constant 49 : index
    %c0_56 = arith.constant 0 : index
    %98 = vector.load %arg14[%c49, %c0_56] : memref<224x16xf32, #tpu.memory_space<vmem>>, vector<12x16xf32>
    tpu.vector_store %arg14[%c49, %c0_56], %97 {strides = array<i32>} : memref<224x16xf32, #tpu.memory_space<vmem>>, vector<12x16xf32>,
    %c225 = arith.constant 225 : index
    %c0_57 = arith.constant 0 : index
    %99 = vector.load %arg13[%c225, %c0_57] : memref<832x16xf32, #tpu.memory_space<vmem>>, vector<24x16xf32>
    %c226 = arith.constant 226 : index
    %c0_58 = arith.constant 0 : index
    %100 = vector.load %arg13[%c226, %c0_58] : memref<832x16xf32, #tpu.memory_space<vmem>>, vector<24x16xf32>
    %101 = arith.maximumf %99, %100 : vector<24x16xf32>
    %c257 = arith.constant 257 : index
    %c0_59 = arith.constant 0 : index
    %102 = vector.load %arg13[%c257, %c0_59] : memref<832x16xf32, #tpu.memory_space<vmem>>, vector<24x16xf32>
    %c258 = arith.constant 258 : index
    %c0_60 = arith.constant 0 : index
    %103 = vector.load %arg13[%c258, %c0_60] : memref<832x16xf32, #tpu.memory_space<vmem>>, vector<24x16xf32>
    %104 = arith.maximumf %102, %103 : vector<24x16xf32>
    %105 = arith.maximumf %101, %104 : vector<24x16xf32>
    %cst_61 = arith.constant dense<0.000000e+00> : vector<12x16xf32>
    %106 = tpu.matmul %71, %105, %cst_61 {dimension_numbers = #tpu.dot_dimension_numbers<[1], [0], [0], [1], [0, 0, 1, 1], [], []>} : vector<12x24xf32>, vector<24x16xf32>, vector<12x16xf32> -> vector<12x16xf32>
    %c65_62 = arith.constant 65 : index
    %c0_63 = arith.constant 0 : index
    %107 = vector.load %arg14[%c65_62, %c0_63] : memref<224x16xf32, #tpu.memory_space<vmem>>, vector<12x16xf32>
    tpu.vector_store %arg14[%c65_62, %c0_63], %106 {strides = array<i32>} : memref<224x16xf32, #tpu.memory_space<vmem>>, vector<12x16xf32>,
    %c289 = arith.constant 289 : index
    %c0_64 = arith.constant 0 : index
    %108 = vector.load %arg13[%c289, %c0_64] : memref<832x16xf32, #tpu.memory_space<vmem>>, vector<24x16xf32>
    %c290 = arith.constant 290 : index
    %c0_65 = arith.constant 0 : index
    %109 = vector.load %arg13[%c290, %c0_65] : memref<832x16xf32, #tpu.memory_space<vmem>>, vector<24x16xf32>
    %110 = arith.maximumf %108, %109 : vector<24x16xf32>
    %c321 = arith.constant 321 : index
    %c0_66 = arith.constant 0 : index
    %111 = vector.load %arg13[%c321, %c0_66] : memref<832x16xf32, #tpu.memory_space<vmem>>, vector<24x16xf32>
    %c322 = arith.constant 322 : index
    %c0_67 = arith.constant 0 : index
    %112 = vector.load %arg13[%c322, %c0_67] : memref<832x16xf32, #tpu.memory_space<vmem>>, vector<24x16xf32>
    %113 = arith.maximumf %111, %112 : vector<24x16xf32>
    %114 = arith.maximumf %110, %113 : vector<24x16xf32>
    %cst_68 = arith.constant dense<0.000000e+00> : vector<12x16xf32>
    %115 = tpu.matmul %71, %114, %cst_68 {dimension_numbers = #tpu.dot_dimension_numbers<[1], [0], [0], [1], [0, 0, 1, 1], [], []>} : vector<12x24xf32>, vector<24x16xf32>, vector<12x16xf32> -> vector<12x16xf32>
    %c81 = arith.constant 81 : index
    %c0_69 = arith.constant 0 : index
    %116 = vector.load %arg14[%c81, %c0_69] : memref<224x16xf32, #tpu.memory_space<vmem>>, vector<12x16xf32>
    tpu.vector_store %arg14[%c81, %c0_69], %115 {strides = array<i32>} : memref<224x16xf32, #tpu.memory_space<vmem>>, vector<12x16xf32>,
    %c353 = arith.constant 353 : index
    %c0_70 = arith.constant 0 : index
    %117 = vector.load %arg13[%c353, %c0_70] : memref<832x16xf32, #tpu.memory_space<vmem>>, vector<24x16xf32>
    %c354 = arith.constant 354 : index
    %c0_71 = arith.constant 0 : index
    %118 = vector.load %arg13[%c354, %c0_71] : memref<832x16xf32, #tpu.memory_space<vmem>>, vector<24x16xf32>
    %119 = arith.maximumf %117, %118 : vector<24x16xf32>
    %c385 = arith.constant 385 : index
    %c0_72 = arith.constant 0 : index
    %120 = vector.load %arg13[%c385, %c0_72] : memref<832x16xf32, #tpu.memory_space<vmem>>, vector<24x16xf32>
    %c386 = arith.constant 386 : index
    %c0_73 = arith.constant 0 : index
    %121 = vector.load %arg13[%c386, %c0_73] : memref<832x16xf32, #tpu.memory_space<vmem>>, vector<24x16xf32>
    %122 = arith.maximumf %120, %121 : vector<24x16xf32>
    %123 = arith.maximumf %119, %122 : vector<24x16xf32>
    %cst_74 = arith.constant dense<0.000000e+00> : vector<12x16xf32>
    %124 = tpu.matmul %71, %123, %cst_74 {dimension_numbers = #tpu.dot_dimension_numbers<[1], [0], [0], [1], [0, 0, 1, 1], [], []>} : vector<12x24xf32>, vector<24x16xf32>, vector<12x16xf32> -> vector<12x16xf32>
    %c97_75 = arith.constant 97 : index
    %c0_76 = arith.constant 0 : index
    %125 = vector.load %arg14[%c97_75, %c0_76] : memref<224x16xf32, #tpu.memory_space<vmem>>, vector<12x16xf32>
    tpu.vector_store %arg14[%c97_75, %c0_76], %124 {strides = array<i32>} : memref<224x16xf32, #tpu.memory_space<vmem>>, vector<12x16xf32>,
    %c417 = arith.constant 417 : index
    %c0_77 = arith.constant 0 : index
    %126 = vector.load %arg13[%c417, %c0_77] : memref<832x16xf32, #tpu.memory_space<vmem>>, vector<24x16xf32>
    %c418 = arith.constant 418 : index
    %c0_78 = arith.constant 0 : index
    %127 = vector.load %arg13[%c418, %c0_78] : memref<832x16xf32, #tpu.memory_space<vmem>>, vector<24x16xf32>
    %128 = arith.maximumf %126, %127 : vector<24x16xf32>
    %c449 = arith.constant 449 : index
    %c0_79 = arith.constant 0 : index
    %129 = vector.load %arg13[%c449, %c0_79] : memref<832x16xf32, #tpu.memory_space<vmem>>, vector<24x16xf32>
    %c450 = arith.constant 450 : index
    %c0_80 = arith.constant 0 : index
    %130 = vector.load %arg13[%c450, %c0_80] : memref<832x16xf32, #tpu.memory_space<vmem>>, vector<24x16xf32>
    %131 = arith.maximumf %129, %130 : vector<24x16xf32>
    %132 = arith.maximumf %128, %131 : vector<24x16xf32>
    %cst_81 = arith.constant dense<0.000000e+00> : vector<12x16xf32>
    %133 = tpu.matmul %71, %132, %cst_81 {dimension_numbers = #tpu.dot_dimension_numbers<[1], [0], [0], [1], [0, 0, 1, 1], [], []>} : vector<12x24xf32>, vector<24x16xf32>, vector<12x16xf32> -> vector<12x16xf32>
    %c113 = arith.constant 113 : index
    %c0_82 = arith.constant 0 : index
    %134 = vector.load %arg14[%c113, %c0_82] : memref<224x16xf32, #tpu.memory_space<vmem>>, vector<12x16xf32>
    tpu.vector_store %arg14[%c113, %c0_82], %133 {strides = array<i32>} : memref<224x16xf32, #tpu.memory_space<vmem>>, vector<12x16xf32>,
    %c481 = arith.constant 481 : index
    %c0_83 = arith.constant 0 : index
    %135 = vector.load %arg13[%c481, %c0_83] : memref<832x16xf32, #tpu.memory_space<vmem>>, vector<24x16xf32>
    %c482 = arith.constant 482 : index
    %c0_84 = arith.constant 0 : index
    %136 = vector.load %arg13[%c482, %c0_84] : memref<832x16xf32, #tpu.memory_space<vmem>>, vector<24x16xf32>
    %137 = arith.maximumf %135, %136 : vector<24x16xf32>
    %c513 = arith.constant 513 : index
    %c0_85 = arith.constant 0 : index
    %138 = vector.load %arg13[%c513, %c0_85] : memref<832x16xf32, #tpu.memory_space<vmem>>, vector<24x16xf32>
    %c514 = arith.constant 514 : index
    %c0_86 = arith.constant 0 : index
    %139 = vector.load %arg13[%c514, %c0_86] : memref<832x16xf32, #tpu.memory_space<vmem>>, vector<24x16xf32>
    %140 = arith.maximumf %138, %139 : vector<24x16xf32>
    %141 = arith.maximumf %137, %140 : vector<24x16xf32>
    %cst_87 = arith.constant dense<0.000000e+00> : vector<12x16xf32>
    %142 = tpu.matmul %71, %141, %cst_87 {dimension_numbers = #tpu.dot_dimension_numbers<[1], [0], [0], [1], [0, 0, 1, 1], [], []>} : vector<12x24xf32>, vector<24x16xf32>, vector<12x16xf32> -> vector<12x16xf32>
    %c129_88 = arith.constant 129 : index
    %c0_89 = arith.constant 0 : index
    %143 = vector.load %arg14[%c129_88, %c0_89] : memref<224x16xf32, #tpu.memory_space<vmem>>, vector<12x16xf32>
    tpu.vector_store %arg14[%c129_88, %c0_89], %142 {strides = array<i32>} : memref<224x16xf32, #tpu.memory_space<vmem>>, vector<12x16xf32>,
    %c545 = arith.constant 545 : index
    %c0_90 = arith.constant 0 : index
    %144 = vector.load %arg13[%c545, %c0_90] : memref<832x16xf32, #tpu.memory_space<vmem>>, vector<24x16xf32>
    %c546 = arith.constant 546 : index
    %c0_91 = arith.constant 0 : index
    %145 = vector.load %arg13[%c546, %c0_91] : memref<832x16xf32, #tpu.memory_space<vmem>>, vector<24x16xf32>
    %146 = arith.maximumf %144, %145 : vector<24x16xf32>
    %c577 = arith.constant 577 : index
    %c0_92 = arith.constant 0 : index
    %147 = vector.load %arg13[%c577, %c0_92] : memref<832x16xf32, #tpu.memory_space<vmem>>, vector<24x16xf32>
    %c578 = arith.constant 578 : index
    %c0_93 = arith.constant 0 : index
    %148 = vector.load %arg13[%c578, %c0_93] : memref<832x16xf32, #tpu.memory_space<vmem>>, vector<24x16xf32>
    %149 = arith.maximumf %147, %148 : vector<24x16xf32>
    %150 = arith.maximumf %146, %149 : vector<24x16xf32>
    %cst_94 = arith.constant dense<0.000000e+00> : vector<12x16xf32>
    %151 = tpu.matmul %71, %150, %cst_94 {dimension_numbers = #tpu.dot_dimension_numbers<[1], [0], [0], [1], [0, 0, 1, 1], [], []>} : vector<12x24xf32>, vector<24x16xf32>, vector<12x16xf32> -> vector<12x16xf32>
    %c145 = arith.constant 145 : index
    %c0_95 = arith.constant 0 : index
    %152 = vector.load %arg14[%c145, %c0_95] : memref<224x16xf32, #tpu.memory_space<vmem>>, vector<12x16xf32>
    tpu.vector_store %arg14[%c145, %c0_95], %151 {strides = array<i32>} : memref<224x16xf32, #tpu.memory_space<vmem>>, vector<12x16xf32>,
    %c609 = arith.constant 609 : index
    %c0_96 = arith.constant 0 : index
    %153 = vector.load %arg13[%c609, %c0_96] : memref<832x16xf32, #tpu.memory_space<vmem>>, vector<24x16xf32>
    %c610 = arith.constant 610 : index
    %c0_97 = arith.constant 0 : index
    %154 = vector.load %arg13[%c610, %c0_97] : memref<832x16xf32, #tpu.memory_space<vmem>>, vector<24x16xf32>
    %155 = arith.maximumf %153, %154 : vector<24x16xf32>
    %c641 = arith.constant 641 : index
    %c0_98 = arith.constant 0 : index
    %156 = vector.load %arg13[%c641, %c0_98] : memref<832x16xf32, #tpu.memory_space<vmem>>, vector<24x16xf32>
    %c642 = arith.constant 642 : index
    %c0_99 = arith.constant 0 : index
    %157 = vector.load %arg13[%c642, %c0_99] : memref<832x16xf32, #tpu.memory_space<vmem>>, vector<24x16xf32>
    %158 = arith.maximumf %156, %157 : vector<24x16xf32>
    %159 = arith.maximumf %155, %158 : vector<24x16xf32>
    %cst_100 = arith.constant dense<0.000000e+00> : vector<12x16xf32>
    %160 = tpu.matmul %71, %159, %cst_100 {dimension_numbers = #tpu.dot_dimension_numbers<[1], [0], [0], [1], [0, 0, 1, 1], [], []>} : vector<12x24xf32>, vector<24x16xf32>, vector<12x16xf32> -> vector<12x16xf32>
    %c161_101 = arith.constant 161 : index
    %c0_102 = arith.constant 0 : index
    %161 = vector.load %arg14[%c161_101, %c0_102] : memref<224x16xf32, #tpu.memory_space<vmem>>, vector<12x16xf32>
    tpu.vector_store %arg14[%c161_101, %c0_102], %160 {strides = array<i32>} : memref<224x16xf32, #tpu.memory_space<vmem>>, vector<12x16xf32>,
    %c673 = arith.constant 673 : index
    %c0_103 = arith.constant 0 : index
    %162 = vector.load %arg13[%c673, %c0_103] : memref<832x16xf32, #tpu.memory_space<vmem>>, vector<24x16xf32>
    %c674 = arith.constant 674 : index
    %c0_104 = arith.constant 0 : index
    %163 = vector.load %arg13[%c674, %c0_104] : memref<832x16xf32, #tpu.memory_space<vmem>>, vector<24x16xf32>
    %164 = arith.maximumf %162, %163 : vector<24x16xf32>
    %c705 = arith.constant 705 : index
    %c0_105 = arith.constant 0 : index
    %165 = vector.load %arg13[%c705, %c0_105] : memref<832x16xf32, #tpu.memory_space<vmem>>, vector<24x16xf32>
    %c706 = arith.constant 706 : index
    %c0_106 = arith.constant 0 : index
    %166 = vector.load %arg13[%c706, %c0_106] : memref<832x16xf32, #tpu.memory_space<vmem>>, vector<24x16xf32>
    %167 = arith.maximumf %165, %166 : vector<24x16xf32>
    %168 = arith.maximumf %164, %167 : vector<24x16xf32>
    %cst_107 = arith.constant dense<0.000000e+00> : vector<12x16xf32>
    %169 = tpu.matmul %71, %168, %cst_107 {dimension_numbers = #tpu.dot_dimension_numbers<[1], [0], [0], [1], [0, 0, 1, 1], [], []>} : vector<12x24xf32>, vector<24x16xf32>, vector<12x16xf32> -> vector<12x16xf32>
    %c177 = arith.constant 177 : index
    %c0_108 = arith.constant 0 : index
    %170 = vector.load %arg14[%c177, %c0_108] : memref<224x16xf32, #tpu.memory_space<vmem>>, vector<12x16xf32>
    tpu.vector_store %arg14[%c177, %c0_108], %169 {strides = array<i32>} : memref<224x16xf32, #tpu.memory_space<vmem>>, vector<12x16xf32>,
    %c737 = arith.constant 737 : index
    %c0_109 = arith.constant 0 : index
    %171 = vector.load %arg13[%c737, %c0_109] : memref<832x16xf32, #tpu.memory_space<vmem>>, vector<24x16xf32>
    %c738 = arith.constant 738 : index
    %c0_110 = arith.constant 0 : index
    %172 = vector.load %arg13[%c738, %c0_110] : memref<832x16xf32, #tpu.memory_space<vmem>>, vector<24x16xf32>
    %173 = arith.maximumf %171, %172 : vector<24x16xf32>
    %c769 = arith.constant 769 : index
    %c0_111 = arith.constant 0 : index
    %174 = vector.load %arg13[%c769, %c0_111] : memref<832x16xf32, #tpu.memory_space<vmem>>, vector<24x16xf32>
    %c770 = arith.constant 770 : index
    %c0_112 = arith.constant 0 : index
    %175 = vector.load %arg13[%c770, %c0_112] : memref<832x16xf32, #tpu.memory_space<vmem>>, vector<24x16xf32>
    %176 = arith.maximumf %174, %175 : vector<24x16xf32>
    %177 = arith.maximumf %173, %176 : vector<24x16xf32>
    %cst_113 = arith.constant dense<0.000000e+00> : vector<12x16xf32>
    %178 = tpu.matmul %71, %177, %cst_113 {dimension_numbers = #tpu.dot_dimension_numbers<[1], [0], [0], [1], [0, 0, 1, 1], [], []>} : vector<12x24xf32>, vector<24x16xf32>, vector<12x16xf32> -> vector<12x16xf32>
    %c193_114 = arith.constant 193 : index
    %c0_115 = arith.constant 0 : index
    %179 = vector.load %arg14[%c193_114, %c0_115] : memref<224x16xf32, #tpu.memory_space<vmem>>, vector<12x16xf32>
    tpu.vector_store %arg14[%c193_114, %c0_115], %178 {strides = array<i32>} : memref<224x16xf32, #tpu.memory_space<vmem>>, vector<12x16xf32>,
    %c0_116 = arith.constant 0 : index
    %c0_117 = arith.constant 0 : index
    %180 = vector.load %arg14[%c0_116, %c0_117] : memref<224x16xf32, #tpu.memory_space<vmem>>, vector<190x16xf32>
    %c1_118 = arith.constant 1 : index
    %c0_119 = arith.constant 0 : index
    %181 = vector.load %arg14[%c1_118, %c0_119] : memref<224x16xf32, #tpu.memory_space<vmem>>, vector<190x16xf32>
    %c2_120 = arith.constant 2 : index
    %c0_121 = arith.constant 0 : index
    %182 = vector.load %arg14[%c2_120, %c0_121] : memref<224x16xf32, #tpu.memory_space<vmem>>, vector<190x16xf32>
    %c16 = arith.constant 16 : index
    %c0_122 = arith.constant 0 : index
    %183 = vector.load %arg14[%c16, %c0_122] : memref<224x16xf32, #tpu.memory_space<vmem>>, vector<190x16xf32>
    %c17_123 = arith.constant 17 : index
    %c0_124 = arith.constant 0 : index
    %184 = vector.load %arg14[%c17_123, %c0_124] : memref<224x16xf32, #tpu.memory_space<vmem>>, vector<190x16xf32>
    %c18 = arith.constant 18 : index
    %c0_125 = arith.constant 0 : index
    %185 = vector.load %arg14[%c18, %c0_125] : memref<224x16xf32, #tpu.memory_space<vmem>>, vector<190x16xf32>
    %c32_126 = arith.constant 32 : index
    %c0_127 = arith.constant 0 : index
    %186 = vector.load %arg14[%c32_126, %c0_127] : memref<224x16xf32, #tpu.memory_space<vmem>>, vector<190x16xf32>
    %c33_128 = arith.constant 33 : index
    %c0_129 = arith.constant 0 : index
    %187 = vector.load %arg14[%c33_128, %c0_129] : memref<224x16xf32, #tpu.memory_space<vmem>>, vector<190x16xf32>
    %c34_130 = arith.constant 34 : index
    %c0_131 = arith.constant 0 : index
    %188 = vector.load %arg14[%c34_130, %c0_131] : memref<224x16xf32, #tpu.memory_space<vmem>>, vector<190x16xf32>
    %189 = tpu.concatenate %180, %181, %182, %183, %184, %185, %186, %187, %188 in 1 : vector<190x16xf32>, vector<190x16xf32>, vector<190x16xf32>, vector<190x16xf32>, vector<190x16xf32>, vector<190x16xf32>, vector<190x16xf32>, vector<190x16xf32>, vector<190x16xf32> -> vector<190x144xf32>
    %190 = arith.truncf %189 : vector<190x144xf32> to vector<190x144xbf16>
    %c0_132 = arith.constant 0 : index
    %c0_133 = arith.constant 0 : index
    %191 = vector.load %arg4[%c0_132, %c0_133] : memref<144x32xbf16, #tpu.memory_space<vmem>>, vector<144x32xbf16>
    %cst_134 = arith.constant dense<0.000000e+00> : vector<190x32xf32>
    %192 = tpu.matmul %190, %191, %cst_134 {dimension_numbers = #tpu.dot_dimension_numbers<[1], [0], [0], [1], [0, 0, 1, 1], [], []>} : vector<190x144xbf16>, vector<144x32xbf16>, vector<190x32xf32> -> vector<190x32xf32>
    %c0_135 = arith.constant 0 : index
    %c0_136 = arith.constant 0 : index
    %193 = vector.load %arg5[%c0_135, %c0_136] : memref<1x32xf32, #tpu.memory_space<vmem>>, vector<1x32xf32>
    %194 = vector.broadcast %193 : vector<1x32xf32> to vector<190x32xf32>
    %195 = arith.addf %192, %194 : vector<190x32xf32>
    %cst_137 = arith.constant 0.000000e+00 : f32
    %196 = vector.broadcast %cst_137 : f32 to vector<190x32xf32>
    %197 = arith.maximumf %195, %196 : vector<190x32xf32>
    %c17_138 = arith.constant 17 : index
    %c0_139 = arith.constant 0 : index
    %198 = vector.load %arg15[%c17_138, %c0_139] : memref<224x32xf32, #tpu.memory_space<vmem>>, vector<190x32xf32>
    tpu.vector_store %arg15[%c17_138, %c0_139], %197 {strides = array<i32>} : memref<224x32xf32, #tpu.memory_space<vmem>>, vector<190x32xf32>,
    %199 = tpu.iota {dimensions = array<i32: 0>} : vector<6x12xi32>
    %200 = tpu.iota {dimensions = array<i32: 1>} : vector<6x12xi32>
    %c2_i32_140 = arith.constant 2 : i32
    %201 = vector.broadcast %c2_i32_140 : i32 to vector<6x12xi32>
    %202 = arith.muli %201, %199 : vector<6x12xi32>
    %203 = arith.cmpi eq, %200, %202 : vector<6x12xi32>
    %204 = arith.extui %203 : vector<6x12xi1> to vector<6x12xi32>
    %205 = arith.sitofp %204 : vector<6x12xi32> to vector<6x12xf32>
    %c17_141 = arith.constant 17 : index
    %c0_142 = arith.constant 0 : index
    %206 = vector.load %arg15[%c17_141, %c0_142] : memref<224x32xf32, #tpu.memory_space<vmem>>, vector<12x32xf32>
    %c18_143 = arith.constant 18 : index
    %c0_144 = arith.constant 0 : index
    %207 = vector.load %arg15[%c18_143, %c0_144] : memref<224x32xf32, #tpu.memory_space<vmem>>, vector<12x32xf32>
    %208 = arith.maximumf %206, %207 : vector<12x32xf32>
    %c33_145 = arith.constant 33 : index
    %c0_146 = arith.constant 0 : index
    %209 = vector.load %arg15[%c33_145, %c0_146] : memref<224x32xf32, #tpu.memory_space<vmem>>, vector<12x32xf32>
    %c34_147 = arith.constant 34 : index
    %c0_148 = arith.constant 0 : index
    %210 = vector.load %arg15[%c34_147, %c0_148] : memref<224x32xf32, #tpu.memory_space<vmem>>, vector<12x32xf32>
    %211 = arith.maximumf %209, %210 : vector<12x32xf32>
    %212 = arith.maximumf %208, %211 : vector<12x32xf32>
    %cst_149 = arith.constant dense<0.000000e+00> : vector<6x32xf32>
    %213 = tpu.matmul %205, %212, %cst_149 {dimension_numbers = #tpu.dot_dimension_numbers<[1], [0], [0], [1], [0, 0, 1, 1], [], []>} : vector<6x12xf32>, vector<12x32xf32>, vector<6x32xf32> -> vector<6x32xf32>
    %c9 = arith.constant 9 : index
    %c0_150 = arith.constant 0 : index
    %214 = vector.load %arg16[%c9, %c0_150] : memref<64x32xf32, #tpu.memory_space<vmem>>, vector<6x32xf32>
    tpu.vector_store %arg16[%c9, %c0_150], %213 {strides = array<i32>} : memref<64x32xf32, #tpu.memory_space<vmem>>, vector<6x32xf32>,
    %c49_151 = arith.constant 49 : index
    %c0_152 = arith.constant 0 : index
    %215 = vector.load %arg15[%c49_151, %c0_152] : memref<224x32xf32, #tpu.memory_space<vmem>>, vector<12x32xf32>
    %c50 = arith.constant 50 : index
    %c0_153 = arith.constant 0 : index
    %216 = vector.load %arg15[%c50, %c0_153] : memref<224x32xf32, #tpu.memory_space<vmem>>, vector<12x32xf32>
    %217 = arith.maximumf %215, %216 : vector<12x32xf32>
    %c65_154 = arith.constant 65 : index
    %c0_155 = arith.constant 0 : index
    %218 = vector.load %arg15[%c65_154, %c0_155] : memref<224x32xf32, #tpu.memory_space<vmem>>, vector<12x32xf32>
    %c66_156 = arith.constant 66 : index
    %c0_157 = arith.constant 0 : index
    %219 = vector.load %arg15[%c66_156, %c0_157] : memref<224x32xf32, #tpu.memory_space<vmem>>, vector<12x32xf32>
    %220 = arith.maximumf %218, %219 : vector<12x32xf32>
    %221 = arith.maximumf %217, %220 : vector<12x32xf32>
    %cst_158 = arith.constant dense<0.000000e+00> : vector<6x32xf32>
    %222 = tpu.matmul %205, %221, %cst_158 {dimension_numbers = #tpu.dot_dimension_numbers<[1], [0], [0], [1], [0, 0, 1, 1], [], []>} : vector<6x12xf32>, vector<12x32xf32>, vector<6x32xf32> -> vector<6x32xf32>
    %c17_159 = arith.constant 17 : index
    %c0_160 = arith.constant 0 : index
    %223 = vector.load %arg16[%c17_159, %c0_160] : memref<64x32xf32, #tpu.memory_space<vmem>>, vector<6x32xf32>
    tpu.vector_store %arg16[%c17_159, %c0_160], %222 {strides = array<i32>} : memref<64x32xf32, #tpu.memory_space<vmem>>, vector<6x32xf32>,
    %c81_161 = arith.constant 81 : index
    %c0_162 = arith.constant 0 : index
    %224 = vector.load %arg15[%c81_161, %c0_162] : memref<224x32xf32, #tpu.memory_space<vmem>>, vector<12x32xf32>
    %c82 = arith.constant 82 : index
    %c0_163 = arith.constant 0 : index
    %225 = vector.load %arg15[%c82, %c0_163] : memref<224x32xf32, #tpu.memory_space<vmem>>, vector<12x32xf32>
    %226 = arith.maximumf %224, %225 : vector<12x32xf32>
    %c97_164 = arith.constant 97 : index
    %c0_165 = arith.constant 0 : index
    %227 = vector.load %arg15[%c97_164, %c0_165] : memref<224x32xf32, #tpu.memory_space<vmem>>, vector<12x32xf32>
    %c98_166 = arith.constant 98 : index
    %c0_167 = arith.constant 0 : index
    %228 = vector.load %arg15[%c98_166, %c0_167] : memref<224x32xf32, #tpu.memory_space<vmem>>, vector<12x32xf32>
    %229 = arith.maximumf %227, %228 : vector<12x32xf32>
    %230 = arith.maximumf %226, %229 : vector<12x32xf32>
    %cst_168 = arith.constant dense<0.000000e+00> : vector<6x32xf32>
    %231 = tpu.matmul %205, %230, %cst_168 {dimension_numbers = #tpu.dot_dimension_numbers<[1], [0], [0], [1], [0, 0, 1, 1], [], []>} : vector<6x12xf32>, vector<12x32xf32>, vector<6x32xf32> -> vector<6x32xf32>
    %c25 = arith.constant 25 : index
    %c0_169 = arith.constant 0 : index
    %232 = vector.load %arg16[%c25, %c0_169] : memref<64x32xf32, #tpu.memory_space<vmem>>, vector<6x32xf32>
    tpu.vector_store %arg16[%c25, %c0_169], %231 {strides = array<i32>} : memref<64x32xf32, #tpu.memory_space<vmem>>, vector<6x32xf32>,
    %c113_170 = arith.constant 113 : index
    %c0_171 = arith.constant 0 : index
    %233 = vector.load %arg15[%c113_170, %c0_171] : memref<224x32xf32, #tpu.memory_space<vmem>>, vector<12x32xf32>
    %c114 = arith.constant 114 : index
    %c0_172 = arith.constant 0 : index
    %234 = vector.load %arg15[%c114, %c0_172] : memref<224x32xf32, #tpu.memory_space<vmem>>, vector<12x32xf32>
    %235 = arith.maximumf %233, %234 : vector<12x32xf32>
    %c129_173 = arith.constant 129 : index
    %c0_174 = arith.constant 0 : index
    %236 = vector.load %arg15[%c129_173, %c0_174] : memref<224x32xf32, #tpu.memory_space<vmem>>, vector<12x32xf32>
    %c130_175 = arith.constant 130 : index
    %c0_176 = arith.constant 0 : index
    %237 = vector.load %arg15[%c130_175, %c0_176] : memref<224x32xf32, #tpu.memory_space<vmem>>, vector<12x32xf32>
    %238 = arith.maximumf %236, %237 : vector<12x32xf32>
    %239 = arith.maximumf %235, %238 : vector<12x32xf32>
    %cst_177 = arith.constant dense<0.000000e+00> : vector<6x32xf32>
    %240 = tpu.matmul %205, %239, %cst_177 {dimension_numbers = #tpu.dot_dimension_numbers<[1], [0], [0], [1], [0, 0, 1, 1], [], []>} : vector<6x12xf32>, vector<12x32xf32>, vector<6x32xf32> -> vector<6x32xf32>
    %c33_178 = arith.constant 33 : index
    %c0_179 = arith.constant 0 : index
    %241 = vector.load %arg16[%c33_178, %c0_179] : memref<64x32xf32, #tpu.memory_space<vmem>>, vector<6x32xf32>
    tpu.vector_store %arg16[%c33_178, %c0_179], %240 {strides = array<i32>} : memref<64x32xf32, #tpu.memory_space<vmem>>, vector<6x32xf32>,
    %c145_180 = arith.constant 145 : index
    %c0_181 = arith.constant 0 : index
    %242 = vector.load %arg15[%c145_180, %c0_181] : memref<224x32xf32, #tpu.memory_space<vmem>>, vector<12x32xf32>
    %c146 = arith.constant 146 : index
    %c0_182 = arith.constant 0 : index
    %243 = vector.load %arg15[%c146, %c0_182] : memref<224x32xf32, #tpu.memory_space<vmem>>, vector<12x32xf32>
    %244 = arith.maximumf %242, %243 : vector<12x32xf32>
    %c161_183 = arith.constant 161 : index
    %c0_184 = arith.constant 0 : index
    %245 = vector.load %arg15[%c161_183, %c0_184] : memref<224x32xf32, #tpu.memory_space<vmem>>, vector<12x32xf32>
    %c162_185 = arith.constant 162 : index
    %c0_186 = arith.constant 0 : index
    %246 = vector.load %arg15[%c162_185, %c0_186] : memref<224x32xf32, #tpu.memory_space<vmem>>, vector<12x32xf32>
    %247 = arith.maximumf %245, %246 : vector<12x32xf32>
    %248 = arith.maximumf %244, %247 : vector<12x32xf32>
    %cst_187 = arith.constant dense<0.000000e+00> : vector<6x32xf32>
    %249 = tpu.matmul %205, %248, %cst_187 {dimension_numbers = #tpu.dot_dimension_numbers<[1], [0], [0], [1], [0, 0, 1, 1], [], []>} : vector<6x12xf32>, vector<12x32xf32>, vector<6x32xf32> -> vector<6x32xf32>
    %c41 = arith.constant 41 : index
    %c0_188 = arith.constant 0 : index
    %250 = vector.load %arg16[%c41, %c0_188] : memref<64x32xf32, #tpu.memory_space<vmem>>, vector<6x32xf32>
    tpu.vector_store %arg16[%c41, %c0_188], %249 {strides = array<i32>} : memref<64x32xf32, #tpu.memory_space<vmem>>, vector<6x32xf32>,
    %c177_189 = arith.constant 177 : index
    %c0_190 = arith.constant 0 : index
    %251 = vector.load %arg15[%c177_189, %c0_190] : memref<224x32xf32, #tpu.memory_space<vmem>>, vector<12x32xf32>
    %c178 = arith.constant 178 : index
    %c0_191 = arith.constant 0 : index
    %252 = vector.load %arg15[%c178, %c0_191] : memref<224x32xf32, #tpu.memory_space<vmem>>, vector<12x32xf32>
    %253 = arith.maximumf %251, %252 : vector<12x32xf32>
    %c193_192 = arith.constant 193 : index
    %c0_193 = arith.constant 0 : index
    %254 = vector.load %arg15[%c193_192, %c0_193] : memref<224x32xf32, #tpu.memory_space<vmem>>, vector<12x32xf32>
    %c194_194 = arith.constant 194 : index
    %c0_195 = arith.constant 0 : index
    %255 = vector.load %arg15[%c194_194, %c0_195] : memref<224x32xf32, #tpu.memory_space<vmem>>, vector<12x32xf32>
    %256 = arith.maximumf %254, %255 : vector<12x32xf32>
    %257 = arith.maximumf %253, %256 : vector<12x32xf32>
    %cst_196 = arith.constant dense<0.000000e+00> : vector<6x32xf32>
    %258 = tpu.matmul %205, %257, %cst_196 {dimension_numbers = #tpu.dot_dimension_numbers<[1], [0], [0], [1], [0, 0, 1, 1], [], []>} : vector<6x12xf32>, vector<12x32xf32>, vector<6x32xf32> -> vector<6x32xf32>
    %c49_197 = arith.constant 49 : index
    %c0_198 = arith.constant 0 : index
    %259 = vector.load %arg16[%c49_197, %c0_198] : memref<64x32xf32, #tpu.memory_space<vmem>>, vector<6x32xf32>
    tpu.vector_store %arg16[%c49_197, %c0_198], %258 {strides = array<i32>} : memref<64x32xf32, #tpu.memory_space<vmem>>, vector<6x32xf32>,
    %c0_199 = arith.constant 0 : index
    %c0_200 = arith.constant 0 : index
    %260 = vector.load %arg16[%c0_199, %c0_200] : memref<64x32xf32, #tpu.memory_space<vmem>>, vector<46x32xf32>
    %c1_201 = arith.constant 1 : index
    %c0_202 = arith.constant 0 : index
    %261 = vector.load %arg16[%c1_201, %c0_202] : memref<64x32xf32, #tpu.memory_space<vmem>>, vector<46x32xf32>
    %c2_203 = arith.constant 2 : index
    %c0_204 = arith.constant 0 : index
    %262 = vector.load %arg16[%c2_203, %c0_204] : memref<64x32xf32, #tpu.memory_space<vmem>>, vector<46x32xf32>
    %c8_205 = arith.constant 8 : index
    %c0_206 = arith.constant 0 : index
    %263 = vector.load %arg16[%c8_205, %c0_206] : memref<64x32xf32, #tpu.memory_space<vmem>>, vector<46x32xf32>
    %c9_207 = arith.constant 9 : index
    %c0_208 = arith.constant 0 : index
    %264 = vector.load %arg16[%c9_207, %c0_208] : memref<64x32xf32, #tpu.memory_space<vmem>>, vector<46x32xf32>
    %c10 = arith.constant 10 : index
    %c0_209 = arith.constant 0 : index
    %265 = vector.load %arg16[%c10, %c0_209] : memref<64x32xf32, #tpu.memory_space<vmem>>, vector<46x32xf32>
    %c16_210 = arith.constant 16 : index
    %c0_211 = arith.constant 0 : index
    %266 = vector.load %arg16[%c16_210, %c0_211] : memref<64x32xf32, #tpu.memory_space<vmem>>, vector<46x32xf32>
    %c17_212 = arith.constant 17 : index
    %c0_213 = arith.constant 0 : index
    %267 = vector.load %arg16[%c17_212, %c0_213] : memref<64x32xf32, #tpu.memory_space<vmem>>, vector<46x32xf32>
    %c18_214 = arith.constant 18 : index
    %c0_215 = arith.constant 0 : index
    %268 = vector.load %arg16[%c18_214, %c0_215] : memref<64x32xf32, #tpu.memory_space<vmem>>, vector<46x32xf32>
    %269 = tpu.concatenate %260, %261, %262, %263, %264, %265, %266, %267, %268 in 1 : vector<46x32xf32>, vector<46x32xf32>, vector<46x32xf32>, vector<46x32xf32>, vector<46x32xf32>, vector<46x32xf32>, vector<46x32xf32>, vector<46x32xf32>, vector<46x32xf32> -> vector<46x288xf32>
    %270 = arith.truncf %269 : vector<46x288xf32> to vector<46x288xbf16>
    %c0_216 = arith.constant 0 : index
    %c0_217 = arith.constant 0 : index
    %271 = vector.load %arg6[%c0_216, %c0_217] : memref<288x64xbf16, #tpu.memory_space<vmem>>, vector<288x64xbf16>
    %cst_218 = arith.constant dense<0.000000e+00> : vector<46x64xf32>
    %272 = tpu.matmul %270, %271, %cst_218 {dimension_numbers = #tpu.dot_dimension_numbers<[1], [0], [0], [1], [0, 0, 1, 1], [], []>} : vector<46x288xbf16>, vector<288x64xbf16>, vector<46x64xf32> -> vector<46x64xf32>
    %c0_219 = arith.constant 0 : index
    %c0_220 = arith.constant 0 : index
    %273 = vector.load %arg7[%c0_219, %c0_220] : memref<1x64xf32, #tpu.memory_space<vmem>>, vector<1x64xf32>
    %274 = vector.broadcast %273 : vector<1x64xf32> to vector<46x64xf32>
    %275 = arith.addf %272, %274 : vector<46x64xf32>
    %cst_221 = arith.constant 0.000000e+00 : f32
    %276 = vector.broadcast %cst_221 : f32 to vector<46x64xf32>
    %277 = arith.maximumf %275, %276 : vector<46x64xf32>
    %c9_222 = arith.constant 9 : index
    %c0_223 = arith.constant 0 : index
    %278 = vector.load %arg17[%c9_222, %c0_223] : memref<64x64xf32, #tpu.memory_space<vmem>>, vector<46x64xf32>
    tpu.vector_store %arg17[%c9_222, %c0_223], %277 {strides = array<i32>} : memref<64x64xf32, #tpu.memory_space<vmem>>, vector<46x64xf32>,
    %c9_224 = arith.constant 9 : index
    %c0_225 = arith.constant 0 : index
    %279 = vector.load %arg17[%c9_224, %c0_225] : memref<64x64xf32, #tpu.memory_space<vmem>>, vector<6x64xf32>
    %c10_226 = arith.constant 10 : index
    %c0_227 = arith.constant 0 : index
    %280 = vector.load %arg17[%c10_226, %c0_227] : memref<64x64xf32, #tpu.memory_space<vmem>>, vector<6x64xf32>
    %281 = arith.maximumf %279, %280 : vector<6x64xf32>
    %c17_228 = arith.constant 17 : index
    %c0_229 = arith.constant 0 : index
    %282 = vector.load %arg17[%c17_228, %c0_229] : memref<64x64xf32, #tpu.memory_space<vmem>>, vector<6x64xf32>
    %c18_230 = arith.constant 18 : index
    %c0_231 = arith.constant 0 : index
    %283 = vector.load %arg17[%c18_230, %c0_231] : memref<64x64xf32, #tpu.memory_space<vmem>>, vector<6x64xf32>
    %284 = arith.maximumf %282, %283 : vector<6x64xf32>
    %285 = arith.maximumf %281, %284 : vector<6x64xf32>
    %286 = vector.extract_strided_slice %285 {offsets = [0, 0], sizes = [1, 64], strides = [1, 1]} : vector<6x64xf32> to vector<1x64xf32>
    %287 = vector.extract_strided_slice %285 {offsets = [2, 0], sizes = [1, 64], strides = [1, 1]} : vector<6x64xf32> to vector<1x64xf32>
    %288 = vector.extract_strided_slice %285 {offsets = [4, 0], sizes = [1, 64], strides = [1, 1]} : vector<6x64xf32> to vector<1x64xf32>
    %289 = tpu.concatenate %286, %287, %288 in 1 : vector<1x64xf32>, vector<1x64xf32>, vector<1x64xf32> -> vector<1x192xf32>
    %c0_232 = arith.constant 0 : index
    %c0_233 = arith.constant 0 : index
    %290 = vector.load %arg18[%c0_232, %c0_233] : memref<3x192xf32, #tpu.memory_space<vmem>>, vector<1x192xf32>
    tpu.vector_store %arg18[%c0_232, %c0_233], %289 {strides = array<i32>} : memref<3x192xf32, #tpu.memory_space<vmem>>, vector<1x192xf32>,
    %c25_234 = arith.constant 25 : index
    %c0_235 = arith.constant 0 : index
    %291 = vector.load %arg17[%c25_234, %c0_235] : memref<64x64xf32, #tpu.memory_space<vmem>>, vector<6x64xf32>
    %c26 = arith.constant 26 : index
    %c0_236 = arith.constant 0 : index
    %292 = vector.load %arg17[%c26, %c0_236] : memref<64x64xf32, #tpu.memory_space<vmem>>, vector<6x64xf32>
    %293 = arith.maximumf %291, %292 : vector<6x64xf32>
    %c33_237 = arith.constant 33 : index
    %c0_238 = arith.constant 0 : index
    %294 = vector.load %arg17[%c33_237, %c0_238] : memref<64x64xf32, #tpu.memory_space<vmem>>, vector<6x64xf32>
    %c34_239 = arith.constant 34 : index
    %c0_240 = arith.constant 0 : index
    %295 = vector.load %arg17[%c34_239, %c0_240] : memref<64x64xf32, #tpu.memory_space<vmem>>, vector<6x64xf32>
    %296 = arith.maximumf %294, %295 : vector<6x64xf32>
    %297 = arith.maximumf %293, %296 : vector<6x64xf32>
    %298 = vector.extract_strided_slice %297 {offsets = [0, 0], sizes = [1, 64], strides = [1, 1]} : vector<6x64xf32> to vector<1x64xf32>
    %299 = vector.extract_strided_slice %297 {offsets = [2, 0], sizes = [1, 64], strides = [1, 1]} : vector<6x64xf32> to vector<1x64xf32>
    %300 = vector.extract_strided_slice %297 {offsets = [4, 0], sizes = [1, 64], strides = [1, 1]} : vector<6x64xf32> to vector<1x64xf32>
    %301 = tpu.concatenate %298, %299, %300 in 1 : vector<1x64xf32>, vector<1x64xf32>, vector<1x64xf32> -> vector<1x192xf32>
    %c1_241 = arith.constant 1 : index
    %c0_242 = arith.constant 0 : index
    %302 = vector.load %arg18[%c1_241, %c0_242] : memref<3x192xf32, #tpu.memory_space<vmem>>, vector<1x192xf32>
    tpu.vector_store %arg18[%c1_241, %c0_242], %301 {strides = array<i32>} : memref<3x192xf32, #tpu.memory_space<vmem>>, vector<1x192xf32>,
    %c41_243 = arith.constant 41 : index
    %c0_244 = arith.constant 0 : index
    %303 = vector.load %arg17[%c41_243, %c0_244] : memref<64x64xf32, #tpu.memory_space<vmem>>, vector<6x64xf32>
    %c42 = arith.constant 42 : index
    %c0_245 = arith.constant 0 : index
    %304 = vector.load %arg17[%c42, %c0_245] : memref<64x64xf32, #tpu.memory_space<vmem>>, vector<6x64xf32>
    %305 = arith.maximumf %303, %304 : vector<6x64xf32>
    %c49_246 = arith.constant 49 : index
    %c0_247 = arith.constant 0 : index
    %306 = vector.load %arg17[%c49_246, %c0_247] : memref<64x64xf32, #tpu.memory_space<vmem>>, vector<6x64xf32>
    %c50_248 = arith.constant 50 : index
    %c0_249 = arith.constant 0 : index
    %307 = vector.load %arg17[%c50_248, %c0_249] : memref<64x64xf32, #tpu.memory_space<vmem>>, vector<6x64xf32>
    %308 = arith.maximumf %306, %307 : vector<6x64xf32>
    %309 = arith.maximumf %305, %308 : vector<6x64xf32>
    %310 = vector.extract_strided_slice %309 {offsets = [0, 0], sizes = [1, 64], strides = [1, 1]} : vector<6x64xf32> to vector<1x64xf32>
    %311 = vector.extract_strided_slice %309 {offsets = [2, 0], sizes = [1, 64], strides = [1, 1]} : vector<6x64xf32> to vector<1x64xf32>
    %312 = vector.extract_strided_slice %309 {offsets = [4, 0], sizes = [1, 64], strides = [1, 1]} : vector<6x64xf32> to vector<1x64xf32>
    %313 = tpu.concatenate %310, %311, %312 in 1 : vector<1x64xf32>, vector<1x64xf32>, vector<1x64xf32> -> vector<1x192xf32>
    %c2_250 = arith.constant 2 : index
    %c0_251 = arith.constant 0 : index
    %314 = vector.load %arg18[%c2_250, %c0_251] : memref<3x192xf32, #tpu.memory_space<vmem>>, vector<1x192xf32>
    tpu.vector_store %arg18[%c2_250, %c0_251], %313 {strides = array<i32>} : memref<3x192xf32, #tpu.memory_space<vmem>>, vector<1x192xf32>,
    %c0_252 = arith.constant 0 : index
    %c0_253 = arith.constant 0 : index
    %315 = vector.load %arg18[%c0_252, %c0_253] : memref<3x192xf32, #tpu.memory_space<vmem>>, vector<1x192xf32>
    %316 = arith.truncf %315 : vector<1x192xf32> to vector<1x192xbf16>
    %c0_254 = arith.constant 0 : index
    %c0_255 = arith.constant 0 : index
    %317 = vector.load %arg8[%c0_254, %c0_255] : memref<576x256xbf16, #tpu.memory_space<vmem>>, vector<192x256xbf16>
    %cst_256 = arith.constant dense<0.000000e+00> : vector<1x256xf32>
    %318 = tpu.matmul %316, %317, %cst_256 {dimension_numbers = #tpu.dot_dimension_numbers<[1], [0], [0], [1], [0, 0, 1, 1], [], []>} : vector<1x192xbf16>, vector<192x256xbf16>, vector<1x256xf32> -> vector<1x256xf32>
    %c1_257 = arith.constant 1 : index
    %c0_258 = arith.constant 0 : index
    %319 = vector.load %arg18[%c1_257, %c0_258] : memref<3x192xf32, #tpu.memory_space<vmem>>, vector<1x192xf32>
    %320 = arith.truncf %319 : vector<1x192xf32> to vector<1x192xbf16>
    %c192 = arith.constant 192 : index
    %c0_259 = arith.constant 0 : index
    %321 = vector.load %arg8[%c192, %c0_259] : memref<576x256xbf16, #tpu.memory_space<vmem>>, vector<192x256xbf16>
    %cst_260 = arith.constant dense<0.000000e+00> : vector<1x256xf32>
    %322 = tpu.matmul %320, %321, %cst_260 {dimension_numbers = #tpu.dot_dimension_numbers<[1], [0], [0], [1], [0, 0, 1, 1], [], []>} : vector<1x192xbf16>, vector<192x256xbf16>, vector<1x256xf32> -> vector<1x256xf32>
    %323 = arith.addf %318, %322 : vector<1x256xf32>
    %c2_261 = arith.constant 2 : index
    %c0_262 = arith.constant 0 : index
    %324 = vector.load %arg18[%c2_261, %c0_262] : memref<3x192xf32, #tpu.memory_space<vmem>>, vector<1x192xf32>
    %325 = arith.truncf %324 : vector<1x192xf32> to vector<1x192xbf16>
    %c384 = arith.constant 384 : index
    %c0_263 = arith.constant 0 : index
    %326 = vector.load %arg8[%c384, %c0_263] : memref<576x256xbf16, #tpu.memory_space<vmem>>, vector<192x256xbf16>
    %cst_264 = arith.constant dense<0.000000e+00> : vector<1x256xf32>
    %327 = tpu.matmul %325, %326, %cst_264 {dimension_numbers = #tpu.dot_dimension_numbers<[1], [0], [0], [1], [0, 0, 1, 1], [], []>} : vector<1x192xbf16>, vector<192x256xbf16>, vector<1x256xf32> -> vector<1x256xf32>
    %328 = arith.addf %323, %327 : vector<1x256xf32>
    %c0_265 = arith.constant 0 : index
    %c0_266 = arith.constant 0 : index
    %329 = vector.load %arg9[%c0_265, %c0_266] : memref<1x256xf32, #tpu.memory_space<vmem>>, vector<1x256xf32>
    %330 = arith.addf %328, %329 : vector<1x256xf32>
    %cst_267 = arith.constant 0.000000e+00 : f32
    %331 = vector.broadcast %cst_267 : f32 to vector<1x256xf32>
    %332 = arith.maximumf %330, %331 : vector<1x256xf32>
    %333 = arith.truncf %332 : vector<1x256xf32> to vector<1x256xbf16>
    %c0_268 = arith.constant 0 : index
    %c0_269 = arith.constant 0 : index
    %334 = vector.load %arg10[%c0_268, %c0_269] : memref<256x10xbf16, #tpu.memory_space<vmem>>, vector<256x10xbf16>
    %cst_270 = arith.constant dense<0.000000e+00> : vector<1x10xf32>
    %335 = tpu.matmul %333, %334, %cst_270 {dimension_numbers = #tpu.dot_dimension_numbers<[1], [0], [0], [1], [0, 0, 1, 1], [], []>} : vector<1x256xbf16>, vector<256x10xbf16>, vector<1x10xf32> -> vector<1x10xf32>
    %c0_271 = arith.constant 0 : index
    %c0_272 = arith.constant 0 : index
    %336 = vector.load %arg11[%c0_271, %c0_272] : memref<1x10xf32, #tpu.memory_space<vmem>>, vector<1x10xf32>
    %337 = arith.addf %335, %336 : vector<1x10xf32>
    %cst_273 = arith.constant dense<0xFF800000> : vector<1xf32>
    %338 = vector.multi_reduction <maximumf>, %337, %cst_273 [1] : vector<1x10xf32> to vector<1xf32>
    %339 = vector.shape_cast %338 : vector<1xf32> to vector<1x1xf32>
    %340 = vector.broadcast %339 : vector<1x1xf32> to vector<1x10xf32>
    %341 = arith.subf %337, %340 : vector<1x10xf32>
    %342 = math.exp %341 : vector<1x10xf32>
    %cst_274 = arith.constant dense<0.000000e+00> : vector<1xf32>
    %343 = vector.multi_reduction <add>, %342, %cst_274 [1] : vector<1x10xf32> to vector<1xf32>
    %344 = vector.shape_cast %343 : vector<1xf32> to vector<1x1xf32>
    %345 = vector.broadcast %344 : vector<1x1xf32> to vector<1x10xf32>
    %346 = arith.divf %342, %345 : vector<1x10xf32>
    %c0_275 = arith.constant 0 : index
    %c0_276 = arith.constant 0 : index
    %c0_277 = arith.constant 0 : index
    %347 = vector.load %arg12[%c0_275, %c0_276, %c0_277] : memref<1x1x10xf32, #tpu.memory_space<vmem>>, vector<1x1x10xf32>
    %348 = vector.shape_cast %347 : vector<1x1x10xf32> to vector<1x10xf32>
    %349 = vector.shape_cast %346 : vector<1x10xf32> to vector<1x1x10xf32>
    tpu.vector_store %arg12[%c0_275, %c0_276, %c0_277], %349 {strides = array<i32>} : memref<1x1x10xf32, #tpu.memory_space<vmem>>, vector<1x1x10xf32>,
    return
  }
  func.func @transform_0(%arg0: i32) -> (i32, i32) {
    %c0_i32 = arith.constant 0 : i32
    %c0_i32_0 = arith.constant 0 : i32
    return %arg0, %c0_i32 : i32, i32
  }
  func.func @transform_1(%arg0: i32) -> (i32, i32) {
    %c0_i32 = arith.constant 0 : i32
    %c0_i32_0 = arith.constant 0 : i32
    %c0_i32_1 = arith.constant 0 : i32
    return %c0_i32, %c0_i32_0 : i32, i32
  }
  func.func @transform_2(%arg0: i32) -> (i32, i32) {
    %c0_i32 = arith.constant 0 : i32
    %c0_i32_0 = arith.constant 0 : i32
    %c0_i32_1 = arith.constant 0 : i32
    return %c0_i32, %c0_i32_0 : i32, i32
  }
  func.func @transform_3(%arg0: i32) -> (i32, i32) {
    %c0_i32 = arith.constant 0 : i32
    %c0_i32_0 = arith.constant 0 : i32
    %c0_i32_1 = arith.constant 0 : i32
    return %c0_i32, %c0_i32_0 : i32, i32
  }
  func.func @transform_4(%arg0: i32) -> (i32, i32) {
    %c0_i32 = arith.constant 0 : i32
    %c0_i32_0 = arith.constant 0 : i32
    %c0_i32_1 = arith.constant 0 : i32
    return %c0_i32, %c0_i32_0 : i32, i32
  }
  func.func @transform_5(%arg0: i32) -> (i32, i32) {
    %c0_i32 = arith.constant 0 : i32
    %c0_i32_0 = arith.constant 0 : i32
    %c0_i32_1 = arith.constant 0 : i32
    return %c0_i32, %c0_i32_0 : i32, i32
  }
  func.func @transform_6(%arg0: i32) -> (i32, i32) {
    %c0_i32 = arith.constant 0 : i32
    %c0_i32_0 = arith.constant 0 : i32
    %c0_i32_1 = arith.constant 0 : i32
    return %c0_i32, %c0_i32_0 : i32, i32
  }
  func.func @transform_7(%arg0: i32) -> (i32, i32) {
    %c0_i32 = arith.constant 0 : i32
    %c0_i32_0 = arith.constant 0 : i32
    %c0_i32_1 = arith.constant 0 : i32
    return %c0_i32, %c0_i32_0 : i32, i32
  }
  func.func @transform_8(%arg0: i32) -> (i32, i32) {
    %c0_i32 = arith.constant 0 : i32
    %c0_i32_0 = arith.constant 0 : i32
    %c0_i32_1 = arith.constant 0 : i32
    return %c0_i32, %c0_i32_0 : i32, i32
  }
  func.func @transform_9(%arg0: i32) -> (i32, i32) {
    %c0_i32 = arith.constant 0 : i32
    %c0_i32_0 = arith.constant 0 : i32
    %c0_i32_1 = arith.constant 0 : i32
    return %c0_i32, %c0_i32_0 : i32, i32
  }
  func.func @transform_10(%arg0: i32) -> (i32, i32) {
    %c0_i32 = arith.constant 0 : i32
    %c0_i32_0 = arith.constant 0 : i32
    %c0_i32_1 = arith.constant 0 : i32
    return %c0_i32, %c0_i32_0 : i32, i32
  }
  func.func @transform_11(%arg0: i32) -> (i32, i32, i32) {
    %c0_i32 = arith.constant 0 : i32
    %c0_i32_0 = arith.constant 0 : i32
    %c0_i32_1 = arith.constant 0 : i32
    return %arg0, %c0_i32, %c0_i32_0 : i32, i32, i32
  }
}

</mosaic_0001>

<llo_original>
// kernel: net_forward.1
$region0: #{net_forward.1}
  #allocation0 [shape = 'u32[]', space=smem, size = 0x4, offset = 0x4, fixed_abs, tag = 'smem constant byte address 0x4 - core index']
  #allocation1 [shape = 'u32[72,128]{1,0:T(1,128)}', space=vmem, size = 0x9000, scoped, tag = 'internal scratch']
  #allocation2 [shape = 'f32[832,16]{1,0:T(8,128)}', space=vmem, size = 0x68000, scoped, tag = 'scratch operand']
  #allocation3 [shape = 'f32[224,16]{1,0:T(8,128)}', space=vmem, size = 0x1c000, scoped, tag = 'scratch operand']
  #allocation4 [shape = 'f32[224,32]{1,0:T(8,128)}', space=vmem, size = 0x1c000, scoped, tag = 'scratch operand']
  #allocation5 [shape = 'f32[64,32]{1,0:T(8,128)}', space=vmem, size = 0x8000, scoped, tag = 'scratch operand']
  #allocation6 [shape = 'f32[64,64]{1,0:T(8,128)}', space=vmem, size = 0x8000, scoped, tag = 'scratch operand']
  #allocation7 [shape = 'f32[3,192]{1,0:T(4,128)}', space=vmem, size = 0x1000, scoped, tag = 'scratch operand']
  %s0 = inlined_call_operand.vmem [shape: f32[1664,1], index: 0, kind: input, shape index: {}]
  %s1 = inlined_call_operand.vmem [shape: f32[9,16], index: 1, kind: input, shape index: {}]
  %s2 = inlined_call_operand.vmem [shape: f32[1,16], index: 2, kind: input, shape index: {}]
  %s3 = inlined_call_operand.vmem [shape: bf16[144,32], index: 3, kind: input, shape index: {}]
  %s4 = inlined_call_operand.vmem [shape: f32[1,32], index: 4, kind: input, shape index: {}]
  %s5 = inlined_call_operand.vmem [shape: bf16[288,64], index: 5, kind: input, shape index: {}]
  %s6 = inlined_call_operand.vmem [shape: f32[1,64], index: 6, kind: input, shape index: {}]
  %s7 = inlined_call_operand.vmem [shape: bf16[576,256], index: 7, kind: input, shape index: {}]
  %s8 = inlined_call_operand.vmem [shape: f32[1,256], index: 8, kind: input, shape index: {}]
  %s9 = inlined_call_operand.vmem [shape: bf16[256,10], index: 9, kind: input, shape index: {}]
  %s10 = inlined_call_operand.vmem [shape: f32[1,10], index: 10, kind: input, shape index: {}]
  %s11 = inlined_call_operand.hbm [shape: f32[2,1,10], index: 11, kind: output, shape index: {}]
  %s12 = sld [smem:[#allocation0]]
  $region77: #{net_forward.1} parent=0
    _
  %s14 = ssub.s32 1, %s12
  %s15 = scalar_select 0, %s14, %s12
  $region1: #{net_forward.1} parent=0
    #allocation8 [shape = 'u8[1024]{0}', space=vmem, size = 0x400, scoped, tag = 'output window, operand 0']
    #allocation9 [shape = 's32[2]{0}', space=sflag, size = 0x8, scoped, tag = 'scoped memory for net_forward.1']
    %16 = vsyncpa [#allocation9], 0
    %s17 = scalar_lea.sflag [#allocation9], 1
    %18 = vsyncpa %s17, 0
    loop: start=0, step=1, limit=4
    $region2: #{net_forward.1} parent=1 // loop_pre_header
      _
    $region3: #{net_forward.1} parent=1 // loop_header
      %s20 = sphi 0, %s24
      %p21 = scmp.ge.s32.totalorder %s20, 4
      %s30 = sphi 0, %s32
      %s33 = sphi 0, %s30
      %s34 = sphi 0, %s33
      %s50 = sphi 0, %s34
      %s54 = sphi 0, %s54
      %s56 = sphi 0, %s54
      %s57 = sphi 0, %s56
      %s71 = sphi 0, %s57
      %s75 = sphi 0, %s75
      %s77 = sphi 0, %s75
      %s78 = sphi 0, %s77
      %s92 = sphi 0, %s78
      %s96 = sphi 0, %s96
      %s98 = sphi 0, %s96
      %s99 = sphi 0, %s98
      %s113 = sphi 0, %s99
      %s117 = sphi 0, %s117
      %s119 = sphi 0, %s117
      %s120 = sphi 0, %s119
      %s134 = sphi 0, %s120
      %s138 = sphi 0, %s138
      %s140 = sphi 0, %s138
      %s141 = sphi 0, %s140
      %s155 = sphi 0, %s141
      %s159 = sphi 0, %s159
      %s161 = sphi 0, %s159
      %s162 = sphi 0, %s161
      %s176 = sphi 0, %s162
      %s180 = sphi 0, %s180
      %s182 = sphi 0, %s180
      %s183 = sphi 0, %s182
      %s197 = sphi 0, %s183
      %s201 = sphi 0, %s201
      %s203 = sphi 0, %s201
      %s204 = sphi 0, %s203
      %s218 = sphi 0, %s204
      %s222 = sphi 0, %s222
      %s224 = sphi 0, %s222
      %s225 = sphi 0, %s224
      %s239 = sphi 0, %s225
      %s243 = sphi 0, %s243
      %s245 = sphi 0, %s243
      %s246 = sphi 0, %s245
      %s260 = sphi 0, %s246
      %s266 = sphi 0, %s268
      %s269 = sphi 0, %s266
      %s270 = sphi 0, %s269
      %s286 = sphi 0, %s270
    $region4: #{net_forward.1} parent=1 // loop_header_branch
      %23 = sbr.rel (%p21) target = $region8
    $region5: #{net_forward.1} parent=1 // loop_body
      %s25 = ssub.s32 %s20, 1
      %s26 = ssub.s32 %s20, 2
      %s27 = sadd.s32 %s20, 1
      %s28 = ssub.s32 %s20, %s27
      %p29 = scmp.eq.s32.totalorder %s28, 0
      %s31 = sadd.s32 %s30, 1
      %s32 = scalar_select %p29, %s30, %s31
      %p35 = pneg %p29
      %p36 = scmp.eq.s32.totalorder %s20, 1
      %p37 = por %p35, %p36
      %p38 = scmp.ne.s32.totalorder %s30, %s33
      %p39 = scmp.eq.s32.totalorder %s20, 0
      %p40 = por %p38, %p39
      %p41 = scmp.ne.s32.totalorder %s30, %s33
      %p42 = scmp.eq.s32.totalorder %s25, 1
      %p43 = por %p41, %p42
      %p44 = scmp.ne.s32.totalorder %s33, %s34
      %p45 = scmp.eq.s32.totalorder %s25, 0
      %p46 = por %p44, %p45
      %p47 = scmp.ne.s32.totalorder %s33, %s34
      %p48 = scmp.eq.s32.totalorder %s26, 1
      %p49 = por %p47, %p48
      %p51 = scmp.ne.s32.totalorder %s34, %s50
      %p52 = scmp.eq.s32.totalorder %s26, 0
      %p53 = por %p51, %p52
      %s55 = sadd.s32 %s54, 1
      %p58 = scmp.eq.s32.totalorder %s20, 1
      %p59 = scmp.ne.s32.totalorder %s54, %s56
      %p60 = scmp.eq.s32.totalorder %s20, 0
      %p61 = por %p59, %p60
      %p62 = scmp.ne.s32.totalorder %s54, %s56
      %p63 = scmp.eq.s32.totalorder %s25, 1
      %p64 = por %p62, %p63
      %p65 = scmp.ne.s32.totalorder %s56, %s57
      %p66 = scmp.eq.s32.totalorder %s25, 0
      %p67 = por %p65, %p66
      %p68 = scmp.ne.s32.totalorder %s56, %s57
      %p69 = scmp.eq.s32.totalorder %s26, 1
      %p70 = por %p68, %p69
      %p72 = scmp.ne.s32.totalorder %s57, %s71
      %p73 = scmp.eq.s32.totalorder %s26, 0
      %p74 = por %p72, %p73
      %s76 = sadd.s32 %s75, 1
      %p79 = scmp.eq.s32.totalorder %s20, 1
      %p80 = scmp.ne.s32.totalorder %s75, %s77
      %p81 = scmp.eq.s32.totalorder %s20, 0
      %p82 = por %p80, %p81
      %p83 = scmp.ne.s32.totalorder %s75, %s77
      %p84 = scmp.eq.s32.totalorder %s25, 1
      %p85 = por %p83, %p84
      %p86 = scmp.ne.s32.totalorder %s77, %s78
      %p87 = scmp.eq.s32.totalorder %s25, 0
      %p88 = por %p86, %p87
      %p89 = scmp.ne.s32.totalorder %s77, %s78
      %p90 = scmp.eq.s32.totalorder %s26, 1
      %p91 = por %p89, %p90
      %p93 = scmp.ne.s32.totalorder %s78, %s92
      %p94 = scmp.eq.s32.totalorder %s26, 0
      %p95 = por %p93, %p94
      %s97 = sadd.s32 %s96, 1
      %p100 = scmp.eq.s32.totalorder %s20, 1
      %p101 = scmp.ne.s32.totalorder %s96, %s98
      %p102 = scmp.eq.s32.totalorder %s20, 0
      %p103 = por %p101, %p102
      %p104 = scmp.ne.s32.totalorder %s96, %s98
      %p105 = scmp.eq.s32.totalorder %s25, 1
      %p106 = por %p104, %p105
      %p107 = scmp.ne.s32.totalorder %s98, %s99
      %p108 = scmp.eq.s32.totalorder %s25, 0
      %p109 = por %p107, %p108
      %p110 = scmp.ne.s32.totalorder %s98, %s99
      %p111 = scmp.eq.s32.totalorder %s26, 1
      %p112 = por %p110, %p111
      %p114 = scmp.ne.s32.totalorder %s99, %s113
      %p115 = scmp.eq.s32.totalorder %s26, 0
      %p116 = por %p114, %p115
      %s118 = sadd.s32 %s117, 1
      %p121 = scmp.eq.s32.totalorder %s20, 1
      %p122 = scmp.ne.s32.totalorder %s117, %s119
      %p123 = scmp.eq.s32.totalorder %s20, 0
      %p124 = por %p122, %p123
      %p125 = scmp.ne.s32.totalorder %s117, %s119
      %p126 = scmp.eq.s32.totalorder %s25, 1
      %p127 = por %p125, %p126
      %p128 = scmp.ne.s32.totalorder %s119, %s120
      %p129 = scmp.eq.s32.totalorder %s25, 0
      %p130 = por %p128, %p129
      %p131 = scmp.ne.s32.totalorder %s119, %s120
      %p132 = scmp.eq.s32.totalorder %s26, 1
      %p133 = por %p131, %p132
      %p135 = scmp.ne.s32.totalorder %s120, %s134
      %p136 = scmp.eq.s32.totalorder %s26, 0
      %p137 = por %p135, %p136
      %s139 = sadd.s32 %s138, 1
      %p142 = scmp.eq.s32.totalorder %s20, 1
      %p143 = scmp.ne.s32.totalorder %s138, %s140
      %p144 = scmp.eq.s32.totalorder %s20, 0
      %p145 = por %p143, %p144
      %p146 = scmp.ne.s32.totalorder %s138, %s140
      %p147 = scmp.eq.s32.totalorder %s25, 1
      %p148 = por %p146, %p147
      %p149 = scmp.ne.s32.totalorder %s140, %s141
      %p150 = scmp.eq.s32.totalorder %s25, 0
      %p151 = por %p149, %p150
      %p152 = scmp.ne.s32.totalorder %s140, %s141
      %p153 = scmp.eq.s32.totalorder %s26, 1
      %p154 = por %p152, %p153
      %p156 = scmp.ne.s32.totalorder %s141, %s155
      %p157 = scmp.eq.s32.totalorder %s26, 0
      %p158 = por %p156, %p157
      %s160 = sadd.s32 %s159, 1
      %p163 = scmp.eq.s32.totalorder %s20, 1
      %p164 = scmp.ne.s32.totalorder %s159, %s161
      %p165 = scmp.eq.s32.totalorder %s20, 0
      %p166 = por %p164, %p165
      %p167 = scmp.ne.s32.totalorder %s159, %s161
      %p168 = scmp.eq.s32.totalorder %s25, 1
      %p169 = por %p167, %p168
      %p170 = scmp.ne.s32.totalorder %s161, %s162
      %p171 = scmp.eq.s32.totalorder %s25, 0
      %p172 = por %p170, %p171
      %p173 = scmp.ne.s32.totalorder %s161, %s162
      %p174 = scmp.eq.s32.totalorder %s26, 1
      %p175 = por %p173, %p174
      %p177 = scmp.ne.s32.totalorder %s162, %s176
      %p178 = scmp.eq.s32.totalorder %s26, 0
      %p179 = por %p177, %p178
      %s181 = sadd.s32 %s180, 1
      %p184 = scmp.eq.s32.totalorder %s20, 1
      %p185 = scmp.ne.s32.totalorder %s180, %s182
      %p186 = scmp.eq.s32.totalorder %s20, 0
      %p187 = por %p185, %p186
      %p188 = scmp.ne.s32.totalorder %s180, %s182
      %p189 = scmp.eq.s32.totalorder %s25, 1
      %p190 = por %p188, %p189
      %p191 = scmp.ne.s32.totalorder %s182, %s183
      %p192 = scmp.eq.s32.totalorder %s25, 0
      %p193 = por %p191, %p192
      %p194 = scmp.ne.s32.totalorder %s182, %s183
      %p195 = scmp.eq.s32.totalorder %s26, 1
      %p196 = por %p194, %p195
      %p198 = scmp.ne.s32.totalorder %s183, %s197
      %p199 = scmp.eq.s32.totalorder %s26, 0
      %p200 = por %p198, %p199
      %s202 = sadd.s32 %s201, 1
      %p205 = scmp.eq.s32.totalorder %s20, 1
      %p206 = scmp.ne.s32.totalorder %s201, %s203
      %p207 = scmp.eq.s32.totalorder %s20, 0
      %p208 = por %p206, %p207
      %p209 = scmp.ne.s32.totalorder %s201, %s203
      %p210 = scmp.eq.s32.totalorder %s25, 1
      %p211 = por %p209, %p210
      %p212 = scmp.ne.s32.totalorder %s203, %s204
      %p213 = scmp.eq.s32.totalorder %s25, 0
      %p214 = por %p212, %p213
      %p215 = scmp.ne.s32.totalorder %s203, %s204
      %p216 = scmp.eq.s32.totalorder %s26, 1
      %p217 = por %p215, %p216
      %p219 = scmp.ne.s32.totalorder %s204, %s218
      %p220 = scmp.eq.s32.totalorder %s26, 0
      %p221 = por %p219, %p220
      %s223 = sadd.s32 %s222, 1
      %p226 = scmp.eq.s32.totalorder %s20, 1
      %p227 = scmp.ne.s32.totalorder %s222, %s224
      %p228 = scmp.eq.s32.totalorder %s20, 0
      %p229 = por %p227, %p228
      %p230 = scmp.ne.s32.totalorder %s222, %s224
      %p231 = scmp.eq.s32.totalorder %s25, 1
      %p232 = por %p230, %p231
      %p233 = scmp.ne.s32.totalorder %s224, %s225
      %p234 = scmp.eq.s32.totalorder %s25, 0
      %p235 = por %p233, %p234
      %p236 = scmp.ne.s32.totalorder %s224, %s225
      %p237 = scmp.eq.s32.totalorder %s26, 1
      %p238 = por %p236, %p237
      %p240 = scmp.ne.s32.totalorder %s225, %s239
      %p241 = scmp.eq.s32.totalorder %s26, 0
      %p242 = por %p240, %p241
      %s244 = sadd.s32 %s243, 1
      %p247 = scmp.eq.s32.totalorder %s20, 1
      %p248 = scmp.ne.s32.totalorder %s243, %s245
      %p249 = scmp.eq.s32.totalorder %s20, 0
      %p250 = por %p248, %p249
      %p251 = scmp.ne.s32.totalorder %s243, %s245
      %p252 = scmp.eq.s32.totalorder %s25, 1
      %p253 = por %p251, %p252
      %p254 = scmp.ne.s32.totalorder %s245, %s246
      %p255 = scmp.eq.s32.totalorder %s25, 0
      %p256 = por %p254, %p255
      %p257 = scmp.ne.s32.totalorder %s245, %s246
      %p258 = scmp.eq.s32.totalorder %s26, 1
      %p259 = por %p257, %p258
      %p261 = scmp.ne.s32.totalorder %s246, %s260
      %p262 = scmp.eq.s32.totalorder %s26, 0
      %p263 = por %p261, %p262
      %s264 = ssub.s32 %s20, %s27
      %p265 = scmp.eq.s32.totalorder %s264, 0
      %s267 = sadd.s32 %s266, 1
      %s268 = scalar_select %p265, %s266, %s267
      %p271 = pneg %p265
      %p272 = scmp.eq.s32.totalorder %s20, 1
      %p273 = por %p271, %p272
      %p274 = scmp.ne.s32.totalorder %s266, %s269
      %p275 = scmp.eq.s32.totalorder %s20, 0
      %p276 = por %p274, %p275
      %p277 = scmp.ne.s32.totalorder %s266, %s269
      %p278 = scmp.eq.s32.totalorder %s25, 1
      %p279 = por %p277, %p278
      %p280 = scmp.ne.s32.totalorder %s269, %s270
      %p281 = scmp.eq.s32.totalorder %s25, 0
      %p282 = por %p280, %p281
      %p283 = scmp.ne.s32.totalorder %s269, %s270
      %p284 = scmp.eq.s32.totalorder %s26, 1
      %p285 = por %p283, %p284
      %p287 = scmp.ne.s32.totalorder %s270, %s286
      %p288 = scmp.eq.s32.totalorder %s26, 0
      %p289 = por %p287, %p288
      %p290 = scmp.le.s32.totalorder 1, %s20
      %p291 = scmp.lt.s32.totalorder %s20, 3
      %p292 = pnand %p290, %p291
      %p293 = pneg %p292
      // Predicated region
      $region9: #{net_forward.1} parent=5 // pred_check
        _
      $region10: #{net_forward.1} parent=5 // pred_check_branch
        %295 = sbr.rel (%p292) target = $region12
      $region11: #{net_forward.1} parent=5 // pred_region
        %s296 = ssub.s32 %s20, 1
        // Predicated region
        $region13: #{net_forward.1} parent=11 // pred_check
          %p297 = pneg %p67
        $region14: #{net_forward.1} parent=11 // pred_check_branch
          %299 = sbr.rel (%p297) target = $region16
        $region15: #{net_forward.1} parent=11 // pred_region
          _
        $region16: #{net_forward.1} parent=11 // pred_fallthru
          _
        // Predicated region
        $region17: #{net_forward.1} parent=11 // pred_check
          %p300 = pneg %p88
        $region18: #{net_forward.1} parent=11 // pred_check_branch
          %302 = sbr.rel (%p300) target = $region20
        $region19: #{net_forward.1} parent=11 // pred_region
          _
        $region20: #{net_forward.1} parent=11 // pred_fallthru
          _
        // Predicated region
        $region21: #{net_forward.1} parent=11 // pred_check
          %p303 = pneg %p109
        $region22: #{net_forward.1} parent=11 // pred_check_branch
          %305 = sbr.rel (%p303) target = $region24
        $region23: #{net_forward.1} parent=11 // pred_region
          _
        $region24: #{net_forward.1} parent=11 // pred_fallthru
          _
        // Predicated region
        $region25: #{net_forward.1} parent=11 // pred_check
          %p306 = pneg %p130
        $region26: #{net_forward.1} parent=11 // pred_check_branch
          %308 = sbr.rel (%p306) target = $region28
        $region27: #{net_forward.1} parent=11 // pred_region
          _
        $region28: #{net_forward.1} parent=11 // pred_fallthru
          _
        // Predicated region
        $region29: #{net_forward.1} parent=11 // pred_check
          %p309 = pneg %p151
        $region30: #{net_forward.1} parent=11 // pred_check_branch
          %311 = sbr.rel (%p309) target = $region32
        $region31: #{net_forward.1} parent=11 // pred_region
          _
        $region32: #{net_forward.1} parent=11 // pred_fallthru
          _
        // Predicated region
        $region33: #{net_forward.1} parent=11 // pred_check
          %p312 = pneg %p172
        $region34: #{net_forward.1} parent=11 // pred_check_branch
          %314 = sbr.rel (%p312) target = $region36
        $region35: #{net_forward.1} parent=11 // pred_region
          _
        $region36: #{net_forward.1} parent=11 // pred_fallthru
          _
        // Predicated region
        $region37: #{net_forward.1} parent=11 // pred_check
          %p315 = pneg %p193
        $region38: #{net_forward.1} parent=11 // pred_check_branch
          %317 = sbr.rel (%p315) target = $region40
        $region39: #{net_forward.1} parent=11 // pred_region
          _
        $region40: #{net_forward.1} parent=11 // pred_fallthru
          _
        // Predicated region
        $region41: #{net_forward.1} parent=11 // pred_check
          %p318 = pneg %p214
        $region42: #{net_forward.1} parent=11 // pred_check_branch
          %320 = sbr.rel (%p318) target = $region44
        $region43: #{net_forward.1} parent=11 // pred_region
          _
        $region44: #{net_forward.1} parent=11 // pred_fallthru
          _
        // Predicated region
        $region45: #{net_forward.1} parent=11 // pred_check
          %p321 = pneg %p235
        $region46: #{net_forward.1} parent=11 // pred_check_branch
          %323 = sbr.rel (%p321) target = $region48
        $region47: #{net_forward.1} parent=11 // pred_region
          _
        $region48: #{net_forward.1} parent=11 // pred_fallthru
          _
        // Predicated region
        $region49: #{net_forward.1} parent=11 // pred_check
          %p324 = pneg %p256
        $region50: #{net_forward.1} parent=11 // pred_check_branch
          %326 = sbr.rel (%p324) target = $region52
        $region51: #{net_forward.1} parent=11 // pred_region
          _
        $region52: #{net_forward.1} parent=11 // pred_fallthru
          _
      $region12: #{net_forward.1} parent=5 // pred_fallthru
        _
      %p327 = scmp.lt.s32.totalorder %s20, 2
      // Predicated region
      $region53: #{net_forward.1} parent=5 // pred_check
        %p328 = pneg %p327
      $region54: #{net_forward.1} parent=5 // pred_check_branch
        %330 = sbr.rel (%p328) target = $region56
      $region55: #{net_forward.1} parent=5 // pred_region
        // Predicated region
        $region57: #{net_forward.1} parent=55 // pred_check
          %p331 = pneg %p40
        $region58: #{net_forward.1} parent=55 // pred_check_branch
          %333 = sbr.rel (%p331) target = $region60
        $region59: #{net_forward.1} parent=55 // pred_region
          %s334 = smul.u32 104, %s20
          %p335 = scmp.lt.s32.totalorder %s334, 207
          %s336 = scalar_select %p335, %s334, 207
          %s337 = smul.addr %s336, 8
          %s338 = scalar_lea.vmem %s0, %s337
          %s339 = smul.u32 104, %s20
        $region60: #{net_forward.1} parent=55 // pred_fallthru
          _
      $region56: #{net_forward.1} parent=5 // pred_fallthru
        _
      %p340 = scmp.le.s32.totalorder 1, %s20
      %p341 = scmp.lt.s32.totalorder %s20, 3
      %p342 = pnand %p340, %p341
      %p343 = pneg %p342
      // Predicated region
      $region61: #{net_forward.1} parent=5 // pred_check
        _
      $region62: #{net_forward.1} parent=5 // pred_check_branch
        %345 = sbr.rel (%p342) target = $region64
      $region63: #{net_forward.1} parent=5 // pred_region
        %s346 = ssub.s32 %s20, 1
        %s347 = smul.u32 104, %s25
        %p348 = scmp.lt.s32.totalorder %s347, 207
        %s349 = scalar_select %p348, %s347, 207
        %s350 = smul.addr %s349, 8
        %s351 = scalar_lea.vmem %s0, %s350
        %p352 = pneg %p46
        %p353 = pneg %p43
        %p354 = pneg %p67
        %p355 = pneg %p64
        %p356 = pneg %p88
        %p357 = pneg %p85
        %p358 = pneg %p109
        %p359 = pneg %p106
        %p360 = pneg %p130
        %p361 = pneg %p127
        %p362 = pneg %p151
        %p363 = pneg %p148
        %p364 = pneg %p172
        %p365 = pneg %p169
        %p366 = pneg %p193
        %p367 = pneg %p190
        %p368 = pneg %p214
        %p369 = pneg %p211
        %p370 = pneg %p235
        %p371 = pneg %p232
        %p372 = pneg %p256
        %p373 = pneg %p253
        %p374 = pneg %p282
        %p375 = pneg %p279
        %s376 = sand.u32 %s269, 1
        %s377 = scalar_lea.sflag [#allocation9], %s376
        %s378 = sand.u32 %s269, 1
        %s379 = scalar_lea.vmem [#allocation8], %s378
        %s380 = smul.u32 104, %s25
        %p381 = scmp.lt.s32.totalorder %s380, 207
        %s382 = scalar_select %p381, %s380, 207
        %s383 = smul.addr %s382, 8
        %s384 = scalar_lea.vmem %s0, %s383
        %s385 = smul.u32 104, %s25
        %vm387 = vcmask 130048
        %388 = vst.msk [vmem:[#allocation3] sm:$0xff] %vm387, 0.0
        %389 = vst.msk [vmem:[#allocation3 + $0x8] sm:$0xff] %vm387, 0.0
        %390 = vst.msk [vmem:[#allocation3 + $0x10] sm:$0xff] %vm387, 0.0
        %391 = vst.msk [vmem:[#allocation3 + $0x18] sm:$0xff] %vm387, 0.0
        %392 = vst.msk [vmem:[#allocation3 + $0x20] sm:$0xff] %vm387, 0.0
        %393 = vst.msk [vmem:[#allocation3 + $0x28] sm:$0xff] %vm387, 0.0
        %394 = vst.msk [vmem:[#allocation3 + $0x30] sm:$0xff] %vm387, 0.0
        %395 = vst.msk [vmem:[#allocation3 + $0x38] sm:$0xff] %vm387, 0.0
        %396 = vst.msk [vmem:[#allocation3 + $0x40] sm:$0xff] %vm387, 0.0
        %397 = vst.msk [vmem:[#allocation3 + $0x48] sm:$0xff] %vm387, 0.0
        %398 = vst.msk [vmem:[#allocation3 + $0x50] sm:$0xff] %vm387, 0.0
        %399 = vst.msk [vmem:[#allocation3 + $0x58] sm:$0xff] %vm387, 0.0
        %400 = vst.msk [vmem:[#allocation3 + $0x60] sm:$0xff] %vm387, 0.0
        %401 = vst.msk [vmem:[#allocation3 + $0x68] sm:$0xff] %vm387, 0.0
        %402 = vst.msk [vmem:[#allocation3 + $0x70] sm:$0xff] %vm387, 0.0
        %403 = vst.msk [vmem:[#allocation3 + $0x78] sm:$0xff] %vm387, 0.0
        %404 = vst.msk [vmem:[#allocation3 + $0x80] sm:$0xff] %vm387, 0.0
        %405 = vst.msk [vmem:[#allocation3 + $0x88] sm:$0xff] %vm387, 0.0
        %406 = vst.msk [vmem:[#allocation3 + $0x90] sm:$0xff] %vm387, 0.0
        %407 = vst.msk [vmem:[#allocation3 + $0x98] sm:$0xff] %vm387, 0.0
        %408 = vst.msk [vmem:[#allocation3 + $0xa0] sm:$0xff] %vm387, 0.0
        %409 = vst.msk [vmem:[#allocation3 + $0xa8] sm:$0xff] %vm387, 0.0
        %410 = vst.msk [vmem:[#allocation3 + $0xb0] sm:$0xff] %vm387, 0.0
        %411 = vst.msk [vmem:[#allocation3 + $0xb8] sm:$0xff] %vm387, 0.0
        %412 = vst.msk [vmem:[#allocation3 + $0xc0] sm:$0xff] %vm387, 0.0
        %413 = vst.msk [vmem:[#allocation3 + $0xc8] sm:$0xff] %vm387, 0.0
        %414 = vst.msk [vmem:[#allocation3 + $0xd0] sm:$0xff] %vm387, 0.0
        %415 = vst.msk [vmem:[#allocation3 + $0xd8] sm:$0xff] %vm387, 0.0
        %vm416 = vcmask 261120
        %417 = vst.msk [vmem:[#allocation5] sm:$0xff] %vm416, 0.0
        %418 = vst.msk [vmem:[#allocation5 + $0x8] sm:$0xff] %vm416, 0.0
        %419 = vst.msk [vmem:[#allocation5 + $0x10] sm:$0xff] %vm416, 0.0
        %420 = vst.msk [vmem:[#allocation5 + $0x18] sm:$0xff] %vm416, 0.0
        %421 = vst.msk [vmem:[#allocation5 + $0x20] sm:$0xff] %vm416, 0.0
        %422 = vst.msk [vmem:[#allocation5 + $0x28] sm:$0xff] %vm416, 0.0
        %423 = vst.msk [vmem:[#allocation5 + $0x30] sm:$0xff] %vm416, 0.0
        %424 = vst.msk [vmem:[#allocation5 + $0x38] sm:$0xff] %vm416, 0.0
        %vm425 = vcmask 523264
        %426 = vst.msk [vmem:[#allocation6] sm:$0xff] %vm425, 0.0
        %427 = vst.msk [vmem:[#allocation6 + $0x8] sm:$0xff] %vm425, 0.0
        %428 = vst.msk [vmem:[#allocation6 + $0x10] sm:$0xff] %vm425, 0.0
        %429 = vst.msk [vmem:[#allocation6 + $0x18] sm:$0xff] %vm425, 0.0
        %430 = vst.msk [vmem:[#allocation6 + $0x20] sm:$0xff] %vm425, 0.0
        %431 = vst.msk [vmem:[#allocation6 + $0x28] sm:$0xff] %vm425, 0.0
        %432 = vst.msk [vmem:[#allocation6 + $0x30] sm:$0xff] %vm425, 0.0
        %433 = vst.msk [vmem:[#allocation6 + $0x38] sm:$0xff] %vm425, 0.0
        %v434 = vld [vmem:[%s384] sm:$0xff]
        %v435 = vld [vmem:[%s384 + $0x8] sm:$0xff]
        %v436 = vld [vmem:[%s384 + $0x10] sm:$0xff]
        %v437 = vld [vmem:[%s384 + $0x18] sm:$0xff]
        %v438 = vld [vmem:[%s384 + $0x20] sm:$0xff]
        %v439 = vld [vmem:[%s384 + $0x28] sm:$0xff]
        %v440 = vld [vmem:[%s384 + $0x30] sm:$0xff]
        %v441 = vld [vmem:[%s384 + $0x38] sm:$0xff]
        %v442 = vld [vmem:[%s384 + $0x40] sm:$0xff]
        %v443 = vld [vmem:[%s384 + $0x48] sm:$0xff]
        %v444 = vld [vmem:[%s384 + $0x50] sm:$0xff]
        %v445 = vld [vmem:[%s384 + $0x58] sm:$0xff]
        %v446 = vld [vmem:[%s384 + $0x60] sm:$0xff]
        %v447 = vld [vmem:[%s384 + $0x68] sm:$0xff]
        %v448 = vld [vmem:[%s384 + $0x70] sm:$0xff]
        %v449 = vld [vmem:[%s384 + $0x78] sm:$0xff]
        %v450 = vld [vmem:[%s384 + $0x80] sm:$0xff]
        %v451 = vld [vmem:[%s384 + $0x88] sm:$0xff]
        %v452 = vld [vmem:[%s384 + $0x90] sm:$0xff]
        %v453 = vld [vmem:[%s384 + $0x98] sm:$0xff]
        %v454 = vld [vmem:[%s384 + $0xa0] sm:$0xff]
        %v455 = vld [vmem:[%s384 + $0xa8] sm:$0xff]
        %v456 = vld [vmem:[%s384 + $0xb0] sm:$0xff]
        %v457 = vld [vmem:[%s384 + $0xb8] sm:$0xff]
        %v458 = vld [vmem:[%s384 + $0xc0] sm:$0xff]
        %v459 = vld [vmem:[%s384 + $0xc8] sm:$0xff]
        %v460 = vld [vmem:[%s384 + $0xd0] sm:$0xff]
        %v461 = vld [vmem:[%s384 + $0xd8] sm:$0xff]
        %v462 = vld [vmem:[%s384 + $0xe0] sm:$0xff]
        %v463 = vld [vmem:[%s384 + $0xe8] sm:$0xff]
        %v464 = vld [vmem:[%s384 + $0xf0] sm:$0xff]
        %v465 = vld [vmem:[%s384 + $0xf8] sm:$0xff]
        %v466 = vld [vmem:[%s384 + $0x100] sm:$0xff]
        %v467 = vld [vmem:[%s384 + $0x108] sm:$0xff]
        %v468 = vld [vmem:[%s384 + $0x110] sm:$0xff]
        %v469 = vld [vmem:[%s384 + $0x118] sm:$0xff]
        %v470 = vld [vmem:[%s384 + $0x120] sm:$0xff]
        %v471 = vld [vmem:[%s384 + $0x128] sm:$0xff]
        %v472 = vld [vmem:[%s384 + $0x130] sm:$0xff]
        %v473 = vld [vmem:[%s384 + $0x138] sm:$0xff]
        %v474 = vld [vmem:[%s384 + $0x140] sm:$0xff]
        %v475 = vld [vmem:[%s384 + $0x148] sm:$0xff]
        %v476 = vld [vmem:[%s384 + $0x150] sm:$0xff]
        %v477 = vld [vmem:[%s384 + $0x158] sm:$0xff]
        %v478 = vld [vmem:[%s384 + $0x160] sm:$0xff]
        %v479 = vld [vmem:[%s384 + $0x168] sm:$0xff]
        %v480 = vld [vmem:[%s384 + $0x170] sm:$0xff]
        %v481 = vld [vmem:[%s384 + $0x178] sm:$0xff]
        %v482 = vld [vmem:[%s384 + $0x180] sm:$0xff]
        %v483 = vld [vmem:[%s384 + $0x188] sm:$0xff]
        %v484 = vld [vmem:[%s384 + $0x190] sm:$0xff]
        %v485 = vld [vmem:[%s384 + $0x198] sm:$0xff]
        %v486 = vld [vmem:[%s384 + $0x1a0] sm:$0xff]
        %v487 = vld [vmem:[%s384 + $0x1a8] sm:$0xff]
        %v488 = vld [vmem:[%s384 + $0x1b0] sm:$0xff]
        %v489 = vld [vmem:[%s384 + $0x1b8] sm:$0xff]
        %v490 = vld [vmem:[%s384 + $0x1c0] sm:$0xff]
        %v491 = vld [vmem:[%s384 + $0x1c8] sm:$0xff]
        %v492 = vld [vmem:[%s384 + $0x1d0] sm:$0xff]
        %v493 = vld [vmem:[%s384 + $0x1d8] sm:$0xff]
        %v494 = vld [vmem:[%s384 + $0x1e0] sm:$0xff]
        %v495 = vld [vmem:[%s384 + $0x1e8] sm:$0xff]
        %v496 = vld [vmem:[%s384 + $0x1f0] sm:$0xff]
        %v497 = vld [vmem:[%s384 + $0x1f8] sm:$0xff]
        %v498 = vld [vmem:[%s384 + $0x200] sm:$0xff]
        %v499 = vld [vmem:[%s384 + $0x208] sm:$0xff]
        %v500 = vld [vmem:[%s384 + $0x210] sm:$0xff]
        %v501 = vld [vmem:[%s384 + $0x218] sm:$0xff]
        %v502 = vld [vmem:[%s384 + $0x220] sm:$0xff]
        %v503 = vld [vmem:[%s384 + $0x228] sm:$0xff]
        %v504 = vld [vmem:[%s384 + $0x230] sm:$0xff]
        %v505 = vld [vmem:[%s384 + $0x238] sm:$0xff]
        %v506 = vld [vmem:[%s384 + $0x240] sm:$0xff]
        %v507 = vld [vmem:[%s384 + $0x248] sm:$0xff]
        %v508 = vld [vmem:[%s384 + $0x250] sm:$0xff]
        %v509 = vld [vmem:[%s384 + $0x258] sm:$0xff]
        %v510 = vld [vmem:[%s384 + $0x260] sm:$0xff]
        %v511 = vld [vmem:[%s384 + $0x268] sm:$0xff]
        %v512 = vld [vmem:[%s384 + $0x270] sm:$0xff]
        %v513 = vld [vmem:[%s384 + $0x278] sm:$0xff]
        %v514 = vld [vmem:[%s384 + $0x280] sm:$0xff]
        %v515 = vld [vmem:[%s384 + $0x288] sm:$0xff]
        %v516 = vld [vmem:[%s384 + $0x290] sm:$0xff]
        %v517 = vld [vmem:[%s384 + $0x298] sm:$0xff]
        %v518 = vld [vmem:[%s384 + $0x2a0] sm:$0xff]
        %v519 = vld [vmem:[%s384 + $0x2a8] sm:$0xff]
        %v520 = vld [vmem:[%s384 + $0x2b0] sm:$0xff]
        %v521 = vld [vmem:[%s384 + $0x2b8] sm:$0xff]
        %v522 = vld [vmem:[%s384 + $0x2c0] sm:$0xff]
        %v523 = vld [vmem:[%s384 + $0x2c8] sm:$0xff]
        %v524 = vld [vmem:[%s384 + $0x2d0] sm:$0xff]
        %v525 = vld [vmem:[%s384 + $0x2d8] sm:$0xff]
        %v526 = vld [vmem:[%s384 + $0x2e0] sm:$0xff]
        %v527 = vld [vmem:[%s384 + $0x2e8] sm:$0xff]
        %v528 = vld [vmem:[%s384 + $0x2f0] sm:$0xff]
        %v529 = vld [vmem:[%s384 + $0x2f8] sm:$0x3f]
        %v530 = vld [vmem:[%s1] sm:$0x1]
        %532 = vset.pattern.permute.xlu0 0
        %533 = vperm.xlu0 %532, %v434
        %v534 = vpop.permute.xlu0 %533
        %537 = vset.pattern.permute.xlu0 0
        %538 = vperm.xlu0 %537, %v435
        %v539 = vpop.permute.xlu0 %538
        %542 = vset.pattern.permute.xlu0 0
        %543 = vperm.xlu0 %542, %v436
        %v544 = vpop.permute.xlu0 %543
        %547 = vset.pattern.permute.xlu0 0
        %548 = vperm.xlu0 %547, %v437
        %v549 = vpop.permute.xlu0 %548
        %552 = vset.pattern.permute.xlu0 0
        %553 = vperm.xlu0 %552, %v438
        %v554 = vpop.permute.xlu0 %553
        %557 = vset.pattern.permute.xlu0 0
        %558 = vperm.xlu0 %557, %v439
        %v559 = vpop.permute.xlu0 %558
        %562 = vset.pattern.permute.xlu0 0
        %563 = vperm.xlu0 %562, %v440
        %v564 = vpop.permute.xlu0 %563
        %567 = vset.pattern.permute.xlu0 0
        %568 = vperm.xlu0 %567, %v441
        %v569 = vpop.permute.xlu0 %568
        %572 = vset.pattern.permute.xlu0 0
        %573 = vperm.xlu0 %572, %v442
        %v574 = vpop.permute.xlu0 %573
        %577 = vset.pattern.permute.xlu0 0
        %578 = vperm.xlu0 %577, %v443
        %v579 = vpop.permute.xlu0 %578
        %582 = vset.pattern.permute.xlu0 0
        %583 = vperm.xlu0 %582, %v444
        %v584 = vpop.permute.xlu0 %583
        %587 = vset.pattern.permute.xlu0 0
        %588 = vperm.xlu0 %587, %v445
        %v589 = vpop.permute.xlu0 %588
        %592 = vset.pattern.permute.xlu0 0
        %593 = vperm.xlu0 %592, %v446
        %v594 = vpop.permute.xlu0 %593
        %597 = vset.pattern.permute.xlu0 0
        %598 = vperm.xlu0 %597, %v447
        %v599 = vpop.permute.xlu0 %598
        %602 = vset.pattern.permute.xlu0 0
        %603 = vperm.xlu0 %602, %v448
        %v604 = vpop.permute.xlu0 %603
        %607 = vset.pattern.permute.xlu0 0
        %608 = vperm.xlu0 %607, %v449
        %v609 = vpop.permute.xlu0 %608
        %612 = vset.pattern.permute.xlu0 0
        %613 = vperm.xlu0 %612, %v450
        %v614 = vpop.permute.xlu0 %613
        %617 = vset.pattern.permute.xlu0 0
        %618 = vperm.xlu0 %617, %v451
        %v619 = vpop.permute.xlu0 %618
        %622 = vset.pattern.permute.xlu0 0
        %623 = vperm.xlu0 %622, %v452
        %v624 = vpop.permute.xlu0 %623
        %627 = vset.pattern.permute.xlu0 0
        %628 = vperm.xlu0 %627, %v453
        %v629 = vpop.permute.xlu0 %628
        %632 = vset.pattern.permute.xlu0 0
        %633 = vperm.xlu0 %632, %v454
        %v634 = vpop.permute.xlu0 %633
        %637 = vset.pattern.permute.xlu0 0
        %638 = vperm.xlu0 %637, %v455
        %v639 = vpop.permute.xlu0 %638
        %642 = vset.pattern.permute.xlu0 0
        %643 = vperm.xlu0 %642, %v456
        %v644 = vpop.permute.xlu0 %643
        %647 = vset.pattern.permute.xlu0 0
        %648 = vperm.xlu0 %647, %v457
        %v649 = vpop.permute.xlu0 %648
        %652 = vset.pattern.permute.xlu0 0
        %653 = vperm.xlu0 %652, %v458
        %v654 = vpop.permute.xlu0 %653
        %657 = vset.pattern.permute.xlu0 0
        %658 = vperm.xlu0 %657, %v459
        %v659 = vpop.permute.xlu0 %658
        %662 = vset.pattern.permute.xlu0 0
        %663 = vperm.xlu0 %662, %v460
        %v664 = vpop.permute.xlu0 %663
        %667 = vset.pattern.permute.xlu0 0
        %668 = vperm.xlu0 %667, %v461
        %v669 = vpop.permute.xlu0 %668
        %672 = vset.pattern.permute.xlu0 0
        %673 = vperm.xlu0 %672, %v462
        %v674 = vpop.permute.xlu0 %673
        %677 = vset.pattern.permute.xlu0 0
        %678 = vperm.xlu0 %677, %v463
        %v679 = vpop.permute.xlu0 %678
        %682 = vset.pattern.permute.xlu0 0
        %683 = vperm.xlu0 %682, %v464
        %v684 = vpop.permute.xlu0 %683
        %687 = vset.pattern.permute.xlu0 0
        %688 = vperm.xlu0 %687, %v465
        %v689 = vpop.permute.xlu0 %688
        %692 = vset.pattern.permute.xlu0 0
        %693 = vperm.xlu0 %692, %v466
        %v694 = vpop.permute.xlu0 %693
        %697 = vset.pattern.permute.xlu0 0
        %698 = vperm.xlu0 %697, %v467
        %v699 = vpop.permute.xlu0 %698
        %702 = vset.pattern.permute.xlu0 0
        %703 = vperm.xlu0 %702, %v468
        %v704 = vpop.permute.xlu0 %703
        %707 = vset.pattern.permute.xlu0 0
        %708 = vperm.xlu0 %707, %v469
        %v709 = vpop.permute.xlu0 %708
        %712 = vset.pattern.permute.xlu0 0
        %713 = vperm.xlu0 %712, %v470
        %v714 = vpop.permute.xlu0 %713
        %717 = vset.pattern.permute.xlu0 0
        %718 = vperm.xlu0 %717, %v471
        %v719 = vpop.permute.xlu0 %718
        %722 = vset.pattern.permute.xlu0 0
        %723 = vperm.xlu0 %722, %v472
        %v724 = vpop.permute.xlu0 %723
        %727 = vset.pattern.permute.xlu0 0
        %728 = vperm.xlu0 %727, %v473
        %v729 = vpop.permute.xlu0 %728
        %732 = vset.pattern.permute.xlu0 0
        %733 = vperm.xlu0 %732, %v474
        %v734 = vpop.permute.xlu0 %733
        %737 = vset.pattern.permute.xlu0 0
        %738 = vperm.xlu0 %737, %v475
        %v739 = vpop.permute.xlu0 %738
        %742 = vset.pattern.permute.xlu0 0
        %743 = vperm.xlu0 %742, %v476
        %v744 = vpop.permute.xlu0 %743
        %747 = vset.pattern.permute.xlu0 0
        %748 = vperm.xlu0 %747, %v477
        %v749 = vpop.permute.xlu0 %748
        %752 = vset.pattern.permute.xlu0 0
        %753 = vperm.xlu0 %752, %v478
        %v754 = vpop.permute.xlu0 %753
        %757 = vset.pattern.permute.xlu0 0
        %758 = vperm.xlu0 %757, %v479
        %v759 = vpop.permute.xlu0 %758
        %762 = vset.pattern.permute.xlu0 0
        %763 = vperm.xlu0 %762, %v480
        %v764 = vpop.permute.xlu0 %763
        %767 = vset.pattern.permute.xlu0 0
        %768 = vperm.xlu0 %767, %v481
        %v769 = vpop.permute.xlu0 %768
        %772 = vset.pattern.permute.xlu0 0
        %773 = vperm.xlu0 %772, %v482
        %v774 = vpop.permute.xlu0 %773
        %777 = vset.pattern.permute.xlu0 0
        %778 = vperm.xlu0 %777, %v483
        %v779 = vpop.permute.xlu0 %778
        %782 = vset.pattern.permute.xlu0 0
        %783 = vperm.xlu0 %782, %v484
        %v784 = vpop.permute.xlu0 %783
        %787 = vset.pattern.permute.xlu0 0
        %788 = vperm.xlu0 %787, %v485
        %v789 = vpop.permute.xlu0 %788
        %792 = vset.pattern.permute.xlu0 0
        %793 = vperm.xlu0 %792, %v486
        %v794 = vpop.permute.xlu0 %793
        %797 = vset.pattern.permute.xlu0 0
        %798 = vperm.xlu0 %797, %v487
        %v799 = vpop.permute.xlu0 %798
        %802 = vset.pattern.permute.xlu0 0
        %803 = vperm.xlu0 %802, %v488
        %v804 = vpop.permute.xlu0 %803
        %807 = vset.pattern.permute.xlu0 0
        %808 = vperm.xlu0 %807, %v489
        %v809 = vpop.permute.xlu0 %808
        %812 = vset.pattern.permute.xlu0 0
        %813 = vperm.xlu0 %812, %v490
        %v814 = vpop.permute.xlu0 %813
        %817 = vset.pattern.permute.xlu0 0
        %818 = vperm.xlu0 %817, %v491
        %v819 = vpop.permute.xlu0 %818
        %822 = vset.pattern.permute.xlu0 0
        %823 = vperm.xlu0 %822, %v492
        %v824 = vpop.permute.xlu0 %823
        %827 = vset.pattern.permute.xlu0 0
        %828 = vperm.xlu0 %827, %v493
        %v829 = vpop.permute.xlu0 %828
        %832 = vset.pattern.permute.xlu0 0
        %833 = vperm.xlu0 %832, %v494
        %v834 = vpop.permute.xlu0 %833
        %837 = vset.pattern.permute.xlu0 0
        %838 = vperm.xlu0 %837, %v495
        %v839 = vpop.permute.xlu0 %838
        %842 = vset.pattern.permute.xlu0 0
        %843 = vperm.xlu0 %842, %v496
        %v844 = vpop.permute.xlu0 %843
        %847 = vset.pattern.permute.xlu0 0
        %848 = vperm.xlu0 %847, %v497
        %v849 = vpop.permute.xlu0 %848
        %852 = vset.pattern.permute.xlu0 0
        %853 = vperm.xlu0 %852, %v498
        %v854 = vpop.permute.xlu0 %853
        %857 = vset.pattern.permute.xlu0 0
        %858 = vperm.xlu0 %857, %v499
        %v859 = vpop.permute.xlu0 %858
        %862 = vset.pattern.permute.xlu0 0
        %863 = vperm.xlu0 %862, %v500
        %v864 = vpop.permute.xlu0 %863
        %867 = vset.pattern.permute.xlu0 0
        %868 = vperm.xlu0 %867, %v501
        %v869 = vpop.permute.xlu0 %868
        %872 = vset.pattern.permute.xlu0 0
        %873 = vperm.xlu0 %872, %v502
        %v874 = vpop.permute.xlu0 %873
        %877 = vset.pattern.permute.xlu0 0
        %878 = vperm.xlu0 %877, %v503
        %v879 = vpop.permute.xlu0 %878
        %882 = vset.pattern.permute.xlu0 0
        %883 = vperm.xlu0 %882, %v504
        %v884 = vpop.permute.xlu0 %883
        %887 = vset.pattern.permute.xlu0 0
        %888 = vperm.xlu0 %887, %v505
        %v889 = vpop.permute.xlu0 %888
        %892 = vset.pattern.permute.xlu0 0
        %893 = vperm.xlu0 %892, %v506
        %v894 = vpop.permute.xlu0 %893
        %897 = vset.pattern.permute.xlu0 0
        %898 = vperm.xlu0 %897, %v507
        %v899 = vpop.permute.xlu0 %898
        %902 = vset.pattern.permute.xlu0 0
        %903 = vperm.xlu0 %902, %v508
        %v904 = vpop.permute.xlu0 %903
        %907 = vset.pattern.permute.xlu0 0
        %908 = vperm.xlu0 %907, %v509
        %v909 = vpop.permute.xlu0 %908
        %912 = vset.pattern.permute.xlu0 0
        %913 = vperm.xlu0 %912, %v510
        %v914 = vpop.permute.xlu0 %913
        %917 = vset.pattern.permute.xlu0 0
        %918 = vperm.xlu0 %917, %v511
        %v919 = vpop.permute.xlu0 %918
        %922 = vset.pattern.permute.xlu0 0
        %923 = vperm.xlu0 %922, %v512
        %v924 = vpop.permute.xlu0 %923
        %927 = vset.pattern.permute.xlu0 0
        %928 = vperm.xlu0 %927, %v513
        %v929 = vpop.permute.xlu0 %928
        %932 = vset.pattern.permute.xlu0 0
        %933 = vperm.xlu0 %932, %v514
        %v934 = vpop.permute.xlu0 %933
        %937 = vset.pattern.permute.xlu0 0
        %938 = vperm.xlu0 %937, %v515
        %v939 = vpop.permute.xlu0 %938
        %942 = vset.pattern.permute.xlu0 0
        %943 = vperm.xlu0 %942, %v516
        %v944 = vpop.permute.xlu0 %943
        %947 = vset.pattern.permute.xlu0 0
        %948 = vperm.xlu0 %947, %v517
        %v949 = vpop.permute.xlu0 %948
        %952 = vset.pattern.permute.xlu0 0
        %953 = vperm.xlu0 %952, %v518
        %v954 = vpop.permute.xlu0 %953
        %957 = vset.pattern.permute.xlu0 0
        %958 = vperm.xlu0 %957, %v519
        %v959 = vpop.permute.xlu0 %958
        %962 = vset.pattern.permute.xlu0 0
        %963 = vperm.xlu0 %962, %v520
        %v964 = vpop.permute.xlu0 %963
        %967 = vset.pattern.permute.xlu0 0
        %968 = vperm.xlu0 %967, %v521
        %v969 = vpop.permute.xlu0 %968
        %972 = vset.pattern.permute.xlu0 0
        %973 = vperm.xlu0 %972, %v522
        %v974 = vpop.permute.xlu0 %973
        %977 = vset.pattern.permute.xlu0 0
        %978 = vperm.xlu0 %977, %v523
        %v979 = vpop.permute.xlu0 %978
        %982 = vset.pattern.permute.xlu0 0
        %983 = vperm.xlu0 %982, %v524
        %v984 = vpop.permute.xlu0 %983
        %987 = vset.pattern.permute.xlu0 0
        %988 = vperm.xlu0 %987, %v525
        %v989 = vpop.permute.xlu0 %988
        %992 = vset.pattern.permute.xlu0 0
        %993 = vperm.xlu0 %992, %v526
        %v994 = vpop.permute.xlu0 %993
        %997 = vset.pattern.permute.xlu0 0
        %998 = vperm.xlu0 %997, %v527
        %v999 = vpop.permute.xlu0 %998
        %1002 = vset.pattern.permute.xlu0 0
        %1003 = vperm.xlu0 %1002, %v528
        %v1004 = vpop.permute.xlu0 %1003
        %1007 = vset.pattern.permute.xlu0 0
        %1008 = vperm.xlu0 %1007, %v529
        %v1009 = vpop.permute.xlu0 %1008
        %v1011 = vperm.slane %v530, 0
        %v1012 = vmul.f32 %v534, %v1011
        %v1013 = vmul.f32 %v539, %v1011
        %v1014 = vmul.f32 %v544, %v1011
        %v1015 = vmul.f32 %v549, %v1011
        %v1016 = vmul.f32 %v554, %v1011
        %v1017 = vmul.f32 %v559, %v1011
        %v1018 = vmul.f32 %v564, %v1011
        %v1019 = vmul.f32 %v569, %v1011
        %v1020 = vmul.f32 %v574, %v1011
        %v1021 = vmul.f32 %v579, %v1011
        %v1022 = vmul.f32 %v584, %v1011
        %v1023 = vmul.f32 %v589, %v1011
        %v1024 = vmul.f32 %v594, %v1011
        %v1025 = vmul.f32 %v599, %v1011
        %v1026 = vmul.f32 %v604, %v1011
        %v1027 = vmul.f32 %v609, %v1011
        %v1028 = vmul.f32 %v614, %v1011
        %v1029 = vmul.f32 %v619, %v1011
        %v1030 = vmul.f32 %v624, %v1011
        %v1031 = vmul.f32 %v629, %v1011
        %v1032 = vmul.f32 %v634, %v1011
        %v1033 = vmul.f32 %v639, %v1011
        %v1034 = vmul.f32 %v644, %v1011
        %v1035 = vmul.f32 %v649, %v1011
        %v1036 = vmul.f32 %v654, %v1011
        %v1037 = vmul.f32 %v659, %v1011
        %v1038 = vmul.f32 %v664, %v1011
        %v1039 = vmul.f32 %v669, %v1011
        %v1040 = vmul.f32 %v674, %v1011
        %v1041 = vmul.f32 %v679, %v1011
        %v1042 = vmul.f32 %v684, %v1011
        %v1043 = vmul.f32 %v689, %v1011
        %v1044 = vmul.f32 %v694, %v1011
        %v1045 = vmul.f32 %v699, %v1011
        %v1046 = vmul.f32 %v704, %v1011
        %v1047 = vmul.f32 %v709, %v1011
        %v1048 = vmul.f32 %v714, %v1011
        %v1049 = vmul.f32 %v719, %v1011
        %v1050 = vmul.f32 %v724, %v1011
        %v1051 = vmul.f32 %v729, %v1011
        %v1052 = vmul.f32 %v734, %v1011
        %v1053 = vmul.f32 %v739, %v1011
        %v1054 = vmul.f32 %v744, %v1011
        %v1055 = vmul.f32 %v749, %v1011
        %v1056 = vmul.f32 %v754, %v1011
        %v1057 = vmul.f32 %v759, %v1011
        %v1058 = vmul.f32 %v764, %v1011
        %v1059 = vmul.f32 %v769, %v1011
        %v1060 = vmul.f32 %v774, %v1011
        %v1061 = vmul.f32 %v779, %v1011
        %v1062 = vmul.f32 %v784, %v1011
        %v1063 = vmul.f32 %v789, %v1011
        %v1064 = vmul.f32 %v794, %v1011
        %v1065 = vmul.f32 %v799, %v1011
        %v1066 = vmul.f32 %v804, %v1011
        %v1067 = vmul.f32 %v809, %v1011
        %v1068 = vmul.f32 %v814, %v1011
        %v1069 = vmul.f32 %v819, %v1011
        %v1070 = vmul.f32 %v824, %v1011
        %v1071 = vmul.f32 %v829, %v1011
        %v1072 = vmul.f32 %v834, %v1011
        %v1073 = vmul.f32 %v839, %v1011
        %v1074 = vmul.f32 %v844, %v1011
        %v1075 = vmul.f32 %v849, %v1011
        %v1076 = vmul.f32 %v854, %v1011
        %v1077 = vmul.f32 %v859, %v1011
        %v1078 = vmul.f32 %v864, %v1011
        %v1079 = vmul.f32 %v869, %v1011
        %v1080 = vmul.f32 %v874, %v1011
        %v1081 = vmul.f32 %v879, %v1011
        %v1082 = vmul.f32 %v884, %v1011
        %v1083 = vmul.f32 %v889, %v1011
        %v1084 = vmul.f32 %v894, %v1011
        %v1085 = vmul.f32 %v899, %v1011
        %v1086 = vmul.f32 %v904, %v1011
        %v1087 = vmul.f32 %v909, %v1011
        %v1088 = vmul.f32 %v914, %v1011
        %v1089 = vmul.f32 %v919, %v1011
        %v1090 = vmul.f32 %v924, %v1011
        %v1091 = vmul.f32 %v929, %v1011
        %v1092 = vmul.f32 %v934, %v1011
        %v1093 = vmul.f32 %v939, %v1011
        %v1094 = vmul.f32 %v944, %v1011
        %v1095 = vmul.f32 %v949, %v1011
        %v1096 = vmul.f32 %v954, %v1011
        %v1097 = vmul.f32 %v959, %v1011
        %v1098 = vmul.f32 %v964, %v1011
        %v1099 = vmul.f32 %v969, %v1011
        %v1100 = vmul.f32 %v974, %v1011
        %v1101 = vmul.f32 %v979, %v1011
        %v1102 = vmul.f32 %v984, %v1011
        %v1103 = vmul.f32 %v989, %v1011
        %v1104 = vmul.f32 %v994, %v1011
        %v1105 = vmul.f32 %v999, %v1011
        %v1106 = vmul.f32 %v1004, %v1011
        %v1107 = vmul.f32 %v1009, %v1011
        %v1108 = vld [vmem:[%s384 + $0x1] sm:$0xff]
        %v1109 = vld [vmem:[%s384 + $0x9] sm:$0xff]
        %v1110 = vld [vmem:[%s384 + $0x11] sm:$0xff]
        %v1111 = vld [vmem:[%s384 + $0x19] sm:$0xff]
        %v1112 = vld [vmem:[%s384 + $0x21] sm:$0xff]
        %v1113 = vld [vmem:[%s384 + $0x29] sm:$0xff]
        %v1114 = vld [vmem:[%s384 + $0x31] sm:$0xff]
        %v1115 = vld [vmem:[%s384 + $0x39] sm:$0xff]
        %v1116 = vld [vmem:[%s384 + $0x41] sm:$0xff]
        %v1117 = vld [vmem:[%s384 + $0x49] sm:$0xff]
        %v1118 = vld [vmem:[%s384 + $0x51] sm:$0xff]
        %v1119 = vld [vmem:[%s384 + $0x59] sm:$0xff]
        %v1120 = vld [vmem:[%s384 + $0x61] sm:$0xff]
        %v1121 = vld [vmem:[%s384 + $0x69] sm:$0xff]
        %v1122 = vld [vmem:[%s384 + $0x71] sm:$0xff]
        %v1123 = vld [vmem:[%s384 + $0x79] sm:$0xff]
        %v1124 = vld [vmem:[%s384 + $0x81] sm:$0xff]
        %v1125 = vld [vmem:[%s384 + $0x89] sm:$0xff]
        %v1126 = vld [vmem:[%s384 + $0x91] sm:$0xff]
        %v1127 = vld [vmem:[%s384 + $0x99] sm:$0xff]
        %v1128 = vld [vmem:[%s384 + $0xa1] sm:$0xff]
        %v1129 = vld [vmem:[%s384 + $0xa9] sm:$0xff]
        %v1130 = vld [vmem:[%s384 + $0xb1] sm:$0xff]
        %v1131 = vld [vmem:[%s384 + $0xb9] sm:$0xff]
        %v1132 = vld [vmem:[%s384 + $0xc1] sm:$0xff]
        %v1133 = vld [vmem:[%s384 + $0xc9] sm:$0xff]
        %v1134 = vld [vmem:[%s384 + $0xd1] sm:$0xff]
        %v1135 = vld [vmem:[%s384 + $0xd9] sm:$0xff]
        %v1136 = vld [vmem:[%s384 + $0xe1] sm:$0xff]
        %v1137 = vld [vmem:[%s384 + $0xe9] sm:$0xff]
        %v1138 = vld [vmem:[%s384 + $0xf1] sm:$0xff]
        %v1139 = vld [vmem:[%s384 + $0xf9] sm:$0xff]
        %v1140 = vld [vmem:[%s384 + $0x101] sm:$0xff]
        %v1141 = vld [vmem:[%s384 + $0x109] sm:$0xff]
        %v1142 = vld [vmem:[%s384 + $0x111] sm:$0xff]
        %v1143 = vld [vmem:[%s384 + $0x119] sm:$0xff]
        %v1144 = vld [vmem:[%s384 + $0x121] sm:$0xff]
        %v1145 = vld [vmem:[%s384 + $0x129] sm:$0xff]
        %v1146 = vld [vmem:[%s384 + $0x131] sm:$0xff]
        %v1147 = vld [vmem:[%s384 + $0x139] sm:$0xff]
        %v1148 = vld [vmem:[%s384 + $0x141] sm:$0xff]
        %v1149 = vld [vmem:[%s384 + $0x149] sm:$0xff]
        %v1150 = vld [vmem:[%s384 + $0x151] sm:$0xff]
        %v1151 = vld [vmem:[%s384 + $0x159] sm:$0xff]
        %v1152 = vld [vmem:[%s384 + $0x161] sm:$0xff]
        %v1153 = vld [vmem:[%s384 + $0x169] sm:$0xff]
        %v1154 = vld [vmem:[%s384 + $0x171] sm:$0xff]
        %v1155 = vld [vmem:[%s384 + $0x179] sm:$0xff]
        %v1156 = vld [vmem:[%s384 + $0x181] sm:$0xff]
        %v1157 = vld [vmem:[%s384 + $0x189] sm:$0xff]
        %v1158 = vld [vmem:[%s384 + $0x191] sm:$0xff]
        %v1159 = vld [vmem:[%s384 + $0x199] sm:$0xff]
        %v1160 = vld [vmem:[%s384 + $0x1a1] sm:$0xff]
        %v1161 = vld [vmem:[%s384 + $0x1a9] sm:$0xff]
        %v1162 = vld [vmem:[%s384 + $0x1b1] sm:$0xff]
        %v1163 = vld [vmem:[%s384 + $0x1b9] sm:$0xff]
        %v1164 = vld [vmem:[%s384 + $0x1c1] sm:$0xff]
        %v1165 = vld [vmem:[%s384 + $0x1c9] sm:$0xff]
        %v1166 = vld [vmem:[%s384 + $0x1d1] sm:$0xff]
        %v1167 = vld [vmem:[%s384 + $0x1d9] sm:$0xff]
        %v1168 = vld [vmem:[%s384 + $0x1e1] sm:$0xff]
        %v1169 = vld [vmem:[%s384 + $0x1e9] sm:$0xff]
        %v1170 = vld [vmem:[%s384 + $0x1f1] sm:$0xff]
        %v1171 = vld [vmem:[%s384 + $0x1f9] sm:$0xff]
        %v1172 = vld [vmem:[%s384 + $0x201] sm:$0xff]
        %v1173 = vld [vmem:[%s384 + $0x209] sm:$0xff]
        %v1174 = vld [vmem:[%s384 + $0x211] sm:$0xff]
        %v1175 = vld [vmem:[%s384 + $0x219] sm:$0xff]
        %v1176 = vld [vmem:[%s384 + $0x221] sm:$0xff]
        %v1177 = vld [vmem:[%s384 + $0x229] sm:$0xff]
        %v1178 = vld [vmem:[%s384 + $0x231] sm:$0xff]
        %v1179 = vld [vmem:[%s384 + $0x239] sm:$0xff]
        %v1180 = vld [vmem:[%s384 + $0x241] sm:$0xff]
        %v1181 = vld [vmem:[%s384 + $0x249] sm:$0xff]
        %v1182 = vld [vmem:[%s384 + $0x251] sm:$0xff]
        %v1183 = vld [vmem:[%s384 + $0x259] sm:$0xff]
        %v1184 = vld [vmem:[%s384 + $0x261] sm:$0xff]
        %v1185 = vld [vmem:[%s384 + $0x269] sm:$0xff]
        %v1186 = vld [vmem:[%s384 + $0x271] sm:$0xff]
        %v1187 = vld [vmem:[%s384 + $0x279] sm:$0xff]
        %v1188 = vld [vmem:[%s384 + $0x281] sm:$0xff]
        %v1189 = vld [vmem:[%s384 + $0x289] sm:$0xff]
        %v1190 = vld [vmem:[%s384 + $0x291] sm:$0xff]
        %v1191 = vld [vmem:[%s384 + $0x299] sm:$0xff]
        %v1192 = vld [vmem:[%s384 + $0x2a1] sm:$0xff]
        %v1193 = vld [vmem:[%s384 + $0x2a9] sm:$0xff]
        %v1194 = vld [vmem:[%s384 + $0x2b1] sm:$0xff]
        %v1195 = vld [vmem:[%s384 + $0x2b9] sm:$0xff]
        %v1196 = vld [vmem:[%s384 + $0x2c1] sm:$0xff]
        %v1197 = vld [vmem:[%s384 + $0x2c9] sm:$0xff]
        %v1198 = vld [vmem:[%s384 + $0x2d1] sm:$0xff]
        %v1199 = vld [vmem:[%s384 + $0x2d9] sm:$0xff]
        %v1200 = vld [vmem:[%s384 + $0x2e1] sm:$0xff]
        %v1201 = vld [vmem:[%s384 + $0x2e9] sm:$0xff]
        %v1202 = vld [vmem:[%s384 + $0x2f1] sm:$0xff]
        %v1203 = vld [vmem:[%s384 + $0x2f9] sm:$0x3f]
        %v1204 = vld [vmem:[%s1 + $0x1] sm:$0x1]
        %1206 = vset.pattern.permute.xlu0 0
        %1207 = vperm.xlu0 %1206, %v1108
        %v1208 = vpop.permute.xlu0 %1207
        %1211 = vset.pattern.permute.xlu0 0
        %1212 = vperm.xlu0 %1211, %v1109
        %v1213 = vpop.permute.xlu0 %1212
        %1216 = vset.pattern.permute.xlu0 0
        %1217 = vperm.xlu0 %1216, %v1110
        %v1218 = vpop.permute.xlu0 %1217
        %1221 = vset.pattern.permute.xlu0 0
        %1222 = vperm.xlu0 %1221, %v1111
        %v1223 = vpop.permute.xlu0 %1222
        %1226 = vset.pattern.permute.xlu0 0
        %1227 = vperm.xlu0 %1226, %v1112
        %v1228 = vpop.permute.xlu0 %1227
        %1231 = vset.pattern.permute.xlu0 0
        %1232 = vperm.xlu0 %1231, %v1113
        %v1233 = vpop.permute.xlu0 %1232
        %1236 = vset.pattern.permute.xlu0 0
        %1237 = vperm.xlu0 %1236, %v1114
        %v1238 = vpop.permute.xlu0 %1237
        %1241 = vset.pattern.permute.xlu0 0
        %1242 = vperm.xlu0 %1241, %v1115
        %v1243 = vpop.permute.xlu0 %1242
        %1246 = vset.pattern.permute.xlu0 0
        %1247 = vperm.xlu0 %1246, %v1116
        %v1248 = vpop.permute.xlu0 %1247
        %1251 = vset.pattern.permute.xlu0 0
        %1252 = vperm.xlu0 %1251, %v1117
        %v1253 = vpop.permute.xlu0 %1252
        %1256 = vset.pattern.permute.xlu0 0
        %1257 = vperm.xlu0 %1256, %v1118
        %v1258 = vpop.permute.xlu0 %1257
        %1261 = vset.pattern.permute.xlu0 0
        %1262 = vperm.xlu0 %1261, %v1119
        %v1263 = vpop.permute.xlu0 %1262
        %1266 = vset.pattern.permute.xlu0 0
        %1267 = vperm.xlu0 %1266, %v1120
        %v1268 = vpop.permute.xlu0 %1267
        %1271 = vset.pattern.permute.xlu0 0
        %1272 = vperm.xlu0 %1271, %v1121
        %v1273 = vpop.permute.xlu0 %1272
        %1276 = vset.pattern.permute.xlu0 0
        %1277 = vperm.xlu0 %1276, %v1122
        %v1278 = vpop.permute.xlu0 %1277
        %1281 = vset.pattern.permute.xlu0 0
        %1282 = vperm.xlu0 %1281, %v1123
        %v1283 = vpop.permute.xlu0 %1282
        %1286 = vset.pattern.permute.xlu0 0
        %1287 = vperm.xlu0 %1286, %v1124
        %v1288 = vpop.permute.xlu0 %1287
        %1291 = vset.pattern.permute.xlu0 0
        %1292 = vperm.xlu0 %1291, %v1125
        %v1293 = vpop.permute.xlu0 %1292
        %1296 = vset.pattern.permute.xlu0 0
        %1297 = vperm.xlu0 %1296, %v1126
        %v1298 = vpop.permute.xlu0 %1297
        %1301 = vset.pattern.permute.xlu0 0
        %1302 = vperm.xlu0 %1301, %v1127
        %v1303 = vpop.permute.xlu0 %1302
        %1306 = vset.pattern.permute.xlu0 0
        %1307 = vperm.xlu0 %1306, %v1128
        %v1308 = vpop.permute.xlu0 %1307
        %1311 = vset.pattern.permute.xlu0 0
        %1312 = vperm.xlu0 %1311, %v1129
        %v1313 = vpop.permute.xlu0 %1312
        %1316 = vset.pattern.permute.xlu0 0
        %1317 = vperm.xlu0 %1316, %v1130
        %v1318 = vpop.permute.xlu0 %1317
        %1321 = vset.pattern.permute.xlu0 0
        %1322 = vperm.xlu0 %1321, %v1131
        %v1323 = vpop.permute.xlu0 %1322
        %1326 = vset.pattern.permute.xlu0 0
        %1327 = vperm.xlu0 %1326, %v1132
        %v1328 = vpop.permute.xlu0 %1327
        %1331 = vset.pattern.permute.xlu0 0
        %1332 = vperm.xlu0 %1331, %v1133
        %v1333 = vpop.permute.xlu0 %1332
        %1336 = vset.pattern.permute.xlu0 0
        %1337 = vperm.xlu0 %1336, %v1134
        %v1338 = vpop.permute.xlu0 %1337
        %1341 = vset.pattern.permute.xlu0 0
        %1342 = vperm.xlu0 %1341, %v1135
        %v1343 = vpop.permute.xlu0 %1342
        %1346 = vset.pattern.permute.xlu0 0
        %1347 = vperm.xlu0 %1346, %v1136
        %v1348 = vpop.permute.xlu0 %1347
        %1351 = vset.pattern.permute.xlu0 0
        %1352 = vperm.xlu0 %1351, %v1137
        %v1353 = vpop.permute.xlu0 %1352
        %1356 = vset.pattern.permute.xlu0 0
        %1357 = vperm.xlu0 %1356, %v1138
        %v1358 = vpop.permute.xlu0 %1357
        %1361 = vset.pattern.permute.xlu0 0
        %1362 = vperm.xlu0 %1361, %v1139
        %v1363 = vpop.permute.xlu0 %1362
        %1366 = vset.pattern.permute.xlu0 0
        %1367 = vperm.xlu0 %1366, %v1140
        %v1368 = vpop.permute.xlu0 %1367
        %1371 = vset.pattern.permute.xlu0 0
        %1372 = vperm.xlu0 %1371, %v1141
        %v1373 = vpop.permute.xlu0 %1372
        %1376 = vset.pattern.permute.xlu0 0
        %1377 = vperm.xlu0 %1376, %v1142
        %v1378 = vpop.permute.xlu0 %1377
        %1381 = vset.pattern.permute.xlu0 0
        %1382 = vperm.xlu0 %1381, %v1143
        %v1383 = vpop.permute.xlu0 %1382
        %1386 = vset.pattern.permute.xlu0 0
        %1387 = vperm.xlu0 %1386, %v1144
        %v1388 = vpop.permute.xlu0 %1387
        %1391 = vset.pattern.permute.xlu0 0
        %1392 = vperm.xlu0 %1391, %v1145
        %v1393 = vpop.permute.xlu0 %1392
        %1396 = vset.pattern.permute.xlu0 0
        %1397 = vperm.xlu0 %1396, %v1146
        %v1398 = vpop.permute.xlu0 %1397
        %1401 = vset.pattern.permute.xlu0 0
        %1402 = vperm.xlu0 %1401, %v1147
        %v1403 = vpop.permute.xlu0 %1402
        %1406 = vset.pattern.permute.xlu0 0
        %1407 = vperm.xlu0 %1406, %v1148
        %v1408 = vpop.permute.xlu0 %1407
        %1411 = vset.pattern.permute.xlu0 0
        %1412 = vperm.xlu0 %1411, %v1149
        %v1413 = vpop.permute.xlu0 %1412
        %1416 = vset.pattern.permute.xlu0 0
        %1417 = vperm.xlu0 %1416, %v1150
        %v1418 = vpop.permute.xlu0 %1417
        %1421 = vset.pattern.permute.xlu0 0
        %1422 = vperm.xlu0 %1421, %v1151
        %v1423 = vpop.permute.xlu0 %1422
        %1426 = vset.pattern.permute.xlu0 0
        %1427 = vperm.xlu0 %1426, %v1152
        %v1428 = vpop.permute.xlu0 %1427
        %1431 = vset.pattern.permute.xlu0 0
        %1432 = vperm.xlu0 %1431, %v1153
        %v1433 = vpop.permute.xlu0 %1432
        %1436 = vset.pattern.permute.xlu0 0
        %1437 = vperm.xlu0 %1436, %v1154
        %v1438 = vpop.permute.xlu0 %1437
        %1441 = vset.pattern.permute.xlu0 0
        %1442 = vperm.xlu0 %1441, %v1155
        %v1443 = vpop.permute.xlu0 %1442
        %1446 = vset.pattern.permute.xlu0 0
        %1447 = vperm.xlu0 %1446, %v1156
        %v1448 = vpop.permute.xlu0 %1447
        %1451 = vset.pattern.permute.xlu0 0
        %1452 = vperm.xlu0 %1451, %v1157
        %v1453 = vpop.permute.xlu0 %1452
        %1456 = vset.pattern.permute.xlu0 0
        %1457 = vperm.xlu0 %1456, %v1158
        %v1458 = vpop.permute.xlu0 %1457
        %1461 = vset.pattern.permute.xlu0 0
        %1462 = vperm.xlu0 %1461, %v1159
        %v1463 = vpop.permute.xlu0 %1462
        %1466 = vset.pattern.permute.xlu0 0
        %1467 = vperm.xlu0 %1466, %v1160
        %v1468 = vpop.permute.xlu0 %1467
        %1471 = vset.pattern.permute.xlu0 0
        %1472 = vperm.xlu0 %1471, %v1161
        %v1473 = vpop.permute.xlu0 %1472
        %1476 = vset.pattern.permute.xlu0 0
        %1477 = vperm.xlu0 %1476, %v1162
        %v1478 = vpop.permute.xlu0 %1477
        %1481 = vset.pattern.permute.xlu0 0
        %1482 = vperm.xlu0 %1481, %v1163
        %v1483 = vpop.permute.xlu0 %1482
        %1486 = vset.pattern.permute.xlu0 0
        %1487 = vperm.xlu0 %1486, %v1164
        %v1488 = vpop.permute.xlu0 %1487
        %1491 = vset.pattern.permute.xlu0 0
        %1492 = vperm.xlu0 %1491, %v1165
        %v1493 = vpop.permute.xlu0 %1492
        %1496 = vset.pattern.permute.xlu0 0
        %1497 = vperm.xlu0 %1496, %v1166
        %v1498 = vpop.permute.xlu0 %1497
        %1501 = vset.pattern.permute.xlu0 0
        %1502 = vperm.xlu0 %1501, %v1167
        %v1503 = vpop.permute.xlu0 %1502
        %1506 = vset.pattern.permute.xlu0 0
        %1507 = vperm.xlu0 %1506, %v1168
        %v1508 = vpop.permute.xlu0 %1507
        %1511 = vset.pattern.permute.xlu0 0
        %1512 = vperm.xlu0 %1511, %v1169
        %v1513 = vpop.permute.xlu0 %1512
        %1516 = vset.pattern.permute.xlu0 0
        %1517 = vperm.xlu0 %1516, %v1170
        %v1518 = vpop.permute.xlu0 %1517
        %1521 = vset.pattern.permute.xlu0 0
        %1522 = vperm.xlu0 %1521, %v1171
        %v1523 = vpop.permute.xlu0 %1522
        %1526 = vset.pattern.permute.xlu0 0
        %1527 = vperm.xlu0 %1526, %v1172
        %v1528 = vpop.permute.xlu0 %1527
        %1531 = vset.pattern.permute.xlu0 0
        %1532 = vperm.xlu0 %1531, %v1173
        %v1533 = vpop.permute.xlu0 %1532
        %1536 = vset.pattern.permute.xlu0 0
        %1537 = vperm.xlu0 %1536, %v1174
        %v1538 = vpop.permute.xlu0 %1537
        %1541 = vset.pattern.permute.xlu0 0
        %1542 = vperm.xlu0 %1541, %v1175
        %v1543 = vpop.permute.xlu0 %1542
        %1546 = vset.pattern.permute.xlu0 0
        %1547 = vperm.xlu0 %1546, %v1176
        %v1548 = vpop.permute.xlu0 %1547
        %1551 = vset.pattern.permute.xlu0 0
        %1552 = vperm.xlu0 %1551, %v1177
        %v1553 = vpop.permute.xlu0 %1552
        %1556 = vset.pattern.permute.xlu0 0
        %1557 = vperm.xlu0 %1556, %v1178
        %v1558 = vpop.permute.xlu0 %1557
        %1561 = vset.pattern.permute.xlu0 0
        %1562 = vperm.xlu0 %1561, %v1179
        %v1563 = vpop.permute.xlu0 %1562
        %1566 = vset.pattern.permute.xlu0 0
        %1567 = vperm.xlu0 %1566, %v1180
        %v1568 = vpop.permute.xlu0 %1567
        %1571 = vset.pattern.permute.xlu0 0
        %1572 = vperm.xlu0 %1571, %v1181
        %v1573 = vpop.permute.xlu0 %1572
        %1576 = vset.pattern.permute.xlu0 0
        %1577 = vperm.xlu0 %1576, %v1182
        %v1578 = vpop.permute.xlu0 %1577
        %1581 = vset.pattern.permute.xlu0 0
        %1582 = vperm.xlu0 %1581, %v1183
        %v1583 = vpop.permute.xlu0 %1582
        %1586 = vset.pattern.permute.xlu0 0
        %1587 = vperm.xlu0 %1586, %v1184
        %v1588 = vpop.permute.xlu0 %1587
        %1591 = vset.pattern.permute.xlu0 0
        %1592 = vperm.xlu0 %1591, %v1185
        %v1593 = vpop.permute.xlu0 %1592
        %1596 = vset.pattern.permute.xlu0 0
        %1597 = vperm.xlu0 %1596, %v1186
        %v1598 = vpop.permute.xlu0 %1597
        %1601 = vset.pattern.permute.xlu0 0
        %1602 = vperm.xlu0 %1601, %v1187
        %v1603 = vpop.permute.xlu0 %1602
        %1606 = vset.pattern.permute.xlu0 0
        %1607 = vperm.xlu0 %1606, %v1188
        %v1608 = vpop.permute.xlu0 %1607
        %1611 = vset.pattern.permute.xlu0 0
        %1612 = vperm.xlu0 %1611, %v1189
        %v1613 = vpop.permute.xlu0 %1612
        %1616 = vset.pattern.permute.xlu0 0
        %1617 = vperm.xlu0 %1616, %v1190
        %v1618 = vpop.permute.xlu0 %1617
        %1621 = vset.pattern.permute.xlu0 0
        %1622 = vperm.xlu0 %1621, %v1191
        %v1623 = vpop.permute.xlu0 %1622
        %1626 = vset.pattern.permute.xlu0 0
        %1627 = vperm.xlu0 %1626, %v1192
        %v1628 = vpop.permute.xlu0 %1627
        %1631 = vset.pattern.permute.xlu0 0
        %1632 = vperm.xlu0 %1631, %v1193
        %v1633 = vpop.permute.xlu0 %1632
        %1636 = vset.pattern.permute.xlu0 0
        %1637 = vperm.xlu0 %1636, %v1194
        %v1638 = vpop.permute.xlu0 %1637
        %1641 = vset.pattern.permute.xlu0 0
        %1642 = vperm.xlu0 %1641, %v1195
        %v1643 = vpop.permute.xlu0 %1642
        %1646 = vset.pattern.permute.xlu0 0
        %1647 = vperm.xlu0 %1646, %v1196
        %v1648 = vpop.permute.xlu0 %1647
        %1651 = vset.pattern.permute.xlu0 0
        %1652 = vperm.xlu0 %1651, %v1197
        %v1653 = vpop.permute.xlu0 %1652
        %1656 = vset.pattern.permute.xlu0 0
        %1657 = vperm.xlu0 %1656, %v1198
        %v1658 = vpop.permute.xlu0 %1657
        %1661 = vset.pattern.permute.xlu0 0
        %1662 = vperm.xlu0 %1661, %v1199
        %v1663 = vpop.permute.xlu0 %1662
        %1666 = vset.pattern.permute.xlu0 0
        %1667 = vperm.xlu0 %1666, %v1200
        %v1668 = vpop.permute.xlu0 %1667
        %1671 = vset.pattern.permute.xlu0 0
        %1672 = vperm.xlu0 %1671, %v1201
        %v1673 = vpop.permute.xlu0 %1672
        %1676 = vset.pattern.permute.xlu0 0
        %1677 = vperm.xlu0 %1676, %v1202
        %v1678 = vpop.permute.xlu0 %1677
        %1681 = vset.pattern.permute.xlu0 0
        %1682 = vperm.xlu0 %1681, %v1203
        %v1683 = vpop.permute.xlu0 %1682
        %v1685 = vperm.slane %v1204, 0
        %v1686 = vmul.f32 %v1208, %v1685
        %v1687 = vmul.f32 %v1213, %v1685
        %v1688 = vmul.f32 %v1218, %v1685
        %v1689 = vmul.f32 %v1223, %v1685
        %v1690 = vmul.f32 %v1228, %v1685
        %v1691 = vmul.f32 %v1233, %v1685
        %v1692 = vmul.f32 %v1238, %v1685
        %v1693 = vmul.f32 %v1243, %v1685
        %v1694 = vmul.f32 %v1248, %v1685
        %v1695 = vmul.f32 %v1253, %v1685
        %v1696 = vmul.f32 %v1258, %v1685
        %v1697 = vmul.f32 %v1263, %v1685
        %v1698 = vmul.f32 %v1268, %v1685
        %v1699 = vmul.f32 %v1273, %v1685
        %v1700 = vmul.f32 %v1278, %v1685
        %v1701 = vmul.f32 %v1283, %v1685
        %v1702 = vmul.f32 %v1288, %v1685
        %v1703 = vmul.f32 %v1293, %v1685
        %v1704 = vmul.f32 %v1298, %v1685
        %v1705 = vmul.f32 %v1303, %v1685
        %v1706 = vmul.f32 %v1308, %v1685
        %v1707 = vmul.f32 %v1313, %v1685
        %v1708 = vmul.f32 %v1318, %v1685
        %v1709 = vmul.f32 %v1323, %v1685
        %v1710 = vmul.f32 %v1328, %v1685
        %v1711 = vmul.f32 %v1333, %v1685
        %v1712 = vmul.f32 %v1338, %v1685
        %v1713 = vmul.f32 %v1343, %v1685
        %v1714 = vmul.f32 %v1348, %v1685
        %v1715 = vmul.f32 %v1353, %v1685
        %v1716 = vmul.f32 %v1358, %v1685
        %v1717 = vmul.f32 %v1363, %v1685
        %v1718 = vmul.f32 %v1368, %v1685
        %v1719 = vmul.f32 %v1373, %v1685
        %v1720 = vmul.f32 %v1378, %v1685
        %v1721 = vmul.f32 %v1383, %v1685
        %v1722 = vmul.f32 %v1388, %v1685
        %v1723 = vmul.f32 %v1393, %v1685
        %v1724 = vmul.f32 %v1398, %v1685
        %v1725 = vmul.f32 %v1403, %v1685
        %v1726 = vmul.f32 %v1408, %v1685
        %v1727 = vmul.f32 %v1413, %v1685
        %v1728 = vmul.f32 %v1418, %v1685
        %v1729 = vmul.f32 %v1423, %v1685
        %v1730 = vmul.f32 %v1428, %v1685
        %v1731 = vmul.f32 %v1433, %v1685
        %v1732 = vmul.f32 %v1438, %v1685
        %v1733 = vmul.f32 %v1443, %v1685
        %v1734 = vmul.f32 %v1448, %v1685
        %v1735 = vmul.f32 %v1453, %v1685
        %v1736 = vmul.f32 %v1458, %v1685
        %v1737 = vmul.f32 %v1463, %v1685
        %v1738 = vmul.f32 %v1468, %v1685
        %v1739 = vmul.f32 %v1473, %v1685
        %v1740 = vmul.f32 %v1478, %v1685
        %v1741 = vmul.f32 %v1483, %v1685
        %v1742 = vmul.f32 %v1488, %v1685
        %v1743 = vmul.f32 %v1493, %v1685
        %v1744 = vmul.f32 %v1498, %v1685
        %v1745 = vmul.f32 %v1503, %v1685
        %v1746 = vmul.f32 %v1508, %v1685
        %v1747 = vmul.f32 %v1513, %v1685
        %v1748 = vmul.f32 %v1518, %v1685
        %v1749 = vmul.f32 %v1523, %v1685
        %v1750 = vmul.f32 %v1528, %v1685
        %v1751 = vmul.f32 %v1533, %v1685
        %v1752 = vmul.f32 %v1538, %v1685
        %v1753 = vmul.f32 %v1543, %v1685
        %v1754 = vmul.f32 %v1548, %v1685
        %v1755 = vmul.f32 %v1553, %v1685
        %v1756 = vmul.f32 %v1558, %v1685
        %v1757 = vmul.f32 %v1563, %v1685
        %v1758 = vmul.f32 %v1568, %v1685
        %v1759 = vmul.f32 %v1573, %v1685
        %v1760 = vmul.f32 %v1578, %v1685
        %v1761 = vmul.f32 %v1583, %v1685
        %v1762 = vmul.f32 %v1588, %v1685
        %v1763 = vmul.f32 %v1593, %v1685
        %v1764 = vmul.f32 %v1598, %v1685
        %v1765 = vmul.f32 %v1603, %v1685
        %v1766 = vmul.f32 %v1608, %v1685
        %v1767 = vmul.f32 %v1613, %v1685
        %v1768 = vmul.f32 %v1618, %v1685
        %v1769 = vmul.f32 %v1623, %v1685
        %v1770 = vmul.f32 %v1628, %v1685
        %v1771 = vmul.f32 %v1633, %v1685
        %v1772 = vmul.f32 %v1638, %v1685
        %v1773 = vmul.f32 %v1643, %v1685
        %v1774 = vmul.f32 %v1648, %v1685
        %v1775 = vmul.f32 %v1653, %v1685
        %v1776 = vmul.f32 %v1658, %v1685
        %v1777 = vmul.f32 %v1663, %v1685
        %v1778 = vmul.f32 %v1668, %v1685
        %v1779 = vmul.f32 %v1673, %v1685
        %v1780 = vmul.f32 %v1678, %v1685
        %v1781 = vmul.f32 %v1683, %v1685
        %v1782 = vadd.f32 %v1012, %v1686
        %v1783 = vadd.f32 %v1013, %v1687
        %v1784 = vadd.f32 %v1014, %v1688
        %v1785 = vadd.f32 %v1015, %v1689
        %v1786 = vadd.f32 %v1016, %v1690
        %v1787 = vadd.f32 %v1017, %v1691
        %v1788 = vadd.f32 %v1018, %v1692
        %v1789 = vadd.f32 %v1019, %v1693
        %v1790 = vadd.f32 %v1020, %v1694
        %v1791 = vadd.f32 %v1021, %v1695
        %v1792 = vadd.f32 %v1022, %v1696
        %v1793 = vadd.f32 %v1023, %v1697
        %v1794 = vadd.f32 %v1024, %v1698
        %v1795 = vadd.f32 %v1025, %v1699
        %v1796 = vadd.f32 %v1026, %v1700
        %v1797 = vadd.f32 %v1027, %v1701
        %v1798 = vadd.f32 %v1028, %v1702
        %v1799 = vadd.f32 %v1029, %v1703
        %v1800 = vadd.f32 %v1030, %v1704
        %v1801 = vadd.f32 %v1031, %v1705
        %v1802 = vadd.f32 %v1032, %v1706
        %v1803 = vadd.f32 %v1033, %v1707
        %v1804 = vadd.f32 %v1034, %v1708
        %v1805 = vadd.f32 %v1035, %v1709
        %v1806 = vadd.f32 %v1036, %v1710
        %v1807 = vadd.f32 %v1037, %v1711
        %v1808 = vadd.f32 %v1038, %v1712
        %v1809 = vadd.f32 %v1039, %v1713
        %v1810 = vadd.f32 %v1040, %v1714
        %v1811 = vadd.f32 %v1041, %v1715
        %v1812 = vadd.f32 %v1042, %v1716
        %v1813 = vadd.f32 %v1043, %v1717
        %v1814 = vadd.f32 %v1044, %v1718
        %v1815 = vadd.f32 %v1045, %v1719
        %v1816 = vadd.f32 %v1046, %v1720
        %v1817 = vadd.f32 %v1047, %v1721
        %v1818 = vadd.f32 %v1048, %v1722
        %v1819 = vadd.f32 %v1049, %v1723
        %v1820 = vadd.f32 %v1050, %v1724
        %v1821 = vadd.f32 %v1051, %v1725
        %v1822 = vadd.f32 %v1052, %v1726
        %v1823 = vadd.f32 %v1053, %v1727
        %v1824 = vadd.f32 %v1054, %v1728
        %v1825 = vadd.f32 %v1055, %v1729
        %v1826 = vadd.f32 %v1056, %v1730
        %v1827 = vadd.f32 %v1057, %v1731
        %v1828 = vadd.f32 %v1058, %v1732
        %v1829 = vadd.f32 %v1059, %v1733
        %v1830 = vadd.f32 %v1060, %v1734
        %v1831 = vadd.f32 %v1061, %v1735
        %v1832 = vadd.f32 %v1062, %v1736
        %v1833 = vadd.f32 %v1063, %v1737
        %v1834 = vadd.f32 %v1064, %v1738
        %v1835 = vadd.f32 %v1065, %v1739
        %v1836 = vadd.f32 %v1066, %v1740
        %v1837 = vadd.f32 %v1067, %v1741
        %v1838 = vadd.f32 %v1068, %v1742
        %v1839 = vadd.f32 %v1069, %v1743
        %v1840 = vadd.f32 %v1070, %v1744
        %v1841 = vadd.f32 %v1071, %v1745
        %v1842 = vadd.f32 %v1072, %v1746
        %v1843 = vadd.f32 %v1073, %v1747
        %v1844 = vadd.f32 %v1074, %v1748
        %v1845 = vadd.f32 %v1075, %v1749
        %v1846 = vadd.f32 %v1076, %v1750
        %v1847 = vadd.f32 %v1077, %v1751
        %v1848 = vadd.f32 %v1078, %v1752
        %v1849 = vadd.f32 %v1079, %v1753
        %v1850 = vadd.f32 %v1080, %v1754
        %v1851 = vadd.f32 %v1081, %v1755
        %v1852 = vadd.f32 %v1082, %v1756
        %v1853 = vadd.f32 %v1083, %v1757
        %v1854 = vadd.f32 %v1084, %v1758
        %v1855 = vadd.f32 %v1085, %v1759
        %v1856 = vadd.f32 %v1086, %v1760
        %v1857 = vadd.f32 %v1087, %v1761
        %v1858 = vadd.f32 %v1088, %v1762
        %v1859 = vadd.f32 %v1089, %v1763
        %v1860 = vadd.f32 %v1090, %v1764
        %v1861 = vadd.f32 %v1091, %v1765
        %v1862 = vadd.f32 %v1092, %v1766
        %v1863 = vadd.f32 %v1093, %v1767
        %v1864 = vadd.f32 %v1094, %v1768
        %v1865 = vadd.f32 %v1095, %v1769
        %v1866 = vadd.f32 %v1096, %v1770
        %v1867 = vadd.f32 %v1097, %v1771
        %v1868 = vadd.f32 %v1098, %v1772
        %v1869 = vadd.f32 %v1099, %v1773
        %v1870 = vadd.f32 %v1100, %v1774
        %v1871 = vadd.f32 %v1101, %v1775
        %v1872 = vadd.f32 %v1102, %v1776
        %v1873 = vadd.f32 %v1103, %v1777
        %v1874 = vadd.f32 %v1104, %v1778
        %v1875 = vadd.f32 %v1105, %v1779
        %v1876 = vadd.f32 %v1106, %v1780
        %v1877 = vadd.f32 %v1107, %v1781
        %v1878 = vld [vmem:[%s384 + $0x2] sm:$0xff]
        %v1879 = vld [vmem:[%s384 + $0xa] sm:$0xff]
        %v1880 = vld [vmem:[%s384 + $0x12] sm:$0xff]
        %v1881 = vld [vmem:[%s384 + $0x1a] sm:$0xff]
        %v1882 = vld [vmem:[%s384 + $0x22] sm:$0xff]
        %v1883 = vld [vmem:[%s384 + $0x2a] sm:$0xff]
        %v1884 = vld [vmem:[%s384 + $0x32] sm:$0xff]
        %v1885 = vld [vmem:[%s384 + $0x3a] sm:$0xff]
        %v1886 = vld [vmem:[%s384 + $0x42] sm:$0xff]
        %v1887 = vld [vmem:[%s384 + $0x4a] sm:$0xff]
        %v1888 = vld [vmem:[%s384 + $0x52] sm:$0xff]
        %v1889 = vld [vmem:[%s384 + $0x5a] sm:$0xff]
        %v1890 = vld [vmem:[%s384 + $0x62] sm:$0xff]
        %v1891 = vld [vmem:[%s384 + $0x6a] sm:$0xff]
        %v1892 = vld [vmem:[%s384 + $0x72] sm:$0xff]
        %v1893 = vld [vmem:[%s384 + $0x7a] sm:$0xff]
        %v1894 = vld [vmem:[%s384 + $0x82] sm:$0xff]
        %v1895 = vld [vmem:[%s384 + $0x8a] sm:$0xff]
        %v1896 = vld [vmem:[%s384 + $0x92] sm:$0xff]
        %v1897 = vld [vmem:[%s384 + $0x9a] sm:$0xff]
        %v1898 = vld [vmem:[%s384 + $0xa2] sm:$0xff]
        %v1899 = vld [vmem:[%s384 + $0xaa] sm:$0xff]
        %v1900 = vld [vmem:[%s384 + $0xb2] sm:$0xff]
        %v1901 = vld [vmem:[%s384 + $0xba] sm:$0xff]
        %v1902 = vld [vmem:[%s384 + $0xc2] sm:$0xff]
        %v1903 = vld [vmem:[%s384 + $0xca] sm:$0xff]
        %v1904 = vld [vmem:[%s384 + $0xd2] sm:$0xff]
        %v1905 = vld [vmem:[%s384 + $0xda] sm:$0xff]
        %v1906 = vld [vmem:[%s384 + $0xe2] sm:$0xff]
        %v1907 = vld [vmem:[%s384 + $0xea] sm:$0xff]
        %v1908 = vld [vmem:[%s384 + $0xf2] sm:$0xff]
        %v1909 = vld [vmem:[%s384 + $0xfa] sm:$0xff]
        %v1910 = vld [vmem:[%s384 + $0x102] sm:$0xff]
        %v1911 = vld [vmem:[%s384 + $0x10a] sm:$0xff]
        %v1912 = vld [vmem:[%s384 + $0x112] sm:$0xff]
        %v1913 = vld [vmem:[%s384 + $0x11a] sm:$0xff]
        %v1914 = vld [vmem:[%s384 + $0x122] sm:$0xff]
        %v1915 = vld [vmem:[%s384 + $0x12a] sm:$0xff]
        %v1916 = vld [vmem:[%s384 + $0x132] sm:$0xff]
        %v1917 = vld [vmem:[%s384 + $0x13a] sm:$0xff]
        %v1918 = vld [vmem:[%s384 + $0x142] sm:$0xff]
        %v1919 = vld [vmem:[%s384 + $0x14a] sm:$0xff]
        %v1920 = vld [vmem:[%s384 + $0x152] sm:$0xff]
        %v1921 = vld [vmem:[%s384 + $0x15a] sm:$0xff]
        %v1922 = vld [vmem:[%s384 + $0x162] sm:$0xff]
        %v1923 = vld [vmem:[%s384 + $0x16a] sm:$0xff]
        %v1924 = vld [vmem:[%s384 + $0x172] sm:$0xff]
        %v1925 = vld [vmem:[%s384 + $0x17a] sm:$0xff]
        %v1926 = vld [vmem:[%s384 + $0x182] sm:$0xff]
        %v1927 = vld [vmem:[%s384 + $0x18a] sm:$0xff]
        %v1928 = vld [vmem:[%s384 + $0x192] sm:$0xff]
        %v1929 = vld [vmem:[%s384 + $0x19a] sm:$0xff]
        %v1930 = vld [vmem:[%s384 + $0x1a2] sm:$0xff]
        %v1931 = vld [vmem:[%s384 + $0x1aa] sm:$0xff]
        %v1932 = vld [vmem:[%s384 + $0x1b2] sm:$0xff]
        %v1933 = vld [vmem:[%s384 + $0x1ba] sm:$0xff]
        %v1934 = vld [vmem:[%s384 + $0x1c2] sm:$0xff]
        %v1935 = vld [vmem:[%s384 + $0x1ca] sm:$0xff]
        %v1936 = vld [vmem:[%s384 + $0x1d2] sm:$0xff]
        %v1937 = vld [vmem:[%s384 + $0x1da] sm:$0xff]
        %v1938 = vld [vmem:[%s384 + $0x1e2] sm:$0xff]
        %v1939 = vld [vmem:[%s384 + $0x1ea] sm:$0xff]
        %v1940 = vld [vmem:[%s384 + $0x1f2] sm:$0xff]
        %v1941 = vld [vmem:[%s384 + $0x1fa] sm:$0xff]
        %v1942 = vld [vmem:[%s384 + $0x202] sm:$0xff]
        %v1943 = vld [vmem:[%s384 + $0x20a] sm:$0xff]
        %v1944 = vld [vmem:[%s384 + $0x212] sm:$0xff]
        %v1945 = vld [vmem:[%s384 + $0x21a] sm:$0xff]
        %v1946 = vld [vmem:[%s384 + $0x222] sm:$0xff]
        %v1947 = vld [vmem:[%s384 + $0x22a] sm:$0xff]
        %v1948 = vld [vmem:[%s384 + $0x232] sm:$0xff]
        %v1949 = vld [vmem:[%s384 + $0x23a] sm:$0xff]
        %v1950 = vld [vmem:[%s384 + $0x242] sm:$0xff]
        %v1951 = vld [vmem:[%s384 + $0x24a] sm:$0xff]
        %v1952 = vld [vmem:[%s384 + $0x252] sm:$0xff]
        %v1953 = vld [vmem:[%s384 + $0x25a] sm:$0xff]
        %v1954 = vld [vmem:[%s384 + $0x262] sm:$0xff]
        %v1955 = vld [vmem:[%s384 + $0x26a] sm:$0xff]
        %v1956 = vld [vmem:[%s384 + $0x272] sm:$0xff]
        %v1957 = vld [vmem:[%s384 + $0x27a] sm:$0xff]
        %v1958 = vld [vmem:[%s384 + $0x282] sm:$0xff]
        %v1959 = vld [vmem:[%s384 + $0x28a] sm:$0xff]
        %v1960 = vld [vmem:[%s384 + $0x292] sm:$0xff]
        %v1961 = vld [vmem:[%s384 + $0x29a] sm:$0xff]
        %v1962 = vld [vmem:[%s384 + $0x2a2] sm:$0xff]
        %v1963 = vld [vmem:[%s384 + $0x2aa] sm:$0xff]
        %v1964 = vld [vmem:[%s384 + $0x2b2] sm:$0xff]
        %v1965 = vld [vmem:[%s384 + $0x2ba] sm:$0xff]
        %v1966 = vld [vmem:[%s384 + $0x2c2] sm:$0xff]
        %v1967 = vld [vmem:[%s384 + $0x2ca] sm:$0xff]
        %v1968 = vld [vmem:[%s384 + $0x2d2] sm:$0xff]
        %v1969 = vld [vmem:[%s384 + $0x2da] sm:$0xff]
        %v1970 = vld [vmem:[%s384 + $0x2e2] sm:$0xff]
        %v1971 = vld [vmem:[%s384 + $0x2ea] sm:$0xff]
        %v1972 = vld [vmem:[%s384 + $0x2f2] sm:$0xff]
        %v1973 = vld [vmem:[%s384 + $0x2fa] sm:$0x3f]
        %v1974 = vld [vmem:[%s1 + $0x2] sm:$0x1]
        %1976 = vset.pattern.permute.xlu0 0
        %1977 = vperm.xlu0 %1976, %v1878
        %v1978 = vpop.permute.xlu0 %1977
        %1981 = vset.pattern.permute.xlu0 0
        %1982 = vperm.xlu0 %1981, %v1879
        %v1983 = vpop.permute.xlu0 %1982
        %1986 = vset.pattern.permute.xlu0 0
        %1987 = vperm.xlu0 %1986, %v1880
        %v1988 = vpop.permute.xlu0 %1987
        %1991 = vset.pattern.permute.xlu0 0
        %1992 = vperm.xlu0 %1991, %v1881
        %v1993 = vpop.permute.xlu0 %1992
        %1996 = vset.pattern.permute.xlu0 0
        %1997 = vperm.xlu0 %1996, %v1882
        %v1998 = vpop.permute.xlu0 %1997
        %2001 = vset.pattern.permute.xlu0 0
        %2002 = vperm.xlu0 %2001, %v1883
        %v2003 = vpop.permute.xlu0 %2002
        %2006 = vset.pattern.permute.xlu0 0
        %2007 = vperm.xlu0 %2006, %v1884
        %v2008 = vpop.permute.xlu0 %2007
        %2011 = vset.pattern.permute.xlu0 0
        %2012 = vperm.xlu0 %2011, %v1885
        %v2013 = vpop.permute.xlu0 %2012
        %2016 = vset.pattern.permute.xlu0 0
        %2017 = vperm.xlu0 %2016, %v1886
        %v2018 = vpop.permute.xlu0 %2017
        %2021 = vset.pattern.permute.xlu0 0
        %2022 = vperm.xlu0 %2021, %v1887
        %v2023 = vpop.permute.xlu0 %2022
        %2026 = vset.pattern.permute.xlu0 0
        %2027 = vperm.xlu0 %2026, %v1888
        %v2028 = vpop.permute.xlu0 %2027
        %2031 = vset.pattern.permute.xlu0 0
        %2032 = vperm.xlu0 %2031, %v1889
        %v2033 = vpop.permute.xlu0 %2032
        %2036 = vset.pattern.permute.xlu0 0
        %2037 = vperm.xlu0 %2036, %v1890
        %v2038 = vpop.permute.xlu0 %2037
        %2041 = vset.pattern.permute.xlu0 0
        %2042 = vperm.xlu0 %2041, %v1891
        %v2043 = vpop.permute.xlu0 %2042
        %2046 = vset.pattern.permute.xlu0 0
        %2047 = vperm.xlu0 %2046, %v1892
        %v2048 = vpop.permute.xlu0 %2047
        %2051 = vset.pattern.permute.xlu0 0
        %2052 = vperm.xlu0 %2051, %v1893
        %v2053 = vpop.permute.xlu0 %2052
        %2056 = vset.pattern.permute.xlu0 0
        %2057 = vperm.xlu0 %2056, %v1894
        %v2058 = vpop.permute.xlu0 %2057
        %2061 = vset.pattern.permute.xlu0 0
        %2062 = vperm.xlu0 %2061, %v1895
        %v2063 = vpop.permute.xlu0 %2062
        %2066 = vset.pattern.permute.xlu0 0
        %2067 = vperm.xlu0 %2066, %v1896
        %v2068 = vpop.permute.xlu0 %2067
        %2071 = vset.pattern.permute.xlu0 0
        %2072 = vperm.xlu0 %2071, %v1897
        %v2073 = vpop.permute.xlu0 %2072
        %2076 = vset.pattern.permute.xlu0 0
        %2077 = vperm.xlu0 %2076, %v1898
        %v2078 = vpop.permute.xlu0 %2077
        %2081 = vset.pattern.permute.xlu0 0
        %2082 = vperm.xlu0 %2081, %v1899
        %v2083 = vpop.permute.xlu0 %2082
        %2086 = vset.pattern.permute.xlu0 0
        %2087 = vperm.xlu0 %2086, %v1900
        %v2088 = vpop.permute.xlu0 %2087
        %2091 = vset.pattern.permute.xlu0 0
        %2092 = vperm.xlu0 %2091, %v1901
        %v2093 = vpop.permute.xlu0 %2092
        %2096 = vset.pattern.permute.xlu0 0
        %2097 = vperm.xlu0 %2096, %v1902
        %v2098 = vpop.permute.xlu0 %2097
        %2101 = vset.pattern.permute.xlu0 0
        %2102 = vperm.xlu0 %2101, %v1903
        %v2103 = vpop.permute.xlu0 %2102
        %2106 = vset.pattern.permute.xlu0 0
        %2107 = vperm.xlu0 %2106, %v1904
        %v2108 = vpop.permute.xlu0 %2107
        %2111 = vset.pattern.permute.xlu0 0
        %2112 = vperm.xlu0 %2111, %v1905
        %v2113 = vpop.permute.xlu0 %2112
        %2116 = vset.pattern.permute.xlu0 0
        %2117 = vperm.xlu0 %2116, %v1906
        %v2118 = vpop.permute.xlu0 %2117
        %2121 = vset.pattern.permute.xlu0 0
        %2122 = vperm.xlu0 %2121, %v1907
        %v2123 = vpop.permute.xlu0 %2122
        %2126 = vset.pattern.permute.xlu0 0
        %2127 = vperm.xlu0 %2126, %v1908
        %v2128 = vpop.permute.xlu0 %2127
        %2131 = vset.pattern.permute.xlu0 0
        %2132 = vperm.xlu0 %2131, %v1909
        %v2133 = vpop.permute.xlu0 %2132
        %2136 = vset.pattern.permute.xlu0 0
        %2137 = vperm.xlu0 %2136, %v1910
        %v2138 = vpop.permute.xlu0 %2137
        %2141 = vset.pattern.permute.xlu0 0
        %2142 = vperm.xlu0 %2141, %v1911
        %v2143 = vpop.permute.xlu0 %2142
        %2146 = vset.pattern.permute.xlu0 0
        %2147 = vperm.xlu0 %2146, %v1912
        %v2148 = vpop.permute.xlu0 %2147
        %2151 = vset.pattern.permute.xlu0 0
        %2152 = vperm.xlu0 %2151, %v1913
        %v2153 = vpop.permute.xlu0 %2152
        %2156 = vset.pattern.permute.xlu0 0
        %2157 = vperm.xlu0 %2156, %v1914
        %v2158 = vpop.permute.xlu0 %2157
        %2161 = vset.pattern.permute.xlu0 0
        %2162 = vperm.xlu0 %2161, %v1915
        %v2163 = vpop.permute.xlu0 %2162
        %2166 = vset.pattern.permute.xlu0 0
        %2167 = vperm.xlu0 %2166, %v1916
        %v2168 = vpop.permute.xlu0 %2167
        %2171 = vset.pattern.permute.xlu0 0
        %2172 = vperm.xlu0 %2171, %v1917
        %v2173 = vpop.permute.xlu0 %2172
        %2176 = vset.pattern.permute.xlu0 0
        %2177 = vperm.xlu0 %2176, %v1918
        %v2178 = vpop.permute.xlu0 %2177
        %2181 = vset.pattern.permute.xlu0 0
        %2182 = vperm.xlu0 %2181, %v1919
        %v2183 = vpop.permute.xlu0 %2182
        %2186 = vset.pattern.permute.xlu0 0
        %2187 = vperm.xlu0 %2186, %v1920
        %v2188 = vpop.permute.xlu0 %2187
        %2191 = vset.pattern.permute.xlu0 0
        %2192 = vperm.xlu0 %2191, %v1921
        %v2193 = vpop.permute.xlu0 %2192
        %2196 = vset.pattern.permute.xlu0 0
        %2197 = vperm.xlu0 %2196, %v1922
        %v2198 = vpop.permute.xlu0 %2197
        %2201 = vset.pattern.permute.xlu0 0
        %2202 = vperm.xlu0 %2201, %v1923
        %v2203 = vpop.permute.xlu0 %2202
        %2206 = vset.pattern.permute.xlu0 0
        %2207 = vperm.xlu0 %2206, %v1924
        %v2208 = vpop.permute.xlu0 %2207
        %2211 = vset.pattern.permute.xlu0 0
        %2212 = vperm.xlu0 %2211, %v1925
        %v2213 = vpop.permute.xlu0 %2212
        %2216 = vset.pattern.permute.xlu0 0
        %2217 = vperm.xlu0 %2216, %v1926
        %v2218 = vpop.permute.xlu0 %2217
        %2221 = vset.pattern.permute.xlu0 0
        %2222 = vperm.xlu0 %2221, %v1927
        %v2223 = vpop.permute.xlu0 %2222
        %2226 = vset.pattern.permute.xlu0 0
        %2227 = vperm.xlu0 %2226, %v1928
        %v2228 = vpop.permute.xlu0 %2227
        %2231 = vset.pattern.permute.xlu0 0
        %2232 = vperm.xlu0 %2231, %v1929
        %v2233 = vpop.permute.xlu0 %2232
        %2236 = vset.pattern.permute.xlu0 0
        %2237 = vperm.xlu0 %2236, %v1930
        %v2238 = vpop.permute.xlu0 %2237
        %2241 = vset.pattern.permute.xlu0 0
        %2242 = vperm.xlu0 %2241, %v1931
        %v2243 = vpop.permute.xlu0 %2242
        %2246 = vset.pattern.permute.xlu0 0
        %2247 = vperm.xlu0 %2246, %v1932
        %v2248 = vpop.permute.xlu0 %2247
        %2251 = vset.pattern.permute.xlu0 0
        %2252 = vperm.xlu0 %2251, %v1933
        %v2253 = vpop.permute.xlu0 %2252
        %2256 = vset.pattern.permute.xlu0 0
        %2257 = vperm.xlu0 %2256, %v1934
        %v2258 = vpop.permute.xlu0 %2257
        %2261 = vset.pattern.permute.xlu0 0
        %2262 = vperm.xlu0 %2261, %v1935
        %v2263 = vpop.permute.xlu0 %2262
        %2266 = vset.pattern.permute.xlu0 0
        %2267 = vperm.xlu0 %2266, %v1936
        %v2268 = vpop.permute.xlu0 %2267
        %2271 = vset.pattern.permute.xlu0 0
        %2272 = vperm.xlu0 %2271, %v1937
        %v2273 = vpop.permute.xlu0 %2272
        %2276 = vset.pattern.permute.xlu0 0
        %2277 = vperm.xlu0 %2276, %v1938
        %v2278 = vpop.permute.xlu0 %2277
        %2281 = vset.pattern.permute.xlu0 0
        %2282 = vperm.xlu0 %2281, %v1939
        %v2283 = vpop.permute.xlu0 %2282
        %2286 = vset.pattern.permute.xlu0 0
        %2287 = vperm.xlu0 %2286, %v1940
        %v2288 = vpop.permute.xlu0 %2287
        %2291 = vset.pattern.permute.xlu0 0
        %2292 = vperm.xlu0 %2291, %v1941
        %v2293 = vpop.permute.xlu0 %2292
        %2296 = vset.pattern.permute.xlu0 0
        %2297 = vperm.xlu0 %2296, %v1942
        %v2298 = vpop.permute.xlu0 %2297
        %2301 = vset.pattern.permute.xlu0 0
        %2302 = vperm.xlu0 %2301, %v1943
        %v2303 = vpop.permute.xlu0 %2302
        %2306 = vset.pattern.permute.xlu0 0
        %2307 = vperm.xlu0 %2306, %v1944
        %v2308 = vpop.permute.xlu0 %2307
        %2311 = vset.pattern.permute.xlu0 0
        %2312 = vperm.xlu0 %2311, %v1945
        %v2313 = vpop.permute.xlu0 %2312
        %2316 = vset.pattern.permute.xlu0 0
        %2317 = vperm.xlu0 %2316, %v1946
        %v2318 = vpop.permute.xlu0 %2317
        %2321 = vset.pattern.permute.xlu0 0
        %2322 = vperm.xlu0 %2321, %v1947
        %v2323 = vpop.permute.xlu0 %2322
        %2326 = vset.pattern.permute.xlu0 0
        %2327 = vperm.xlu0 %2326, %v1948
        %v2328 = vpop.permute.xlu0 %2327
        %2331 = vset.pattern.permute.xlu0 0
        %2332 = vperm.xlu0 %2331, %v1949
        %v2333 = vpop.permute.xlu0 %2332
        %2336 = vset.pattern.permute.xlu0 0
        %2337 = vperm.xlu0 %2336, %v1950
        %v2338 = vpop.permute.xlu0 %2337
        %2341 = vset.pattern.permute.xlu0 0
        %2342 = vperm.xlu0 %2341, %v1951
        %v2343 = vpop.permute.xlu0 %2342
        %2346 = vset.pattern.permute.xlu0 0
        %2347 = vperm.xlu0 %2346, %v1952
        %v2348 = vpop.permute.xlu0 %2347
        %2351 = vset.pattern.permute.xlu0 0
        %2352 = vperm.xlu0 %2351, %v1953
        %v2353 = vpop.permute.xlu0 %2352
        %2356 = vset.pattern.permute.xlu0 0
        %2357 = vperm.xlu0 %2356, %v1954
        %v2358 = vpop.permute.xlu0 %2357
        %2361 = vset.pattern.permute.xlu0 0
        %2362 = vperm.xlu0 %2361, %v1955
        %v2363 = vpop.permute.xlu0 %2362
        %2366 = vset.pattern.permute.xlu0 0
        %2367 = vperm.xlu0 %2366, %v1956
        %v2368 = vpop.permute.xlu0 %2367
        %2371 = vset.pattern.permute.xlu0 0
        %2372 = vperm.xlu0 %2371, %v1957
        %v2373 = vpop.permute.xlu0 %2372
        %2376 = vset.pattern.permute.xlu0 0
        %2377 = vperm.xlu0 %2376, %v1958
        %v2378 = vpop.permute.xlu0 %2377
        %2381 = vset.pattern.permute.xlu0 0
        %2382 = vperm.xlu0 %2381, %v1959
        %v2383 = vpop.permute.xlu0 %2382
        %2386 = vset.pattern.permute.xlu0 0
        %2387 = vperm.xlu0 %2386, %v1960
        %v2388 = vpop.permute.xlu0 %2387
        %2391 = vset.pattern.permute.xlu0 0
        %2392 = vperm.xlu0 %2391, %v1961
        %v2393 = vpop.permute.xlu0 %2392
        %2396 = vset.pattern.permute.xlu0 0
        %2397 = vperm.xlu0 %2396, %v1962
        %v2398 = vpop.permute.xlu0 %2397
        %2401 = vset.pattern.permute.xlu0 0
        %2402 = vperm.xlu0 %2401, %v1963
        %v2403 = vpop.permute.xlu0 %2402
        %2406 = vset.pattern.permute.xlu0 0
        %2407 = vperm.xlu0 %2406, %v1964
        %v2408 = vpop.permute.xlu0 %2407
        %2411 = vset.pattern.permute.xlu0 0
        %2412 = vperm.xlu0 %2411, %v1965
        %v2413 = vpop.permute.xlu0 %2412
        %2416 = vset.pattern.permute.xlu0 0
        %2417 = vperm.xlu0 %2416, %v1966
        %v2418 = vpop.permute.xlu0 %2417
        %2421 = vset.pattern.permute.xlu0 0
        %2422 = vperm.xlu0 %2421, %v1967
        %v2423 = vpop.permute.xlu0 %2422
        %2426 = vset.pattern.permute.xlu0 0
        %2427 = vperm.xlu0 %2426, %v1968
        %v2428 = vpop.permute.xlu0 %2427
        %2431 = vset.pattern.permute.xlu0 0
        %2432 = vperm.xlu0 %2431, %v1969
        %v2433 = vpop.permute.xlu0 %2432
        %2436 = vset.pattern.permute.xlu0 0
        %2437 = vperm.xlu0 %2436, %v1970
        %v2438 = vpop.permute.xlu0 %2437
        %2441 = vset.pattern.permute.xlu0 0
        %2442 = vperm.xlu0 %2441, %v1971
        %v2443 = vpop.permute.xlu0 %2442
        %2446 = vset.pattern.permute.xlu0 0
        %2447 = vperm.xlu0 %2446, %v1972
        %v2448 = vpop.permute.xlu0 %2447
        %2451 = vset.pattern.permute.xlu0 0
        %2452 = vperm.xlu0 %2451, %v1973
        %v2453 = vpop.permute.xlu0 %2452
        %v2455 = vperm.slane %v1974, 0
        %v2456 = vmul.f32 %v1978, %v2455
        %v2457 = vmul.f32 %v1983, %v2455
        %v2458 = vmul.f32 %v1988, %v2455
        %v2459 = vmul.f32 %v1993, %v2455
        %v2460 = vmul.f32 %v1998, %v2455
        %v2461 = vmul.f32 %v2003, %v2455
        %v2462 = vmul.f32 %v2008, %v2455
        %v2463 = vmul.f32 %v2013, %v2455
        %v2464 = vmul.f32 %v2018, %v2455
        %v2465 = vmul.f32 %v2023, %v2455
        %v2466 = vmul.f32 %v2028, %v2455
        %v2467 = vmul.f32 %v2033, %v2455
        %v2468 = vmul.f32 %v2038, %v2455
        %v2469 = vmul.f32 %v2043, %v2455
        %v2470 = vmul.f32 %v2048, %v2455
        %v2471 = vmul.f32 %v2053, %v2455
        %v2472 = vmul.f32 %v2058, %v2455
        %v2473 = vmul.f32 %v2063, %v2455
        %v2474 = vmul.f32 %v2068, %v2455
        %v2475 = vmul.f32 %v2073, %v2455
        %v2476 = vmul.f32 %v2078, %v2455
        %v2477 = vmul.f32 %v2083, %v2455
        %v2478 = vmul.f32 %v2088, %v2455
        %v2479 = vmul.f32 %v2093, %v2455
        %v2480 = vmul.f32 %v2098, %v2455
        %v2481 = vmul.f32 %v2103, %v2455
        %v2482 = vmul.f32 %v2108, %v2455
        %v2483 = vmul.f32 %v2113, %v2455
        %v2484 = vmul.f32 %v2118, %v2455
        %v2485 = vmul.f32 %v2123, %v2455
        %v2486 = vmul.f32 %v2128, %v2455
        %v2487 = vmul.f32 %v2133, %v2455
        %v2488 = vmul.f32 %v2138, %v2455
        %v2489 = vmul.f32 %v2143, %v2455
        %v2490 = vmul.f32 %v2148, %v2455
        %v2491 = vmul.f32 %v2153, %v2455
        %v2492 = vmul.f32 %v2158, %v2455
        %v2493 = vmul.f32 %v2163, %v2455
        %v2494 = vmul.f32 %v2168, %v2455
        %v2495 = vmul.f32 %v2173, %v2455
        %v2496 = vmul.f32 %v2178, %v2455
        %v2497 = vmul.f32 %v2183, %v2455
        %v2498 = vmul.f32 %v2188, %v2455
        %v2499 = vmul.f32 %v2193, %v2455
        %v2500 = vmul.f32 %v2198, %v2455
        %v2501 = vmul.f32 %v2203, %v2455
        %v2502 = vmul.f32 %v2208, %v2455
        %v2503 = vmul.f32 %v2213, %v2455
        %v2504 = vmul.f32 %v2218, %v2455
        %v2505 = vmul.f32 %v2223, %v2455
        %v2506 = vmul.f32 %v2228, %v2455
        %v2507 = vmul.f32 %v2233, %v2455
        %v2508 = vmul.f32 %v2238, %v2455
        %v2509 = vmul.f32 %v2243, %v2455
        %v2510 = vmul.f32 %v2248, %v2455
        %v2511 = vmul.f32 %v2253, %v2455
        %v2512 = vmul.f32 %v2258, %v2455
        %v2513 = vmul.f32 %v2263, %v2455
        %v2514 = vmul.f32 %v2268, %v2455
        %v2515 = vmul.f32 %v2273, %v2455
        %v2516 = vmul.f32 %v2278, %v2455
        %v2517 = vmul.f32 %v2283, %v2455
        %v2518 = vmul.f32 %v2288, %v2455
        %v2519 = vmul.f32 %v2293, %v2455
        %v2520 = vmul.f32 %v2298, %v2455
        %v2521 = vmul.f32 %v2303, %v2455
        %v2522 = vmul.f32 %v2308, %v2455
        %v2523 = vmul.f32 %v2313, %v2455
        %v2524 = vmul.f32 %v2318, %v2455
        %v2525 = vmul.f32 %v2323, %v2455
        %v2526 = vmul.f32 %v2328, %v2455
        %v2527 = vmul.f32 %v2333, %v2455
        %v2528 = vmul.f32 %v2338, %v2455
        %v2529 = vmul.f32 %v2343, %v2455
        %v2530 = vmul.f32 %v2348, %v2455
        %v2531 = vmul.f32 %v2353, %v2455
        %v2532 = vmul.f32 %v2358, %v2455
        %v2533 = vmul.f32 %v2363, %v2455
        %v2534 = vmul.f32 %v2368, %v2455
        %v2535 = vmul.f32 %v2373, %v2455
        %v2536 = vmul.f32 %v2378, %v2455
        %v2537 = vmul.f32 %v2383, %v2455
        %v2538 = vmul.f32 %v2388, %v2455
        %v2539 = vmul.f32 %v2393, %v2455
        %v2540 = vmul.f32 %v2398, %v2455
        %v2541 = vmul.f32 %v2403, %v2455
        %v2542 = vmul.f32 %v2408, %v2455
        %v2543 = vmul.f32 %v2413, %v2455
        %v2544 = vmul.f32 %v2418, %v2455
        %v2545 = vmul.f32 %v2423, %v2455
        %v2546 = vmul.f32 %v2428, %v2455
        %v2547 = vmul.f32 %v2433, %v2455
        %v2548 = vmul.f32 %v2438, %v2455
        %v2549 = vmul.f32 %v2443, %v2455
        %v2550 = vmul.f32 %v2448, %v2455
        %v2551 = vmul.f32 %v2453, %v2455
        %v2552 = vadd.f32 %v1782, %v2456
        %v2553 = vadd.f32 %v1783, %v2457
        %v2554 = vadd.f32 %v1784, %v2458
        %v2555 = vadd.f32 %v1785, %v2459
        %v2556 = vadd.f32 %v1786, %v2460
        %v2557 = vadd.f32 %v1787, %v2461
        %v2558 = vadd.f32 %v1788, %v2462
        %v2559 = vadd.f32 %v1789, %v2463
        %v2560 = vadd.f32 %v1790, %v2464
        %v2561 = vadd.f32 %v1791, %v2465
        %v2562 = vadd.f32 %v1792, %v2466
        %v2563 = vadd.f32 %v1793, %v2467
        %v2564 = vadd.f32 %v1794, %v2468
        %v2565 = vadd.f32 %v1795, %v2469
        %v2566 = vadd.f32 %v1796, %v2470
        %v2567 = vadd.f32 %v1797, %v2471
        %v2568 = vadd.f32 %v1798, %v2472
        %v2569 = vadd.f32 %v1799, %v2473
        %v2570 = vadd.f32 %v1800, %v2474
        %v2571 = vadd.f32 %v1801, %v2475
        %v2572 = vadd.f32 %v1802, %v2476
        %v2573 = vadd.f32 %v1803, %v2477
        %v2574 = vadd.f32 %v1804, %v2478
        %v2575 = vadd.f32 %v1805, %v2479
        %v2576 = vadd.f32 %v1806, %v2480
        %v2577 = vadd.f32 %v1807, %v2481
        %v2578 = vadd.f32 %v1808, %v2482
        %v2579 = vadd.f32 %v1809, %v2483
        %v2580 = vadd.f32 %v1810, %v2484
        %v2581 = vadd.f32 %v1811, %v2485
        %v2582 = vadd.f32 %v1812, %v2486
        %v2583 = vadd.f32 %v1813, %v2487
        %v2584 = vadd.f32 %v1814, %v2488
        %v2585 = vadd.f32 %v1815, %v2489
        %v2586 = vadd.f32 %v1816, %v2490
        %v2587 = vadd.f32 %v1817, %v2491
        %v2588 = vadd.f32 %v1818, %v2492
        %v2589 = vadd.f32 %v1819, %v2493
        %v2590 = vadd.f32 %v1820, %v2494
        %v2591 = vadd.f32 %v1821, %v2495
        %v2592 = vadd.f32 %v1822, %v2496
        %v2593 = vadd.f32 %v1823, %v2497
        %v2594 = vadd.f32 %v1824, %v2498
        %v2595 = vadd.f32 %v1825, %v2499
        %v2596 = vadd.f32 %v1826, %v2500
        %v2597 = vadd.f32 %v1827, %v2501
        %v2598 = vadd.f32 %v1828, %v2502
        %v2599 = vadd.f32 %v1829, %v2503
        %v2600 = vadd.f32 %v1830, %v2504
        %v2601 = vadd.f32 %v1831, %v2505
        %v2602 = vadd.f32 %v1832, %v2506
        %v2603 = vadd.f32 %v1833, %v2507
        %v2604 = vadd.f32 %v1834, %v2508
        %v2605 = vadd.f32 %v1835, %v2509
        %v2606 = vadd.f32 %v1836, %v2510
        %v2607 = vadd.f32 %v1837, %v2511
        %v2608 = vadd.f32 %v1838, %v2512
        %v2609 = vadd.f32 %v1839, %v2513
        %v2610 = vadd.f32 %v1840, %v2514
        %v2611 = vadd.f32 %v1841, %v2515
        %v2612 = vadd.f32 %v1842, %v2516
        %v2613 = vadd.f32 %v1843, %v2517
        %v2614 = vadd.f32 %v1844, %v2518
        %v2615 = vadd.f32 %v1845, %v2519
        %v2616 = vadd.f32 %v1846, %v2520
        %v2617 = vadd.f32 %v1847, %v2521
        %v2618 = vadd.f32 %v1848, %v2522
        %v2619 = vadd.f32 %v1849, %v2523
        %v2620 = vadd.f32 %v1850, %v2524
        %v2621 = vadd.f32 %v1851, %v2525
        %v2622 = vadd.f32 %v1852, %v2526
        %v2623 = vadd.f32 %v1853, %v2527
        %v2624 = vadd.f32 %v1854, %v2528
        %v2625 = vadd.f32 %v1855, %v2529
        %v2626 = vadd.f32 %v1856, %v2530
        %v2627 = vadd.f32 %v1857, %v2531
        %v2628 = vadd.f32 %v1858, %v2532
        %v2629 = vadd.f32 %v1859, %v2533
        %v2630 = vadd.f32 %v1860, %v2534
        %v2631 = vadd.f32 %v1861, %v2535
        %v2632 = vadd.f32 %v1862, %v2536
        %v2633 = vadd.f32 %v1863, %v2537
        %v2634 = vadd.f32 %v1864, %v2538
        %v2635 = vadd.f32 %v1865, %v2539
        %v2636 = vadd.f32 %v1866, %v2540
        %v2637 = vadd.f32 %v1867, %v2541
        %v2638 = vadd.f32 %v1868, %v2542
        %v2639 = vadd.f32 %v1869, %v2543
        %v2640 = vadd.f32 %v1870, %v2544
        %v2641 = vadd.f32 %v1871, %v2545
        %v2642 = vadd.f32 %v1872, %v2546
        %v2643 = vadd.f32 %v1873, %v2547
        %v2644 = vadd.f32 %v1874, %v2548
        %v2645 = vadd.f32 %v1875, %v2549
        %v2646 = vadd.f32 %v1876, %v2550
        %v2647 = vadd.f32 %v1877, %v2551
        %v2648 = vld [vmem:[%s384 + $0x20] sm:$0xff]
        %v2649 = vld [vmem:[%s384 + $0x28] sm:$0xff]
        %v2650 = vld [vmem:[%s384 + $0x30] sm:$0xff]
        %v2651 = vld [vmem:[%s384 + $0x38] sm:$0xff]
        %v2652 = vld [vmem:[%s384 + $0x40] sm:$0xff]
        %v2653 = vld [vmem:[%s384 + $0x48] sm:$0xff]
        %v2654 = vld [vmem:[%s384 + $0x50] sm:$0xff]
        %v2655 = vld [vmem:[%s384 + $0x58] sm:$0xff]
        %v2656 = vld [vmem:[%s384 + $0x60] sm:$0xff]
        %v2657 = vld [vmem:[%s384 + $0x68] sm:$0xff]
        %v2658 = vld [vmem:[%s384 + $0x70] sm:$0xff]
        %v2659 = vld [vmem:[%s384 + $0x78] sm:$0xff]
        %v2660 = vld [vmem:[%s384 + $0x80] sm:$0xff]
        %v2661 = vld [vmem:[%s384 + $0x88] sm:$0xff]
        %v2662 = vld [vmem:[%s384 + $0x90] sm:$0xff]
        %v2663 = vld [vmem:[%s384 + $0x98] sm:$0xff]
        %v2664 = vld [vmem:[%s384 + $0xa0] sm:$0xff]
        %v2665 = vld [vmem:[%s384 + $0xa8] sm:$0xff]
        %v2666 = vld [vmem:[%s384 + $0xb0] sm:$0xff]
        %v2667 = vld [vmem:[%s384 + $0xb8] sm:$0xff]
        %v2668 = vld [vmem:[%s384 + $0xc0] sm:$0xff]
        %v2669 = vld [vmem:[%s384 + $0xc8] sm:$0xff]
        %v2670 = vld [vmem:[%s384 + $0xd0] sm:$0xff]
        %v2671 = vld [vmem:[%s384 + $0xd8] sm:$0xff]
        %v2672 = vld [vmem:[%s384 + $0xe0] sm:$0xff]
        %v2673 = vld [vmem:[%s384 + $0xe8] sm:$0xff]
        %v2674 = vld [vmem:[%s384 + $0xf0] sm:$0xff]
        %v2675 = vld [vmem:[%s384 + $0xf8] sm:$0xff]
        %v2676 = vld [vmem:[%s384 + $0x100] sm:$0xff]
        %v2677 = vld [vmem:[%s384 + $0x108] sm:$0xff]
        %v2678 = vld [vmem:[%s384 + $0x110] sm:$0xff]
        %v2679 = vld [vmem:[%s384 + $0x118] sm:$0xff]
        %v2680 = vld [vmem:[%s384 + $0x120] sm:$0xff]
        %v2681 = vld [vmem:[%s384 + $0x128] sm:$0xff]
        %v2682 = vld [vmem:[%s384 + $0x130] sm:$0xff]
        %v2683 = vld [vmem:[%s384 + $0x138] sm:$0xff]
        %v2684 = vld [vmem:[%s384 + $0x140] sm:$0xff]
        %v2685 = vld [vmem:[%s384 + $0x148] sm:$0xff]
        %v2686 = vld [vmem:[%s384 + $0x150] sm:$0xff]
        %v2687 = vld [vmem:[%s384 + $0x158] sm:$0xff]
        %v2688 = vld [vmem:[%s384 + $0x160] sm:$0xff]
        %v2689 = vld [vmem:[%s384 + $0x168] sm:$0xff]
        %v2690 = vld [vmem:[%s384 + $0x170] sm:$0xff]
        %v2691 = vld [vmem:[%s384 + $0x178] sm:$0xff]
        %v2692 = vld [vmem:[%s384 + $0x180] sm:$0xff]
        %v2693 = vld [vmem:[%s384 + $0x188] sm:$0xff]
        %v2694 = vld [vmem:[%s384 + $0x190] sm:$0xff]
        %v2695 = vld [vmem:[%s384 + $0x198] sm:$0xff]
        %v2696 = vld [vmem:[%s384 + $0x1a0] sm:$0xff]
        %v2697 = vld [vmem:[%s384 + $0x1a8] sm:$0xff]
        %v2698 = vld [vmem:[%s384 + $0x1b0] sm:$0xff]
        %v2699 = vld [vmem:[%s384 + $0x1b8] sm:$0xff]
        %v2700 = vld [vmem:[%s384 + $0x1c0] sm:$0xff]
        %v2701 = vld [vmem:[%s384 + $0x1c8] sm:$0xff]
        %v2702 = vld [vmem:[%s384 + $0x1d0] sm:$0xff]
        %v2703 = vld [vmem:[%s384 + $0x1d8] sm:$0xff]
        %v2704 = vld [vmem:[%s384 + $0x1e0] sm:$0xff]
        %v2705 = vld [vmem:[%s384 + $0x1e8] sm:$0xff]
        %v2706 = vld [vmem:[%s384 + $0x1f0] sm:$0xff]
        %v2707 = vld [vmem:[%s384 + $0x1f8] sm:$0xff]
        %v2708 = vld [vmem:[%s384 + $0x200] sm:$0xff]
        %v2709 = vld [vmem:[%s384 + $0x208] sm:$0xff]
        %v2710 = vld [vmem:[%s384 + $0x210] sm:$0xff]
        %v2711 = vld [vmem:[%s384 + $0x218] sm:$0xff]
        %v2712 = vld [vmem:[%s384 + $0x220] sm:$0xff]
        %v2713 = vld [vmem:[%s384 + $0x228] sm:$0xff]
        %v2714 = vld [vmem:[%s384 + $0x230] sm:$0xff]
        %v2715 = vld [vmem:[%s384 + $0x238] sm:$0xff]
        %v2716 = vld [vmem:[%s384 + $0x240] sm:$0xff]
        %v2717 = vld [vmem:[%s384 + $0x248] sm:$0xff]
        %v2718 = vld [vmem:[%s384 + $0x250] sm:$0xff]
        %v2719 = vld [vmem:[%s384 + $0x258] sm:$0xff]
        %v2720 = vld [vmem:[%s384 + $0x260] sm:$0xff]
        %v2721 = vld [vmem:[%s384 + $0x268] sm:$0xff]
        %v2722 = vld [vmem:[%s384 + $0x270] sm:$0xff]
        %v2723 = vld [vmem:[%s384 + $0x278] sm:$0xff]
        %v2724 = vld [vmem:[%s384 + $0x280] sm:$0xff]
        %v2725 = vld [vmem:[%s384 + $0x288] sm:$0xff]
        %v2726 = vld [vmem:[%s384 + $0x290] sm:$0xff]
        %v2727 = vld [vmem:[%s384 + $0x298] sm:$0xff]
        %v2728 = vld [vmem:[%s384 + $0x2a0] sm:$0xff]
        %v2729 = vld [vmem:[%s384 + $0x2a8] sm:$0xff]
        %v2730 = vld [vmem:[%s384 + $0x2b0] sm:$0xff]
        %v2731 = vld [vmem:[%s384 + $0x2b8] sm:$0xff]
        %v2732 = vld [vmem:[%s384 + $0x2c0] sm:$0xff]
        %v2733 = vld [vmem:[%s384 + $0x2c8] sm:$0xff]
        %v2734 = vld [vmem:[%s384 + $0x2d0] sm:$0xff]
        %v2735 = vld [vmem:[%s384 + $0x2d8] sm:$0xff]
        %v2736 = vld [vmem:[%s384 + $0x2e0] sm:$0xff]
        %v2737 = vld [vmem:[%s384 + $0x2e8] sm:$0xff]
        %v2738 = vld [vmem:[%s384 + $0x2f0] sm:$0xff]
        %v2739 = vld [vmem:[%s384 + $0x2f8] sm:$0xff]
        %v2740 = vld [vmem:[%s384 + $0x300] sm:$0xff]
        %v2741 = vld [vmem:[%s384 + $0x308] sm:$0xff]
        %v2742 = vld [vmem:[%s384 + $0x310] sm:$0xff]
        %v2743 = vld [vmem:[%s384 + $0x318] sm:$0x3f]
        %v2744 = vld [vmem:[%s1 + $0x3] sm:$0x1]
        %2746 = vset.pattern.permute.xlu0 0
        %2747 = vperm.xlu0 %2746, %v2648
        %v2748 = vpop.permute.xlu0 %2747
        %2751 = vset.pattern.permute.xlu0 0
        %2752 = vperm.xlu0 %2751, %v2649
        %v2753 = vpop.permute.xlu0 %2752
        %2756 = vset.pattern.permute.xlu0 0
        %2757 = vperm.xlu0 %2756, %v2650
        %v2758 = vpop.permute.xlu0 %2757
        %2761 = vset.pattern.permute.xlu0 0
        %2762 = vperm.xlu0 %2761, %v2651
        %v2763 = vpop.permute.xlu0 %2762
        %2766 = vset.pattern.permute.xlu0 0
        %2767 = vperm.xlu0 %2766, %v2652
        %v2768 = vpop.permute.xlu0 %2767
        %2771 = vset.pattern.permute.xlu0 0
        %2772 = vperm.xlu0 %2771, %v2653
        %v2773 = vpop.permute.xlu0 %2772
        %2776 = vset.pattern.permute.xlu0 0
        %2777 = vperm.xlu0 %2776, %v2654
        %v2778 = vpop.permute.xlu0 %2777
        %2781 = vset.pattern.permute.xlu0 0
        %2782 = vperm.xlu0 %2781, %v2655
        %v2783 = vpop.permute.xlu0 %2782
        %2786 = vset.pattern.permute.xlu0 0
        %2787 = vperm.xlu0 %2786, %v2656
        %v2788 = vpop.permute.xlu0 %2787
        %2791 = vset.pattern.permute.xlu0 0
        %2792 = vperm.xlu0 %2791, %v2657
        %v2793 = vpop.permute.xlu0 %2792
        %2796 = vset.pattern.permute.xlu0 0
        %2797 = vperm.xlu0 %2796, %v2658
        %v2798 = vpop.permute.xlu0 %2797
        %2801 = vset.pattern.permute.xlu0 0
        %2802 = vperm.xlu0 %2801, %v2659
        %v2803 = vpop.permute.xlu0 %2802
        %2806 = vset.pattern.permute.xlu0 0
        %2807 = vperm.xlu0 %2806, %v2660
        %v2808 = vpop.permute.xlu0 %2807
        %2811 = vset.pattern.permute.xlu0 0
        %2812 = vperm.xlu0 %2811, %v2661
        %v2813 = vpop.permute.xlu0 %2812
        %2816 = vset.pattern.permute.xlu0 0
        %2817 = vperm.xlu0 %2816, %v2662
        %v2818 = vpop.permute.xlu0 %2817
        %2821 = vset.pattern.permute.xlu0 0
        %2822 = vperm.xlu0 %2821, %v2663
        %v2823 = vpop.permute.xlu0 %2822
        %2826 = vset.pattern.permute.xlu0 0
        %2827 = vperm.xlu0 %2826, %v2664
        %v2828 = vpop.permute.xlu0 %2827
        %2831 = vset.pattern.permute.xlu0 0
        %2832 = vperm.xlu0 %2831, %v2665
        %v2833 = vpop.permute.xlu0 %2832
        %2836 = vset.pattern.permute.xlu0 0
        %2837 = vperm.xlu0 %2836, %v2666
        %v2838 = vpop.permute.xlu0 %2837
        %2841 = vset.pattern.permute.xlu0 0
        %2842 = vperm.xlu0 %2841, %v2667
        %v2843 = vpop.permute.xlu0 %2842
        %2846 = vset.pattern.permute.xlu0 0
        %2847 = vperm.xlu0 %2846, %v2668
        %v2848 = vpop.permute.xlu0 %2847
        %2851 = vset.pattern.permute.xlu0 0
        %2852 = vperm.xlu0 %2851, %v2669
        %v2853 = vpop.permute.xlu0 %2852
        %2856 = vset.pattern.permute.xlu0 0
        %2857 = vperm.xlu0 %2856, %v2670
        %v2858 = vpop.permute.xlu0 %2857
        %2861 = vset.pattern.permute.xlu0 0
        %2862 = vperm.xlu0 %2861, %v2671
        %v2863 = vpop.permute.xlu0 %2862
        %2866 = vset.pattern.permute.xlu0 0
        %2867 = vperm.xlu0 %2866, %v2672
        %v2868 = vpop.permute.xlu0 %2867
        %2871 = vset.pattern.permute.xlu0 0
        %2872 = vperm.xlu0 %2871, %v2673
        %v2873 = vpop.permute.xlu0 %2872
        %2876 = vset.pattern.permute.xlu0 0
        %2877 = vperm.xlu0 %2876, %v2674
        %v2878 = vpop.permute.xlu0 %2877
        %2881 = vset.pattern.permute.xlu0 0
        %2882 = vperm.xlu0 %2881, %v2675
        %v2883 = vpop.permute.xlu0 %2882
        %2886 = vset.pattern.permute.xlu0 0
        %2887 = vperm.xlu0 %2886, %v2676
        %v2888 = vpop.permute.xlu0 %2887
        %2891 = vset.pattern.permute.xlu0 0
        %2892 = vperm.xlu0 %2891, %v2677
        %v2893 = vpop.permute.xlu0 %2892
        %2896 = vset.pattern.permute.xlu0 0
        %2897 = vperm.xlu0 %2896, %v2678
        %v2898 = vpop.permute.xlu0 %2897
        %2901 = vset.pattern.permute.xlu0 0
        %2902 = vperm.xlu0 %2901, %v2679
        %v2903 = vpop.permute.xlu0 %2902
        %2906 = vset.pattern.permute.xlu0 0
        %2907 = vperm.xlu0 %2906, %v2680
        %v2908 = vpop.permute.xlu0 %2907
        %2911 = vset.pattern.permute.xlu0 0
        %2912 = vperm.xlu0 %2911, %v2681
        %v2913 = vpop.permute.xlu0 %2912
        %2916 = vset.pattern.permute.xlu0 0
        %2917 = vperm.xlu0 %2916, %v2682
        %v2918 = vpop.permute.xlu0 %2917
        %2921 = vset.pattern.permute.xlu0 0
        %2922 = vperm.xlu0 %2921, %v2683
        %v2923 = vpop.permute.xlu0 %2922
        %2926 = vset.pattern.permute.xlu0 0
        %2927 = vperm.xlu0 %2926, %v2684
        %v2928 = vpop.permute.xlu0 %2927
        %2931 = vset.pattern.permute.xlu0 0
        %2932 = vperm.xlu0 %2931, %v2685
        %v2933 = vpop.permute.xlu0 %2932
        %2936 = vset.pattern.permute.xlu0 0
        %2937 = vperm.xlu0 %2936, %v2686
        %v2938 = vpop.permute.xlu0 %2937
        %2941 = vset.pattern.permute.xlu0 0
        %2942 = vperm.xlu0 %2941, %v2687
        %v2943 = vpop.permute.xlu0 %2942
        %2946 = vset.pattern.permute.xlu0 0
        %2947 = vperm.xlu0 %2946, %v2688
        %v2948 = vpop.permute.xlu0 %2947
        %2951 = vset.pattern.permute.xlu0 0
        %2952 = vperm.xlu0 %2951, %v2689
        %v2953 = vpop.permute.xlu0 %2952
        %2956 = vset.pattern.permute.xlu0 0
        %2957 = vperm.xlu0 %2956, %v2690
        %v2958 = vpop.permute.xlu0 %2957
        %2961 = vset.pattern.permute.xlu0 0
        %2962 = vperm.xlu0 %2961, %v2691
        %v2963 = vpop.permute.xlu0 %2962
        %2966 = vset.pattern.permute.xlu0 0
        %2967 = vperm.xlu0 %2966, %v2692
        %v2968 = vpop.permute.xlu0 %2967
        %2971 = vset.pattern.permute.xlu0 0
        %2972 = vperm.xlu0 %2971, %v2693
        %v2973 = vpop.permute.xlu0 %2972
        %2976 = vset.pattern.permute.xlu0 0
        %2977 = vperm.xlu0 %2976, %v2694
        %v2978 = vpop.permute.xlu0 %2977
        %2981 = vset.pattern.permute.xlu0 0
        %2982 = vperm.xlu0 %2981, %v2695
        %v2983 = vpop.permute.xlu0 %2982
        %2986 = vset.pattern.permute.xlu0 0
        %2987 = vperm.xlu0 %2986, %v2696
        %v2988 = vpop.permute.xlu0 %2987
        %2991 = vset.pattern.permute.xlu0 0
        %2992 = vperm.xlu0 %2991, %v2697
        %v2993 = vpop.permute.xlu0 %2992
        %2996 = vset.pattern.permute.xlu0 0
        %2997 = vperm.xlu0 %2996, %v2698
        %v2998 = vpop.permute.xlu0 %2997
        %3001 = vset.pattern.permute.xlu0 0
        %3002 = vperm.xlu0 %3001, %v2699
        %v3003 = vpop.permute.xlu0 %3002
        %3006 = vset.pattern.permute.xlu0 0
        %3007 = vperm.xlu0 %3006, %v2700
        %v3008 = vpop.permute.xlu0 %3007
        %3011 = vset.pattern.permute.xlu0 0
        %3012 = vperm.xlu0 %3011, %v2701
        %v3013 = vpop.permute.xlu0 %3012
        %3016 = vset.pattern.permute.xlu0 0
        %3017 = vperm.xlu0 %3016, %v2702
        %v3018 = vpop.permute.xlu0 %3017
        %3021 = vset.pattern.permute.xlu0 0
        %3022 = vperm.xlu0 %3021, %v2703
        %v3023 = vpop.permute.xlu0 %3022
        %3026 = vset.pattern.permute.xlu0 0
        %3027 = vperm.xlu0 %3026, %v2704
        %v3028 = vpop.permute.xlu0 %3027
        %3031 = vset.pattern.permute.xlu0 0
        %3032 = vperm.xlu0 %3031, %v2705
        %v3033 = vpop.permute.xlu0 %3032
        %3036 = vset.pattern.permute.xlu0 0
        %3037 = vperm.xlu0 %3036, %v2706
        %v3038 = vpop.permute.xlu0 %3037
        %3041 = vset.pattern.permute.xlu0 0
        %3042 = vperm.xlu0 %3041, %v2707
        %v3043 = vpop.permute.xlu0 %3042
        %3046 = vset.pattern.permute.xlu0 0
        %3047 = vperm.xlu0 %3046, %v2708
        %v3048 = vpop.permute.xlu0 %3047
        %3051 = vset.pattern.permute.xlu0 0
        %3052 = vperm.xlu0 %3051, %v2709
        %v3053 = vpop.permute.xlu0 %3052
        %3056 = vset.pattern.permute.xlu0 0
        %3057 = vperm.xlu0 %3056, %v2710
        %v3058 = vpop.permute.xlu0 %3057
        %3061 = vset.pattern.permute.xlu0 0
        %3062 = vperm.xlu0 %3061, %v2711
        %v3063 = vpop.permute.xlu0 %3062
        %3066 = vset.pattern.permute.xlu0 0
        %3067 = vperm.xlu0 %3066, %v2712
        %v3068 = vpop.permute.xlu0 %3067
        %3071 = vset.pattern.permute.xlu0 0
        %3072 = vperm.xlu0 %3071, %v2713
        %v3073 = vpop.permute.xlu0 %3072
        %3076 = vset.pattern.permute.xlu0 0
        %3077 = vperm.xlu0 %3076, %v2714
        %v3078 = vpop.permute.xlu0 %3077
        %3081 = vset.pattern.permute.xlu0 0
        %3082 = vperm.xlu0 %3081, %v2715
        %v3083 = vpop.permute.xlu0 %3082
        %3086 = vset.pattern.permute.xlu0 0
        %3087 = vperm.xlu0 %3086, %v2716
        %v3088 = vpop.permute.xlu0 %3087
        %3091 = vset.pattern.permute.xlu0 0
        %3092 = vperm.xlu0 %3091, %v2717
        %v3093 = vpop.permute.xlu0 %3092
        %3096 = vset.pattern.permute.xlu0 0
        %3097 = vperm.xlu0 %3096, %v2718
        %v3098 = vpop.permute.xlu0 %3097
        %3101 = vset.pattern.permute.xlu0 0
        %3102 = vperm.xlu0 %3101, %v2719
        %v3103 = vpop.permute.xlu0 %3102
        %3106 = vset.pattern.permute.xlu0 0
        %3107 = vperm.xlu0 %3106, %v2720
        %v3108 = vpop.permute.xlu0 %3107
        %3111 = vset.pattern.permute.xlu0 0
        %3112 = vperm.xlu0 %3111, %v2721
        %v3113 = vpop.permute.xlu0 %3112
        %3116 = vset.pattern.permute.xlu0 0
        %3117 = vperm.xlu0 %3116, %v2722
        %v3118 = vpop.permute.xlu0 %3117
        %3121 = vset.pattern.permute.xlu0 0
        %3122 = vperm.xlu0 %3121, %v2723
        %v3123 = vpop.permute.xlu0 %3122
        %3126 = vset.pattern.permute.xlu0 0
        %3127 = vperm.xlu0 %3126, %v2724
        %v3128 = vpop.permute.xlu0 %3127
        %3131 = vset.pattern.permute.xlu0 0
        %3132 = vperm.xlu0 %3131, %v2725
        %v3133 = vpop.permute.xlu0 %3132
        %3136 = vset.pattern.permute.xlu0 0
        %3137 = vperm.xlu0 %3136, %v2726
        %v3138 = vpop.permute.xlu0 %3137
        %3141 = vset.pattern.permute.xlu0 0
        %3142 = vperm.xlu0 %3141, %v2727
        %v3143 = vpop.permute.xlu0 %3142
        %3146 = vset.pattern.permute.xlu0 0
        %3147 = vperm.xlu0 %3146, %v2728
        %v3148 = vpop.permute.xlu0 %3147
        %3151 = vset.pattern.permute.xlu0 0
        %3152 = vperm.xlu0 %3151, %v2729
        %v3153 = vpop.permute.xlu0 %3152
        %3156 = vset.pattern.permute.xlu0 0
        %3157 = vperm.xlu0 %3156, %v2730
        %v3158 = vpop.permute.xlu0 %3157
        %3161 = vset.pattern.permute.xlu0 0
        %3162 = vperm.xlu0 %3161, %v2731
        %v3163 = vpop.permute.xlu0 %3162
        %3166 = vset.pattern.permute.xlu0 0
        %3167 = vperm.xlu0 %3166, %v2732
        %v3168 = vpop.permute.xlu0 %3167
        %3171 = vset.pattern.permute.xlu0 0
        %3172 = vperm.xlu0 %3171, %v2733
        %v3173 = vpop.permute.xlu0 %3172
        %3176 = vset.pattern.permute.xlu0 0
        %3177 = vperm.xlu0 %3176, %v2734
        %v3178 = vpop.permute.xlu0 %3177
        %3181 = vset.pattern.permute.xlu0 0
        %3182 = vperm.xlu0 %3181, %v2735
        %v3183 = vpop.permute.xlu0 %3182
        %3186 = vset.pattern.permute.xlu0 0
        %3187 = vperm.xlu0 %3186, %v2736
        %v3188 = vpop.permute.xlu0 %3187
        %3191 = vset.pattern.permute.xlu0 0
        %3192 = vperm.xlu0 %3191, %v2737
        %v3193 = vpop.permute.xlu0 %3192
        %3196 = vset.pattern.permute.xlu0 0
        %3197 = vperm.xlu0 %3196, %v2738
        %v3198 = vpop.permute.xlu0 %3197
        %3201 = vset.pattern.permute.xlu0 0
        %3202 = vperm.xlu0 %3201, %v2739
        %v3203 = vpop.permute.xlu0 %3202
        %3206 = vset.pattern.permute.xlu0 0
        %3207 = vperm.xlu0 %3206, %v2740
        %v3208 = vpop.permute.xlu0 %3207
        %3211 = vset.pattern.permute.xlu0 0
        %3212 = vperm.xlu0 %3211, %v2741
        %v3213 = vpop.permute.xlu0 %3212
        %3216 = vset.pattern.permute.xlu0 0
        %3217 = vperm.xlu0 %3216, %v2742
        %v3218 = vpop.permute.xlu0 %3217
        %3221 = vset.pattern.permute.xlu0 0
        %3222 = vperm.xlu0 %3221, %v2743
        %v3223 = vpop.permute.xlu0 %3222
        %v3225 = vperm.slane %v2744, 0
        %v3226 = vmul.f32 %v2748, %v3225
        %v3227 = vmul.f32 %v2753, %v3225
        %v3228 = vmul.f32 %v2758, %v3225
        %v3229 = vmul.f32 %v2763, %v3225
        %v3230 = vmul.f32 %v2768, %v3225
        %v3231 = vmul.f32 %v2773, %v3225
        %v3232 = vmul.f32 %v2778, %v3225
        %v3233 = vmul.f32 %v2783, %v3225
        %v3234 = vmul.f32 %v2788, %v3225
        %v3235 = vmul.f32 %v2793, %v3225
        %v3236 = vmul.f32 %v2798, %v3225
        %v3237 = vmul.f32 %v2803, %v3225
        %v3238 = vmul.f32 %v2808, %v3225
        %v3239 = vmul.f32 %v2813, %v3225
        %v3240 = vmul.f32 %v2818, %v3225
        %v3241 = vmul.f32 %v2823, %v3225
        %v3242 = vmul.f32 %v2828, %v3225
        %v3243 = vmul.f32 %v2833, %v3225
        %v3244 = vmul.f32 %v2838, %v3225
        %v3245 = vmul.f32 %v2843, %v3225
        %v3246 = vmul.f32 %v2848, %v3225
        %v3247 = vmul.f32 %v2853, %v3225
        %v3248 = vmul.f32 %v2858, %v3225
        %v3249 = vmul.f32 %v2863, %v3225
        %v3250 = vmul.f32 %v2868, %v3225
        %v3251 = vmul.f32 %v2873, %v3225
        %v3252 = vmul.f32 %v2878, %v3225
        %v3253 = vmul.f32 %v2883, %v3225
        %v3254 = vmul.f32 %v2888, %v3225
        %v3255 = vmul.f32 %v2893, %v3225
        %v3256 = vmul.f32 %v2898, %v3225
        %v3257 = vmul.f32 %v2903, %v3225
        %v3258 = vmul.f32 %v2908, %v3225
        %v3259 = vmul.f32 %v2913, %v3225
        %v3260 = vmul.f32 %v2918, %v3225
        %v3261 = vmul.f32 %v2923, %v3225
        %v3262 = vmul.f32 %v2928, %v3225
        %v3263 = vmul.f32 %v2933, %v3225
        %v3264 = vmul.f32 %v2938, %v3225
        %v3265 = vmul.f32 %v2943, %v3225
        %v3266 = vmul.f32 %v2948, %v3225
        %v3267 = vmul.f32 %v2953, %v3225
        %v3268 = vmul.f32 %v2958, %v3225
        %v3269 = vmul.f32 %v2963, %v3225
        %v3270 = vmul.f32 %v2968, %v3225
        %v3271 = vmul.f32 %v2973, %v3225
        %v3272 = vmul.f32 %v2978, %v3225
        %v3273 = vmul.f32 %v2983, %v3225
        %v3274 = vmul.f32 %v2988, %v3225
        %v3275 = vmul.f32 %v2993, %v3225
        %v3276 = vmul.f32 %v2998, %v3225
        %v3277 = vmul.f32 %v3003, %v3225
        %v3278 = vmul.f32 %v3008, %v3225
        %v3279 = vmul.f32 %v3013, %v3225
        %v3280 = vmul.f32 %v3018, %v3225
        %v3281 = vmul.f32 %v3023, %v3225
        %v3282 = vmul.f32 %v3028, %v3225
        %v3283 = vmul.f32 %v3033, %v3225
        %v3284 = vmul.f32 %v3038, %v3225
        %v3285 = vmul.f32 %v3043, %v3225
        %v3286 = vmul.f32 %v3048, %v3225
        %v3287 = vmul.f32 %v3053, %v3225
        %v3288 = vmul.f32 %v3058, %v3225
        %v3289 = vmul.f32 %v3063, %v3225
        %v3290 = vmul.f32 %v3068, %v3225
        %v3291 = vmul.f32 %v3073, %v3225
        %v3292 = vmul.f32 %v3078, %v3225
        %v3293 = vmul.f32 %v3083, %v3225
        %v3294 = vmul.f32 %v3088, %v3225
        %v3295 = vmul.f32 %v3093, %v3225
        %v3296 = vmul.f32 %v3098, %v3225
        %v3297 = vmul.f32 %v3103, %v3225
        %v3298 = vmul.f32 %v3108, %v3225
        %v3299 = vmul.f32 %v3113, %v3225
        %v3300 = vmul.f32 %v3118, %v3225
        %v3301 = vmul.f32 %v3123, %v3225
        %v3302 = vmul.f32 %v3128, %v3225
        %v3303 = vmul.f32 %v3133, %v3225
        %v3304 = vmul.f32 %v3138, %v3225
        %v3305 = vmul.f32 %v3143, %v3225
        %v3306 = vmul.f32 %v3148, %v3225
        %v3307 = vmul.f32 %v3153, %v3225
        %v3308 = vmul.f32 %v3158, %v3225
        %v3309 = vmul.f32 %v3163, %v3225
        %v3310 = vmul.f32 %v3168, %v3225
        %v3311 = vmul.f32 %v3173, %v3225
        %v3312 = vmul.f32 %v3178, %v3225
        %v3313 = vmul.f32 %v3183, %v3225
        %v3314 = vmul.f32 %v3188, %v3225
        %v3315 = vmul.f32 %v3193, %v3225
        %v3316 = vmul.f32 %v3198, %v3225
        %v3317 = vmul.f32 %v3203, %v3225
        %v3318 = vmul.f32 %v3208, %v3225
        %v3319 = vmul.f32 %v3213, %v3225
        %v3320 = vmul.f32 %v3218, %v3225
        %v3321 = vmul.f32 %v3223, %v3225
        %v3322 = vadd.f32 %v2552, %v3226
        %v3323 = vadd.f32 %v2553, %v3227
        %v3324 = vadd.f32 %v2554, %v3228
        %v3325 = vadd.f32 %v2555, %v3229
        %v3326 = vadd.f32 %v2556, %v3230
        %v3327 = vadd.f32 %v2557, %v3231
        %v3328 = vadd.f32 %v2558, %v3232
        %v3329 = vadd.f32 %v2559, %v3233
        %v3330 = vadd.f32 %v2560, %v3234
        %v3331 = vadd.f32 %v2561, %v3235
        %v3332 = vadd.f32 %v2562, %v3236
        %v3333 = vadd.f32 %v2563, %v3237
        %v3334 = vadd.f32 %v2564, %v3238
        %v3335 = vadd.f32 %v2565, %v3239
        %v3336 = vadd.f32 %v2566, %v3240
        %v3337 = vadd.f32 %v2567, %v3241
        %v3338 = vadd.f32 %v2568, %v3242
        %v3339 = vadd.f32 %v2569, %v3243
        %v3340 = vadd.f32 %v2570, %v3244
        %v3341 = vadd.f32 %v2571, %v3245
        %v3342 = vadd.f32 %v2572, %v3246
        %v3343 = vadd.f32 %v2573, %v3247
        %v3344 = vadd.f32 %v2574, %v3248
        %v3345 = vadd.f32 %v2575, %v3249
        %v3346 = vadd.f32 %v2576, %v3250
        %v3347 = vadd.f32 %v2577, %v3251
        %v3348 = vadd.f32 %v2578, %v3252
        %v3349 = vadd.f32 %v2579, %v3253
        %v3350 = vadd.f32 %v2580, %v3254
        %v3351 = vadd.f32 %v2581, %v3255
        %v3352 = vadd.f32 %v2582, %v3256
        %v3353 = vadd.f32 %v2583, %v3257
        %v3354 = vadd.f32 %v2584, %v3258
        %v3355 = vadd.f32 %v2585, %v3259
        %v3356 = vadd.f32 %v2586, %v3260
        %v3357 = vadd.f32 %v2587, %v3261
        %v3358 = vadd.f32 %v2588, %v3262
        %v3359 = vadd.f32 %v2589, %v3263
        %v3360 = vadd.f32 %v2590, %v3264
        %v3361 = vadd.f32 %v2591, %v3265
        %v3362 = vadd.f32 %v2592, %v3266
        %v3363 = vadd.f32 %v2593, %v3267
        %v3364 = vadd.f32 %v2594, %v3268
        %v3365 = vadd.f32 %v2595, %v3269
        %v3366 = vadd.f32 %v2596, %v3270
        %v3367 = vadd.f32 %v2597, %v3271
        %v3368 = vadd.f32 %v2598, %v3272
        %v3369 = vadd.f32 %v2599, %v3273
        %v3370 = vadd.f32 %v2600, %v3274
        %v3371 = vadd.f32 %v2601, %v3275
        %v3372 = vadd.f32 %v2602, %v3276
        %v3373 = vadd.f32 %v2603, %v3277
        %v3374 = vadd.f32 %v2604, %v3278
        %v3375 = vadd.f32 %v2605, %v3279
        %v3376 = vadd.f32 %v2606, %v3280
        %v3377 = vadd.f32 %v2607, %v3281
        %v3378 = vadd.f32 %v2608, %v3282
        %v3379 = vadd.f32 %v2609, %v3283
        %v3380 = vadd.f32 %v2610, %v3284
        %v3381 = vadd.f32 %v2611, %v3285
        %v3382 = vadd.f32 %v2612, %v3286
        %v3383 = vadd.f32 %v2613, %v3287
        %v3384 = vadd.f32 %v2614, %v3288
        %v3385 = vadd.f32 %v2615, %v3289
        %v3386 = vadd.f32 %v2616, %v3290
        %v3387 = vadd.f32 %v2617, %v3291
        %v3388 = vadd.f32 %v2618, %v3292
        %v3389 = vadd.f32 %v2619, %v3293
        %v3390 = vadd.f32 %v2620, %v3294
        %v3391 = vadd.f32 %v2621, %v3295
        %v3392 = vadd.f32 %v2622, %v3296
        %v3393 = vadd.f32 %v2623, %v3297
        %v3394 = vadd.f32 %v2624, %v3298
        %v3395 = vadd.f32 %v2625, %v3299
        %v3396 = vadd.f32 %v2626, %v3300
        %v3397 = vadd.f32 %v2627, %v3301
        %v3398 = vadd.f32 %v2628, %v3302
        %v3399 = vadd.f32 %v2629, %v3303
        %v3400 = vadd.f32 %v2630, %v3304
        %v3401 = vadd.f32 %v2631, %v3305
        %v3402 = vadd.f32 %v2632, %v3306
        %v3403 = vadd.f32 %v2633, %v3307
        %v3404 = vadd.f32 %v2634, %v3308
        %v3405 = vadd.f32 %v2635, %v3309
        %v3406 = vadd.f32 %v2636, %v3310
        %v3407 = vadd.f32 %v2637, %v3311
        %v3408 = vadd.f32 %v2638, %v3312
        %v3409 = vadd.f32 %v2639, %v3313
        %v3410 = vadd.f32 %v2640, %v3314
        %v3411 = vadd.f32 %v2641, %v3315
        %v3412 = vadd.f32 %v2642, %v3316
        %v3413 = vadd.f32 %v2643, %v3317
        %v3414 = vadd.f32 %v2644, %v3318
        %v3415 = vadd.f32 %v2645, %v3319
        %v3416 = vadd.f32 %v2646, %v3320
        %v3417 = vadd.f32 %v2647, %v3321
        %v3418 = vld [vmem:[%s384 + $0x21] sm:$0xff]
        %v3419 = vld [vmem:[%s384 + $0x29] sm:$0xff]
        %v3420 = vld [vmem:[%s384 + $0x31] sm:$0xff]
        %v3421 = vld [vmem:[%s384 + $0x39] sm:$0xff]
        %v3422 = vld [vmem:[%s384 + $0x41] sm:$0xff]
        %v3423 = vld [vmem:[%s384 + $0x49] sm:$0xff]
        %v3424 = vld [vmem:[%s384 + $0x51] sm:$0xff]
        %v3425 = vld [vmem:[%s384 + $0x59] sm:$0xff]
        %v3426 = vld [vmem:[%s384 + $0x61] sm:$0xff]
        %v3427 = vld [vmem:[%s384 + $0x69] sm:$0xff]
        %v3428 = vld [vmem:[%s384 + $0x71] sm:$0xff]
        %v3429 = vld [vmem:[%s384 + $0x79] sm:$0xff]
        %v3430 = vld [vmem:[%s384 + $0x81] sm:$0xff]
        %v3431 = vld [vmem:[%s384 + $0x89] sm:$0xff]
        %v3432 = vld [vmem:[%s384 + $0x91] sm:$0xff]
        %v3433 = vld [vmem:[%s384 + $0x99] sm:$0xff]
        %v3434 = vld [vmem:[%s384 + $0xa1] sm:$0xff]
        %v3435 = vld [vmem:[%s384 + $0xa9] sm:$0xff]
        %v3436 = vld [vmem:[%s384 + $0xb1] sm:$0xff]
        %v3437 = vld [vmem:[%s384 + $0xb9] sm:$0xff]
        %v3438 = vld [vmem:[%s384 + $0xc1] sm:$0xff]
        %v3439 = vld [vmem:[%s384 + $0xc9] sm:$0xff]
        %v3440 = vld [vmem:[%s384 + $0xd1] sm:$0xff]
        %v3441 = vld [vmem:[%s384 + $0xd9] sm:$0xff]
        %v3442 = vld [vmem:[%s384 + $0xe1] sm:$0xff]
        %v3443 = vld [vmem:[%s384 + $0xe9] sm:$0xff]
        %v3444 = vld [vmem:[%s384 + $0xf1] sm:$0xff]
        %v3445 = vld [vmem:[%s384 + $0xf9] sm:$0xff]
        %v3446 = vld [vmem:[%s384 + $0x101] sm:$0xff]
        %v3447 = vld [vmem:[%s384 + $0x109] sm:$0xff]
        %v3448 = vld [vmem:[%s384 + $0x111] sm:$0xff]
        %v3449 = vld [vmem:[%s384 + $0x119] sm:$0xff]
        %v3450 = vld [vmem:[%s384 + $0x121] sm:$0xff]
        %v3451 = vld [vmem:[%s384 + $0x129] sm:$0xff]
        %v3452 = vld [vmem:[%s384 + $0x131] sm:$0xff]
        %v3453 = vld [vmem:[%s384 + $0x139] sm:$0xff]
        %v3454 = vld [vmem:[%s384 + $0x141] sm:$0xff]
        %v3455 = vld [vmem:[%s384 + $0x149] sm:$0xff]
        %v3456 = vld [vmem:[%s384 + $0x151] sm:$0xff]
        %v3457 = vld [vmem:[%s384 + $0x159] sm:$0xff]
        %v3458 = vld [vmem:[%s384 + $0x161] sm:$0xff]
        %v3459 = vld [vmem:[%s384 + $0x169] sm:$0xff]
        %v3460 = vld [vmem:[%s384 + $0x171] sm:$0xff]
        %v3461 = vld [vmem:[%s384 + $0x179] sm:$0xff]
        %v3462 = vld [vmem:[%s384 + $0x181] sm:$0xff]
        %v3463 = vld [vmem:[%s384 + $0x189] sm:$0xff]
        %v3464 = vld [vmem:[%s384 + $0x191] sm:$0xff]
        %v3465 = vld [vmem:[%s384 + $0x199] sm:$0xff]
        %v3466 = vld [vmem:[%s384 + $0x1a1] sm:$0xff]
        %v3467 = vld [vmem:[%s384 + $0x1a9] sm:$0xff]
        %v3468 = vld [vmem:[%s384 + $0x1b1] sm:$0xff]
        %v3469 = vld [vmem:[%s384 + $0x1b9] sm:$0xff]
        %v3470 = vld [vmem:[%s384 + $0x1c1] sm:$0xff]
        %v3471 = vld [vmem:[%s384 + $0x1c9] sm:$0xff]
        %v3472 = vld [vmem:[%s384 + $0x1d1] sm:$0xff]
        %v3473 = vld [vmem:[%s384 + $0x1d9] sm:$0xff]
        %v3474 = vld [vmem:[%s384 + $0x1e1] sm:$0xff]
        %v3475 = vld [vmem:[%s384 + $0x1e9] sm:$0xff]
        %v3476 = vld [vmem:[%s384 + $0x1f1] sm:$0xff]
        %v3477 = vld [vmem:[%s384 + $0x1f9] sm:$0xff]
        %v3478 = vld [vmem:[%s384 + $0x201] sm:$0xff]
        %v3479 = vld [vmem:[%s384 + $0x209] sm:$0xff]
        %v3480 = vld [vmem:[%s384 + $0x211] sm:$0xff]
        %v3481 = vld [vmem:[%s384 + $0x219] sm:$0xff]
        %v3482 = vld [vmem:[%s384 + $0x221] sm:$0xff]
        %v3483 = vld [vmem:[%s384 + $0x229] sm:$0xff]
        %v3484 = vld [vmem:[%s384 + $0x231] sm:$0xff]
        %v3485 = vld [vmem:[%s384 + $0x239] sm:$0xff]
        %v3486 = vld [vmem:[%s384 + $0x241] sm:$0xff]
        %v3487 = vld [vmem:[%s384 + $0x249] sm:$0xff]
        %v3488 = vld [vmem:[%s384 + $0x251] sm:$0xff]
        %v3489 = vld [vmem:[%s384 + $0x259] sm:$0xff]
        %v3490 = vld [vmem:[%s384 + $0x261] sm:$0xff]
        %v3491 = vld [vmem:[%s384 + $0x269] sm:$0xff]
        %v3492 = vld [vmem:[%s384 + $0x271] sm:$0xff]
        %v3493 = vld [vmem:[%s384 + $0x279] sm:$0xff]
        %v3494 = vld [vmem:[%s384 + $0x281] sm:$0xff]
        %v3495 = vld [vmem:[%s384 + $0x289] sm:$0xff]
        %v3496 = vld [vmem:[%s384 + $0x291] sm:$0xff]
        %v3497 = vld [vmem:[%s384 + $0x299] sm:$0xff]
        %v3498 = vld [vmem:[%s384 + $0x2a1] sm:$0xff]
        %v3499 = vld [vmem:[%s384 + $0x2a9] sm:$0xff]
        %v3500 = vld [vmem:[%s384 + $0x2b1] sm:$0xff]
        %v3501 = vld [vmem:[%s384 + $0x2b9] sm:$0xff]
        %v3502 = vld [vmem:[%s384 + $0x2c1] sm:$0xff]
        %v3503 = vld [vmem:[%s384 + $0x2c9] sm:$0xff]
        %v3504 = vld [vmem:[%s384 + $0x2d1] sm:$0xff]
        %v3505 = vld [vmem:[%s384 + $0x2d9] sm:$0xff]
        %v3506 = vld [vmem:[%s384 + $0x2e1] sm:$0xff]
        %v3507 = vld [vmem:[%s384 + $0x2e9] sm:$0xff]
        %v3508 = vld [vmem:[%s384 + $0x2f1] sm:$0xff]
        %v3509 = vld [vmem:[%s384 + $0x2f9] sm:$0xff]
        %v3510 = vld [vmem:[%s384 + $0x301] sm:$0xff]
        %v3511 = vld [vmem:[%s384 + $0x309] sm:$0xff]
        %v3512 = vld [vmem:[%s384 + $0x311] sm:$0xff]
        %v3513 = vld [vmem:[%s384 + $0x319] sm:$0x3f]
        %v3514 = vld [vmem:[%s1 + $0x4] sm:$0x1]
        %3516 = vset.pattern.permute.xlu0 0
        %3517 = vperm.xlu0 %3516, %v3418
        %v3518 = vpop.permute.xlu0 %3517
        %3521 = vset.pattern.permute.xlu0 0
        %3522 = vperm.xlu0 %3521, %v3419
        %v3523 = vpop.permute.xlu0 %3522
        %3526 = vset.pattern.permute.xlu0 0
        %3527 = vperm.xlu0 %3526, %v3420
        %v3528 = vpop.permute.xlu0 %3527
        %3531 = vset.pattern.permute.xlu0 0
        %3532 = vperm.xlu0 %3531, %v3421
        %v3533 = vpop.permute.xlu0 %3532
        %3536 = vset.pattern.permute.xlu0 0
        %3537 = vperm.xlu0 %3536, %v3422
        %v3538 = vpop.permute.xlu0 %3537
        %3541 = vset.pattern.permute.xlu0 0
        %3542 = vperm.xlu0 %3541, %v3423
        %v3543 = vpop.permute.xlu0 %3542
        %3546 = vset.pattern.permute.xlu0 0
        %3547 = vperm.xlu0 %3546, %v3424
        %v3548 = vpop.permute.xlu0 %3547
        %3551 = vset.pattern.permute.xlu0 0
        %3552 = vperm.xlu0 %3551, %v3425
        %v3553 = vpop.permute.xlu0 %3552
        %3556 = vset.pattern.permute.xlu0 0
        %3557 = vperm.xlu0 %3556, %v3426
        %v3558 = vpop.permute.xlu0 %3557
        %3561 = vset.pattern.permute.xlu0 0
        %3562 = vperm.xlu0 %3561, %v3427
        %v3563 = vpop.permute.xlu0 %3562
        %3566 = vset.pattern.permute.xlu0 0
        %3567 = vperm.xlu0 %3566, %v3428
        %v3568 = vpop.permute.xlu0 %3567
        %3571 = vset.pattern.permute.xlu0 0
        %3572 = vperm.xlu0 %3571, %v3429
        %v3573 = vpop.permute.xlu0 %3572
        %3576 = vset.pattern.permute.xlu0 0
        %3577 = vperm.xlu0 %3576, %v3430
        %v3578 = vpop.permute.xlu0 %3577
        %3581 = vset.pattern.permute.xlu0 0
        %3582 = vperm.xlu0 %3581, %v3431
        %v3583 = vpop.permute.xlu0 %3582
        %3586 = vset.pattern.permute.xlu0 0
        %3587 = vperm.xlu0 %3586, %v3432
        %v3588 = vpop.permute.xlu0 %3587
        %3591 = vset.pattern.permute.xlu0 0
        %3592 = vperm.xlu0 %3591, %v3433
        %v3593 = vpop.permute.xlu0 %3592
        %3596 = vset.pattern.permute.xlu0 0
        %3597 = vperm.xlu0 %3596, %v3434
        %v3598 = vpop.permute.xlu0 %3597
        %3601 = vset.pattern.permute.xlu0 0
        %3602 = vperm.xlu0 %3601, %v3435
        %v3603 = vpop.permute.xlu0 %3602
        %3606 = vset.pattern.permute.xlu0 0
        %3607 = vperm.xlu0 %3606, %v3436
        %v3608 = vpop.permute.xlu0 %3607
        %3611 = vset.pattern.permute.xlu0 0
        %3612 = vperm.xlu0 %3611, %v3437
        %v3613 = vpop.permute.xlu0 %3612
        %3616 = vset.pattern.permute.xlu0 0
        %3617 = vperm.xlu0 %3616, %v3438
        %v3618 = vpop.permute.xlu0 %3617
        %3621 = vset.pattern.permute.xlu0 0
        %3622 = vperm.xlu0 %3621, %v3439
        %v3623 = vpop.permute.xlu0 %3622
        %3626 = vset.pattern.permute.xlu0 0
        %3627 = vperm.xlu0 %3626, %v3440
        %v3628 = vpop.permute.xlu0 %3627
        %3631 = vset.pattern.permute.xlu0 0
        %3632 = vperm.xlu0 %3631, %v3441
        %v3633 = vpop.permute.xlu0 %3632
        %3636 = vset.pattern.permute.xlu0 0
        %3637 = vperm.xlu0 %3636, %v3442
        %v3638 = vpop.permute.xlu0 %3637
        %3641 = vset.pattern.permute.xlu0 0
        %3642 = vperm.xlu0 %3641, %v3443
        %v3643 = vpop.permute.xlu0 %3642
        %3646 = vset.pattern.permute.xlu0 0
        %3647 = vperm.xlu0 %3646, %v3444
        %v3648 = vpop.permute.xlu0 %3647
        %3651 = vset.pattern.permute.xlu0 0
        %3652 = vperm.xlu0 %3651, %v3445
        %v3653 = vpop.permute.xlu0 %3652
        %3656 = vset.pattern.permute.xlu0 0
        %3657 = vperm.xlu0 %3656, %v3446
        %v3658 = vpop.permute.xlu0 %3657
        %3661 = vset.pattern.permute.xlu0 0
        %3662 = vperm.xlu0 %3661, %v3447
        %v3663 = vpop.permute.xlu0 %3662
        %3666 = vset.pattern.permute.xlu0 0
        %3667 = vperm.xlu0 %3666, %v3448
        %v3668 = vpop.permute.xlu0 %3667
        %3671 = vset.pattern.permute.xlu0 0
        %3672 = vperm.xlu0 %3671, %v3449
        %v3673 = vpop.permute.xlu0 %3672
        %3676 = vset.pattern.permute.xlu0 0
        %3677 = vperm.xlu0 %3676, %v3450
        %v3678 = vpop.permute.xlu0 %3677
        %3681 = vset.pattern.permute.xlu0 0
        %3682 = vperm.xlu0 %3681, %v3451
        %v3683 = vpop.permute.xlu0 %3682
        %3686 = vset.pattern.permute.xlu0 0
        %3687 = vperm.xlu0 %3686, %v3452
        %v3688 = vpop.permute.xlu0 %3687
        %3691 = vset.pattern.permute.xlu0 0
        %3692 = vperm.xlu0 %3691, %v3453
        %v3693 = vpop.permute.xlu0 %3692
        %3696 = vset.pattern.permute.xlu0 0
        %3697 = vperm.xlu0 %3696, %v3454
        %v3698 = vpop.permute.xlu0 %3697
        %3701 = vset.pattern.permute.xlu0 0
        %3702 = vperm.xlu0 %3701, %v3455
        %v3703 = vpop.permute.xlu0 %3702
        %3706 = vset.pattern.permute.xlu0 0
        %3707 = vperm.xlu0 %3706, %v3456
        %v3708 = vpop.permute.xlu0 %3707
        %3711 = vset.pattern.permute.xlu0 0
        %3712 = vperm.xlu0 %3711, %v3457
        %v3713 = vpop.permute.xlu0 %3712
        %3716 = vset.pattern.permute.xlu0 0
        %3717 = vperm.xlu0 %3716, %v3458
        %v3718 = vpop.permute.xlu0 %3717
        %3721 = vset.pattern.permute.xlu0 0
        %3722 = vperm.xlu0 %3721, %v3459
        %v3723 = vpop.permute.xlu0 %3722
        %3726 = vset.pattern.permute.xlu0 0
        %3727 = vperm.xlu0 %3726, %v3460
        %v3728 = vpop.permute.xlu0 %3727
        %3731 = vset.pattern.permute.xlu0 0
        %3732 = vperm.xlu0 %3731, %v3461
        %v3733 = vpop.permute.xlu0 %3732
        %3736 = vset.pattern.permute.xlu0 0
        %3737 = vperm.xlu0 %3736, %v3462
        %v3738 = vpop.permute.xlu0 %3737
        %3741 = vset.pattern.permute.xlu0 0
        %3742 = vperm.xlu0 %3741, %v3463
        %v3743 = vpop.permute.xlu0 %3742
        %3746 = vset.pattern.permute.xlu0 0
        %3747 = vperm.xlu0 %3746, %v3464
        %v3748 = vpop.permute.xlu0 %3747
        %3751 = vset.pattern.permute.xlu0 0
        %3752 = vperm.xlu0 %3751, %v3465
        %v3753 = vpop.permute.xlu0 %3752
        %3756 = vset.pattern.permute.xlu0 0
        %3757 = vperm.xlu0 %3756, %v3466
        %v3758 = vpop.permute.xlu0 %3757
        %3761 = vset.pattern.permute.xlu0 0
        %3762 = vperm.xlu0 %3761, %v3467
        %v3763 = vpop.permute.xlu0 %3762
        %3766 = vset.pattern.permute.xlu0 0
        %3767 = vperm.xlu0 %3766, %v3468
        %v3768 = vpop.permute.xlu0 %3767
        %3771 = vset.pattern.permute.xlu0 0
        %3772 = vperm.xlu0 %3771, %v3469
        %v3773 = vpop.permute.xlu0 %3772
        %3776 = vset.pattern.permute.xlu0 0
        %3777 = vperm.xlu0 %3776, %v3470
        %v3778 = vpop.permute.xlu0 %3777
        %3781 = vset.pattern.permute.xlu0 0
        %3782 = vperm.xlu0 %3781, %v3471
        %v3783 = vpop.permute.xlu0 %3782
        %3786 = vset.pattern.permute.xlu0 0
        %3787 = vperm.xlu0 %3786, %v3472
        %v3788 = vpop.permute.xlu0 %3787
        %3791 = vset.pattern.permute.xlu0 0
        %3792 = vperm.xlu0 %3791, %v3473
        %v3793 = vpop.permute.xlu0 %3792
        %3796 = vset.pattern.permute.xlu0 0
        %3797 = vperm.xlu0 %3796, %v3474
        %v3798 = vpop.permute.xlu0 %3797
        %3801 = vset.pattern.permute.xlu0 0
        %3802 = vperm.xlu0 %3801, %v3475
        %v3803 = vpop.permute.xlu0 %3802
        %3806 = vset.pattern.permute.xlu0 0
        %3807 = vperm.xlu0 %3806, %v3476
        %v3808 = vpop.permute.xlu0 %3807
        %3811 = vset.pattern.permute.xlu0 0
        %3812 = vperm.xlu0 %3811, %v3477
        %v3813 = vpop.permute.xlu0 %3812
        %3816 = vset.pattern.permute.xlu0 0
        %3817 = vperm.xlu0 %3816, %v3478
        %v3818 = vpop.permute.xlu0 %3817
        %3821 = vset.pattern.permute.xlu0 0
        %3822 = vperm.xlu0 %3821, %v3479
        %v3823 = vpop.permute.xlu0 %3822
        %3826 = vset.pattern.permute.xlu0 0
        %3827 = vperm.xlu0 %3826, %v3480
        %v3828 = vpop.permute.xlu0 %3827
        %3831 = vset.pattern.permute.xlu0 0
        %3832 = vperm.xlu0 %3831, %v3481
        %v3833 = vpop.permute.xlu0 %3832
        %3836 = vset.pattern.permute.xlu0 0
        %3837 = vperm.xlu0 %3836, %v3482
        %v3838 = vpop.permute.xlu0 %3837
        %3841 = vset.pattern.permute.xlu0 0
        %3842 = vperm.xlu0 %3841, %v3483
        %v3843 = vpop.permute.xlu0 %3842
        %3846 = vset.pattern.permute.xlu0 0
        %3847 = vperm.xlu0 %3846, %v3484
        %v3848 = vpop.permute.xlu0 %3847
        %3851 = vset.pattern.permute.xlu0 0
        %3852 = vperm.xlu0 %3851, %v3485
        %v3853 = vpop.permute.xlu0 %3852
        %3856 = vset.pattern.permute.xlu0 0
        %3857 = vperm.xlu0 %3856, %v3486
        %v3858 = vpop.permute.xlu0 %3857
        %3861 = vset.pattern.permute.xlu0 0
        %3862 = vperm.xlu0 %3861, %v3487
        %v3863 = vpop.permute.xlu0 %3862
        %3866 = vset.pattern.permute.xlu0 0
        %3867 = vperm.xlu0 %3866, %v3488
        %v3868 = vpop.permute.xlu0 %3867
        %3871 = vset.pattern.permute.xlu0 0
        %3872 = vperm.xlu0 %3871, %v3489
        %v3873 = vpop.permute.xlu0 %3872
        %3876 = vset.pattern.permute.xlu0 0
        %3877 = vperm.xlu0 %3876, %v3490
        %v3878 = vpop.permute.xlu0 %3877
        %3881 = vset.pattern.permute.xlu0 0
        %3882 = vperm.xlu0 %3881, %v3491
        %v3883 = vpop.permute.xlu0 %3882
        %3886 = vset.pattern.permute.xlu0 0
        %3887 = vperm.xlu0 %3886, %v3492
        %v3888 = vpop.permute.xlu0 %3887
        %3891 = vset.pattern.permute.xlu0 0
        %3892 = vperm.xlu0 %3891, %v3493
        %v3893 = vpop.permute.xlu0 %3892
        %3896 = vset.pattern.permute.xlu0 0
        %3897 = vperm.xlu0 %3896, %v3494
        %v3898 = vpop.permute.xlu0 %3897
        %3901 = vset.pattern.permute.xlu0 0
        %3902 = vperm.xlu0 %3901, %v3495
        %v3903 = vpop.permute.xlu0 %3902
        %3906 = vset.pattern.permute.xlu0 0
        %3907 = vperm.xlu0 %3906, %v3496
        %v3908 = vpop.permute.xlu0 %3907
        %3911 = vset.pattern.permute.xlu0 0
        %3912 = vperm.xlu0 %3911, %v3497
        %v3913 = vpop.permute.xlu0 %3912
        %3916 = vset.pattern.permute.xlu0 0
        %3917 = vperm.xlu0 %3916, %v3498
        %v3918 = vpop.permute.xlu0 %3917
        %3921 = vset.pattern.permute.xlu0 0
        %3922 = vperm.xlu0 %3921, %v3499
        %v3923 = vpop.permute.xlu0 %3922
        %3926 = vset.pattern.permute.xlu0 0
        %3927 = vperm.xlu0 %3926, %v3500
        %v3928 = vpop.permute.xlu0 %3927
        %3931 = vset.pattern.permute.xlu0 0
        %3932 = vperm.xlu0 %3931, %v3501
        %v3933 = vpop.permute.xlu0 %3932
        %3936 = vset.pattern.permute.xlu0 0
        %3937 = vperm.xlu0 %3936, %v3502
        %v3938 = vpop.permute.xlu0 %3937
        %3941 = vset.pattern.permute.xlu0 0
        %3942 = vperm.xlu0 %3941, %v3503
        %v3943 = vpop.permute.xlu0 %3942
        %3946 = vset.pattern.permute.xlu0 0
        %3947 = vperm.xlu0 %3946, %v3504
        %v3948 = vpop.permute.xlu0 %3947
        %3951 = vset.pattern.permute.xlu0 0
        %3952 = vperm.xlu0 %3951, %v3505
        %v3953 = vpop.permute.xlu0 %3952
        %3956 = vset.pattern.permute.xlu0 0
        %3957 = vperm.xlu0 %3956, %v3506
        %v3958 = vpop.permute.xlu0 %3957
        %3961 = vset.pattern.permute.xlu0 0
        %3962 = vperm.xlu0 %3961, %v3507
        %v3963 = vpop.permute.xlu0 %3962
        %3966 = vset.pattern.permute.xlu0 0
        %3967 = vperm.xlu0 %3966, %v3508
        %v3968 = vpop.permute.xlu0 %3967
        %3971 = vset.pattern.permute.xlu0 0
        %3972 = vperm.xlu0 %3971, %v3509
        %v3973 = vpop.permute.xlu0 %3972
        %3976 = vset.pattern.permute.xlu0 0
        %3977 = vperm.xlu0 %3976, %v3510
        %v3978 = vpop.permute.xlu0 %3977
        %3981 = vset.pattern.permute.xlu0 0
        %3982 = vperm.xlu0 %3981, %v3511
        %v3983 = vpop.permute.xlu0 %3982
        %3986 = vset.pattern.permute.xlu0 0
        %3987 = vperm.xlu0 %3986, %v3512
        %v3988 = vpop.permute.xlu0 %3987
        %3991 = vset.pattern.permute.xlu0 0
        %3992 = vperm.xlu0 %3991, %v3513
        %v3993 = vpop.permute.xlu0 %3992
        %v3995 = vperm.slane %v3514, 0
        %v3996 = vmul.f32 %v3518, %v3995
        %v3997 = vmul.f32 %v3523, %v3995
        %v3998 = vmul.f32 %v3528, %v3995
        %v3999 = vmul.f32 %v3533, %v3995
        %v4000 = vmul.f32 %v3538, %v3995
        %v4001 = vmul.f32 %v3543, %v3995
        %v4002 = vmul.f32 %v3548, %v3995
        %v4003 = vmul.f32 %v3553, %v3995
        %v4004 = vmul.f32 %v3558, %v3995
        %v4005 = vmul.f32 %v3563, %v3995
        %v4006 = vmul.f32 %v3568, %v3995
        %v4007 = vmul.f32 %v3573, %v3995
        %v4008 = vmul.f32 %v3578, %v3995
        %v4009 = vmul.f32 %v3583, %v3995
        %v4010 = vmul.f32 %v3588, %v3995
        %v4011 = vmul.f32 %v3593, %v3995
        %v4012 = vmul.f32 %v3598, %v3995
        %v4013 = vmul.f32 %v3603, %v3995
        %v4014 = vmul.f32 %v3608, %v3995
        %v4015 = vmul.f32 %v3613, %v3995
        %v4016 = vmul.f32 %v3618, %v3995
        %v4017 = vmul.f32 %v3623, %v3995
        %v4018 = vmul.f32 %v3628, %v3995
        %v4019 = vmul.f32 %v3633, %v3995
        %v4020 = vmul.f32 %v3638, %v3995
        %v4021 = vmul.f32 %v3643, %v3995
        %v4022 = vmul.f32 %v3648, %v3995
        %v4023 = vmul.f32 %v3653, %v3995
        %v4024 = vmul.f32 %v3658, %v3995
        %v4025 = vmul.f32 %v3663, %v3995
        %v4026 = vmul.f32 %v3668, %v3995
        %v4027 = vmul.f32 %v3673, %v3995
        %v4028 = vmul.f32 %v3678, %v3995
        %v4029 = vmul.f32 %v3683, %v3995
        %v4030 = vmul.f32 %v3688, %v3995
        %v4031 = vmul.f32 %v3693, %v3995
        %v4032 = vmul.f32 %v3698, %v3995
        %v4033 = vmul.f32 %v3703, %v3995
        %v4034 = vmul.f32 %v3708, %v3995
        %v4035 = vmul.f32 %v3713, %v3995
        %v4036 = vmul.f32 %v3718, %v3995
        %v4037 = vmul.f32 %v3723, %v3995
        %v4038 = vmul.f32 %v3728, %v3995
        %v4039 = vmul.f32 %v3733, %v3995
        %v4040 = vmul.f32 %v3738, %v3995
        %v4041 = vmul.f32 %v3743, %v3995
        %v4042 = vmul.f32 %v3748, %v3995
        %v4043 = vmul.f32 %v3753, %v3995
        %v4044 = vmul.f32 %v3758, %v3995
        %v4045 = vmul.f32 %v3763, %v3995
        %v4046 = vmul.f32 %v3768, %v3995
        %v4047 = vmul.f32 %v3773, %v3995
        %v4048 = vmul.f32 %v3778, %v3995
        %v4049 = vmul.f32 %v3783, %v3995
        %v4050 = vmul.f32 %v3788, %v3995
        %v4051 = vmul.f32 %v3793, %v3995
        %v4052 = vmul.f32 %v3798, %v3995
        %v4053 = vmul.f32 %v3803, %v3995
        %v4054 = vmul.f32 %v3808, %v3995
        %v4055 = vmul.f32 %v3813, %v3995
        %v4056 = vmul.f32 %v3818, %v3995
        %v4057 = vmul.f32 %v3823, %v3995
        %v4058 = vmul.f32 %v3828, %v3995
        %v4059 = vmul.f32 %v3833, %v3995
        %v4060 = vmul.f32 %v3838, %v3995
        %v4061 = vmul.f32 %v3843, %v3995
        %v4062 = vmul.f32 %v3848, %v3995
        %v4063 = vmul.f32 %v3853, %v3995
        %v4064 = vmul.f32 %v3858, %v3995
        %v4065 = vmul.f32 %v3863, %v3995
        %v4066 = vmul.f32 %v3868, %v3995
        %v4067 = vmul.f32 %v3873, %v3995
        %v4068 = vmul.f32 %v3878, %v3995
        %v4069 = vmul.f32 %v3883, %v3995
        %v4070 = vmul.f32 %v3888, %v3995
        %v4071 = vmul.f32 %v3893, %v3995
        %v4072 = vmul.f32 %v3898, %v3995
        %v4073 = vmul.f32 %v3903, %v3995
        %v4074 = vmul.f32 %v3908, %v3995
        %v4075 = vmul.f32 %v3913, %v3995
        %v4076 = vmul.f32 %v3918, %v3995
        %v4077 = vmul.f32 %v3923, %v3995
        %v4078 = vmul.f32 %v3928, %v3995
        %v4079 = vmul.f32 %v3933, %v3995
        %v4080 = vmul.f32 %v3938, %v3995
        %v4081 = vmul.f32 %v3943, %v3995
        %v4082 = vmul.f32 %v3948, %v3995
        %v4083 = vmul.f32 %v3953, %v3995
        %v4084 = vmul.f32 %v3958, %v3995
        %v4085 = vmul.f32 %v3963, %v3995
        %v4086 = vmul.f32 %v3968, %v3995
        %v4087 = vmul.f32 %v3973, %v3995
        %v4088 = vmul.f32 %v3978, %v3995
        %v4089 = vmul.f32 %v3983, %v3995
        %v4090 = vmul.f32 %v3988, %v3995
        %v4091 = vmul.f32 %v3993, %v3995
        %v4092 = vadd.f32 %v3322, %v3996
        %v4093 = vadd.f32 %v3323, %v3997
        %v4094 = vadd.f32 %v3324, %v3998
        %v4095 = vadd.f32 %v3325, %v3999
        %v4096 = vadd.f32 %v3326, %v4000
        %v4097 = vadd.f32 %v3327, %v4001
        %v4098 = vadd.f32 %v3328, %v4002
        %v4099 = vadd.f32 %v3329, %v4003
        %v4100 = vadd.f32 %v3330, %v4004
        %v4101 = vadd.f32 %v3331, %v4005
        %v4102 = vadd.f32 %v3332, %v4006
        %v4103 = vadd.f32 %v3333, %v4007
        %v4104 = vadd.f32 %v3334, %v4008
        %v4105 = vadd.f32 %v3335, %v4009
        %v4106 = vadd.f32 %v3336, %v4010
        %v4107 = vadd.f32 %v3337, %v4011
        %v4108 = vadd.f32 %v3338, %v4012
        %v4109 = vadd.f32 %v3339, %v4013
        %v4110 = vadd.f32 %v3340, %v4014
        %v4111 = vadd.f32 %v3341, %v4015
        %v4112 = vadd.f32 %v3342, %v4016
        %v4113 = vadd.f32 %v3343, %v4017
        %v4114 = vadd.f32 %v3344, %v4018
        %v4115 = vadd.f32 %v3345, %v4019
        %v4116 = vadd.f32 %v3346, %v4020
        %v4117 = vadd.f32 %v3347, %v4021
        %v4118 = vadd.f32 %v3348, %v4022
        %v4119 = vadd.f32 %v3349, %v4023
        %v4120 = vadd.f32 %v3350, %v4024
        %v4121 = vadd.f32 %v3351, %v4025
        %v4122 = vadd.f32 %v3352, %v4026
        %v4123 = vadd.f32 %v3353, %v4027
        %v4124 = vadd.f32 %v3354, %v4028
        %v4125 = vadd.f32 %v3355, %v4029
        %v4126 = vadd.f32 %v3356, %v4030
        %v4127 = vadd.f32 %v3357, %v4031
        %v4128 = vadd.f32 %v3358, %v4032
        %v4129 = vadd.f32 %v3359, %v4033
        %v4130 = vadd.f32 %v3360, %v4034
        %v4131 = vadd.f32 %v3361, %v4035
        %v4132 = vadd.f32 %v3362, %v4036
        %v4133 = vadd.f32 %v3363, %v4037
        %v4134 = vadd.f32 %v3364, %v4038
        %v4135 = vadd.f32 %v3365, %v4039
        %v4136 = vadd.f32 %v3366, %v4040
        %v4137 = vadd.f32 %v3367, %v4041
        %v4138 = vadd.f32 %v3368, %v4042
        %v4139 = vadd.f32 %v3369, %v4043
        %v4140 = vadd.f32 %v3370, %v4044
        %v4141 = vadd.f32 %v3371, %v4045
        %v4142 = vadd.f32 %v3372, %v4046
        %v4143 = vadd.f32 %v3373, %v4047
        %v4144 = vadd.f32 %v3374, %v4048
        %v4145 = vadd.f32 %v3375, %v4049
        %v4146 = vadd.f32 %v3376, %v4050
        %v4147 = vadd.f32 %v3377, %v4051
        %v4148 = vadd.f32 %v3378, %v4052
        %v4149 = vadd.f32 %v3379, %v4053
        %v4150 = vadd.f32 %v3380, %v4054
        %v4151 = vadd.f32 %v3381, %v4055
        %v4152 = vadd.f32 %v3382, %v4056
        %v4153 = vadd.f32 %v3383, %v4057
        %v4154 = vadd.f32 %v3384, %v4058
        %v4155 = vadd.f32 %v3385, %v4059
        %v4156 = vadd.f32 %v3386, %v4060
        %v4157 = vadd.f32 %v3387, %v4061
        %v4158 = vadd.f32 %v3388, %v4062
        %v4159 = vadd.f32 %v3389, %v4063
        %v4160 = vadd.f32 %v3390, %v4064
        %v4161 = vadd.f32 %v3391, %v4065
        %v4162 = vadd.f32 %v3392, %v4066
        %v4163 = vadd.f32 %v3393, %v4067
        %v4164 = vadd.f32 %v3394, %v4068
        %v4165 = vadd.f32 %v3395, %v4069
        %v4166 = vadd.f32 %v3396, %v4070
        %v4167 = vadd.f32 %v3397, %v4071
        %v4168 = vadd.f32 %v3398, %v4072
        %v4169 = vadd.f32 %v3399, %v4073
        %v4170 = vadd.f32 %v3400, %v4074
        %v4171 = vadd.f32 %v3401, %v4075
        %v4172 = vadd.f32 %v3402, %v4076
        %v4173 = vadd.f32 %v3403, %v4077
        %v4174 = vadd.f32 %v3404, %v4078
        %v4175 = vadd.f32 %v3405, %v4079
        %v4176 = vadd.f32 %v3406, %v4080
        %v4177 = vadd.f32 %v3407, %v4081
        %v4178 = vadd.f32 %v3408, %v4082
        %v4179 = vadd.f32 %v3409, %v4083
        %v4180 = vadd.f32 %v3410, %v4084
        %v4181 = vadd.f32 %v3411, %v4085
        %v4182 = vadd.f32 %v3412, %v4086
        %v4183 = vadd.f32 %v3413, %v4087
        %v4184 = vadd.f32 %v3414, %v4088
        %v4185 = vadd.f32 %v3415, %v4089
        %v4186 = vadd.f32 %v3416, %v4090
        %v4187 = vadd.f32 %v3417, %v4091
        %v4188 = vld [vmem:[%s384 + $0x22] sm:$0xff]
        %v4189 = vld [vmem:[%s384 + $0x2a] sm:$0xff]
        %v4190 = vld [vmem:[%s384 + $0x32] sm:$0xff]
        %v4191 = vld [vmem:[%s384 + $0x3a] sm:$0xff]
        %v4192 = vld [vmem:[%s384 + $0x42] sm:$0xff]
        %v4193 = vld [vmem:[%s384 + $0x4a] sm:$0xff]
        %v4194 = vld [vmem:[%s384 + $0x52] sm:$0xff]
        %v4195 = vld [vmem:[%s384 + $0x5a] sm:$0xff]
        %v4196 = vld [vmem:[%s384 + $0x62] sm:$0xff]
        %v4197 = vld [vmem:[%s384 + $0x6a] sm:$0xff]
        %v4198 = vld [vmem:[%s384 + $0x72] sm:$0xff]
        %v4199 = vld [vmem:[%s384 + $0x7a] sm:$0xff]
        %v4200 = vld [vmem:[%s384 + $0x82] sm:$0xff]
        %v4201 = vld [vmem:[%s384 + $0x8a] sm:$0xff]
        %v4202 = vld [vmem:[%s384 + $0x92] sm:$0xff]
        %v4203 = vld [vmem:[%s384 + $0x9a] sm:$0xff]
        %v4204 = vld [vmem:[%s384 + $0xa2] sm:$0xff]
        %v4205 = vld [vmem:[%s384 + $0xaa] sm:$0xff]
        %v4206 = vld [vmem:[%s384 + $0xb2] sm:$0xff]
        %v4207 = vld [vmem:[%s384 + $0xba] sm:$0xff]
        %v4208 = vld [vmem:[%s384 + $0xc2] sm:$0xff]
        %v4209 = vld [vmem:[%s384 + $0xca] sm:$0xff]
        %v4210 = vld [vmem:[%s384 + $0xd2] sm:$0xff]
        %v4211 = vld [vmem:[%s384 + $0xda] sm:$0xff]
        %v4212 = vld [vmem:[%s384 + $0xe2] sm:$0xff]
        %v4213 = vld [vmem:[%s384 + $0xea] sm:$0xff]
        %v4214 = vld [vmem:[%s384 + $0xf2] sm:$0xff]
        %v4215 = vld [vmem:[%s384 + $0xfa] sm:$0xff]
        %v4216 = vld [vmem:[%s384 + $0x102] sm:$0xff]
        %v4217 = vld [vmem:[%s384 + $0x10a] sm:$0xff]
        %v4218 = vld [vmem:[%s384 + $0x112] sm:$0xff]
        %v4219 = vld [vmem:[%s384 + $0x11a] sm:$0xff]
        %v4220 = vld [vmem:[%s384 + $0x122] sm:$0xff]
        %v4221 = vld [vmem:[%s384 + $0x12a] sm:$0xff]
        %v4222 = vld [vmem:[%s384 + $0x132] sm:$0xff]
        %v4223 = vld [vmem:[%s384 + $0x13a] sm:$0xff]
        %v4224 = vld [vmem:[%s384 + $0x142] sm:$0xff]
        %v4225 = vld [vmem:[%s384 + $0x14a] sm:$0xff]
        %v4226 = vld [vmem:[%s384 + $0x152] sm:$0xff]
        %v4227 = vld [vmem:[%s384 + $0x15a] sm:$0xff]
        %v4228 = vld [vmem:[%s384 + $0x162] sm:$0xff]
        %v4229 = vld [vmem:[%s384 + $0x16a] sm:$0xff]
        %v4230 = vld [vmem:[%s384 + $0x172] sm:$0xff]
        %v4231 = vld [vmem:[%s384 + $0x17a] sm:$0xff]
        %v4232 = vld [vmem:[%s384 + $0x182] sm:$0xff]
        %v4233 = vld [vmem:[%s384 + $0x18a] sm:$0xff]
        %v4234 = vld [vmem:[%s384 + $0x192] sm:$0xff]
        %v4235 = vld [vmem:[%s384 + $0x19a] sm:$0xff]
        %v4236 = vld [vmem:[%s384 + $0x1a2] sm:$0xff]
        %v4237 = vld [vmem:[%s384 + $0x1aa] sm:$0xff]
        %v4238 = vld [vmem:[%s384 + $0x1b2] sm:$0xff]
        %v4239 = vld [vmem:[%s384 + $0x1ba] sm:$0xff]
        %v4240 = vld [vmem:[%s384 + $0x1c2] sm:$0xff]
        %v4241 = vld [vmem:[%s384 + $0x1ca] sm:$0xff]
        %v4242 = vld [vmem:[%s384 + $0x1d2] sm:$0xff]
        %v4243 = vld [vmem:[%s384 + $0x1da] sm:$0xff]
        %v4244 = vld [vmem:[%s384 + $0x1e2] sm:$0xff]
        %v4245 = vld [vmem:[%s384 + $0x1ea] sm:$0xff]
        %v4246 = vld [vmem:[%s384 + $0x1f2] sm:$0xff]
        %v4247 = vld [vmem:[%s384 + $0x1fa] sm:$0xff]
        %v4248 = vld [vmem:[%s384 + $0x202] sm:$0xff]
        %v4249 = vld [vmem:[%s384 + $0x20a] sm:$0xff]
        %v4250 = vld [vmem:[%s384 + $0x212] sm:$0xff]
        %v4251 = vld [vmem:[%s384 + $0x21a] sm:$0xff]
        %v4252 = vld [vmem:[%s384 + $0x222] sm:$0xff]
        %v4253 = vld [vmem:[%s384 + $0x22a] sm:$0xff]
        %v4254 = vld [vmem:[%s384 + $0x232] sm:$0xff]
        %v4255 = vld [vmem:[%s384 + $0x23a] sm:$0xff]
        %v4256 = vld [vmem:[%s384 + $0x242] sm:$0xff]
        %v4257 = vld [vmem:[%s384 + $0x24a] sm:$0xff]
        %v4258 = vld [vmem:[%s384 + $0x252] sm:$0xff]
        %v4259 = vld [vmem:[%s384 + $0x25a] sm:$0xff]
        %v4260 = vld [vmem:[%s384 + $0x262] sm:$0xff]
        %v4261 = vld [vmem:[%s384 + $0x26a] sm:$0xff]
        %v4262 = vld [vmem:[%s384 + $0x272] sm:$0xff]
        %v4263 = vld [vmem:[%s384 + $0x27a] sm:$0xff]
        %v4264 = vld [vmem:[%s384 + $0x282] sm:$0xff]
        %v4265 = vld [vmem:[%s384 + $0x28a] sm:$0xff]
        %v4266 = vld [vmem:[%s384 + $0x292] sm:$0xff]
        %v4267 = vld [vmem:[%s384 + $0x29a] sm:$0xff]
        %v4268 = vld [vmem:[%s384 + $0x2a2] sm:$0xff]
        %v4269 = vld [vmem:[%s384 + $0x2aa] sm:$0xff]
        %v4270 = vld [vmem:[%s384 + $0x2b2] sm:$0xff]
        %v4271 = vld [vmem:[%s384 + $0x2ba] sm:$0xff]
        %v4272 = vld [vmem:[%s384 + $0x2c2] sm:$0xff]
        %v4273 = vld [vmem:[%s384 + $0x2ca] sm:$0xff]
        %v4274 = vld [vmem:[%s384 + $0x2d2] sm:$0xff]
        %v4275 = vld [vmem:[%s384 + $0x2da] sm:$0xff]
        %v4276 = vld [vmem:[%s384 + $0x2e2] sm:$0xff]
        %v4277 = vld [vmem:[%s384 + $0x2ea] sm:$0xff]
        %v4278 = vld [vmem:[%s384 + $0x2f2] sm:$0xff]
        %v4279 = vld [vmem:[%s384 + $0x2fa] sm:$0xff]
        %v4280 = vld [vmem:[%s384 + $0x302] sm:$0xff]
        %v4281 = vld [vmem:[%s384 + $0x30a] sm:$0xff]
        %v4282 = vld [vmem:[%s384 + $0x312] sm:$0xff]
        %v4283 = vld [vmem:[%s384 + $0x31a] sm:$0x3f]
        %v4284 = vld [vmem:[%s1 + $0x5] sm:$0x1]
        %4286 = vset.pattern.permute.xlu0 0
        %4287 = vperm.xlu0 %4286, %v4188
        %v4288 = vpop.permute.xlu0 %4287
        %4291 = vset.pattern.permute.xlu0 0
        %4292 = vperm.xlu0 %4291, %v4189
        %v4293 = vpop.permute.xlu0 %4292
        %4296 = vset.pattern.permute.xlu0 0
        %4297 = vperm.xlu0 %4296, %v4190
        %v4298 = vpop.permute.xlu0 %4297
        %4301 = vset.pattern.permute.xlu0 0
        %4302 = vperm.xlu0 %4301, %v4191
        %v4303 = vpop.permute.xlu0 %4302
        %4306 = vset.pattern.permute.xlu0 0
        %4307 = vperm.xlu0 %4306, %v4192
        %v4308 = vpop.permute.xlu0 %4307
        %4311 = vset.pattern.permute.xlu0 0
        %4312 = vperm.xlu0 %4311, %v4193
        %v4313 = vpop.permute.xlu0 %4312
        %4316 = vset.pattern.permute.xlu0 0
        %4317 = vperm.xlu0 %4316, %v4194
        %v4318 = vpop.permute.xlu0 %4317
        %4321 = vset.pattern.permute.xlu0 0
        %4322 = vperm.xlu0 %4321, %v4195
        %v4323 = vpop.permute.xlu0 %4322
        %4326 = vset.pattern.permute.xlu0 0
        %4327 = vperm.xlu0 %4326, %v4196
        %v4328 = vpop.permute.xlu0 %4327
        %4331 = vset.pattern.permute.xlu0 0
        %4332 = vperm.xlu0 %4331, %v4197
        %v4333 = vpop.permute.xlu0 %4332
        %4336 = vset.pattern.permute.xlu0 0
        %4337 = vperm.xlu0 %4336, %v4198
        %v4338 = vpop.permute.xlu0 %4337
        %4341 = vset.pattern.permute.xlu0 0
        %4342 = vperm.xlu0 %4341, %v4199
        %v4343 = vpop.permute.xlu0 %4342
        %4346 = vset.pattern.permute.xlu0 0
        %4347 = vperm.xlu0 %4346, %v4200
        %v4348 = vpop.permute.xlu0 %4347
        %4351 = vset.pattern.permute.xlu0 0
        %4352 = vperm.xlu0 %4351, %v4201
        %v4353 = vpop.permute.xlu0 %4352
        %4356 = vset.pattern.permute.xlu0 0
        %4357 = vperm.xlu0 %4356, %v4202
        %v4358 = vpop.permute.xlu0 %4357
        %4361 = vset.pattern.permute.xlu0 0
        %4362 = vperm.xlu0 %4361, %v4203
        %v4363 = vpop.permute.xlu0 %4362
        %4366 = vset.pattern.permute.xlu0 0
        %4367 = vperm.xlu0 %4366, %v4204
        %v4368 = vpop.permute.xlu0 %4367
        %4371 = vset.pattern.permute.xlu0 0
        %4372 = vperm.xlu0 %4371, %v4205
        %v4373 = vpop.permute.xlu0 %4372
        %4376 = vset.pattern.permute.xlu0 0
        %4377 = vperm.xlu0 %4376, %v4206
        %v4378 = vpop.permute.xlu0 %4377
        %4381 = vset.pattern.permute.xlu0 0
        %4382 = vperm.xlu0 %4381, %v4207
        %v4383 = vpop.permute.xlu0 %4382
        %4386 = vset.pattern.permute.xlu0 0
        %4387 = vperm.xlu0 %4386, %v4208
        %v4388 = vpop.permute.xlu0 %4387
        %4391 = vset.pattern.permute.xlu0 0
        %4392 = vperm.xlu0 %4391, %v4209
        %v4393 = vpop.permute.xlu0 %4392
        %4396 = vset.pattern.permute.xlu0 0
        %4397 = vperm.xlu0 %4396, %v4210
        %v4398 = vpop.permute.xlu0 %4397
        %4401 = vset.pattern.permute.xlu0 0
        %4402 = vperm.xlu0 %4401, %v4211
        %v4403 = vpop.permute.xlu0 %4402
        %4406 = vset.pattern.permute.xlu0 0
        %4407 = vperm.xlu0 %4406, %v4212
        %v4408 = vpop.permute.xlu0 %4407
        %4411 = vset.pattern.permute.xlu0 0
        %4412 = vperm.xlu0 %4411, %v4213
        %v4413 = vpop.permute.xlu0 %4412
        %4416 = vset.pattern.permute.xlu0 0
        %4417 = vperm.xlu0 %4416, %v4214
        %v4418 = vpop.permute.xlu0 %4417
        %4421 = vset.pattern.permute.xlu0 0
        %4422 = vperm.xlu0 %4421, %v4215
        %v4423 = vpop.permute.xlu0 %4422
        %4426 = vset.pattern.permute.xlu0 0
        %4427 = vperm.xlu0 %4426, %v4216
        %v4428 = vpop.permute.xlu0 %4427
        %4431 = vset.pattern.permute.xlu0 0
        %4432 = vperm.xlu0 %4431, %v4217
        %v4433 = vpop.permute.xlu0 %4432
        %4436 = vset.pattern.permute.xlu0 0
        %4437 = vperm.xlu0 %4436, %v4218
        %v4438 = vpop.permute.xlu0 %4437
        %4441 = vset.pattern.permute.xlu0 0
        %4442 = vperm.xlu0 %4441, %v4219
        %v4443 = vpop.permute.xlu0 %4442
        %4446 = vset.pattern.permute.xlu0 0
        %4447 = vperm.xlu0 %4446, %v4220
        %v4448 = vpop.permute.xlu0 %4447
        %4451 = vset.pattern.permute.xlu0 0
        %4452 = vperm.xlu0 %4451, %v4221
        %v4453 = vpop.permute.xlu0 %4452
        %4456 = vset.pattern.permute.xlu0 0
        %4457 = vperm.xlu0 %4456, %v4222
        %v4458 = vpop.permute.xlu0 %4457
        %4461 = vset.pattern.permute.xlu0 0
        %4462 = vperm.xlu0 %4461, %v4223
        %v4463 = vpop.permute.xlu0 %4462
        %4466 = vset.pattern.permute.xlu0 0
        %4467 = vperm.xlu0 %4466, %v4224
        %v4468 = vpop.permute.xlu0 %4467
        %4471 = vset.pattern.permute.xlu0 0
        %4472 = vperm.xlu0 %4471, %v4225
        %v4473 = vpop.permute.xlu0 %4472
        %4476 = vset.pattern.permute.xlu0 0
        %4477 = vperm.xlu0 %4476, %v4226
        %v4478 = vpop.permute.xlu0 %4477
        %4481 = vset.pattern.permute.xlu0 0
        %4482 = vperm.xlu0 %4481, %v4227
        %v4483 = vpop.permute.xlu0 %4482
        %4486 = vset.pattern.permute.xlu0 0
        %4487 = vperm.xlu0 %4486, %v4228
        %v4488 = vpop.permute.xlu0 %4487
        %4491 = vset.pattern.permute.xlu0 0
        %4492 = vperm.xlu0 %4491, %v4229
        %v4493 = vpop.permute.xlu0 %4492
        %4496 = vset.pattern.permute.xlu0 0
        %4497 = vperm.xlu0 %4496, %v4230
        %v4498 = vpop.permute.xlu0 %4497
        %4501 = vset.pattern.permute.xlu0 0
        %4502 = vperm.xlu0 %4501, %v4231
        %v4503 = vpop.permute.xlu0 %4502
        %4506 = vset.pattern.permute.xlu0 0
        %4507 = vperm.xlu0 %4506, %v4232
        %v4508 = vpop.permute.xlu0 %4507
        %4511 = vset.pattern.permute.xlu0 0
        %4512 = vperm.xlu0 %4511, %v4233
        %v4513 = vpop.permute.xlu0 %4512
        %4516 = vset.pattern.permute.xlu0 0
        %4517 = vperm.xlu0 %4516, %v4234
        %v4518 = vpop.permute.xlu0 %4517
        %4521 = vset.pattern.permute.xlu0 0
        %4522 = vperm.xlu0 %4521, %v4235
        %v4523 = vpop.permute.xlu0 %4522
        %4526 = vset.pattern.permute.xlu0 0
        %4527 = vperm.xlu0 %4526, %v4236
        %v4528 = vpop.permute.xlu0 %4527
        %4531 = vset.pattern.permute.xlu0 0
        %4532 = vperm.xlu0 %4531, %v4237
        %v4533 = vpop.permute.xlu0 %4532
        %4536 = vset.pattern.permute.xlu0 0
        %4537 = vperm.xlu0 %4536, %v4238
        %v4538 = vpop.permute.xlu0 %4537
        %4541 = vset.pattern.permute.xlu0 0
        %4542 = vperm.xlu0 %4541, %v4239
        %v4543 = vpop.permute.xlu0 %4542
        %4546 = vset.pattern.permute.xlu0 0
        %4547 = vperm.xlu0 %4546, %v4240
        %v4548 = vpop.permute.xlu0 %4547
        %4551 = vset.pattern.permute.xlu0 0
        %4552 = vperm.xlu0 %4551, %v4241
        %v4553 = vpop.permute.xlu0 %4552
        %4556 = vset.pattern.permute.xlu0 0
        %4557 = vperm.xlu0 %4556, %v4242
        %v4558 = vpop.permute.xlu0 %4557
        %4561 = vset.pattern.permute.xlu0 0
        %4562 = vperm.xlu0 %4561, %v4243
        %v4563 = vpop.permute.xlu0 %4562
        %4566 = vset.pattern.permute.xlu0 0
        %4567 = vperm.xlu0 %4566, %v4244
        %v4568 = vpop.permute.xlu0 %4567
        %4571 = vset.pattern.permute.xlu0 0
        %4572 = vperm.xlu0 %4571, %v4245
        %v4573 = vpop.permute.xlu0 %4572
        %4576 = vset.pattern.permute.xlu0 0
        %4577 = vperm.xlu0 %4576, %v4246
        %v4578 = vpop.permute.xlu0 %4577
        %4581 = vset.pattern.permute.xlu0 0
        %4582 = vperm.xlu0 %4581, %v4247
        %v4583 = vpop.permute.xlu0 %4582
        %4586 = vset.pattern.permute.xlu0 0
        %4587 = vperm.xlu0 %4586, %v4248
        %v4588 = vpop.permute.xlu0 %4587
        %4591 = vset.pattern.permute.xlu0 0
        %4592 = vperm.xlu0 %4591, %v4249
        %v4593 = vpop.permute.xlu0 %4592
        %4596 = vset.pattern.permute.xlu0 0
        %4597 = vperm.xlu0 %4596, %v4250
        %v4598 = vpop.permute.xlu0 %4597
        %4601 = vset.pattern.permute.xlu0 0
        %4602 = vperm.xlu0 %4601, %v4251
        %v4603 = vpop.permute.xlu0 %4602
        %4606 = vset.pattern.permute.xlu0 0
        %4607 = vperm.xlu0 %4606, %v4252
        %v4608 = vpop.permute.xlu0 %4607
        %4611 = vset.pattern.permute.xlu0 0
        %4612 = vperm.xlu0 %4611, %v4253
        %v4613 = vpop.permute.xlu0 %4612
        %4616 = vset.pattern.permute.xlu0 0
        %4617 = vperm.xlu0 %4616, %v4254
        %v4618 = vpop.permute.xlu0 %4617
        %4621 = vset.pattern.permute.xlu0 0
        %4622 = vperm.xlu0 %4621, %v4255
        %v4623 = vpop.permute.xlu0 %4622
        %4626 = vset.pattern.permute.xlu0 0
        %4627 = vperm.xlu0 %4626, %v4256
        %v4628 = vpop.permute.xlu0 %4627
        %4631 = vset.pattern.permute.xlu0 0
        %4632 = vperm.xlu0 %4631, %v4257
        %v4633 = vpop.permute.xlu0 %4632
        %4636 = vset.pattern.permute.xlu0 0
        %4637 = vperm.xlu0 %4636, %v4258
        %v4638 = vpop.permute.xlu0 %4637
        %4641 = vset.pattern.permute.xlu0 0
        %4642 = vperm.xlu0 %4641, %v4259
        %v4643 = vpop.permute.xlu0 %4642
        %4646 = vset.pattern.permute.xlu0 0
        %4647 = vperm.xlu0 %4646, %v4260
        %v4648 = vpop.permute.xlu0 %4647
        %4651 = vset.pattern.permute.xlu0 0
        %4652 = vperm.xlu0 %4651, %v4261
        %v4653 = vpop.permute.xlu0 %4652
        %4656 = vset.pattern.permute.xlu0 0
        %4657 = vperm.xlu0 %4656, %v4262
        %v4658 = vpop.permute.xlu0 %4657
        %4661 = vset.pattern.permute.xlu0 0
        %4662 = vperm.xlu0 %4661, %v4263
        %v4663 = vpop.permute.xlu0 %4662
        %4666 = vset.pattern.permute.xlu0 0
        %4667 = vperm.xlu0 %4666, %v4264
        %v4668 = vpop.permute.xlu0 %4667
        %4671 = vset.pattern.permute.xlu0 0
        %4672 = vperm.xlu0 %4671, %v4265
        %v4673 = vpop.permute.xlu0 %4672
        %4676 = vset.pattern.permute.xlu0 0
        %4677 = vperm.xlu0 %4676, %v4266
        %v4678 = vpop.permute.xlu0 %4677
        %4681 = vset.pattern.permute.xlu0 0
        %4682 = vperm.xlu0 %4681, %v4267
        %v4683 = vpop.permute.xlu0 %4682
        %4686 = vset.pattern.permute.xlu0 0
        %4687 = vperm.xlu0 %4686, %v4268
        %v4688 = vpop.permute.xlu0 %4687
        %4691 = vset.pattern.permute.xlu0 0
        %4692 = vperm.xlu0 %4691, %v4269
        %v4693 = vpop.permute.xlu0 %4692
        %4696 = vset.pattern.permute.xlu0 0
        %4697 = vperm.xlu0 %4696, %v4270
        %v4698 = vpop.permute.xlu0 %4697
        %4701 = vset.pattern.permute.xlu0 0
        %4702 = vperm.xlu0 %4701, %v4271
        %v4703 = vpop.permute.xlu0 %4702
        %4706 = vset.pattern.permute.xlu0 0
        %4707 = vperm.xlu0 %4706, %v4272
        %v4708 = vpop.permute.xlu0 %4707
        %4711 = vset.pattern.permute.xlu0 0
        %4712 = vperm.xlu0 %4711, %v4273
        %v4713 = vpop.permute.xlu0 %4712
        %4716 = vset.pattern.permute.xlu0 0
        %4717 = vperm.xlu0 %4716, %v4274
        %v4718 = vpop.permute.xlu0 %4717
        %4721 = vset.pattern.permute.xlu0 0
        %4722 = vperm.xlu0 %4721, %v4275
        %v4723 = vpop.permute.xlu0 %4722
        %4726 = vset.pattern.permute.xlu0 0
        %4727 = vperm.xlu0 %4726, %v4276
        %v4728 = vpop.permute.xlu0 %4727
        %4731 = vset.pattern.permute.xlu0 0
        %4732 = vperm.xlu0 %4731, %v4277
        %v4733 = vpop.permute.xlu0 %4732
        %4736 = vset.pattern.permute.xlu0 0
        %4737 = vperm.xlu0 %4736, %v4278
        %v4738 = vpop.permute.xlu0 %4737
        %4741 = vset.pattern.permute.xlu0 0
        %4742 = vperm.xlu0 %4741, %v4279
        %v4743 = vpop.permute.xlu0 %4742
        %4746 = vset.pattern.permute.xlu0 0
        %4747 = vperm.xlu0 %4746, %v4280
        %v4748 = vpop.permute.xlu0 %4747
        %4751 = vset.pattern.permute.xlu0 0
        %4752 = vperm.xlu0 %4751, %v4281
        %v4753 = vpop.permute.xlu0 %4752
        %4756 = vset.pattern.permute.xlu0 0
        %4757 = vperm.xlu0 %4756, %v4282
        %v4758 = vpop.permute.xlu0 %4757
        %4761 = vset.pattern.permute.xlu0 0
        %4762 = vperm.xlu0 %4761, %v4283
        %v4763 = vpop.permute.xlu0 %4762
        %v4765 = vperm.slane %v4284, 0
        %v4766 = vmul.f32 %v4288, %v4765
        %v4767 = vmul.f32 %v4293, %v4765
        %v4768 = vmul.f32 %v4298, %v4765
        %v4769 = vmul.f32 %v4303, %v4765
        %v4770 = vmul.f32 %v4308, %v4765
        %v4771 = vmul.f32 %v4313, %v4765
        %v4772 = vmul.f32 %v4318, %v4765
        %v4773 = vmul.f32 %v4323, %v4765
        %v4774 = vmul.f32 %v4328, %v4765
        %v4775 = vmul.f32 %v4333, %v4765
        %v4776 = vmul.f32 %v4338, %v4765
        %v4777 = vmul.f32 %v4343, %v4765
        %v4778 = vmul.f32 %v4348, %v4765
        %v4779 = vmul.f32 %v4353, %v4765
        %v4780 = vmul.f32 %v4358, %v4765
        %v4781 = vmul.f32 %v4363, %v4765
        %v4782 = vmul.f32 %v4368, %v4765
        %v4783 = vmul.f32 %v4373, %v4765
        %v4784 = vmul.f32 %v4378, %v4765
        %v4785 = vmul.f32 %v4383, %v4765
        %v4786 = vmul.f32 %v4388, %v4765
        %v4787 = vmul.f32 %v4393, %v4765
        %v4788 = vmul.f32 %v4398, %v4765
        %v4789 = vmul.f32 %v4403, %v4765
        %v4790 = vmul.f32 %v4408, %v4765
        %v4791 = vmul.f32 %v4413, %v4765
        %v4792 = vmul.f32 %v4418, %v4765
        %v4793 = vmul.f32 %v4423, %v4765
        %v4794 = vmul.f32 %v4428, %v4765
        %v4795 = vmul.f32 %v4433, %v4765
        %v4796 = vmul.f32 %v4438, %v4765
        %v4797 = vmul.f32 %v4443, %v4765
        %v4798 = vmul.f32 %v4448, %v4765
        %v4799 = vmul.f32 %v4453, %v4765
        %v4800 = vmul.f32 %v4458, %v4765
        %v4801 = vmul.f32 %v4463, %v4765
        %v4802 = vmul.f32 %v4468, %v4765
        %v4803 = vmul.f32 %v4473, %v4765
        %v4804 = vmul.f32 %v4478, %v4765
        %v4805 = vmul.f32 %v4483, %v4765
        %v4806 = vmul.f32 %v4488, %v4765
        %v4807 = vmul.f32 %v4493, %v4765
        %v4808 = vmul.f32 %v4498, %v4765
        %v4809 = vmul.f32 %v4503, %v4765
        %v4810 = vmul.f32 %v4508, %v4765
        %v4811 = vmul.f32 %v4513, %v4765
        %v4812 = vmul.f32 %v4518, %v4765
        %v4813 = vmul.f32 %v4523, %v4765
        %v4814 = vmul.f32 %v4528, %v4765
        %v4815 = vmul.f32 %v4533, %v4765
        %v4816 = vmul.f32 %v4538, %v4765
        %v4817 = vmul.f32 %v4543, %v4765
        %v4818 = vmul.f32 %v4548, %v4765
        %v4819 = vmul.f32 %v4553, %v4765
        %v4820 = vmul.f32 %v4558, %v4765
        %v4821 = vmul.f32 %v4563, %v4765
        %v4822 = vmul.f32 %v4568, %v4765
        %v4823 = vmul.f32 %v4573, %v4765
        %v4824 = vmul.f32 %v4578, %v4765
        %v4825 = vmul.f32 %v4583, %v4765
        %v4826 = vmul.f32 %v4588, %v4765
        %v4827 = vmul.f32 %v4593, %v4765
        %v4828 = vmul.f32 %v4598, %v4765
        %v4829 = vmul.f32 %v4603, %v4765
        %v4830 = vmul.f32 %v4608, %v4765
        %v4831 = vmul.f32 %v4613, %v4765
        %v4832 = vmul.f32 %v4618, %v4765
        %v4833 = vmul.f32 %v4623, %v4765
        %v4834 = vmul.f32 %v4628, %v4765
        %v4835 = vmul.f32 %v4633, %v4765
        %v4836 = vmul.f32 %v4638, %v4765
        %v4837 = vmul.f32 %v4643, %v4765
        %v4838 = vmul.f32 %v4648, %v4765
        %v4839 = vmul.f32 %v4653, %v4765
        %v4840 = vmul.f32 %v4658, %v4765
        %v4841 = vmul.f32 %v4663, %v4765
        %v4842 = vmul.f32 %v4668, %v4765
        %v4843 = vmul.f32 %v4673, %v4765
        %v4844 = vmul.f32 %v4678, %v4765
        %v4845 = vmul.f32 %v4683, %v4765
        %v4846 = vmul.f32 %v4688, %v4765
        %v4847 = vmul.f32 %v4693, %v4765
        %v4848 = vmul.f32 %v4698, %v4765
        %v4849 = vmul.f32 %v4703, %v4765
        %v4850 = vmul.f32 %v4708, %v4765
        %v4851 = vmul.f32 %v4713, %v4765
        %v4852 = vmul.f32 %v4718, %v4765
        %v4853 = vmul.f32 %v4723, %v4765
        %v4854 = vmul.f32 %v4728, %v4765
        %v4855 = vmul.f32 %v4733, %v4765
        %v4856 = vmul.f32 %v4738, %v4765
        %v4857 = vmul.f32 %v4743, %v4765
        %v4858 = vmul.f32 %v4748, %v4765
        %v4859 = vmul.f32 %v4753, %v4765
        %v4860 = vmul.f32 %v4758, %v4765
        %v4861 = vmul.f32 %v4763, %v4765
        %v4862 = vadd.f32 %v4092, %v4766
        %v4863 = vadd.f32 %v4093, %v4767
        %v4864 = vadd.f32 %v4094, %v4768
        %v4865 = vadd.f32 %v4095, %v4769
        %v4866 = vadd.f32 %v4096, %v4770
        %v4867 = vadd.f32 %v4097, %v4771
        %v4868 = vadd.f32 %v4098, %v4772
        %v4869 = vadd.f32 %v4099, %v4773
        %v4870 = vadd.f32 %v4100, %v4774
        %v4871 = vadd.f32 %v4101, %v4775
        %v4872 = vadd.f32 %v4102, %v4776
        %v4873 = vadd.f32 %v4103, %v4777
        %v4874 = vadd.f32 %v4104, %v4778
        %v4875 = vadd.f32 %v4105, %v4779
        %v4876 = vadd.f32 %v4106, %v4780
        %v4877 = vadd.f32 %v4107, %v4781
        %v4878 = vadd.f32 %v4108, %v4782
        %v4879 = vadd.f32 %v4109, %v4783
        %v4880 = vadd.f32 %v4110, %v4784
        %v4881 = vadd.f32 %v4111, %v4785
        %v4882 = vadd.f32 %v4112, %v4786
        %v4883 = vadd.f32 %v4113, %v4787
        %v4884 = vadd.f32 %v4114, %v4788
        %v4885 = vadd.f32 %v4115, %v4789
        %v4886 = vadd.f32 %v4116, %v4790
        %v4887 = vadd.f32 %v4117, %v4791
        %v4888 = vadd.f32 %v4118, %v4792
        %v4889 = vadd.f32 %v4119, %v4793
        %v4890 = vadd.f32 %v4120, %v4794
        %v4891 = vadd.f32 %v4121, %v4795
        %v4892 = vadd.f32 %v4122, %v4796
        %v4893 = vadd.f32 %v4123, %v4797
        %v4894 = vadd.f32 %v4124, %v4798
        %v4895 = vadd.f32 %v4125, %v4799
        %v4896 = vadd.f32 %v4126, %v4800
        %v4897 = vadd.f32 %v4127, %v4801
        %v4898 = vadd.f32 %v4128, %v4802
        %v4899 = vadd.f32 %v4129, %v4803
        %v4900 = vadd.f32 %v4130, %v4804
        %v4901 = vadd.f32 %v4131, %v4805
        %v4902 = vadd.f32 %v4132, %v4806
        %v4903 = vadd.f32 %v4133, %v4807
        %v4904 = vadd.f32 %v4134, %v4808
        %v4905 = vadd.f32 %v4135, %v4809
        %v4906 = vadd.f32 %v4136, %v4810
        %v4907 = vadd.f32 %v4137, %v4811
        %v4908 = vadd.f32 %v4138, %v4812
        %v4909 = vadd.f32 %v4139, %v4813
        %v4910 = vadd.f32 %v4140, %v4814
        %v4911 = vadd.f32 %v4141, %v4815
        %v4912 = vadd.f32 %v4142, %v4816
        %v4913 = vadd.f32 %v4143, %v4817
        %v4914 = vadd.f32 %v4144, %v4818
        %v4915 = vadd.f32 %v4145, %v4819
        %v4916 = vadd.f32 %v4146, %v4820
        %v4917 = vadd.f32 %v4147, %v4821
        %v4918 = vadd.f32 %v4148, %v4822
        %v4919 = vadd.f32 %v4149, %v4823
        %v4920 = vadd.f32 %v4150, %v4824
        %v4921 = vadd.f32 %v4151, %v4825
        %v4922 = vadd.f32 %v4152, %v4826
        %v4923 = vadd.f32 %v4153, %v4827
        %v4924 = vadd.f32 %v4154, %v4828
        %v4925 = vadd.f32 %v4155, %v4829
        %v4926 = vadd.f32 %v4156, %v4830
        %v4927 = vadd.f32 %v4157, %v4831
        %v4928 = vadd.f32 %v4158, %v4832
        %v4929 = vadd.f32 %v4159, %v4833
        %v4930 = vadd.f32 %v4160, %v4834
        %v4931 = vadd.f32 %v4161, %v4835
        %v4932 = vadd.f32 %v4162, %v4836
        %v4933 = vadd.f32 %v4163, %v4837
        %v4934 = vadd.f32 %v4164, %v4838
        %v4935 = vadd.f32 %v4165, %v4839
        %v4936 = vadd.f32 %v4166, %v4840
        %v4937 = vadd.f32 %v4167, %v4841
        %v4938 = vadd.f32 %v4168, %v4842
        %v4939 = vadd.f32 %v4169, %v4843
        %v4940 = vadd.f32 %v4170, %v4844
        %v4941 = vadd.f32 %v4171, %v4845
        %v4942 = vadd.f32 %v4172, %v4846
        %v4943 = vadd.f32 %v4173, %v4847
        %v4944 = vadd.f32 %v4174, %v4848
        %v4945 = vadd.f32 %v4175, %v4849
        %v4946 = vadd.f32 %v4176, %v4850
        %v4947 = vadd.f32 %v4177, %v4851
        %v4948 = vadd.f32 %v4178, %v4852
        %v4949 = vadd.f32 %v4179, %v4853
        %v4950 = vadd.f32 %v4180, %v4854
        %v4951 = vadd.f32 %v4181, %v4855
        %v4952 = vadd.f32 %v4182, %v4856
        %v4953 = vadd.f32 %v4183, %v4857
        %v4954 = vadd.f32 %v4184, %v4858
        %v4955 = vadd.f32 %v4185, %v4859
        %v4956 = vadd.f32 %v4186, %v4860
        %v4957 = vadd.f32 %v4187, %v4861
        %v4958 = vld [vmem:[%s384 + $0x40] sm:$0xff]
        %v4959 = vld [vmem:[%s384 + $0x48] sm:$0xff]
        %v4960 = vld [vmem:[%s384 + $0x50] sm:$0xff]
        %v4961 = vld [vmem:[%s384 + $0x58] sm:$0xff]
        %v4962 = vld [vmem:[%s384 + $0x60] sm:$0xff]
        %v4963 = vld [vmem:[%s384 + $0x68] sm:$0xff]
        %v4964 = vld [vmem:[%s384 + $0x70] sm:$0xff]
        %v4965 = vld [vmem:[%s384 + $0x78] sm:$0xff]
        %v4966 = vld [vmem:[%s384 + $0x80] sm:$0xff]
        %v4967 = vld [vmem:[%s384 + $0x88] sm:$0xff]
        %v4968 = vld [vmem:[%s384 + $0x90] sm:$0xff]
        %v4969 = vld [vmem:[%s384 + $0x98] sm:$0xff]
        %v4970 = vld [vmem:[%s384 + $0xa0] sm:$0xff]
        %v4971 = vld [vmem:[%s384 + $0xa8] sm:$0xff]
        %v4972 = vld [vmem:[%s384 + $0xb0] sm:$0xff]
        %v4973 = vld [vmem:[%s384 + $0xb8] sm:$0xff]
        %v4974 = vld [vmem:[%s384 + $0xc0] sm:$0xff]
        %v4975 = vld [vmem:[%s384 + $0xc8] sm:$0xff]
        %v4976 = vld [vmem:[%s384 + $0xd0] sm:$0xff]
        %v4977 = vld [vmem:[%s384 + $0xd8] sm:$0xff]
        %v4978 = vld [vmem:[%s384 + $0xe0] sm:$0xff]
        %v4979 = vld [vmem:[%s384 + $0xe8] sm:$0xff]
        %v4980 = vld [vmem:[%s384 + $0xf0] sm:$0xff]
        %v4981 = vld [vmem:[%s384 + $0xf8] sm:$0xff]
        %v4982 = vld [vmem:[%s384 + $0x100] sm:$0xff]
        %v4983 = vld [vmem:[%s384 + $0x108] sm:$0xff]
        %v4984 = vld [vmem:[%s384 + $0x110] sm:$0xff]
        %v4985 = vld [vmem:[%s384 + $0x118] sm:$0xff]
        %v4986 = vld [vmem:[%s384 + $0x120] sm:$0xff]
        %v4987 = vld [vmem:[%s384 + $0x128] sm:$0xff]
        %v4988 = vld [vmem:[%s384 + $0x130] sm:$0xff]
        %v4989 = vld [vmem:[%s384 + $0x138] sm:$0xff]
        %v4990 = vld [vmem:[%s384 + $0x140] sm:$0xff]
        %v4991 = vld [vmem:[%s384 + $0x148] sm:$0xff]
        %v4992 = vld [vmem:[%s384 + $0x150] sm:$0xff]
        %v4993 = vld [vmem:[%s384 + $0x158] sm:$0xff]
        %v4994 = vld [vmem:[%s384 + $0x160] sm:$0xff]
        %v4995 = vld [vmem:[%s384 + $0x168] sm:$0xff]
        %v4996 = vld [vmem:[%s384 + $0x170] sm:$0xff]
        %v4997 = vld [vmem:[%s384 + $0x178] sm:$0xff]
        %v4998 = vld [vmem:[%s384 + $0x180] sm:$0xff]
        %v4999 = vld [vmem:[%s384 + $0x188] sm:$0xff]
        %v5000 = vld [vmem:[%s384 + $0x190] sm:$0xff]
        %v5001 = vld [vmem:[%s384 + $0x198] sm:$0xff]
        %v5002 = vld [vmem:[%s384 + $0x1a0] sm:$0xff]
        %v5003 = vld [vmem:[%s384 + $0x1a8] sm:$0xff]
        %v5004 = vld [vmem:[%s384 + $0x1b0] sm:$0xff]
        %v5005 = vld [vmem:[%s384 + $0x1b8] sm:$0xff]
        %v5006 = vld [vmem:[%s384 + $0x1c0] sm:$0xff]
        %v5007 = vld [vmem:[%s384 + $0x1c8] sm:$0xff]
        %v5008 = vld [vmem:[%s384 + $0x1d0] sm:$0xff]
        %v5009 = vld [vmem:[%s384 + $0x1d8] sm:$0xff]
        %v5010 = vld [vmem:[%s384 + $0x1e0] sm:$0xff]
        %v5011 = vld [vmem:[%s384 + $0x1e8] sm:$0xff]
        %v5012 = vld [vmem:[%s384 + $0x1f0] sm:$0xff]
        %v5013 = vld [vmem:[%s384 + $0x1f8] sm:$0xff]
        %v5014 = vld [vmem:[%s384 + $0x200] sm:$0xff]
        %v5015 = vld [vmem:[%s384 + $0x208] sm:$0xff]
        %v5016 = vld [vmem:[%s384 + $0x210] sm:$0xff]
        %v5017 = vld [vmem:[%s384 + $0x218] sm:$0xff]
        %v5018 = vld [vmem:[%s384 + $0x220] sm:$0xff]
        %v5019 = vld [vmem:[%s384 + $0x228] sm:$0xff]
        %v5020 = vld [vmem:[%s384 + $0x230] sm:$0xff]
        %v5021 = vld [vmem:[%s384 + $0x238] sm:$0xff]
        %v5022 = vld [vmem:[%s384 + $0x240] sm:$0xff]
        %v5023 = vld [vmem:[%s384 + $0x248] sm:$0xff]
        %v5024 = vld [vmem:[%s384 + $0x250] sm:$0xff]
        %v5025 = vld [vmem:[%s384 + $0x258] sm:$0xff]
        %v5026 = vld [vmem:[%s384 + $0x260] sm:$0xff]
        %v5027 = vld [vmem:[%s384 + $0x268] sm:$0xff]
        %v5028 = vld [vmem:[%s384 + $0x270] sm:$0xff]
        %v5029 = vld [vmem:[%s384 + $0x278] sm:$0xff]
        %v5030 = vld [vmem:[%s384 + $0x280] sm:$0xff]
        %v5031 = vld [vmem:[%s384 + $0x288] sm:$0xff]
        %v5032 = vld [vmem:[%s384 + $0x290] sm:$0xff]
        %v5033 = vld [vmem:[%s384 + $0x298] sm:$0xff]
        %v5034 = vld [vmem:[%s384 + $0x2a0] sm:$0xff]
        %v5035 = vld [vmem:[%s384 + $0x2a8] sm:$0xff]
        %v5036 = vld [vmem:[%s384 + $0x2b0] sm:$0xff]
        %v5037 = vld [vmem:[%s384 + $0x2b8] sm:$0xff]
        %v5038 = vld [vmem:[%s384 + $0x2c0] sm:$0xff]
        %v5039 = vld [vmem:[%s384 + $0x2c8] sm:$0xff]
        %v5040 = vld [vmem:[%s384 + $0x2d0] sm:$0xff]
        %v5041 = vld [vmem:[%s384 + $0x2d8] sm:$0xff]
        %v5042 = vld [vmem:[%s384 + $0x2e0] sm:$0xff]
        %v5043 = vld [vmem:[%s384 + $0x2e8] sm:$0xff]
        %v5044 = vld [vmem:[%s384 + $0x2f0] sm:$0xff]
        %v5045 = vld [vmem:[%s384 + $0x2f8] sm:$0xff]
        %v5046 = vld [vmem:[%s384 + $0x300] sm:$0xff]
        %v5047 = vld [vmem:[%s384 + $0x308] sm:$0xff]
        %v5048 = vld [vmem:[%s384 + $0x310] sm:$0xff]
        %v5049 = vld [vmem:[%s384 + $0x318] sm:$0xff]
        %v5050 = vld [vmem:[%s384 + $0x320] sm:$0xff]
        %v5051 = vld [vmem:[%s384 + $0x328] sm:$0xff]
        %v5052 = vld [vmem:[%s384 + $0x330] sm:$0xff]
        %v5053 = vld [vmem:[%s384 + $0x338] sm:$0x3f]
        %v5054 = vld [vmem:[%s1 + $0x6] sm:$0x1]
        %5056 = vset.pattern.permute.xlu0 0
        %5057 = vperm.xlu0 %5056, %v4958
        %v5058 = vpop.permute.xlu0 %5057
        %5061 = vset.pattern.permute.xlu0 0
        %5062 = vperm.xlu0 %5061, %v4959
        %v5063 = vpop.permute.xlu0 %5062
        %5066 = vset.pattern.permute.xlu0 0
        %5067 = vperm.xlu0 %5066, %v4960
        %v5068 = vpop.permute.xlu0 %5067
        %5071 = vset.pattern.permute.xlu0 0
        %5072 = vperm.xlu0 %5071, %v4961
        %v5073 = vpop.permute.xlu0 %5072
        %5076 = vset.pattern.permute.xlu0 0
        %5077 = vperm.xlu0 %5076, %v4962
        %v5078 = vpop.permute.xlu0 %5077
        %5081 = vset.pattern.permute.xlu0 0
        %5082 = vperm.xlu0 %5081, %v4963
        %v5083 = vpop.permute.xlu0 %5082
        %5086 = vset.pattern.permute.xlu0 0
        %5087 = vperm.xlu0 %5086, %v4964
        %v5088 = vpop.permute.xlu0 %5087
        %5091 = vset.pattern.permute.xlu0 0
        %5092 = vperm.xlu0 %5091, %v4965
        %v5093 = vpop.permute.xlu0 %5092
        %5096 = vset.pattern.permute.xlu0 0
        %5097 = vperm.xlu0 %5096, %v4966
        %v5098 = vpop.permute.xlu0 %5097
        %5101 = vset.pattern.permute.xlu0 0
        %5102 = vperm.xlu0 %5101, %v4967
        %v5103 = vpop.permute.xlu0 %5102
        %5106 = vset.pattern.permute.xlu0 0
        %5107 = vperm.xlu0 %5106, %v4968
        %v5108 = vpop.permute.xlu0 %5107
        %5111 = vset.pattern.permute.xlu0 0
        %5112 = vperm.xlu0 %5111, %v4969
        %v5113 = vpop.permute.xlu0 %5112
        %5116 = vset.pattern.permute.xlu0 0
        %5117 = vperm.xlu0 %5116, %v4970
        %v5118 = vpop.permute.xlu0 %5117
        %5121 = vset.pattern.permute.xlu0 0
        %5122 = vperm.xlu0 %5121, %v4971
        %v5123 = vpop.permute.xlu0 %5122
        %5126 = vset.pattern.permute.xlu0 0
        %5127 = vperm.xlu0 %5126, %v4972
        %v5128 = vpop.permute.xlu0 %5127
        %5131 = vset.pattern.permute.xlu0 0
        %5132 = vperm.xlu0 %5131, %v4973
        %v5133 = vpop.permute.xlu0 %5132
        %5136 = vset.pattern.permute.xlu0 0
        %5137 = vperm.xlu0 %5136, %v4974
        %v5138 = vpop.permute.xlu0 %5137
        %5141 = vset.pattern.permute.xlu0 0
        %5142 = vperm.xlu0 %5141, %v4975
        %v5143 = vpop.permute.xlu0 %5142
        %5146 = vset.pattern.permute.xlu0 0
        %5147 = vperm.xlu0 %5146, %v4976
        %v5148 = vpop.permute.xlu0 %5147
        %5151 = vset.pattern.permute.xlu0 0
        %5152 = vperm.xlu0 %5151, %v4977
        %v5153 = vpop.permute.xlu0 %5152
        %5156 = vset.pattern.permute.xlu0 0
        %5157 = vperm.xlu0 %5156, %v4978
        %v5158 = vpop.permute.xlu0 %5157
        %5161 = vset.pattern.permute.xlu0 0
        %5162 = vperm.xlu0 %5161, %v4979
        %v5163 = vpop.permute.xlu0 %5162
        %5166 = vset.pattern.permute.xlu0 0
        %5167 = vperm.xlu0 %5166, %v4980
        %v5168 = vpop.permute.xlu0 %5167
        %5171 = vset.pattern.permute.xlu0 0
        %5172 = vperm.xlu0 %5171, %v4981
        %v5173 = vpop.permute.xlu0 %5172
        %5176 = vset.pattern.permute.xlu0 0
        %5177 = vperm.xlu0 %5176, %v4982
        %v5178 = vpop.permute.xlu0 %5177
        %5181 = vset.pattern.permute.xlu0 0
        %5182 = vperm.xlu0 %5181, %v4983
        %v5183 = vpop.permute.xlu0 %5182
        %5186 = vset.pattern.permute.xlu0 0
        %5187 = vperm.xlu0 %5186, %v4984
        %v5188 = vpop.permute.xlu0 %5187
        %5191 = vset.pattern.permute.xlu0 0
        %5192 = vperm.xlu0 %5191, %v4985
        %v5193 = vpop.permute.xlu0 %5192
        %5196 = vset.pattern.permute.xlu0 0
        %5197 = vperm.xlu0 %5196, %v4986
        %v5198 = vpop.permute.xlu0 %5197
        %5201 = vset.pattern.permute.xlu0 0
        %5202 = vperm.xlu0 %5201, %v4987
        %v5203 = vpop.permute.xlu0 %5202
        %5206 = vset.pattern.permute.xlu0 0
        %5207 = vperm.xlu0 %5206, %v4988
        %v5208 = vpop.permute.xlu0 %5207
        %5211 = vset.pattern.permute.xlu0 0
        %5212 = vperm.xlu0 %5211, %v4989
        %v5213 = vpop.permute.xlu0 %5212
        %5216 = vset.pattern.permute.xlu0 0
        %5217 = vperm.xlu0 %5216, %v4990
        %v5218 = vpop.permute.xlu0 %5217
        %5221 = vset.pattern.permute.xlu0 0
        %5222 = vperm.xlu0 %5221, %v4991
        %v5223 = vpop.permute.xlu0 %5222
        %5226 = vset.pattern.permute.xlu0 0
        %5227 = vperm.xlu0 %5226, %v4992
        %v5228 = vpop.permute.xlu0 %5227
        %5231 = vset.pattern.permute.xlu0 0
        %5232 = vperm.xlu0 %5231, %v4993
        %v5233 = vpop.permute.xlu0 %5232
        %5236 = vset.pattern.permute.xlu0 0
        %5237 = vperm.xlu0 %5236, %v4994
        %v5238 = vpop.permute.xlu0 %5237
        %5241 = vset.pattern.permute.xlu0 0
        %5242 = vperm.xlu0 %5241, %v4995
        %v5243 = vpop.permute.xlu0 %5242
        %5246 = vset.pattern.permute.xlu0 0
        %5247 = vperm.xlu0 %5246, %v4996
        %v5248 = vpop.permute.xlu0 %5247
        %5251 = vset.pattern.permute.xlu0 0
        %5252 = vperm.xlu0 %5251, %v4997
        %v5253 = vpop.permute.xlu0 %5252
        %5256 = vset.pattern.permute.xlu0 0
        %5257 = vperm.xlu0 %5256, %v4998
        %v5258 = vpop.permute.xlu0 %5257
        %5261 = vset.pattern.permute.xlu0 0
        %5262 = vperm.xlu0 %5261, %v4999
        %v5263 = vpop.permute.xlu0 %5262
        %5266 = vset.pattern.permute.xlu0 0
        %5267 = vperm.xlu0 %5266, %v5000
        %v5268 = vpop.permute.xlu0 %5267
        %5271 = vset.pattern.permute.xlu0 0
        %5272 = vperm.xlu0 %5271, %v5001
        %v5273 = vpop.permute.xlu0 %5272
        %5276 = vset.pattern.permute.xlu0 0
        %5277 = vperm.xlu0 %5276, %v5002
        %v5278 = vpop.permute.xlu0 %5277
        %5281 = vset.pattern.permute.xlu0 0
        %5282 = vperm.xlu0 %5281, %v5003
        %v5283 = vpop.permute.xlu0 %5282
        %5286 = vset.pattern.permute.xlu0 0
        %5287 = vperm.xlu0 %5286, %v5004
        %v5288 = vpop.permute.xlu0 %5287
        %5291 = vset.pattern.permute.xlu0 0
        %5292 = vperm.xlu0 %5291, %v5005
        %v5293 = vpop.permute.xlu0 %5292
        %5296 = vset.pattern.permute.xlu0 0
        %5297 = vperm.xlu0 %5296, %v5006
        %v5298 = vpop.permute.xlu0 %5297
        %5301 = vset.pattern.permute.xlu0 0
        %5302 = vperm.xlu0 %5301, %v5007
        %v5303 = vpop.permute.xlu0 %5302
        %5306 = vset.pattern.permute.xlu0 0
        %5307 = vperm.xlu0 %5306, %v5008
        %v5308 = vpop.permute.xlu0 %5307
        %5311 = vset.pattern.permute.xlu0 0
        %5312 = vperm.xlu0 %5311, %v5009
        %v5313 = vpop.permute.xlu0 %5312
        %5316 = vset.pattern.permute.xlu0 0
        %5317 = vperm.xlu0 %5316, %v5010
        %v5318 = vpop.permute.xlu0 %5317
        %5321 = vset.pattern.permute.xlu0 0
        %5322 = vperm.xlu0 %5321, %v5011
        %v5323 = vpop.permute.xlu0 %5322
        %5326 = vset.pattern.permute.xlu0 0
        %5327 = vperm.xlu0 %5326, %v5012
        %v5328 = vpop.permute.xlu0 %5327
        %5331 = vset.pattern.permute.xlu0 0
        %5332 = vperm.xlu0 %5331, %v5013
        %v5333 = vpop.permute.xlu0 %5332
        %5336 = vset.pattern.permute.xlu0 0
        %5337 = vperm.xlu0 %5336, %v5014
        %v5338 = vpop.permute.xlu0 %5337
        %5341 = vset.pattern.permute.xlu0 0
        %5342 = vperm.xlu0 %5341, %v5015
        %v5343 = vpop.permute.xlu0 %5342
        %5346 = vset.pattern.permute.xlu0 0
        %5347 = vperm.xlu0 %5346, %v5016
        %v5348 = vpop.permute.xlu0 %5347
        %5351 = vset.pattern.permute.xlu0 0
        %5352 = vperm.xlu0 %5351, %v5017
        %v5353 = vpop.permute.xlu0 %5352
        %5356 = vset.pattern.permute.xlu0 0
        %5357 = vperm.xlu0 %5356, %v5018
        %v5358 = vpop.permute.xlu0 %5357
        %5361 = vset.pattern.permute.xlu0 0
        %5362 = vperm.xlu0 %5361, %v5019
        %v5363 = vpop.permute.xlu0 %5362
        %5366 = vset.pattern.permute.xlu0 0
        %5367 = vperm.xlu0 %5366, %v5020
        %v5368 = vpop.permute.xlu0 %5367
        %5371 = vset.pattern.permute.xlu0 0
        %5372 = vperm.xlu0 %5371, %v5021
        %v5373 = vpop.permute.xlu0 %5372
        %5376 = vset.pattern.permute.xlu0 0
        %5377 = vperm.xlu0 %5376, %v5022
        %v5378 = vpop.permute.xlu0 %5377
        %5381 = vset.pattern.permute.xlu0 0
        %5382 = vperm.xlu0 %5381, %v5023
        %v5383 = vpop.permute.xlu0 %5382
        %5386 = vset.pattern.permute.xlu0 0
        %5387 = vperm.xlu0 %5386, %v5024
        %v5388 = vpop.permute.xlu0 %5387
        %5391 = vset.pattern.permute.xlu0 0
        %5392 = vperm.xlu0 %5391, %v5025
        %v5393 = vpop.permute.xlu0 %5392
        %5396 = vset.pattern.permute.xlu0 0
        %5397 = vperm.xlu0 %5396, %v5026
        %v5398 = vpop.permute.xlu0 %5397
        %5401 = vset.pattern.permute.xlu0 0
        %5402 = vperm.xlu0 %5401, %v5027
        %v5403 = vpop.permute.xlu0 %5402
        %5406 = vset.pattern.permute.xlu0 0
        %5407 = vperm.xlu0 %5406, %v5028
        %v5408 = vpop.permute.xlu0 %5407
        %5411 = vset.pattern.permute.xlu0 0
        %5412 = vperm.xlu0 %5411, %v5029
        %v5413 = vpop.permute.xlu0 %5412
        %5416 = vset.pattern.permute.xlu0 0
        %5417 = vperm.xlu0 %5416, %v5030
        %v5418 = vpop.permute.xlu0 %5417
        %5421 = vset.pattern.permute.xlu0 0
        %5422 = vperm.xlu0 %5421, %v5031
        %v5423 = vpop.permute.xlu0 %5422
        %5426 = vset.pattern.permute.xlu0 0
        %5427 = vperm.xlu0 %5426, %v5032
        %v5428 = vpop.permute.xlu0 %5427
        %5431 = vset.pattern.permute.xlu0 0
        %5432 = vperm.xlu0 %5431, %v5033
        %v5433 = vpop.permute.xlu0 %5432
        %5436 = vset.pattern.permute.xlu0 0
        %5437 = vperm.xlu0 %5436, %v5034
        %v5438 = vpop.permute.xlu0 %5437
        %5441 = vset.pattern.permute.xlu0 0
        %5442 = vperm.xlu0 %5441, %v5035
        %v5443 = vpop.permute.xlu0 %5442
        %5446 = vset.pattern.permute.xlu0 0
        %5447 = vperm.xlu0 %5446, %v5036
        %v5448 = vpop.permute.xlu0 %5447
        %5451 = vset.pattern.permute.xlu0 0
        %5452 = vperm.xlu0 %5451, %v5037
        %v5453 = vpop.permute.xlu0 %5452
        %5456 = vset.pattern.permute.xlu0 0
        %5457 = vperm.xlu0 %5456, %v5038
        %v5458 = vpop.permute.xlu0 %5457
        %5461 = vset.pattern.permute.xlu0 0
        %5462 = vperm.xlu0 %5461, %v5039
        %v5463 = vpop.permute.xlu0 %5462
        %5466 = vset.pattern.permute.xlu0 0
        %5467 = vperm.xlu0 %5466, %v5040
        %v5468 = vpop.permute.xlu0 %5467
        %5471 = vset.pattern.permute.xlu0 0
        %5472 = vperm.xlu0 %5471, %v5041
        %v5473 = vpop.permute.xlu0 %5472
        %5476 = vset.pattern.permute.xlu0 0
        %5477 = vperm.xlu0 %5476, %v5042
        %v5478 = vpop.permute.xlu0 %5477
        %5481 = vset.pattern.permute.xlu0 0
        %5482 = vperm.xlu0 %5481, %v5043
        %v5483 = vpop.permute.xlu0 %5482
        %5486 = vset.pattern.permute.xlu0 0
        %5487 = vperm.xlu0 %5486, %v5044
        %v5488 = vpop.permute.xlu0 %5487
        %5491 = vset.pattern.permute.xlu0 0
        %5492 = vperm.xlu0 %5491, %v5045
        %v5493 = vpop.permute.xlu0 %5492
        %5496 = vset.pattern.permute.xlu0 0
        %5497 = vperm.xlu0 %5496, %v5046
        %v5498 = vpop.permute.xlu0 %5497
        %5501 = vset.pattern.permute.xlu0 0
        %5502 = vperm.xlu0 %5501, %v5047
        %v5503 = vpop.permute.xlu0 %5502
        %5506 = vset.pattern.permute.xlu0 0
        %5507 = vperm.xlu0 %5506, %v5048
        %v5508 = vpop.permute.xlu0 %5507
        %5511 = vset.pattern.permute.xlu0 0
        %5512 = vperm.xlu0 %5511, %v5049
        %v5513 = vpop.permute.xlu0 %5512
        %5516 = vset.pattern.permute.xlu0 0
        %5517 = vperm.xlu0 %5516, %v5050
        %v5518 = vpop.permute.xlu0 %5517
        %5521 = vset.pattern.permute.xlu0 0
        %5522 = vperm.xlu0 %5521, %v5051
        %v5523 = vpop.permute.xlu0 %5522
        %5526 = vset.pattern.permute.xlu0 0
        %5527 = vperm.xlu0 %5526, %v5052
        %v5528 = vpop.permute.xlu0 %5527
        %5531 = vset.pattern.permute.xlu0 0
        %5532 = vperm.xlu0 %5531, %v5053
        %v5533 = vpop.permute.xlu0 %5532
        %v5535 = vperm.slane %v5054, 0
        %v5536 = vmul.f32 %v5058, %v5535
        %v5537 = vmul.f32 %v5063, %v5535
        %v5538 = vmul.f32 %v5068, %v5535
        %v5539 = vmul.f32 %v5073, %v5535
        %v5540 = vmul.f32 %v5078, %v5535
        %v5541 = vmul.f32 %v5083, %v5535
        %v5542 = vmul.f32 %v5088, %v5535
        %v5543 = vmul.f32 %v5093, %v5535
        %v5544 = vmul.f32 %v5098, %v5535
        %v5545 = vmul.f32 %v5103, %v5535
        %v5546 = vmul.f32 %v5108, %v5535
        %v5547 = vmul.f32 %v5113, %v5535
        %v5548 = vmul.f32 %v5118, %v5535
        %v5549 = vmul.f32 %v5123, %v5535
        %v5550 = vmul.f32 %v5128, %v5535
        %v5551 = vmul.f32 %v5133, %v5535
        %v5552 = vmul.f32 %v5138, %v5535
        %v5553 = vmul.f32 %v5143, %v5535
        %v5554 = vmul.f32 %v5148, %v5535
        %v5555 = vmul.f32 %v5153, %v5535
        %v5556 = vmul.f32 %v5158, %v5535
        %v5557 = vmul.f32 %v5163, %v5535
        %v5558 = vmul.f32 %v5168, %v5535
        %v5559 = vmul.f32 %v5173, %v5535
        %v5560 = vmul.f32 %v5178, %v5535
        %v5561 = vmul.f32 %v5183, %v5535
        %v5562 = vmul.f32 %v5188, %v5535
        %v5563 = vmul.f32 %v5193, %v5535
        %v5564 = vmul.f32 %v5198, %v5535
        %v5565 = vmul.f32 %v5203, %v5535
        %v5566 = vmul.f32 %v5208, %v5535
        %v5567 = vmul.f32 %v5213, %v5535
        %v5568 = vmul.f32 %v5218, %v5535
        %v5569 = vmul.f32 %v5223, %v5535
        %v5570 = vmul.f32 %v5228, %v5535
        %v5571 = vmul.f32 %v5233, %v5535
        %v5572 = vmul.f32 %v5238, %v5535
        %v5573 = vmul.f32 %v5243, %v5535
        %v5574 = vmul.f32 %v5248, %v5535
        %v5575 = vmul.f32 %v5253, %v5535
        %v5576 = vmul.f32 %v5258, %v5535
        %v5577 = vmul.f32 %v5263, %v5535
        %v5578 = vmul.f32 %v5268, %v5535
        %v5579 = vmul.f32 %v5273, %v5535
        %v5580 = vmul.f32 %v5278, %v5535
        %v5581 = vmul.f32 %v5283, %v5535
        %v5582 = vmul.f32 %v5288, %v5535
        %v5583 = vmul.f32 %v5293, %v5535
        %v5584 = vmul.f32 %v5298, %v5535
        %v5585 = vmul.f32 %v5303, %v5535
        %v5586 = vmul.f32 %v5308, %v5535
        %v5587 = vmul.f32 %v5313, %v5535
        %v5588 = vmul.f32 %v5318, %v5535
        %v5589 = vmul.f32 %v5323, %v5535
        %v5590 = vmul.f32 %v5328, %v5535
        %v5591 = vmul.f32 %v5333, %v5535
        %v5592 = vmul.f32 %v5338, %v5535
        %v5593 = vmul.f32 %v5343, %v5535
        %v5594 = vmul.f32 %v5348, %v5535
        %v5595 = vmul.f32 %v5353, %v5535
        %v5596 = vmul.f32 %v5358, %v5535
        %v5597 = vmul.f32 %v5363, %v5535
        %v5598 = vmul.f32 %v5368, %v5535
        %v5599 = vmul.f32 %v5373, %v5535
        %v5600 = vmul.f32 %v5378, %v5535
        %v5601 = vmul.f32 %v5383, %v5535
        %v5602 = vmul.f32 %v5388, %v5535
        %v5603 = vmul.f32 %v5393, %v5535
        %v5604 = vmul.f32 %v5398, %v5535
        %v5605 = vmul.f32 %v5403, %v5535
        %v5606 = vmul.f32 %v5408, %v5535
        %v5607 = vmul.f32 %v5413, %v5535
        %v5608 = vmul.f32 %v5418, %v5535
        %v5609 = vmul.f32 %v5423, %v5535
        %v5610 = vmul.f32 %v5428, %v5535
        %v5611 = vmul.f32 %v5433, %v5535
        %v5612 = vmul.f32 %v5438, %v5535
        %v5613 = vmul.f32 %v5443, %v5535
        %v5614 = vmul.f32 %v5448, %v5535
        %v5615 = vmul.f32 %v5453, %v5535
        %v5616 = vmul.f32 %v5458, %v5535
        %v5617 = vmul.f32 %v5463, %v5535
        %v5618 = vmul.f32 %v5468, %v5535
        %v5619 = vmul.f32 %v5473, %v5535
        %v5620 = vmul.f32 %v5478, %v5535
        %v5621 = vmul.f32 %v5483, %v5535
        %v5622 = vmul.f32 %v5488, %v5535
        %v5623 = vmul.f32 %v5493, %v5535
        %v5624 = vmul.f32 %v5498, %v5535
        %v5625 = vmul.f32 %v5503, %v5535
        %v5626 = vmul.f32 %v5508, %v5535
        %v5627 = vmul.f32 %v5513, %v5535
        %v5628 = vmul.f32 %v5518, %v5535
        %v5629 = vmul.f32 %v5523, %v5535
        %v5630 = vmul.f32 %v5528, %v5535
        %v5631 = vmul.f32 %v5533, %v5535
        %v5632 = vadd.f32 %v4862, %v5536
        %v5633 = vadd.f32 %v4863, %v5537
        %v5634 = vadd.f32 %v4864, %v5538
        %v5635 = vadd.f32 %v4865, %v5539
        %v5636 = vadd.f32 %v4866, %v5540
        %v5637 = vadd.f32 %v4867, %v5541
        %v5638 = vadd.f32 %v4868, %v5542
        %v5639 = vadd.f32 %v4869, %v5543
        %v5640 = vadd.f32 %v4870, %v5544
        %v5641 = vadd.f32 %v4871, %v5545
        %v5642 = vadd.f32 %v4872, %v5546
        %v5643 = vadd.f32 %v4873, %v5547
        %v5644 = vadd.f32 %v4874, %v5548
        %v5645 = vadd.f32 %v4875, %v5549
        %v5646 = vadd.f32 %v4876, %v5550
        %v5647 = vadd.f32 %v4877, %v5551
        %v5648 = vadd.f32 %v4878, %v5552
        %v5649 = vadd.f32 %v4879, %v5553
        %v5650 = vadd.f32 %v4880, %v5554
        %v5651 = vadd.f32 %v4881, %v5555
        %v5652 = vadd.f32 %v4882, %v5556
        %v5653 = vadd.f32 %v4883, %v5557
        %v5654 = vadd.f32 %v4884, %v5558
        %v5655 = vadd.f32 %v4885, %v5559
        %v5656 = vadd.f32 %v4886, %v5560
        %v5657 = vadd.f32 %v4887, %v5561
        %v5658 = vadd.f32 %v4888, %v5562
        %v5659 = vadd.f32 %v4889, %v5563
        %v5660 = vadd.f32 %v4890, %v5564
        %v5661 = vadd.f32 %v4891, %v5565
        %v5662 = vadd.f32 %v4892, %v5566
        %v5663 = vadd.f32 %v4893, %v5567
        %v5664 = vadd.f32 %v4894, %v5568
        %v5665 = vadd.f32 %v4895, %v5569
        %v5666 = vadd.f32 %v4896, %v5570
        %v5667 = vadd.f32 %v4897, %v5571
        %v5668 = vadd.f32 %v4898, %v5572
        %v5669 = vadd.f32 %v4899, %v5573
        %v5670 = vadd.f32 %v4900, %v5574
        %v5671 = vadd.f32 %v4901, %v5575
        %v5672 = vadd.f32 %v4902, %v5576
        %v5673 = vadd.f32 %v4903, %v5577
        %v5674 = vadd.f32 %v4904, %v5578
        %v5675 = vadd.f32 %v4905, %v5579
        %v5676 = vadd.f32 %v4906, %v5580
        %v5677 = vadd.f32 %v4907, %v5581
        %v5678 = vadd.f32 %v4908, %v5582
        %v5679 = vadd.f32 %v4909, %v5583
        %v5680 = vadd.f32 %v4910, %v5584
        %v5681 = vadd.f32 %v4911, %v5585
        %v5682 = vadd.f32 %v4912, %v5586
        %v5683 = vadd.f32 %v4913, %v5587
        %v5684 = vadd.f32 %v4914, %v5588
        %v5685 = vadd.f32 %v4915, %v5589
        %v5686 = vadd.f32 %v4916, %v5590
        %v5687 = vadd.f32 %v4917, %v5591
        %v5688 = vadd.f32 %v4918, %v5592
        %v5689 = vadd.f32 %v4919, %v5593
        %v5690 = vadd.f32 %v4920, %v5594
        %v5691 = vadd.f32 %v4921, %v5595
        %v5692 = vadd.f32 %v4922, %v5596
        %v5693 = vadd.f32 %v4923, %v5597
        %v5694 = vadd.f32 %v4924, %v5598
        %v5695 = vadd.f32 %v4925, %v5599
        %v5696 = vadd.f32 %v4926, %v5600
        %v5697 = vadd.f32 %v4927, %v5601
        %v5698 = vadd.f32 %v4928, %v5602
        %v5699 = vadd.f32 %v4929, %v5603
        %v5700 = vadd.f32 %v4930, %v5604
        %v5701 = vadd.f32 %v4931, %v5605
        %v5702 = vadd.f32 %v4932, %v5606
        %v5703 = vadd.f32 %v4933, %v5607
        %v5704 = vadd.f32 %v4934, %v5608
        %v5705 = vadd.f32 %v4935, %v5609
        %v5706 = vadd.f32 %v4936, %v5610
        %v5707 = vadd.f32 %v4937, %v5611
        %v5708 = vadd.f32 %v4938, %v5612
        %v5709 = vadd.f32 %v4939, %v5613
        %v5710 = vadd.f32 %v4940, %v5614
        %v5711 = vadd.f32 %v4941, %v5615
        %v5712 = vadd.f32 %v4942, %v5616
        %v5713 = vadd.f32 %v4943, %v5617
        %v5714 = vadd.f32 %v4944, %v5618
        %v5715 = vadd.f32 %v4945, %v5619
        %v5716 = vadd.f32 %v4946, %v5620
        %v5717 = vadd.f32 %v4947, %v5621
        %v5718 = vadd.f32 %v4948, %v5622
        %v5719 = vadd.f32 %v4949, %v5623
        %v5720 = vadd.f32 %v4950, %v5624
        %v5721 = vadd.f32 %v4951, %v5625
        %v5722 = vadd.f32 %v4952, %v5626
        %v5723 = vadd.f32 %v4953, %v5627
        %v5724 = vadd.f32 %v4954, %v5628
        %v5725 = vadd.f32 %v4955, %v5629
        %v5726 = vadd.f32 %v4956, %v5630
        %v5727 = vadd.f32 %v4957, %v5631
        %v5728 = vld [vmem:[%s384 + $0x41] sm:$0xff]
        %v5729 = vld [vmem:[%s384 + $0x49] sm:$0xff]
        %v5730 = vld [vmem:[%s384 + $0x51] sm:$0xff]
        %v5731 = vld [vmem:[%s384 + $0x59] sm:$0xff]
        %v5732 = vld [vmem:[%s384 + $0x61] sm:$0xff]
        %v5733 = vld [vmem:[%s384 + $0x69] sm:$0xff]
        %v5734 = vld [vmem:[%s384 + $0x71] sm:$0xff]
        %v5735 = vld [vmem:[%s384 + $0x79] sm:$0xff]
        %v5736 = vld [vmem:[%s384 + $0x81] sm:$0xff]
        %v5737 = vld [vmem:[%s384 + $0x89] sm:$0xff]
        %v5738 = vld [vmem:[%s384 + $0x91] sm:$0xff]
        %v5739 = vld [vmem:[%s384 + $0x99] sm:$0xff]
        %v5740 = vld [vmem:[%s384 + $0xa1] sm:$0xff]
        %v5741 = vld [vmem:[%s384 + $0xa9] sm:$0xff]
        %v5742 = vld [vmem:[%s384 + $0xb1] sm:$0xff]
        %v5743 = vld [vmem:[%s384 + $0xb9] sm:$0xff]
        %v5744 = vld [vmem:[%s384 + $0xc1] sm:$0xff]
        %v5745 = vld [vmem:[%s384 + $0xc9] sm:$0xff]
        %v5746 = vld [vmem:[%s384 + $0xd1] sm:$0xff]
        %v5747 = vld [vmem:[%s384 + $0xd9] sm:$0xff]
        %v5748 = vld [vmem:[%s384 + $0xe1] sm:$0xff]
        %v5749 = vld [vmem:[%s384 + $0xe9] sm:$0xff]
        %v5750 = vld [vmem:[%s384 + $0xf1] sm:$0xff]
        %v5751 = vld [vmem:[%s384 + $0xf9] sm:$0xff]
        %v5752 = vld [vmem:[%s384 + $0x101] sm:$0xff]
        %v5753 = vld [vmem:[%s384 + $0x109] sm:$0xff]
        %v5754 = vld [vmem:[%s384 + $0x111] sm:$0xff]
        %v5755 = vld [vmem:[%s384 + $0x119] sm:$0xff]
        %v5756 = vld [vmem:[%s384 + $0x121] sm:$0xff]
        %v5757 = vld [vmem:[%s384 + $0x129] sm:$0xff]
        %v5758 = vld [vmem:[%s384 + $0x131] sm:$0xff]
        %v5759 = vld [vmem:[%s384 + $0x139] sm:$0xff]
        %v5760 = vld [vmem:[%s384 + $0x141] sm:$0xff]
        %v5761 = vld [vmem:[%s384 + $0x149] sm:$0xff]
        %v5762 = vld [vmem:[%s384 + $0x151] sm:$0xff]
        %v5763 = vld [vmem:[%s384 + $0x159] sm:$0xff]
        %v5764 = vld [vmem:[%s384 + $0x161] sm:$0xff]
        %v5765 = vld [vmem:[%s384 + $0x169] sm:$0xff]
        %v5766 = vld [vmem:[%s384 + $0x171] sm:$0xff]
        %v5767 = vld [vmem:[%s384 + $0x179] sm:$0xff]
        %v5768 = vld [vmem:[%s384 + $0x181] sm:$0xff]
        %v5769 = vld [vmem:[%s384 + $0x189] sm:$0xff]
        %v5770 = vld [vmem:[%s384 + $0x191] sm:$0xff]
        %v5771 = vld [vmem:[%s384 + $0x199] sm:$0xff]
        %v5772 = vld [vmem:[%s384 + $0x1a1] sm:$0xff]
        %v5773 = vld [vmem:[%s384 + $0x1a9] sm:$0xff]
        %v5774 = vld [vmem:[%s384 + $0x1b1] sm:$0xff]
        %v5775 = vld [vmem:[%s384 + $0x1b9] sm:$0xff]
        %v5776 = vld [vmem:[%s384 + $0x1c1] sm:$0xff]
        %v5777 = vld [vmem:[%s384 + $0x1c9] sm:$0xff]
        %v5778 = vld [vmem:[%s384 + $0x1d1] sm:$0xff]
        %v5779 = vld [vmem:[%s384 + $0x1d9] sm:$0xff]
        %v5780 = vld [vmem:[%s384 + $0x1e1] sm:$0xff]
        %v5781 = vld [vmem:[%s384 + $0x1e9] sm:$0xff]
        %v5782 = vld [vmem:[%s384 + $0x1f1] sm:$0xff]
        %v5783 = vld [vmem:[%s384 + $0x1f9] sm:$0xff]
        %v5784 = vld [vmem:[%s384 + $0x201] sm:$0xff]
        %v5785 = vld [vmem:[%s384 + $0x209] sm:$0xff]
        %v5786 = vld [vmem:[%s384 + $0x211] sm:$0xff]
        %v5787 = vld [vmem:[%s384 + $0x219] sm:$0xff]
        %v5788 = vld [vmem:[%s384 + $0x221] sm:$0xff]
        %v5789 = vld [vmem:[%s384 + $0x229] sm:$0xff]
        %v5790 = vld [vmem:[%s384 + $0x231] sm:$0xff]
        %v5791 = vld [vmem:[%s384 + $0x239] sm:$0xff]
        %v5792 = vld [vmem:[%s384 + $0x241] sm:$0xff]
        %v5793 = vld [vmem:[%s384 + $0x249] sm:$0xff]
        %v5794 = vld [vmem:[%s384 + $0x251] sm:$0xff]
        %v5795 = vld [vmem:[%s384 + $0x259] sm:$0xff]
        %v5796 = vld [vmem:[%s384 + $0x261] sm:$0xff]
        %v5797 = vld [vmem:[%s384 + $0x269] sm:$0xff]
        %v5798 = vld [vmem:[%s384 + $0x271] sm:$0xff]
        %v5799 = vld [vmem:[%s384 + $0x279] sm:$0xff]
        %v5800 = vld [vmem:[%s384 + $0x281] sm:$0xff]
        %v5801 = vld [vmem:[%s384 + $0x289] sm:$0xff]
        %v5802 = vld [vmem:[%s384 + $0x291] sm:$0xff]
        %v5803 = vld [vmem:[%s384 + $0x299] sm:$0xff]
        %v5804 = vld [vmem:[%s384 + $0x2a1] sm:$0xff]
        %v5805 = vld [vmem:[%s384 + $0x2a9] sm:$0xff]
        %v5806 = vld [vmem:[%s384 + $0x2b1] sm:$0xff]
        %v5807 = vld [vmem:[%s384 + $0x2b9] sm:$0xff]
        %v5808 = vld [vmem:[%s384 + $0x2c1] sm:$0xff]
        %v5809 = vld [vmem:[%s384 + $0x2c9] sm:$0xff]
        %v5810 = vld [vmem:[%s384 + $0x2d1] sm:$0xff]
        %v5811 = vld [vmem:[%s384 + $0x2d9] sm:$0xff]
        %v5812 = vld [vmem:[%s384 + $0x2e1] sm:$0xff]
        %v5813 = vld [vmem:[%s384 + $0x2e9] sm:$0xff]
        %v5814 = vld [vmem:[%s384 + $0x2f1] sm:$0xff]
        %v5815 = vld [vmem:[%s384 + $0x2f9] sm:$0xff]
        %v5816 = vld [vmem:[%s384 + $0x301] sm:$0xff]
        %v5817 = vld [vmem:[%s384 + $0x309] sm:$0xff]
        %v5818 = vld [vmem:[%s384 + $0x311] sm:$0xff]
        %v5819 = vld [vmem:[%s384 + $0x319] sm:$0xff]
        %v5820 = vld [vmem:[%s384 + $0x321] sm:$0xff]
        %v5821 = vld [vmem:[%s384 + $0x329] sm:$0xff]
        %v5822 = vld [vmem:[%s384 + $0x331] sm:$0xff]
        %v5823 = vld [vmem:[%s384 + $0x339] sm:$0x3f]
        %v5824 = vld [vmem:[%s1 + $0x7] sm:$0x1]
        %5826 = vset.pattern.permute.xlu0 0
        %5827 = vperm.xlu0 %5826, %v5728
        %v5828 = vpop.permute.xlu0 %5827
        %5831 = vset.pattern.permute.xlu0 0
        %5832 = vperm.xlu0 %5831, %v5729
        %v5833 = vpop.permute.xlu0 %5832
        %5836 = vset.pattern.permute.xlu0 0
        %5837 = vperm.xlu0 %5836, %v5730
        %v5838 = vpop.permute.xlu0 %5837
        %5841 = vset.pattern.permute.xlu0 0
        %5842 = vperm.xlu0 %5841, %v5731
        %v5843 = vpop.permute.xlu0 %5842
        %5846 = vset.pattern.permute.xlu0 0
        %5847 = vperm.xlu0 %5846, %v5732
        %v5848 = vpop.permute.xlu0 %5847
        %5851 = vset.pattern.permute.xlu0 0
        %5852 = vperm.xlu0 %5851, %v5733
        %v5853 = vpop.permute.xlu0 %5852
        %5856 = vset.pattern.permute.xlu0 0
        %5857 = vperm.xlu0 %5856, %v5734
        %v5858 = vpop.permute.xlu0 %5857
        %5861 = vset.pattern.permute.xlu0 0
        %5862 = vperm.xlu0 %5861, %v5735
        %v5863 = vpop.permute.xlu0 %5862
        %5866 = vset.pattern.permute.xlu0 0
        %5867 = vperm.xlu0 %5866, %v5736
        %v5868 = vpop.permute.xlu0 %5867
        %5871 = vset.pattern.permute.xlu0 0
        %5872 = vperm.xlu0 %5871, %v5737
        %v5873 = vpop.permute.xlu0 %5872
        %5876 = vset.pattern.permute.xlu0 0
        %5877 = vperm.xlu0 %5876, %v5738
        %v5878 = vpop.permute.xlu0 %5877
        %5881 = vset.pattern.permute.xlu0 0
        %5882 = vperm.xlu0 %5881, %v5739
        %v5883 = vpop.permute.xlu0 %5882
        %5886 = vset.pattern.permute.xlu0 0
        %5887 = vperm.xlu0 %5886, %v5740
        %v5888 = vpop.permute.xlu0 %5887
        %5891 = vset.pattern.permute.xlu0 0
        %5892 = vperm.xlu0 %5891, %v5741
        %v5893 = vpop.permute.xlu0 %5892
        %5896 = vset.pattern.permute.xlu0 0
        %5897 = vperm.xlu0 %5896, %v5742
        %v5898 = vpop.permute.xlu0 %5897
        %5901 = vset.pattern.permute.xlu0 0
        %5902 = vperm.xlu0 %5901, %v5743
        %v5903 = vpop.permute.xlu0 %5902
        %5906 = vset.pattern.permute.xlu0 0
        %5907 = vperm.xlu0 %5906, %v5744
        %v5908 = vpop.permute.xlu0 %5907
        %5911 = vset.pattern.permute.xlu0 0
        %5912 = vperm.xlu0 %5911, %v5745
        %v5913 = vpop.permute.xlu0 %5912
        %5916 = vset.pattern.permute.xlu0 0
        %5917 = vperm.xlu0 %5916, %v5746
        %v5918 = vpop.permute.xlu0 %5917
        %5921 = vset.pattern.permute.xlu0 0
        %5922 = vperm.xlu0 %5921, %v5747
        %v5923 = vpop.permute.xlu0 %5922
        %5926 = vset.pattern.permute.xlu0 0
        %5927 = vperm.xlu0 %5926, %v5748
        %v5928 = vpop.permute.xlu0 %5927
        %5931 = vset.pattern.permute.xlu0 0
        %5932 = vperm.xlu0 %5931, %v5749
        %v5933 = vpop.permute.xlu0 %5932
        %5936 = vset.pattern.permute.xlu0 0
        %5937 = vperm.xlu0 %5936, %v5750
        %v5938 = vpop.permute.xlu0 %5937
        %5941 = vset.pattern.permute.xlu0 0
        %5942 = vperm.xlu0 %5941, %v5751
        %v5943 = vpop.permute.xlu0 %5942
        %5946 = vset.pattern.permute.xlu0 0
        %5947 = vperm.xlu0 %5946, %v5752
        %v5948 = vpop.permute.xlu0 %5947
        %5951 = vset.pattern.permute.xlu0 0
        %5952 = vperm.xlu0 %5951, %v5753
        %v5953 = vpop.permute.xlu0 %5952
        %5956 = vset.pattern.permute.xlu0 0
        %5957 = vperm.xlu0 %5956, %v5754
        %v5958 = vpop.permute.xlu0 %5957
        %5961 = vset.pattern.permute.xlu0 0
        %5962 = vperm.xlu0 %5961, %v5755
        %v5963 = vpop.permute.xlu0 %5962
        %5966 = vset.pattern.permute.xlu0 0
        %5967 = vperm.xlu0 %5966, %v5756
        %v5968 = vpop.permute.xlu0 %5967
        %5971 = vset.pattern.permute.xlu0 0
        %5972 = vperm.xlu0 %5971, %v5757
        %v5973 = vpop.permute.xlu0 %5972
        %5976 = vset.pattern.permute.xlu0 0
        %5977 = vperm.xlu0 %5976, %v5758
        %v5978 = vpop.permute.xlu0 %5977
        %5981 = vset.pattern.permute.xlu0 0
        %5982 = vperm.xlu0 %5981, %v5759
        %v5983 = vpop.permute.xlu0 %5982
        %5986 = vset.pattern.permute.xlu0 0
        %5987 = vperm.xlu0 %5986, %v5760
        %v5988 = vpop.permute.xlu0 %5987
        %5991 = vset.pattern.permute.xlu0 0
        %5992 = vperm.xlu0 %5991, %v5761
        %v5993 = vpop.permute.xlu0 %5992
        %5996 = vset.pattern.permute.xlu0 0
        %5997 = vperm.xlu0 %5996, %v5762
        %v5998 = vpop.permute.xlu0 %5997
        %6001 = vset.pattern.permute.xlu0 0
        %6002 = vperm.xlu0 %6001, %v5763
        %v6003 = vpop.permute.xlu0 %6002
        %6006 = vset.pattern.permute.xlu0 0
        %6007 = vperm.xlu0 %6006, %v5764
        %v6008 = vpop.permute.xlu0 %6007
        %6011 = vset.pattern.permute.xlu0 0
        %6012 = vperm.xlu0 %6011, %v5765
        %v6013 = vpop.permute.xlu0 %6012
        %6016 = vset.pattern.permute.xlu0 0
        %6017 = vperm.xlu0 %6016, %v5766
        %v6018 = vpop.permute.xlu0 %6017
        %6021 = vset.pattern.permute.xlu0 0
        %6022 = vperm.xlu0 %6021, %v5767
        %v6023 = vpop.permute.xlu0 %6022
        %6026 = vset.pattern.permute.xlu0 0
        %6027 = vperm.xlu0 %6026, %v5768
        %v6028 = vpop.permute.xlu0 %6027
        %6031 = vset.pattern.permute.xlu0 0
        %6032 = vperm.xlu0 %6031, %v5769
        %v6033 = vpop.permute.xlu0 %6032
        %6036 = vset.pattern.permute.xlu0 0
        %6037 = vperm.xlu0 %6036, %v5770
        %v6038 = vpop.permute.xlu0 %6037
        %6041 = vset.pattern.permute.xlu0 0
        %6042 = vperm.xlu0 %6041, %v5771
        %v6043 = vpop.permute.xlu0 %6042
        %6046 = vset.pattern.permute.xlu0 0
        %6047 = vperm.xlu0 %6046, %v5772
        %v6048 = vpop.permute.xlu0 %6047
        %6051 = vset.pattern.permute.xlu0 0
        %6052 = vperm.xlu0 %6051, %v5773
        %v6053 = vpop.permute.xlu0 %6052
        %6056 = vset.pattern.permute.xlu0 0
        %6057 = vperm.xlu0 %6056, %v5774
        %v6058 = vpop.permute.xlu0 %6057
        %6061 = vset.pattern.permute.xlu0 0
        %6062 = vperm.xlu0 %6061, %v5775
        %v6063 = vpop.permute.xlu0 %6062
        %6066 = vset.pattern.permute.xlu0 0
        %6067 = vperm.xlu0 %6066, %v5776
        %v6068 = vpop.permute.xlu0 %6067
        %6071 = vset.pattern.permute.xlu0 0
        %6072 = vperm.xlu0 %6071, %v5777
        %v6073 = vpop.permute.xlu0 %6072
        %6076 = vset.pattern.permute.xlu0 0
        %6077 = vperm.xlu0 %6076, %v5778
        %v6078 = vpop.permute.xlu0 %6077
        %6081 = vset.pattern.permute.xlu0 0
        %6082 = vperm.xlu0 %6081, %v5779
        %v6083 = vpop.permute.xlu0 %6082
        %6086 = vset.pattern.permute.xlu0 0
        %6087 = vperm.xlu0 %6086, %v5780
        %v6088 = vpop.permute.xlu0 %6087
        %6091 = vset.pattern.permute.xlu0 0
        %6092 = vperm.xlu0 %6091, %v5781
        %v6093 = vpop.permute.xlu0 %6092
        %6096 = vset.pattern.permute.xlu0 0
        %6097 = vperm.xlu0 %6096, %v5782
        %v6098 = vpop.permute.xlu0 %6097
        %6101 = vset.pattern.permute.xlu0 0
        %6102 = vperm.xlu0 %6101, %v5783
        %v6103 = vpop.permute.xlu0 %6102
        %6106 = vset.pattern.permute.xlu0 0
        %6107 = vperm.xlu0 %6106, %v5784
        %v6108 = vpop.permute.xlu0 %6107
        %6111 = vset.pattern.permute.xlu0 0
        %6112 = vperm.xlu0 %6111, %v5785
        %v6113 = vpop.permute.xlu0 %6112
        %6116 = vset.pattern.permute.xlu0 0
        %6117 = vperm.xlu0 %6116, %v5786
        %v6118 = vpop.permute.xlu0 %6117
        %6121 = vset.pattern.permute.xlu0 0
        %6122 = vperm.xlu0 %6121, %v5787
        %v6123 = vpop.permute.xlu0 %6122
        %6126 = vset.pattern.permute.xlu0 0
        %6127 = vperm.xlu0 %6126, %v5788
        %v6128 = vpop.permute.xlu0 %6127
        %6131 = vset.pattern.permute.xlu0 0
        %6132 = vperm.xlu0 %6131, %v5789
        %v6133 = vpop.permute.xlu0 %6132
        %6136 = vset.pattern.permute.xlu0 0
        %6137 = vperm.xlu0 %6136, %v5790
        %v6138 = vpop.permute.xlu0 %6137
        %6141 = vset.pattern.permute.xlu0 0
        %6142 = vperm.xlu0 %6141, %v5791
        %v6143 = vpop.permute.xlu0 %6142
        %6146 = vset.pattern.permute.xlu0 0
        %6147 = vperm.xlu0 %6146, %v5792
        %v6148 = vpop.permute.xlu0 %6147
        %6151 = vset.pattern.permute.xlu0 0
        %6152 = vperm.xlu0 %6151, %v5793
        %v6153 = vpop.permute.xlu0 %6152
        %6156 = vset.pattern.permute.xlu0 0
        %6157 = vperm.xlu0 %6156, %v5794
        %v6158 = vpop.permute.xlu0 %6157
        %6161 = vset.pattern.permute.xlu0 0
        %6162 = vperm.xlu0 %6161, %v5795
        %v6163 = vpop.permute.xlu0 %6162
        %6166 = vset.pattern.permute.xlu0 0
        %6167 = vperm.xlu0 %6166, %v5796
        %v6168 = vpop.permute.xlu0 %6167
        %6171 = vset.pattern.permute.xlu0 0
        %6172 = vperm.xlu0 %6171, %v5797
        %v6173 = vpop.permute.xlu0 %6172
        %6176 = vset.pattern.permute.xlu0 0
        %6177 = vperm.xlu0 %6176, %v5798
        %v6178 = vpop.permute.xlu0 %6177
        %6181 = vset.pattern.permute.xlu0 0
        %6182 = vperm.xlu0 %6181, %v5799
        %v6183 = vpop.permute.xlu0 %6182
        %6186 = vset.pattern.permute.xlu0 0
        %6187 = vperm.xlu0 %6186, %v5800
        %v6188 = vpop.permute.xlu0 %6187
        %6191 = vset.pattern.permute.xlu0 0
        %6192 = vperm.xlu0 %6191, %v5801
        %v6193 = vpop.permute.xlu0 %6192
        %6196 = vset.pattern.permute.xlu0 0
        %6197 = vperm.xlu0 %6196, %v5802
        %v6198 = vpop.permute.xlu0 %6197
        %6201 = vset.pattern.permute.xlu0 0
        %6202 = vperm.xlu0 %6201, %v5803
        %v6203 = vpop.permute.xlu0 %6202
        %6206 = vset.pattern.permute.xlu0 0
        %6207 = vperm.xlu0 %6206, %v5804
        %v6208 = vpop.permute.xlu0 %6207
        %6211 = vset.pattern.permute.xlu0 0
        %6212 = vperm.xlu0 %6211, %v5805
        %v6213 = vpop.permute.xlu0 %6212
        %6216 = vset.pattern.permute.xlu0 0
        %6217 = vperm.xlu0 %6216, %v5806
        %v6218 = vpop.permute.xlu0 %6217
        %6221 = vset.pattern.permute.xlu0 0
        %6222 = vperm.xlu0 %6221, %v5807
        %v6223 = vpop.permute.xlu0 %6222
        %6226 = vset.pattern.permute.xlu0 0
        %6227 = vperm.xlu0 %6226, %v5808
        %v6228 = vpop.permute.xlu0 %6227
        %6231 = vset.pattern.permute.xlu0 0
        %6232 = vperm.xlu0 %6231, %v5809
        %v6233 = vpop.permute.xlu0 %6232
        %6236 = vset.pattern.permute.xlu0 0
        %6237 = vperm.xlu0 %6236, %v5810
        %v6238 = vpop.permute.xlu0 %6237
        %6241 = vset.pattern.permute.xlu0 0
        %6242 = vperm.xlu0 %6241, %v5811
        %v6243 = vpop.permute.xlu0 %6242
        %6246 = vset.pattern.permute.xlu0 0
        %6247 = vperm.xlu0 %6246, %v5812
        %v6248 = vpop.permute.xlu0 %6247
        %6251 = vset.pattern.permute.xlu0 0
        %6252 = vperm.xlu0 %6251, %v5813
        %v6253 = vpop.permute.xlu0 %6252
        %6256 = vset.pattern.permute.xlu0 0
        %6257 = vperm.xlu0 %6256, %v5814
        %v6258 = vpop.permute.xlu0 %6257
        %6261 = vset.pattern.permute.xlu0 0
        %6262 = vperm.xlu0 %6261, %v5815
        %v6263 = vpop.permute.xlu0 %6262
        %6266 = vset.pattern.permute.xlu0 0
        %6267 = vperm.xlu0 %6266, %v5816
        %v6268 = vpop.permute.xlu0 %6267
        %6271 = vset.pattern.permute.xlu0 0
        %6272 = vperm.xlu0 %6271, %v5817
        %v6273 = vpop.permute.xlu0 %6272
        %6276 = vset.pattern.permute.xlu0 0
        %6277 = vperm.xlu0 %6276, %v5818
        %v6278 = vpop.permute.xlu0 %6277
        %6281 = vset.pattern.permute.xlu0 0
        %6282 = vperm.xlu0 %6281, %v5819
        %v6283 = vpop.permute.xlu0 %6282
        %6286 = vset.pattern.permute.xlu0 0
        %6287 = vperm.xlu0 %6286, %v5820
        %v6288 = vpop.permute.xlu0 %6287
        %6291 = vset.pattern.permute.xlu0 0
        %6292 = vperm.xlu0 %6291, %v5821
        %v6293 = vpop.permute.xlu0 %6292
        %6296 = vset.pattern.permute.xlu0 0
        %6297 = vperm.xlu0 %6296, %v5822
        %v6298 = vpop.permute.xlu0 %6297
        %6301 = vset.pattern.permute.xlu0 0
        %6302 = vperm.xlu0 %6301, %v5823
        %v6303 = vpop.permute.xlu0 %6302
        %v6305 = vperm.slane %v5824, 0
        %v6306 = vmul.f32 %v5828, %v6305
        %v6307 = vmul.f32 %v5833, %v6305
        %v6308 = vmul.f32 %v5838, %v6305
        %v6309 = vmul.f32 %v5843, %v6305
        %v6310 = vmul.f32 %v5848, %v6305
        %v6311 = vmul.f32 %v5853, %v6305
        %v6312 = vmul.f32 %v5858, %v6305
        %v6313 = vmul.f32 %v5863, %v6305
        %v6314 = vmul.f32 %v5868, %v6305
        %v6315 = vmul.f32 %v5873, %v6305
        %v6316 = vmul.f32 %v5878, %v6305
        %v6317 = vmul.f32 %v5883, %v6305
        %v6318 = vmul.f32 %v5888, %v6305
        %v6319 = vmul.f32 %v5893, %v6305
        %v6320 = vmul.f32 %v5898, %v6305
        %v6321 = vmul.f32 %v5903, %v6305
        %v6322 = vmul.f32 %v5908, %v6305
        %v6323 = vmul.f32 %v5913, %v6305
        %v6324 = vmul.f32 %v5918, %v6305
        %v6325 = vmul.f32 %v5923, %v6305
        %v6326 = vmul.f32 %v5928, %v6305
        %v6327 = vmul.f32 %v5933, %v6305
        %v6328 = vmul.f32 %v5938, %v6305
        %v6329 = vmul.f32 %v5943, %v6305
        %v6330 = vmul.f32 %v5948, %v6305
        %v6331 = vmul.f32 %v5953, %v6305
        %v6332 = vmul.f32 %v5958, %v6305
        %v6333 = vmul.f32 %v5963, %v6305
        %v6334 = vmul.f32 %v5968, %v6305
        %v6335 = vmul.f32 %v5973, %v6305
        %v6336 = vmul.f32 %v5978, %v6305
        %v6337 = vmul.f32 %v5983, %v6305
        %v6338 = vmul.f32 %v5988, %v6305
        %v6339 = vmul.f32 %v5993, %v6305
        %v6340 = vmul.f32 %v5998, %v6305
        %v6341 = vmul.f32 %v6003, %v6305
        %v6342 = vmul.f32 %v6008, %v6305
        %v6343 = vmul.f32 %v6013, %v6305
        %v6344 = vmul.f32 %v6018, %v6305
        %v6345 = vmul.f32 %v6023, %v6305
        %v6346 = vmul.f32 %v6028, %v6305
        %v6347 = vmul.f32 %v6033, %v6305
        %v6348 = vmul.f32 %v6038, %v6305
        %v6349 = vmul.f32 %v6043, %v6305
        %v6350 = vmul.f32 %v6048, %v6305
        %v6351 = vmul.f32 %v6053, %v6305
        %v6352 = vmul.f32 %v6058, %v6305
        %v6353 = vmul.f32 %v6063, %v6305
        %v6354 = vmul.f32 %v6068, %v6305
        %v6355 = vmul.f32 %v6073, %v6305
        %v6356 = vmul.f32 %v6078, %v6305
        %v6357 = vmul.f32 %v6083, %v6305
        %v6358 = vmul.f32 %v6088, %v6305
        %v6359 = vmul.f32 %v6093, %v6305
        %v6360 = vmul.f32 %v6098, %v6305
        %v6361 = vmul.f32 %v6103, %v6305
        %v6362 = vmul.f32 %v6108, %v6305
        %v6363 = vmul.f32 %v6113, %v6305
        %v6364 = vmul.f32 %v6118, %v6305
        %v6365 = vmul.f32 %v6123, %v6305
        %v6366 = vmul.f32 %v6128, %v6305
        %v6367 = vmul.f32 %v6133, %v6305
        %v6368 = vmul.f32 %v6138, %v6305
        %v6369 = vmul.f32 %v6143, %v6305
        %v6370 = vmul.f32 %v6148, %v6305
        %v6371 = vmul.f32 %v6153, %v6305
        %v6372 = vmul.f32 %v6158, %v6305
        %v6373 = vmul.f32 %v6163, %v6305
        %v6374 = vmul.f32 %v6168, %v6305
        %v6375 = vmul.f32 %v6173, %v6305
        %v6376 = vmul.f32 %v6178, %v6305
        %v6377 = vmul.f32 %v6183, %v6305
        %v6378 = vmul.f32 %v6188, %v6305
        %v6379 = vmul.f32 %v6193, %v6305
        %v6380 = vmul.f32 %v6198, %v6305
        %v6381 = vmul.f32 %v6203, %v6305
        %v6382 = vmul.f32 %v6208, %v6305
        %v6383 = vmul.f32 %v6213, %v6305
        %v6384 = vmul.f32 %v6218, %v6305
        %v6385 = vmul.f32 %v6223, %v6305
        %v6386 = vmul.f32 %v6228, %v6305
        %v6387 = vmul.f32 %v6233, %v6305
        %v6388 = vmul.f32 %v6238, %v6305
        %v6389 = vmul.f32 %v6243, %v6305
        %v6390 = vmul.f32 %v6248, %v6305
        %v6391 = vmul.f32 %v6253, %v6305
        %v6392 = vmul.f32 %v6258, %v6305
        %v6393 = vmul.f32 %v6263, %v6305
        %v6394 = vmul.f32 %v6268, %v6305
        %v6395 = vmul.f32 %v6273, %v6305
        %v6396 = vmul.f32 %v6278, %v6305
        %v6397 = vmul.f32 %v6283, %v6305
        %v6398 = vmul.f32 %v6288, %v6305
        %v6399 = vmul.f32 %v6293, %v6305
        %v6400 = vmul.f32 %v6298, %v6305
        %v6401 = vmul.f32 %v6303, %v6305
        %v6402 = vadd.f32 %v5632, %v6306
        %v6403 = vadd.f32 %v5633, %v6307
        %v6404 = vadd.f32 %v5634, %v6308
        %v6405 = vadd.f32 %v5635, %v6309
        %v6406 = vadd.f32 %v5636, %v6310
        %v6407 = vadd.f32 %v5637, %v6311
        %v6408 = vadd.f32 %v5638, %v6312
        %v6409 = vadd.f32 %v5639, %v6313
        %v6410 = vadd.f32 %v5640, %v6314
        %v6411 = vadd.f32 %v5641, %v6315
        %v6412 = vadd.f32 %v5642, %v6316
        %v6413 = vadd.f32 %v5643, %v6317
        %v6414 = vadd.f32 %v5644, %v6318
        %v6415 = vadd.f32 %v5645, %v6319
        %v6416 = vadd.f32 %v5646, %v6320
        %v6417 = vadd.f32 %v5647, %v6321
        %v6418 = vadd.f32 %v5648, %v6322
        %v6419 = vadd.f32 %v5649, %v6323
        %v6420 = vadd.f32 %v5650, %v6324
        %v6421 = vadd.f32 %v5651, %v6325
        %v6422 = vadd.f32 %v5652, %v6326
        %v6423 = vadd.f32 %v5653, %v6327
        %v6424 = vadd.f32 %v5654, %v6328
        %v6425 = vadd.f32 %v5655, %v6329
        %v6426 = vadd.f32 %v5656, %v6330
        %v6427 = vadd.f32 %v5657, %v6331
        %v6428 = vadd.f32 %v5658, %v6332
        %v6429 = vadd.f32 %v5659, %v6333
        %v6430 = vadd.f32 %v5660, %v6334
        %v6431 = vadd.f32 %v5661, %v6335
        %v6432 = vadd.f32 %v5662, %v6336
        %v6433 = vadd.f32 %v5663, %v6337
        %v6434 = vadd.f32 %v5664, %v6338
        %v6435 = vadd.f32 %v5665, %v6339
        %v6436 = vadd.f32 %v5666, %v6340
        %v6437 = vadd.f32 %v5667, %v6341
        %v6438 = vadd.f32 %v5668, %v6342
        %v6439 = vadd.f32 %v5669, %v6343
        %v6440 = vadd.f32 %v5670, %v6344
        %v6441 = vadd.f32 %v5671, %v6345
        %v6442 = vadd.f32 %v5672, %v6346
        %v6443 = vadd.f32 %v5673, %v6347
        %v6444 = vadd.f32 %v5674, %v6348
        %v6445 = vadd.f32 %v5675, %v6349
        %v6446 = vadd.f32 %v5676, %v6350
        %v6447 = vadd.f32 %v5677, %v6351
        %v6448 = vadd.f32 %v5678, %v6352
        %v6449 = vadd.f32 %v5679, %v6353
        %v6450 = vadd.f32 %v5680, %v6354
        %v6451 = vadd.f32 %v5681, %v6355
        %v6452 = vadd.f32 %v5682, %v6356
        %v6453 = vadd.f32 %v5683, %v6357
        %v6454 = vadd.f32 %v5684, %v6358
        %v6455 = vadd.f32 %v5685, %v6359
        %v6456 = vadd.f32 %v5686, %v6360
        %v6457 = vadd.f32 %v5687, %v6361
        %v6458 = vadd.f32 %v5688, %v6362
        %v6459 = vadd.f32 %v5689, %v6363
        %v6460 = vadd.f32 %v5690, %v6364
        %v6461 = vadd.f32 %v5691, %v6365
        %v6462 = vadd.f32 %v5692, %v6366
        %v6463 = vadd.f32 %v5693, %v6367
        %v6464 = vadd.f32 %v5694, %v6368
        %v6465 = vadd.f32 %v5695, %v6369
        %v6466 = vadd.f32 %v5696, %v6370
        %v6467 = vadd.f32 %v5697, %v6371
        %v6468 = vadd.f32 %v5698, %v6372
        %v6469 = vadd.f32 %v5699, %v6373
        %v6470 = vadd.f32 %v5700, %v6374
        %v6471 = vadd.f32 %v5701, %v6375
        %v6472 = vadd.f32 %v5702, %v6376
        %v6473 = vadd.f32 %v5703, %v6377
        %v6474 = vadd.f32 %v5704, %v6378
        %v6475 = vadd.f32 %v5705, %v6379
        %v6476 = vadd.f32 %v5706, %v6380
        %v6477 = vadd.f32 %v5707, %v6381
        %v6478 = vadd.f32 %v5708, %v6382
        %v6479 = vadd.f32 %v5709, %v6383
        %v6480 = vadd.f32 %v5710, %v6384
        %v6481 = vadd.f32 %v5711, %v6385
        %v6482 = vadd.f32 %v5712, %v6386
        %v6483 = vadd.f32 %v5713, %v6387
        %v6484 = vadd.f32 %v5714, %v6388
        %v6485 = vadd.f32 %v5715, %v6389
        %v6486 = vadd.f32 %v5716, %v6390
        %v6487 = vadd.f32 %v5717, %v6391
        %v6488 = vadd.f32 %v5718, %v6392
        %v6489 = vadd.f32 %v5719, %v6393
        %v6490 = vadd.f32 %v5720, %v6394
        %v6491 = vadd.f32 %v5721, %v6395
        %v6492 = vadd.f32 %v5722, %v6396
        %v6493 = vadd.f32 %v5723, %v6397
        %v6494 = vadd.f32 %v5724, %v6398
        %v6495 = vadd.f32 %v5725, %v6399
        %v6496 = vadd.f32 %v5726, %v6400
        %v6497 = vadd.f32 %v5727, %v6401
        %v6498 = vld [vmem:[%s384 + $0x42] sm:$0xff]
        %v6499 = vld [vmem:[%s384 + $0x4a] sm:$0xff]
        %v6500 = vld [vmem:[%s384 + $0x52] sm:$0xff]
        %v6501 = vld [vmem:[%s384 + $0x5a] sm:$0xff]
        %v6502 = vld [vmem:[%s384 + $0x62] sm:$0xff]
        %v6503 = vld [vmem:[%s384 + $0x6a] sm:$0xff]
        %v6504 = vld [vmem:[%s384 + $0x72] sm:$0xff]
        %v6505 = vld [vmem:[%s384 + $0x7a] sm:$0xff]
        %v6506 = vld [vmem:[%s384 + $0x82] sm:$0xff]
        %v6507 = vld [vmem:[%s384 + $0x8a] sm:$0xff]
        %v6508 = vld [vmem:[%s384 + $0x92] sm:$0xff]
        %v6509 = vld [vmem:[%s384 + $0x9a] sm:$0xff]
        %v6510 = vld [vmem:[%s384 + $0xa2] sm:$0xff]
        %v6511 = vld [vmem:[%s384 + $0xaa] sm:$0xff]
        %v6512 = vld [vmem:[%s384 + $0xb2] sm:$0xff]
        %v6513 = vld [vmem:[%s384 + $0xba] sm:$0xff]
        %v6514 = vld [vmem:[%s384 + $0xc2] sm:$0xff]
        %v6515 = vld [vmem:[%s384 + $0xca] sm:$0xff]
        %v6516 = vld [vmem:[%s384 + $0xd2] sm:$0xff]
        %v6517 = vld [vmem:[%s384 + $0xda] sm:$0xff]
        %v6518 = vld [vmem:[%s384 + $0xe2] sm:$0xff]
        %v6519 = vld [vmem:[%s384 + $0xea] sm:$0xff]
        %v6520 = vld [vmem:[%s384 + $0xf2] sm:$0xff]
        %v6521 = vld [vmem:[%s384 + $0xfa] sm:$0xff]
        %v6522 = vld [vmem:[%s384 + $0x102] sm:$0xff]
        %v6523 = vld [vmem:[%s384 + $0x10a] sm:$0xff]
        %v6524 = vld [vmem:[%s384 + $0x112] sm:$0xff]
        %v6525 = vld [vmem:[%s384 + $0x11a] sm:$0xff]
        %v6526 = vld [vmem:[%s384 + $0x122] sm:$0xff]
        %v6527 = vld [vmem:[%s384 + $0x12a] sm:$0xff]
        %v6528 = vld [vmem:[%s384 + $0x132] sm:$0xff]
        %v6529 = vld [vmem:[%s384 + $0x13a] sm:$0xff]
        %v6530 = vld [vmem:[%s384 + $0x142] sm:$0xff]
        %v6531 = vld [vmem:[%s384 + $0x14a] sm:$0xff]
        %v6532 = vld [vmem:[%s384 + $0x152] sm:$0xff]
        %v6533 = vld [vmem:[%s384 + $0x15a] sm:$0xff]
        %v6534 = vld [vmem:[%s384 + $0x162] sm:$0xff]
        %v6535 = vld [vmem:[%s384 + $0x16a] sm:$0xff]
        %v6536 = vld [vmem:[%s384 + $0x172] sm:$0xff]
        %v6537 = vld [vmem:[%s384 + $0x17a] sm:$0xff]
        %v6538 = vld [vmem:[%s384 + $0x182] sm:$0xff]
        %v6539 = vld [vmem:[%s384 + $0x18a] sm:$0xff]
        %v6540 = vld [vmem:[%s384 + $0x192] sm:$0xff]
        %v6541 = vld [vmem:[%s384 + $0x19a] sm:$0xff]
        %v6542 = vld [vmem:[%s384 + $0x1a2] sm:$0xff]
        %v6543 = vld [vmem:[%s384 + $0x1aa] sm:$0xff]
        %v6544 = vld [vmem:[%s384 + $0x1b2] sm:$0xff]
        %v6545 = vld [vmem:[%s384 + $0x1ba] sm:$0xff]
        %v6546 = vld [vmem:[%s384 + $0x1c2] sm:$0xff]
        %v6547 = vld [vmem:[%s384 + $0x1ca] sm:$0xff]
        %v6548 = vld [vmem:[%s384 + $0x1d2] sm:$0xff]
        %v6549 = vld [vmem:[%s384 + $0x1da] sm:$0xff]
        %v6550 = vld [vmem:[%s384 + $0x1e2] sm:$0xff]
        %v6551 = vld [vmem:[%s384 + $0x1ea] sm:$0xff]
        %v6552 = vld [vmem:[%s384 + $0x1f2] sm:$0xff]
        %v6553 = vld [vmem:[%s384 + $0x1fa] sm:$0xff]
        %v6554 = vld [vmem:[%s384 + $0x202] sm:$0xff]
        %v6555 = vld [vmem:[%s384 + $0x20a] sm:$0xff]
        %v6556 = vld [vmem:[%s384 + $0x212] sm:$0xff]
        %v6557 = vld [vmem:[%s384 + $0x21a] sm:$0xff]
        %v6558 = vld [vmem:[%s384 + $0x222] sm:$0xff]
        %v6559 = vld [vmem:[%s384 + $0x22a] sm:$0xff]
        %v6560 = vld [vmem:[%s384 + $0x232] sm:$0xff]
        %v6561 = vld [vmem:[%s384 + $0x23a] sm:$0xff]
        %v6562 = vld [vmem:[%s384 + $0x242] sm:$0xff]
        %v6563 = vld [vmem:[%s384 + $0x24a] sm:$0xff]
        %v6564 = vld [vmem:[%s384 + $0x252] sm:$0xff]
        %v6565 = vld [vmem:[%s384 + $0x25a] sm:$0xff]
        %v6566 = vld [vmem:[%s384 + $0x262] sm:$0xff]
        %v6567 = vld [vmem:[%s384 + $0x26a] sm:$0xff]
        %v6568 = vld [vmem:[%s384 + $0x272] sm:$0xff]
        %v6569 = vld [vmem:[%s384 + $0x27a] sm:$0xff]
        %v6570 = vld [vmem:[%s384 + $0x282] sm:$0xff]
        %v6571 = vld [vmem:[%s384 + $0x28a] sm:$0xff]
        %v6572 = vld [vmem:[%s384 + $0x292] sm:$0xff]
        %v6573 = vld [vmem:[%s384 + $0x29a] sm:$0xff]
        %v6574 = vld [vmem:[%s384 + $0x2a2] sm:$0xff]
        %v6575 = vld [vmem:[%s384 + $0x2aa] sm:$0xff]
        %v6576 = vld [vmem:[%s384 + $0x2b2] sm:$0xff]
        %v6577 = vld [vmem:[%s384 + $0x2ba] sm:$0xff]
        %v6578 = vld [vmem:[%s384 + $0x2c2] sm:$0xff]
        %v6579 = vld [vmem:[%s384 + $0x2ca] sm:$0xff]
        %v6580 = vld [vmem:[%s384 + $0x2d2] sm:$0xff]
        %v6581 = vld [vmem:[%s384 + $0x2da] sm:$0xff]
        %v6582 = vld [vmem:[%s384 + $0x2e2] sm:$0xff]
        %v6583 = vld [vmem:[%s384 + $0x2ea] sm:$0xff]
        %v6584 = vld [vmem:[%s384 + $0x2f2] sm:$0xff]
        %v6585 = vld [vmem:[%s384 + $0x2fa] sm:$0xff]
        %v6586 = vld [vmem:[%s384 + $0x302] sm:$0xff]
        %v6587 = vld [vmem:[%s384 + $0x30a] sm:$0xff]
        %v6588 = vld [vmem:[%s384 + $0x312] sm:$0xff]
        %v6589 = vld [vmem:[%s384 + $0x31a] sm:$0xff]
        %v6590 = vld [vmem:[%s384 + $0x322] sm:$0xff]
        %v6591 = vld [vmem:[%s384 + $0x32a] sm:$0xff]
        %v6592 = vld [vmem:[%s384 + $0x332] sm:$0xff]
        %v6593 = vld [vmem:[%s384 + $0x33a] sm:$0x3f]
        %v6594 = vld [vmem:[%s1 + $0x8] sm:$0x1]
        %6596 = vset.pattern.permute.xlu0 0
        %6597 = vperm.xlu0 %6596, %v6498
        %v6598 = vpop.permute.xlu0 %6597
        %6601 = vset.pattern.permute.xlu0 0
        %6602 = vperm.xlu0 %6601, %v6499
        %v6603 = vpop.permute.xlu0 %6602
        %6606 = vset.pattern.permute.xlu0 0
        %6607 = vperm.xlu0 %6606, %v6500
        %v6608 = vpop.permute.xlu0 %6607
        %6611 = vset.pattern.permute.xlu0 0
        %6612 = vperm.xlu0 %6611, %v6501
        %v6613 = vpop.permute.xlu0 %6612
        %6616 = vset.pattern.permute.xlu0 0
        %6617 = vperm.xlu0 %6616, %v6502
        %v6618 = vpop.permute.xlu0 %6617
        %6621 = vset.pattern.permute.xlu0 0
        %6622 = vperm.xlu0 %6621, %v6503
        %v6623 = vpop.permute.xlu0 %6622
        %6626 = vset.pattern.permute.xlu0 0
        %6627 = vperm.xlu0 %6626, %v6504
        %v6628 = vpop.permute.xlu0 %6627
        %6631 = vset.pattern.permute.xlu0 0
        %6632 = vperm.xlu0 %6631, %v6505
        %v6633 = vpop.permute.xlu0 %6632
        %6636 = vset.pattern.permute.xlu0 0
        %6637 = vperm.xlu0 %6636, %v6506
        %v6638 = vpop.permute.xlu0 %6637
        %6641 = vset.pattern.permute.xlu0 0
        %6642 = vperm.xlu0 %6641, %v6507
        %v6643 = vpop.permute.xlu0 %6642
        %6646 = vset.pattern.permute.xlu0 0
        %6647 = vperm.xlu0 %6646, %v6508
        %v6648 = vpop.permute.xlu0 %6647
        %6651 = vset.pattern.permute.xlu0 0
        %6652 = vperm.xlu0 %6651, %v6509
        %v6653 = vpop.permute.xlu0 %6652
        %6656 = vset.pattern.permute.xlu0 0
        %6657 = vperm.xlu0 %6656, %v6510
        %v6658 = vpop.permute.xlu0 %6657
        %6661 = vset.pattern.permute.xlu0 0
        %6662 = vperm.xlu0 %6661, %v6511
        %v6663 = vpop.permute.xlu0 %6662
        %6666 = vset.pattern.permute.xlu0 0
        %6667 = vperm.xlu0 %6666, %v6512
        %v6668 = vpop.permute.xlu0 %6667
        %6671 = vset.pattern.permute.xlu0 0
        %6672 = vperm.xlu0 %6671, %v6513
        %v6673 = vpop.permute.xlu0 %6672
        %6676 = vset.pattern.permute.xlu0 0
        %6677 = vperm.xlu0 %6676, %v6514
        %v6678 = vpop.permute.xlu0 %6677
        %6681 = vset.pattern.permute.xlu0 0
        %6682 = vperm.xlu0 %6681, %v6515
        %v6683 = vpop.permute.xlu0 %6682
        %6686 = vset.pattern.permute.xlu0 0
        %6687 = vperm.xlu0 %6686, %v6516
        %v6688 = vpop.permute.xlu0 %6687
        %6691 = vset.pattern.permute.xlu0 0
        %6692 = vperm.xlu0 %6691, %v6517
        %v6693 = vpop.permute.xlu0 %6692
        %6696 = vset.pattern.permute.xlu0 0
        %6697 = vperm.xlu0 %6696, %v6518
        %v6698 = vpop.permute.xlu0 %6697
        %6701 = vset.pattern.permute.xlu0 0
        %6702 = vperm.xlu0 %6701, %v6519
        %v6703 = vpop.permute.xlu0 %6702
        %6706 = vset.pattern.permute.xlu0 0
        %6707 = vperm.xlu0 %6706, %v6520
        %v6708 = vpop.permute.xlu0 %6707
        %6711 = vset.pattern.permute.xlu0 0
        %6712 = vperm.xlu0 %6711, %v6521
        %v6713 = vpop.permute.xlu0 %6712
        %6716 = vset.pattern.permute.xlu0 0
        %6717 = vperm.xlu0 %6716, %v6522
        %v6718 = vpop.permute.xlu0 %6717
        %6721 = vset.pattern.permute.xlu0 0
        %6722 = vperm.xlu0 %6721, %v6523
        %v6723 = vpop.permute.xlu0 %6722
        %6726 = vset.pattern.permute.xlu0 0
        %6727 = vperm.xlu0 %6726, %v6524
        %v6728 = vpop.permute.xlu0 %6727
        %6731 = vset.pattern.permute.xlu0 0
        %6732 = vperm.xlu0 %6731, %v6525
        %v6733 = vpop.permute.xlu0 %6732
        %6736 = vset.pattern.permute.xlu0 0
        %6737 = vperm.xlu0 %6736, %v6526
        %v6738 = vpop.permute.xlu0 %6737
        %6741 = vset.pattern.permute.xlu0 0
        %6742 = vperm.xlu0 %6741, %v6527
        %v6743 = vpop.permute.xlu0 %6742
        %6746 = vset.pattern.permute.xlu0 0
        %6747 = vperm.xlu0 %6746, %v6528
        %v6748 = vpop.permute.xlu0 %6747
        %6751 = vset.pattern.permute.xlu0 0
        %6752 = vperm.xlu0 %6751, %v6529
        %v6753 = vpop.permute.xlu0 %6752
        %6756 = vset.pattern.permute.xlu0 0
        %6757 = vperm.xlu0 %6756, %v6530
        %v6758 = vpop.permute.xlu0 %6757
        %6761 = vset.pattern.permute.xlu0 0
        %6762 = vperm.xlu0 %6761, %v6531
        %v6763 = vpop.permute.xlu0 %6762
        %6766 = vset.pattern.permute.xlu0 0
        %6767 = vperm.xlu0 %6766, %v6532
        %v6768 = vpop.permute.xlu0 %6767
        %6771 = vset.pattern.permute.xlu0 0
        %6772 = vperm.xlu0 %6771, %v6533
        %v6773 = vpop.permute.xlu0 %6772
        %6776 = vset.pattern.permute.xlu0 0
        %6777 = vperm.xlu0 %6776, %v6534
        %v6778 = vpop.permute.xlu0 %6777
        %6781 = vset.pattern.permute.xlu0 0
        %6782 = vperm.xlu0 %6781, %v6535
        %v6783 = vpop.permute.xlu0 %6782
        %6786 = vset.pattern.permute.xlu0 0
        %6787 = vperm.xlu0 %6786, %v6536
        %v6788 = vpop.permute.xlu0 %6787
        %6791 = vset.pattern.permute.xlu0 0
        %6792 = vperm.xlu0 %6791, %v6537
        %v6793 = vpop.permute.xlu0 %6792
        %6796 = vset.pattern.permute.xlu0 0
        %6797 = vperm.xlu0 %6796, %v6538
        %v6798 = vpop.permute.xlu0 %6797
        %6801 = vset.pattern.permute.xlu0 0
        %6802 = vperm.xlu0 %6801, %v6539
        %v6803 = vpop.permute.xlu0 %6802
        %6806 = vset.pattern.permute.xlu0 0
        %6807 = vperm.xlu0 %6806, %v6540
        %v6808 = vpop.permute.xlu0 %6807
        %6811 = vset.pattern.permute.xlu0 0
        %6812 = vperm.xlu0 %6811, %v6541
        %v6813 = vpop.permute.xlu0 %6812
        %6816 = vset.pattern.permute.xlu0 0
        %6817 = vperm.xlu0 %6816, %v6542
        %v6818 = vpop.permute.xlu0 %6817
        %6821 = vset.pattern.permute.xlu0 0
        %6822 = vperm.xlu0 %6821, %v6543
        %v6823 = vpop.permute.xlu0 %6822
        %6826 = vset.pattern.permute.xlu0 0
        %6827 = vperm.xlu0 %6826, %v6544
        %v6828 = vpop.permute.xlu0 %6827
        %6831 = vset.pattern.permute.xlu0 0
        %6832 = vperm.xlu0 %6831, %v6545
        %v6833 = vpop.permute.xlu0 %6832
        %6836 = vset.pattern.permute.xlu0 0
        %6837 = vperm.xlu0 %6836, %v6546
        %v6838 = vpop.permute.xlu0 %6837
        %6841 = vset.pattern.permute.xlu0 0
        %6842 = vperm.xlu0 %6841, %v6547
        %v6843 = vpop.permute.xlu0 %6842
        %6846 = vset.pattern.permute.xlu0 0
        %6847 = vperm.xlu0 %6846, %v6548
        %v6848 = vpop.permute.xlu0 %6847
        %6851 = vset.pattern.permute.xlu0 0
        %6852 = vperm.xlu0 %6851, %v6549
        %v6853 = vpop.permute.xlu0 %6852
        %6856 = vset.pattern.permute.xlu0 0
        %6857 = vperm.xlu0 %6856, %v6550
        %v6858 = vpop.permute.xlu0 %6857
        %6861 = vset.pattern.permute.xlu0 0
        %6862 = vperm.xlu0 %6861, %v6551
        %v6863 = vpop.permute.xlu0 %6862
        %6866 = vset.pattern.permute.xlu0 0
        %6867 = vperm.xlu0 %6866, %v6552
        %v6868 = vpop.permute.xlu0 %6867
        %6871 = vset.pattern.permute.xlu0 0
        %6872 = vperm.xlu0 %6871, %v6553
        %v6873 = vpop.permute.xlu0 %6872
        %6876 = vset.pattern.permute.xlu0 0
        %6877 = vperm.xlu0 %6876, %v6554
        %v6878 = vpop.permute.xlu0 %6877
        %6881 = vset.pattern.permute.xlu0 0
        %6882 = vperm.xlu0 %6881, %v6555
        %v6883 = vpop.permute.xlu0 %6882
        %6886 = vset.pattern.permute.xlu0 0
        %6887 = vperm.xlu0 %6886, %v6556
        %v6888 = vpop.permute.xlu0 %6887
        %6891 = vset.pattern.permute.xlu0 0
        %6892 = vperm.xlu0 %6891, %v6557
        %v6893 = vpop.permute.xlu0 %6892
        %6896 = vset.pattern.permute.xlu0 0
        %6897 = vperm.xlu0 %6896, %v6558
        %v6898 = vpop.permute.xlu0 %6897
        %6901 = vset.pattern.permute.xlu0 0
        %6902 = vperm.xlu0 %6901, %v6559
        %v6903 = vpop.permute.xlu0 %6902
        %6906 = vset.pattern.permute.xlu0 0
        %6907 = vperm.xlu0 %6906, %v6560
        %v6908 = vpop.permute.xlu0 %6907
        %6911 = vset.pattern.permute.xlu0 0
        %6912 = vperm.xlu0 %6911, %v6561
        %v6913 = vpop.permute.xlu0 %6912
        %6916 = vset.pattern.permute.xlu0 0
        %6917 = vperm.xlu0 %6916, %v6562
        %v6918 = vpop.permute.xlu0 %6917
        %6921 = vset.pattern.permute.xlu0 0
        %6922 = vperm.xlu0 %6921, %v6563
        %v6923 = vpop.permute.xlu0 %6922
        %6926 = vset.pattern.permute.xlu0 0
        %6927 = vperm.xlu0 %6926, %v6564
        %v6928 = vpop.permute.xlu0 %6927
        %6931 = vset.pattern.permute.xlu0 0
        %6932 = vperm.xlu0 %6931, %v6565
        %v6933 = vpop.permute.xlu0 %6932
        %6936 = vset.pattern.permute.xlu0 0
        %6937 = vperm.xlu0 %6936, %v6566
        %v6938 = vpop.permute.xlu0 %6937
        %6941 = vset.pattern.permute.xlu0 0
        %6942 = vperm.xlu0 %6941, %v6567
        %v6943 = vpop.permute.xlu0 %6942
        %6946 = vset.pattern.permute.xlu0 0
        %6947 = vperm.xlu0 %6946, %v6568
        %v6948 = vpop.permute.xlu0 %6947
        %6951 = vset.pattern.permute.xlu0 0
        %6952 = vperm.xlu0 %6951, %v6569
        %v6953 = vpop.permute.xlu0 %6952
        %6956 = vset.pattern.permute.xlu0 0
        %6957 = vperm.xlu0 %6956, %v6570
        %v6958 = vpop.permute.xlu0 %6957
        %6961 = vset.pattern.permute.xlu0 0
        %6962 = vperm.xlu0 %6961, %v6571
        %v6963 = vpop.permute.xlu0 %6962
        %6966 = vset.pattern.permute.xlu0 0
        %6967 = vperm.xlu0 %6966, %v6572
        %v6968 = vpop.permute.xlu0 %6967
        %6971 = vset.pattern.permute.xlu0 0
        %6972 = vperm.xlu0 %6971, %v6573
        %v6973 = vpop.permute.xlu0 %6972
        %6976 = vset.pattern.permute.xlu0 0
        %6977 = vperm.xlu0 %6976, %v6574
        %v6978 = vpop.permute.xlu0 %6977
        %6981 = vset.pattern.permute.xlu0 0
        %6982 = vperm.xlu0 %6981, %v6575
        %v6983 = vpop.permute.xlu0 %6982
        %6986 = vset.pattern.permute.xlu0 0
        %6987 = vperm.xlu0 %6986, %v6576
        %v6988 = vpop.permute.xlu0 %6987
        %6991 = vset.pattern.permute.xlu0 0
        %6992 = vperm.xlu0 %6991, %v6577
        %v6993 = vpop.permute.xlu0 %6992
        %6996 = vset.pattern.permute.xlu0 0
        %6997 = vperm.xlu0 %6996, %v6578
        %v6998 = vpop.permute.xlu0 %6997
        %7001 = vset.pattern.permute.xlu0 0
        %7002 = vperm.xlu0 %7001, %v6579
        %v7003 = vpop.permute.xlu0 %7002
        %7006 = vset.pattern.permute.xlu0 0
        %7007 = vperm.xlu0 %7006, %v6580
        %v7008 = vpop.permute.xlu0 %7007
        %7011 = vset.pattern.permute.xlu0 0
        %7012 = vperm.xlu0 %7011, %v6581
        %v7013 = vpop.permute.xlu0 %7012
        %7016 = vset.pattern.permute.xlu0 0
        %7017 = vperm.xlu0 %7016, %v6582
        %v7018 = vpop.permute.xlu0 %7017
        %7021 = vset.pattern.permute.xlu0 0
        %7022 = vperm.xlu0 %7021, %v6583
        %v7023 = vpop.permute.xlu0 %7022
        %7026 = vset.pattern.permute.xlu0 0
        %7027 = vperm.xlu0 %7026, %v6584
        %v7028 = vpop.permute.xlu0 %7027
        %7031 = vset.pattern.permute.xlu0 0
        %7032 = vperm.xlu0 %7031, %v6585
        %v7033 = vpop.permute.xlu0 %7032
        %7036 = vset.pattern.permute.xlu0 0
        %7037 = vperm.xlu0 %7036, %v6586
        %v7038 = vpop.permute.xlu0 %7037
        %7041 = vset.pattern.permute.xlu0 0
        %7042 = vperm.xlu0 %7041, %v6587
        %v7043 = vpop.permute.xlu0 %7042
        %7046 = vset.pattern.permute.xlu0 0
        %7047 = vperm.xlu0 %7046, %v6588
        %v7048 = vpop.permute.xlu0 %7047
        %7051 = vset.pattern.permute.xlu0 0
        %7052 = vperm.xlu0 %7051, %v6589
        %v7053 = vpop.permute.xlu0 %7052
        %7056 = vset.pattern.permute.xlu0 0
        %7057 = vperm.xlu0 %7056, %v6590
        %v7058 = vpop.permute.xlu0 %7057
        %7061 = vset.pattern.permute.xlu0 0
        %7062 = vperm.xlu0 %7061, %v6591
        %v7063 = vpop.permute.xlu0 %7062
        %7066 = vset.pattern.permute.xlu0 0
        %7067 = vperm.xlu0 %7066, %v6592
        %v7068 = vpop.permute.xlu0 %7067
        %7071 = vset.pattern.permute.xlu0 0
        %7072 = vperm.xlu0 %7071, %v6593
        %v7073 = vpop.permute.xlu0 %7072
        %v7075 = vperm.slane %v6594, 0
        %v7076 = vmul.f32 %v6598, %v7075
        %v7077 = vmul.f32 %v6603, %v7075
        %v7078 = vmul.f32 %v6608, %v7075
        %v7079 = vmul.f32 %v6613, %v7075
        %v7080 = vmul.f32 %v6618, %v7075
        %v7081 = vmul.f32 %v6623, %v7075
        %v7082 = vmul.f32 %v6628, %v7075
        %v7083 = vmul.f32 %v6633, %v7075
        %v7084 = vmul.f32 %v6638, %v7075
        %v7085 = vmul.f32 %v6643, %v7075
        %v7086 = vmul.f32 %v6648, %v7075
        %v7087 = vmul.f32 %v6653, %v7075
        %v7088 = vmul.f32 %v6658, %v7075
        %v7089 = vmul.f32 %v6663, %v7075
        %v7090 = vmul.f32 %v6668, %v7075
        %v7091 = vmul.f32 %v6673, %v7075
        %v7092 = vmul.f32 %v6678, %v7075
        %v7093 = vmul.f32 %v6683, %v7075
        %v7094 = vmul.f32 %v6688, %v7075
        %v7095 = vmul.f32 %v6693, %v7075
        %v7096 = vmul.f32 %v6698, %v7075
        %v7097 = vmul.f32 %v6703, %v7075
        %v7098 = vmul.f32 %v6708, %v7075
        %v7099 = vmul.f32 %v6713, %v7075
        %v7100 = vmul.f32 %v6718, %v7075
        %v7101 = vmul.f32 %v6723, %v7075
        %v7102 = vmul.f32 %v6728, %v7075
        %v7103 = vmul.f32 %v6733, %v7075
        %v7104 = vmul.f32 %v6738, %v7075
        %v7105 = vmul.f32 %v6743, %v7075
        %v7106 = vmul.f32 %v6748, %v7075
        %v7107 = vmul.f32 %v6753, %v7075
        %v7108 = vmul.f32 %v6758, %v7075
        %v7109 = vmul.f32 %v6763, %v7075
        %v7110 = vmul.f32 %v6768, %v7075
        %v7111 = vmul.f32 %v6773, %v7075
        %v7112 = vmul.f32 %v6778, %v7075
        %v7113 = vmul.f32 %v6783, %v7075
        %v7114 = vmul.f32 %v6788, %v7075
        %v7115 = vmul.f32 %v6793, %v7075
        %v7116 = vmul.f32 %v6798, %v7075
        %v7117 = vmul.f32 %v6803, %v7075
        %v7118 = vmul.f32 %v6808, %v7075
        %v7119 = vmul.f32 %v6813, %v7075
        %v7120 = vmul.f32 %v6818, %v7075
        %v7121 = vmul.f32 %v6823, %v7075
        %v7122 = vmul.f32 %v6828, %v7075
        %v7123 = vmul.f32 %v6833, %v7075
        %v7124 = vmul.f32 %v6838, %v7075
        %v7125 = vmul.f32 %v6843, %v7075
        %v7126 = vmul.f32 %v6848, %v7075
        %v7127 = vmul.f32 %v6853, %v7075
        %v7128 = vmul.f32 %v6858, %v7075
        %v7129 = vmul.f32 %v6863, %v7075
        %v7130 = vmul.f32 %v6868, %v7075
        %v7131 = vmul.f32 %v6873, %v7075
        %v7132 = vmul.f32 %v6878, %v7075
        %v7133 = vmul.f32 %v6883, %v7075
        %v7134 = vmul.f32 %v6888, %v7075
        %v7135 = vmul.f32 %v6893, %v7075
        %v7136 = vmul.f32 %v6898, %v7075
        %v7137 = vmul.f32 %v6903, %v7075
        %v7138 = vmul.f32 %v6908, %v7075
        %v7139 = vmul.f32 %v6913, %v7075
        %v7140 = vmul.f32 %v6918, %v7075
        %v7141 = vmul.f32 %v6923, %v7075
        %v7142 = vmul.f32 %v6928, %v7075
        %v7143 = vmul.f32 %v6933, %v7075
        %v7144 = vmul.f32 %v6938, %v7075
        %v7145 = vmul.f32 %v6943, %v7075
        %v7146 = vmul.f32 %v6948, %v7075
        %v7147 = vmul.f32 %v6953, %v7075
        %v7148 = vmul.f32 %v6958, %v7075
        %v7149 = vmul.f32 %v6963, %v7075
        %v7150 = vmul.f32 %v6968, %v7075
        %v7151 = vmul.f32 %v6973, %v7075
        %v7152 = vmul.f32 %v6978, %v7075
        %v7153 = vmul.f32 %v6983, %v7075
        %v7154 = vmul.f32 %v6988, %v7075
        %v7155 = vmul.f32 %v6993, %v7075
        %v7156 = vmul.f32 %v6998, %v7075
        %v7157 = vmul.f32 %v7003, %v7075
        %v7158 = vmul.f32 %v7008, %v7075
        %v7159 = vmul.f32 %v7013, %v7075
        %v7160 = vmul.f32 %v7018, %v7075
        %v7161 = vmul.f32 %v7023, %v7075
        %v7162 = vmul.f32 %v7028, %v7075
        %v7163 = vmul.f32 %v7033, %v7075
        %v7164 = vmul.f32 %v7038, %v7075
        %v7165 = vmul.f32 %v7043, %v7075
        %v7166 = vmul.f32 %v7048, %v7075
        %v7167 = vmul.f32 %v7053, %v7075
        %v7168 = vmul.f32 %v7058, %v7075
        %v7169 = vmul.f32 %v7063, %v7075
        %v7170 = vmul.f32 %v7068, %v7075
        %v7171 = vmul.f32 %v7073, %v7075
        %v7172 = vadd.f32 %v6402, %v7076
        %v7173 = vadd.f32 %v6403, %v7077
        %v7174 = vadd.f32 %v6404, %v7078
        %v7175 = vadd.f32 %v6405, %v7079
        %v7176 = vadd.f32 %v6406, %v7080
        %v7177 = vadd.f32 %v6407, %v7081
        %v7178 = vadd.f32 %v6408, %v7082
        %v7179 = vadd.f32 %v6409, %v7083
        %v7180 = vadd.f32 %v6410, %v7084
        %v7181 = vadd.f32 %v6411, %v7085
        %v7182 = vadd.f32 %v6412, %v7086
        %v7183 = vadd.f32 %v6413, %v7087
        %v7184 = vadd.f32 %v6414, %v7088
        %v7185 = vadd.f32 %v6415, %v7089
        %v7186 = vadd.f32 %v6416, %v7090
        %v7187 = vadd.f32 %v6417, %v7091
        %v7188 = vadd.f32 %v6418, %v7092
        %v7189 = vadd.f32 %v6419, %v7093
        %v7190 = vadd.f32 %v6420, %v7094
        %v7191 = vadd.f32 %v6421, %v7095
        %v7192 = vadd.f32 %v6422, %v7096
        %v7193 = vadd.f32 %v6423, %v7097
        %v7194 = vadd.f32 %v6424, %v7098
        %v7195 = vadd.f32 %v6425, %v7099
        %v7196 = vadd.f32 %v6426, %v7100
        %v7197 = vadd.f32 %v6427, %v7101
        %v7198 = vadd.f32 %v6428, %v7102
        %v7199 = vadd.f32 %v6429, %v7103
        %v7200 = vadd.f32 %v6430, %v7104
        %v7201 = vadd.f32 %v6431, %v7105
        %v7202 = vadd.f32 %v6432, %v7106
        %v7203 = vadd.f32 %v6433, %v7107
        %v7204 = vadd.f32 %v6434, %v7108
        %v7205 = vadd.f32 %v6435, %v7109
        %v7206 = vadd.f32 %v6436, %v7110
        %v7207 = vadd.f32 %v6437, %v7111
        %v7208 = vadd.f32 %v6438, %v7112
        %v7209 = vadd.f32 %v6439, %v7113
        %v7210 = vadd.f32 %v6440, %v7114
        %v7211 = vadd.f32 %v6441, %v7115
        %v7212 = vadd.f32 %v6442, %v7116
        %v7213 = vadd.f32 %v6443, %v7117
        %v7214 = vadd.f32 %v6444, %v7118
        %v7215 = vadd.f32 %v6445, %v7119
        %v7216 = vadd.f32 %v6446, %v7120
        %v7217 = vadd.f32 %v6447, %v7121
        %v7218 = vadd.f32 %v6448, %v7122
        %v7219 = vadd.f32 %v6449, %v7123
        %v7220 = vadd.f32 %v6450, %v7124
        %v7221 = vadd.f32 %v6451, %v7125
        %v7222 = vadd.f32 %v6452, %v7126
        %v7223 = vadd.f32 %v6453, %v7127
        %v7224 = vadd.f32 %v6454, %v7128
        %v7225 = vadd.f32 %v6455, %v7129
        %v7226 = vadd.f32 %v6456, %v7130
        %v7227 = vadd.f32 %v6457, %v7131
        %v7228 = vadd.f32 %v6458, %v7132
        %v7229 = vadd.f32 %v6459, %v7133
        %v7230 = vadd.f32 %v6460, %v7134
        %v7231 = vadd.f32 %v6461, %v7135
        %v7232 = vadd.f32 %v6462, %v7136
        %v7233 = vadd.f32 %v6463, %v7137
        %v7234 = vadd.f32 %v6464, %v7138
        %v7235 = vadd.f32 %v6465, %v7139
        %v7236 = vadd.f32 %v6466, %v7140
        %v7237 = vadd.f32 %v6467, %v7141
        %v7238 = vadd.f32 %v6468, %v7142
        %v7239 = vadd.f32 %v6469, %v7143
        %v7240 = vadd.f32 %v6470, %v7144
        %v7241 = vadd.f32 %v6471, %v7145
        %v7242 = vadd.f32 %v6472, %v7146
        %v7243 = vadd.f32 %v6473, %v7147
        %v7244 = vadd.f32 %v6474, %v7148
        %v7245 = vadd.f32 %v6475, %v7149
        %v7246 = vadd.f32 %v6476, %v7150
        %v7247 = vadd.f32 %v6477, %v7151
        %v7248 = vadd.f32 %v6478, %v7152
        %v7249 = vadd.f32 %v6479, %v7153
        %v7250 = vadd.f32 %v6480, %v7154
        %v7251 = vadd.f32 %v6481, %v7155
        %v7252 = vadd.f32 %v6482, %v7156
        %v7253 = vadd.f32 %v6483, %v7157
        %v7254 = vadd.f32 %v6484, %v7158
        %v7255 = vadd.f32 %v6485, %v7159
        %v7256 = vadd.f32 %v6486, %v7160
        %v7257 = vadd.f32 %v6487, %v7161
        %v7258 = vadd.f32 %v6488, %v7162
        %v7259 = vadd.f32 %v6489, %v7163
        %v7260 = vadd.f32 %v6490, %v7164
        %v7261 = vadd.f32 %v6491, %v7165
        %v7262 = vadd.f32 %v6492, %v7166
        %v7263 = vadd.f32 %v6493, %v7167
        %v7264 = vadd.f32 %v6494, %v7168
        %v7265 = vadd.f32 %v6495, %v7169
        %v7266 = vadd.f32 %v6496, %v7170
        %v7267 = vadd.f32 %v6497, %v7171
        %v7268 = vld [vmem:[%s2] sm:$0x1]
        %v7270 = vperm.slane %v7268, 0
        %v7272 = vadd.f32 %v7172, %v7270
        %v7273 = vadd.f32 %v7173, %v7270
        %v7274 = vadd.f32 %v7174, %v7270
        %v7275 = vadd.f32 %v7175, %v7270
        %v7276 = vadd.f32 %v7176, %v7270
        %v7277 = vadd.f32 %v7177, %v7270
        %v7278 = vadd.f32 %v7178, %v7270
        %v7279 = vadd.f32 %v7179, %v7270
        %v7280 = vadd.f32 %v7180, %v7270
        %v7281 = vadd.f32 %v7181, %v7270
        %v7282 = vadd.f32 %v7182, %v7270
        %v7283 = vadd.f32 %v7183, %v7270
        %v7284 = vadd.f32 %v7184, %v7270
        %v7285 = vadd.f32 %v7185, %v7270
        %v7286 = vadd.f32 %v7186, %v7270
        %v7287 = vadd.f32 %v7187, %v7270
        %v7288 = vadd.f32 %v7188, %v7270
        %v7289 = vadd.f32 %v7189, %v7270
        %v7290 = vadd.f32 %v7190, %v7270
        %v7291 = vadd.f32 %v7191, %v7270
        %v7292 = vadd.f32 %v7192, %v7270
        %v7293 = vadd.f32 %v7193, %v7270
        %v7294 = vadd.f32 %v7194, %v7270
        %v7295 = vadd.f32 %v7195, %v7270
        %v7296 = vadd.f32 %v7196, %v7270
        %v7297 = vadd.f32 %v7197, %v7270
        %v7298 = vadd.f32 %v7198, %v7270
        %v7299 = vadd.f32 %v7199, %v7270
        %v7300 = vadd.f32 %v7200, %v7270
        %v7301 = vadd.f32 %v7201, %v7270
        %v7302 = vadd.f32 %v7202, %v7270
        %v7303 = vadd.f32 %v7203, %v7270
        %v7304 = vadd.f32 %v7204, %v7270
        %v7305 = vadd.f32 %v7205, %v7270
        %v7306 = vadd.f32 %v7206, %v7270
        %v7307 = vadd.f32 %v7207, %v7270
        %v7308 = vadd.f32 %v7208, %v7270
        %v7309 = vadd.f32 %v7209, %v7270
        %v7310 = vadd.f32 %v7210, %v7270
        %v7311 = vadd.f32 %v7211, %v7270
        %v7312 = vadd.f32 %v7212, %v7270
        %v7313 = vadd.f32 %v7213, %v7270
        %v7314 = vadd.f32 %v7214, %v7270
        %v7315 = vadd.f32 %v7215, %v7270
        %v7316 = vadd.f32 %v7216, %v7270
        %v7317 = vadd.f32 %v7217, %v7270
        %v7318 = vadd.f32 %v7218, %v7270
        %v7319 = vadd.f32 %v7219, %v7270
        %v7320 = vadd.f32 %v7220, %v7270
        %v7321 = vadd.f32 %v7221, %v7270
        %v7322 = vadd.f32 %v7222, %v7270
        %v7323 = vadd.f32 %v7223, %v7270
        %v7324 = vadd.f32 %v7224, %v7270
        %v7325 = vadd.f32 %v7225, %v7270
        %v7326 = vadd.f32 %v7226, %v7270
        %v7327 = vadd.f32 %v7227, %v7270
        %v7328 = vadd.f32 %v7228, %v7270
        %v7329 = vadd.f32 %v7229, %v7270
        %v7330 = vadd.f32 %v7230, %v7270
        %v7331 = vadd.f32 %v7231, %v7270
        %v7332 = vadd.f32 %v7232, %v7270
        %v7333 = vadd.f32 %v7233, %v7270
        %v7334 = vadd.f32 %v7234, %v7270
        %v7335 = vadd.f32 %v7235, %v7270
        %v7336 = vadd.f32 %v7236, %v7270
        %v7337 = vadd.f32 %v7237, %v7270
        %v7338 = vadd.f32 %v7238, %v7270
        %v7339 = vadd.f32 %v7239, %v7270
        %v7340 = vadd.f32 %v7240, %v7270
        %v7341 = vadd.f32 %v7241, %v7270
        %v7342 = vadd.f32 %v7242, %v7270
        %v7343 = vadd.f32 %v7243, %v7270
        %v7344 = vadd.f32 %v7244, %v7270
        %v7345 = vadd.f32 %v7245, %v7270
        %v7346 = vadd.f32 %v7246, %v7270
        %v7347 = vadd.f32 %v7247, %v7270
        %v7348 = vadd.f32 %v7248, %v7270
        %v7349 = vadd.f32 %v7249, %v7270
        %v7350 = vadd.f32 %v7250, %v7270
        %v7351 = vadd.f32 %v7251, %v7270
        %v7352 = vadd.f32 %v7252, %v7270
        %v7353 = vadd.f32 %v7253, %v7270
        %v7354 = vadd.f32 %v7254, %v7270
        %v7355 = vadd.f32 %v7255, %v7270
        %v7356 = vadd.f32 %v7256, %v7270
        %v7357 = vadd.f32 %v7257, %v7270
        %v7358 = vadd.f32 %v7258, %v7270
        %v7359 = vadd.f32 %v7259, %v7270
        %v7360 = vadd.f32 %v7260, %v7270
        %v7361 = vadd.f32 %v7261, %v7270
        %v7362 = vadd.f32 %v7262, %v7270
        %v7363 = vadd.f32 %v7263, %v7270
        %v7364 = vadd.f32 %v7264, %v7270
        %v7365 = vadd.f32 %v7265, %v7270
        %v7366 = vadd.f32 %v7266, %v7270
        %v7367 = vadd.f32 %v7267, %v7270
        %v7368 = vmax.f32 %v7272, 0.0
        %v7369 = vmax.f32 %v7273, 0.0
        %v7370 = vmax.f32 %v7274, 0.0
        %v7371 = vmax.f32 %v7275, 0.0
        %v7372 = vmax.f32 %v7276, 0.0
        %v7373 = vmax.f32 %v7277, 0.0
        %v7374 = vmax.f32 %v7278, 0.0
        %v7375 = vmax.f32 %v7279, 0.0
        %v7376 = vmax.f32 %v7280, 0.0
        %v7377 = vmax.f32 %v7281, 0.0
        %v7378 = vmax.f32 %v7282, 0.0
        %v7379 = vmax.f32 %v7283, 0.0
        %v7380 = vmax.f32 %v7284, 0.0
        %v7381 = vmax.f32 %v7285, 0.0
        %v7382 = vmax.f32 %v7286, 0.0
        %v7383 = vmax.f32 %v7287, 0.0
        %v7384 = vmax.f32 %v7288, 0.0
        %v7385 = vmax.f32 %v7289, 0.0
        %v7386 = vmax.f32 %v7290, 0.0
        %v7387 = vmax.f32 %v7291, 0.0
        %v7388 = vmax.f32 %v7292, 0.0
        %v7389 = vmax.f32 %v7293, 0.0
        %v7390 = vmax.f32 %v7294, 0.0
        %v7391 = vmax.f32 %v7295, 0.0
        %v7392 = vmax.f32 %v7296, 0.0
        %v7393 = vmax.f32 %v7297, 0.0
        %v7394 = vmax.f32 %v7298, 0.0
        %v7395 = vmax.f32 %v7299, 0.0
        %v7396 = vmax.f32 %v7300, 0.0
        %v7397 = vmax.f32 %v7301, 0.0
        %v7398 = vmax.f32 %v7302, 0.0
        %v7399 = vmax.f32 %v7303, 0.0
        %v7400 = vmax.f32 %v7304, 0.0
        %v7401 = vmax.f32 %v7305, 0.0
        %v7402 = vmax.f32 %v7306, 0.0
        %v7403 = vmax.f32 %v7307, 0.0
        %v7404 = vmax.f32 %v7308, 0.0
        %v7405 = vmax.f32 %v7309, 0.0
        %v7406 = vmax.f32 %v7310, 0.0
        %v7407 = vmax.f32 %v7311, 0.0
        %v7408 = vmax.f32 %v7312, 0.0
        %v7409 = vmax.f32 %v7313, 0.0
        %v7410 = vmax.f32 %v7314, 0.0
        %v7411 = vmax.f32 %v7315, 0.0
        %v7412 = vmax.f32 %v7316, 0.0
        %v7413 = vmax.f32 %v7317, 0.0
        %v7414 = vmax.f32 %v7318, 0.0
        %v7415 = vmax.f32 %v7319, 0.0
        %v7416 = vmax.f32 %v7320, 0.0
        %v7417 = vmax.f32 %v7321, 0.0
        %v7418 = vmax.f32 %v7322, 0.0
        %v7419 = vmax.f32 %v7323, 0.0
        %v7420 = vmax.f32 %v7324, 0.0
        %v7421 = vmax.f32 %v7325, 0.0
        %v7422 = vmax.f32 %v7326, 0.0
        %v7423 = vmax.f32 %v7327, 0.0
        %v7424 = vmax.f32 %v7328, 0.0
        %v7425 = vmax.f32 %v7329, 0.0
        %v7426 = vmax.f32 %v7330, 0.0
        %v7427 = vmax.f32 %v7331, 0.0
        %v7428 = vmax.f32 %v7332, 0.0
        %v7429 = vmax.f32 %v7333, 0.0
        %v7430 = vmax.f32 %v7334, 0.0
        %v7431 = vmax.f32 %v7335, 0.0
        %v7432 = vmax.f32 %v7336, 0.0
        %v7433 = vmax.f32 %v7337, 0.0
        %v7434 = vmax.f32 %v7338, 0.0
        %v7435 = vmax.f32 %v7339, 0.0
        %v7436 = vmax.f32 %v7340, 0.0
        %v7437 = vmax.f32 %v7341, 0.0
        %v7438 = vmax.f32 %v7342, 0.0
        %v7439 = vmax.f32 %v7343, 0.0
        %v7440 = vmax.f32 %v7344, 0.0
        %v7441 = vmax.f32 %v7345, 0.0
        %v7442 = vmax.f32 %v7346, 0.0
        %v7443 = vmax.f32 %v7347, 0.0
        %v7444 = vmax.f32 %v7348, 0.0
        %v7445 = vmax.f32 %v7349, 0.0
        %v7446 = vmax.f32 %v7350, 0.0
        %v7447 = vmax.f32 %v7351, 0.0
        %v7448 = vmax.f32 %v7352, 0.0
        %v7449 = vmax.f32 %v7353, 0.0
        %v7450 = vmax.f32 %v7354, 0.0
        %v7451 = vmax.f32 %v7355, 0.0
        %v7452 = vmax.f32 %v7356, 0.0
        %v7453 = vmax.f32 %v7357, 0.0
        %v7454 = vmax.f32 %v7358, 0.0
        %v7455 = vmax.f32 %v7359, 0.0
        %v7456 = vmax.f32 %v7360, 0.0
        %v7457 = vmax.f32 %v7361, 0.0
        %v7458 = vmax.f32 %v7362, 0.0
        %v7459 = vmax.f32 %v7363, 0.0
        %v7460 = vmax.f32 %v7364, 0.0
        %v7461 = vmax.f32 %v7365, 0.0
        %v7462 = vmax.f32 %v7366, 0.0
        %v7463 = vmax.f32 %v7367, 0.0
        %7464 = vst.msk [vmem:[#allocation2 + $0x21] sm:$0xff] %vm387, %v7368
        %7465 = vst.msk [vmem:[#allocation2 + $0x29] sm:$0xff] %vm387, %v7369
        %7466 = vst.msk [vmem:[#allocation2 + $0x31] sm:$0xff] %vm387, %v7370
        %7467 = vst.msk [vmem:[#allocation2 + $0x39] sm:$0xff] %vm387, %v7371
        %7468 = vst.msk [vmem:[#allocation2 + $0x41] sm:$0xff] %vm387, %v7372
        %7469 = vst.msk [vmem:[#allocation2 + $0x49] sm:$0xff] %vm387, %v7373
        %7470 = vst.msk [vmem:[#allocation2 + $0x51] sm:$0xff] %vm387, %v7374
        %7471 = vst.msk [vmem:[#allocation2 + $0x59] sm:$0xff] %vm387, %v7375
        %7472 = vst.msk [vmem:[#allocation2 + $0x61] sm:$0xff] %vm387, %v7376
        %7473 = vst.msk [vmem:[#allocation2 + $0x69] sm:$0xff] %vm387, %v7377
        %7474 = vst.msk [vmem:[#allocation2 + $0x71] sm:$0xff] %vm387, %v7378
        %7475 = vst.msk [vmem:[#allocation2 + $0x79] sm:$0xff] %vm387, %v7379
        %7476 = vst.msk [vmem:[#allocation2 + $0x81] sm:$0xff] %vm387, %v7380
        %7477 = vst.msk [vmem:[#allocation2 + $0x89] sm:$0xff] %vm387, %v7381
        %7478 = vst.msk [vmem:[#allocation2 + $0x91] sm:$0xff] %vm387, %v7382
        %7479 = vst.msk [vmem:[#allocation2 + $0x99] sm:$0xff] %vm387, %v7383
        %7480 = vst.msk [vmem:[#allocation2 + $0xa1] sm:$0xff] %vm387, %v7384
        %7481 = vst.msk [vmem:[#allocation2 + $0xa9] sm:$0xff] %vm387, %v7385
        %7482 = vst.msk [vmem:[#allocation2 + $0xb1] sm:$0xff] %vm387, %v7386
        %7483 = vst.msk [vmem:[#allocation2 + $0xb9] sm:$0xff] %vm387, %v7387
        %7484 = vst.msk [vmem:[#allocation2 + $0xc1] sm:$0xff] %vm387, %v7388
        %7485 = vst.msk [vmem:[#allocation2 + $0xc9] sm:$0xff] %vm387, %v7389
        %7486 = vst.msk [vmem:[#allocation2 + $0xd1] sm:$0xff] %vm387, %v7390
        %7487 = vst.msk [vmem:[#allocation2 + $0xd9] sm:$0xff] %vm387, %v7391
        %7488 = vst.msk [vmem:[#allocation2 + $0xe1] sm:$0xff] %vm387, %v7392
        %7489 = vst.msk [vmem:[#allocation2 + $0xe9] sm:$0xff] %vm387, %v7393
        %7490 = vst.msk [vmem:[#allocation2 + $0xf1] sm:$0xff] %vm387, %v7394
        %7491 = vst.msk [vmem:[#allocation2 + $0xf9] sm:$0xff] %vm387, %v7395
        %7492 = vst.msk [vmem:[#allocation2 + $0x101] sm:$0xff] %vm387, %v7396
        %7493 = vst.msk [vmem:[#allocation2 + $0x109] sm:$0xff] %vm387, %v7397
        %7494 = vst.msk [vmem:[#allocation2 + $0x111] sm:$0xff] %vm387, %v7398
        %7495 = vst.msk [vmem:[#allocation2 + $0x119] sm:$0xff] %vm387, %v7399
        %7496 = vst.msk [vmem:[#allocation2 + $0x121] sm:$0xff] %vm387, %v7400
        %7497 = vst.msk [vmem:[#allocation2 + $0x129] sm:$0xff] %vm387, %v7401
        %7498 = vst.msk [vmem:[#allocation2 + $0x131] sm:$0xff] %vm387, %v7402
        %7499 = vst.msk [vmem:[#allocation2 + $0x139] sm:$0xff] %vm387, %v7403
        %7500 = vst.msk [vmem:[#allocation2 + $0x141] sm:$0xff] %vm387, %v7404
        %7501 = vst.msk [vmem:[#allocation2 + $0x149] sm:$0xff] %vm387, %v7405
        %7502 = vst.msk [vmem:[#allocation2 + $0x151] sm:$0xff] %vm387, %v7406
        %7503 = vst.msk [vmem:[#allocation2 + $0x159] sm:$0xff] %vm387, %v7407
        %7504 = vst.msk [vmem:[#allocation2 + $0x161] sm:$0xff] %vm387, %v7408
        %7505 = vst.msk [vmem:[#allocation2 + $0x169] sm:$0xff] %vm387, %v7409
        %7506 = vst.msk [vmem:[#allocation2 + $0x171] sm:$0xff] %vm387, %v7410
        %7507 = vst.msk [vmem:[#allocation2 + $0x179] sm:$0xff] %vm387, %v7411
        %7508 = vst.msk [vmem:[#allocation2 + $0x181] sm:$0xff] %vm387, %v7412
        %7509 = vst.msk [vmem:[#allocation2 + $0x189] sm:$0xff] %vm387, %v7413
        %7510 = vst.msk [vmem:[#allocation2 + $0x191] sm:$0xff] %vm387, %v7414
        %7511 = vst.msk [vmem:[#allocation2 + $0x199] sm:$0xff] %vm387, %v7415
        %7512 = vst.msk [vmem:[#allocation2 + $0x1a1] sm:$0xff] %vm387, %v7416
        %7513 = vst.msk [vmem:[#allocation2 + $0x1a9] sm:$0xff] %vm387, %v7417
        %7514 = vst.msk [vmem:[#allocation2 + $0x1b1] sm:$0xff] %vm387, %v7418
        %7515 = vst.msk [vmem:[#allocation2 + $0x1b9] sm:$0xff] %vm387, %v7419
        %7516 = vst.msk [vmem:[#allocation2 + $0x1c1] sm:$0xff] %vm387, %v7420
        %7517 = vst.msk [vmem:[#allocation2 + $0x1c9] sm:$0xff] %vm387, %v7421
        %7518 = vst.msk [vmem:[#allocation2 + $0x1d1] sm:$0xff] %vm387, %v7422
        %7519 = vst.msk [vmem:[#allocation2 + $0x1d9] sm:$0xff] %vm387, %v7423
        %7520 = vst.msk [vmem:[#allocation2 + $0x1e1] sm:$0xff] %vm387, %v7424
        %7521 = vst.msk [vmem:[#allocation2 + $0x1e9] sm:$0xff] %vm387, %v7425
        %7522 = vst.msk [vmem:[#allocation2 + $0x1f1] sm:$0xff] %vm387, %v7426
        %7523 = vst.msk [vmem:[#allocation2 + $0x1f9] sm:$0xff] %vm387, %v7427
        %7524 = vst.msk [vmem:[#allocation2 + $0x201] sm:$0xff] %vm387, %v7428
        %7525 = vst.msk [vmem:[#allocation2 + $0x209] sm:$0xff] %vm387, %v7429
        %7526 = vst.msk [vmem:[#allocation2 + $0x211] sm:$0xff] %vm387, %v7430
        %7527 = vst.msk [vmem:[#allocation2 + $0x219] sm:$0xff] %vm387, %v7431
        %7528 = vst.msk [vmem:[#allocation2 + $0x221] sm:$0xff] %vm387, %v7432
        %7529 = vst.msk [vmem:[#allocation2 + $0x229] sm:$0xff] %vm387, %v7433
        %7530 = vst.msk [vmem:[#allocation2 + $0x231] sm:$0xff] %vm387, %v7434
        %7531 = vst.msk [vmem:[#allocation2 + $0x239] sm:$0xff] %vm387, %v7435
        %7532 = vst.msk [vmem:[#allocation2 + $0x241] sm:$0xff] %vm387, %v7436
        %7533 = vst.msk [vmem:[#allocation2 + $0x249] sm:$0xff] %vm387, %v7437
        %7534 = vst.msk [vmem:[#allocation2 + $0x251] sm:$0xff] %vm387, %v7438
        %7535 = vst.msk [vmem:[#allocation2 + $0x259] sm:$0xff] %vm387, %v7439
        %7536 = vst.msk [vmem:[#allocation2 + $0x261] sm:$0xff] %vm387, %v7440
        %7537 = vst.msk [vmem:[#allocation2 + $0x269] sm:$0xff] %vm387, %v7441
        %7538 = vst.msk [vmem:[#allocation2 + $0x271] sm:$0xff] %vm387, %v7442
        %7539 = vst.msk [vmem:[#allocation2 + $0x279] sm:$0xff] %vm387, %v7443
        %7540 = vst.msk [vmem:[#allocation2 + $0x281] sm:$0xff] %vm387, %v7444
        %7541 = vst.msk [vmem:[#allocation2 + $0x289] sm:$0xff] %vm387, %v7445
        %7542 = vst.msk [vmem:[#allocation2 + $0x291] sm:$0xff] %vm387, %v7446
        %7543 = vst.msk [vmem:[#allocation2 + $0x299] sm:$0xff] %vm387, %v7447
        %7544 = vst.msk [vmem:[#allocation2 + $0x2a1] sm:$0xff] %vm387, %v7448
        %7545 = vst.msk [vmem:[#allocation2 + $0x2a9] sm:$0xff] %vm387, %v7449
        %7546 = vst.msk [vmem:[#allocation2 + $0x2b1] sm:$0xff] %vm387, %v7450
        %7547 = vst.msk [vmem:[#allocation2 + $0x2b9] sm:$0xff] %vm387, %v7451
        %7548 = vst.msk [vmem:[#allocation2 + $0x2c1] sm:$0xff] %vm387, %v7452
        %7549 = vst.msk [vmem:[#allocation2 + $0x2c9] sm:$0xff] %vm387, %v7453
        %7550 = vst.msk [vmem:[#allocation2 + $0x2d1] sm:$0xff] %vm387, %v7454
        %7551 = vst.msk [vmem:[#allocation2 + $0x2d9] sm:$0xff] %vm387, %v7455
        %7552 = vst.msk [vmem:[#allocation2 + $0x2e1] sm:$0xff] %vm387, %v7456
        %7553 = vst.msk [vmem:[#allocation2 + $0x2e9] sm:$0xff] %vm387, %v7457
        %7554 = vst.msk [vmem:[#allocation2 + $0x2f1] sm:$0xff] %vm387, %v7458
        %7555 = vst.msk [vmem:[#allocation2 + $0x2f9] sm:$0xff] %vm387, %v7459
        %7556 = vst.msk [vmem:[#allocation2 + $0x301] sm:$0xff] %vm387, %v7460
        %7557 = vst.msk [vmem:[#allocation2 + $0x309] sm:$0xff] %vm387, %v7461
        %7558 = vst.msk [vmem:[#allocation2 + $0x311] sm:$0xff] %vm387, %v7462
        %vm7559 = vcmask 128000
        %7560 = vst.msk [vmem:[#allocation2 + $0x319] sm:$0x3f] %vm7559, %v7463
        %v7561 = vlaneseq
        %v7562 = vshrl.u32 %v7561, 7
        %v7563 = vadd.s32 %v7562, 8
        %v7564 = vlaneseq
        %v7565 = vand.u32 %v7564, 127
        %v7566 = vmul.u32 %v7562, 2
        %v7567 = vmul.u32 %v7563, 2
        %vm7568 = vcmp.eq.s32.totalorder %v7565, %v7566
        %vm7569 = vcmp.eq.s32.totalorder %v7565, %v7567
        %v7570 = vsel %vm7568, 1, 0
        %v7571 = vsel %vm7569, 1, 0
        %v7572 = vcvt.s32.f32 %v7570
        %v7573 = vcvt.s32.f32 %v7571
        %v7574 = vld [vmem:[#allocation2 + $0x21] sm:$0xff]
        %v7575 = vld [vmem:[#allocation2 + $0x29] sm:$0xff]
        %v7576 = vld [vmem:[#allocation2 + $0x31] sm:$0xff]
        %v7577 = vld [vmem:[#allocation2 + $0x22] sm:$0xff]
        %v7578 = vld [vmem:[#allocation2 + $0x2a] sm:$0xff]
        %v7579 = vld [vmem:[#allocation2 + $0x32] sm:$0xff]
        %v7580 = vmax.f32 %v7574, %v7577
        %v7581 = vmax.f32 %v7575, %v7578
        %v7582 = vmax.f32 %v7576, %v7579
        %v7583 = vld [vmem:[#allocation2 + $0x41] sm:$0xff]
        %v7584 = vld [vmem:[#allocation2 + $0x49] sm:$0xff]
        %v7585 = vld [vmem:[#allocation2 + $0x51] sm:$0xff]
        %v7586 = vld [vmem:[#allocation2 + $0x42] sm:$0xff]
        %v7587 = vld [vmem:[#allocation2 + $0x4a] sm:$0xff]
        %v7588 = vld [vmem:[#allocation2 + $0x52] sm:$0xff]
        %v7589 = vmax.f32 %v7583, %v7586
        %v7590 = vmax.f32 %v7584, %v7587
        %v7591 = vmax.f32 %v7585, %v7588
        %v7592 = vmax.f32 %v7580, %v7589
        %v7593 = vmax.f32 %v7581, %v7590
        %v7594 = vmax.f32 %v7582, %v7591
        %vm7595 = vcmask 195584
        %v7597 = vsel %vm7595, %v7572, 0
        %v7600 = vsel %vm7595, %v7573, 0
        %7602 = vmatpush.msra.mxu0 0.0
        %7603 = vmatpush.msra.mxu0 0.0
        %7604 = vmatpush.msra.mxu0 0.0
        %7605 = vmatpush.msra.mxu0 0.0
        %7606 = vmatpush.msra.mxu0 0.0
        %7607 = vmatpush.msra.mxu0 0.0
        %7608 = vmatpush.msra.mxu0 0.0
        %7609 = vmatpush.msra.mxu0 0.0
        %7610 = vmatpush.msra.mxu0 0.0
        %7611 = vmatpush.msra.mxu0 0.0
        %7612 = vmatpush.msra.mxu0 0.0
        %7613 = vmatpush.msra.mxu0 0.0
        %7614 = vmatpush.msra.mxu0 0.0
        %7615 = vmatpush.msra.mxu0 %v7594
        %7616 = vmatpush.msra.mxu0 %v7593
        %7617 = vmatpush.msra.mxu0 %v7592
        %7618 = vmatmul.f32.gmra.mxu0 %v7597
        %v7619 = vpop.f32.mrf.mxu0
        %v7620 = vadd.f32 0.0, %v7619
        %7621 = vmatmul.f32.gmra.mxu0 %v7600
        %v7622 = vpop.f32.mrf.mxu0
        %v7623 = vadd.f32 0.0, %v7622
        %7624 = vdwg.mxu0
        %7625 = vst.msk [vmem:[#allocation3 + $0x11] sm:$0xff] %vm387, %v7620
        %vm7626 = vcmask 125952
        %7627 = vst.msk [vmem:[#allocation3 + $0x19] sm:$0xf] %vm7626, %v7623
        %v7628 = vld [vmem:[#allocation2 + $0x61] sm:$0xff]
        %v7629 = vld [vmem:[#allocation2 + $0x69] sm:$0xff]
        %v7630 = vld [vmem:[#allocation2 + $0x71] sm:$0xff]
        %v7631 = vld [vmem:[#allocation2 + $0x62] sm:$0xff]
        %v7632 = vld [vmem:[#allocation2 + $0x6a] sm:$0xff]
        %v7633 = vld [vmem:[#allocation2 + $0x72] sm:$0xff]
        %v7634 = vmax.f32 %v7628, %v7631
        %v7635 = vmax.f32 %v7629, %v7632
        %v7636 = vmax.f32 %v7630, %v7633
        %v7637 = vld [vmem:[#allocation2 + $0x81] sm:$0xff]
        %v7638 = vld [vmem:[#allocation2 + $0x89] sm:$0xff]
        %v7639 = vld [vmem:[#allocation2 + $0x91] sm:$0xff]
        %v7640 = vld [vmem:[#allocation2 + $0x82] sm:$0xff]
        %v7641 = vld [vmem:[#allocation2 + $0x8a] sm:$0xff]
        %v7642 = vld [vmem:[#allocation2 + $0x92] sm:$0xff]
        %v7643 = vmax.f32 %v7637, %v7640
        %v7644 = vmax.f32 %v7638, %v7641
        %v7645 = vmax.f32 %v7639, %v7642
        %v7646 = vmax.f32 %v7634, %v7643
        %v7647 = vmax.f32 %v7635, %v7644
        %v7648 = vmax.f32 %v7636, %v7645
        %7649 = vmatpush.msra.mxu0 0.0
        %7650 = vmatpush.msra.mxu0 0.0
        %7651 = vmatpush.msra.mxu0 0.0
        %7652 = vmatpush.msra.mxu0 0.0
        %7653 = vmatpush.msra.mxu0 0.0
        %7654 = vmatpush.msra.mxu0 0.0
        %7655 = vmatpush.msra.mxu0 0.0
        %7656 = vmatpush.msra.mxu0 0.0
        %7657 = vmatpush.msra.mxu0 0.0
        %7658 = vmatpush.msra.mxu0 0.0
        %7659 = vmatpush.msra.mxu0 0.0
        %7660 = vmatpush.msra.mxu0 0.0
        %7661 = vmatpush.msra.mxu0 0.0
        %7662 = vmatpush.msra.mxu0 %v7648
        %7663 = vmatpush.msra.mxu0 %v7647
        %7664 = vmatpush.msra.mxu0 %v7646
        %7665 = vmatmul.f32.gmra.mxu0 %v7597
        %v7666 = vpop.f32.mrf.mxu0
        %v7667 = vadd.f32 0.0, %v7666
        %7668 = vmatmul.f32.gmra.mxu0 %v7600
        %v7669 = vpop.f32.mrf.mxu0
        %v7670 = vadd.f32 0.0, %v7669
        %7671 = vdwg.mxu0
        %7672 = vst.msk [vmem:[#allocation3 + $0x21] sm:$0xff] %vm387, %v7667
        %7673 = vst.msk [vmem:[#allocation3 + $0x29] sm:$0xf] %vm7626, %v7670
        %v7674 = vld [vmem:[#allocation2 + $0xa1] sm:$0xff]
        %v7675 = vld [vmem:[#allocation2 + $0xa9] sm:$0xff]
        %v7676 = vld [vmem:[#allocation2 + $0xb1] sm:$0xff]
        %v7677 = vld [vmem:[#allocation2 + $0xa2] sm:$0xff]
        %v7678 = vld [vmem:[#allocation2 + $0xaa] sm:$0xff]
        %v7679 = vld [vmem:[#allocation2 + $0xb2] sm:$0xff]
        %v7680 = vmax.f32 %v7674, %v7677
        %v7681 = vmax.f32 %v7675, %v7678
        %v7682 = vmax.f32 %v7676, %v7679
        %v7683 = vld [vmem:[#allocation2 + $0xc1] sm:$0xff]
        %v7684 = vld [vmem:[#allocation2 + $0xc9] sm:$0xff]
        %v7685 = vld [vmem:[#allocation2 + $0xd1] sm:$0xff]
        %v7686 = vld [vmem:[#allocation2 + $0xc2] sm:$0xff]
        %v7687 = vld [vmem:[#allocation2 + $0xca] sm:$0xff]
        %v7688 = vld [vmem:[#allocation2 + $0xd2] sm:$0xff]
        %v7689 = vmax.f32 %v7683, %v7686
        %v7690 = vmax.f32 %v7684, %v7687
        %v7691 = vmax.f32 %v7685, %v7688
        %v7692 = vmax.f32 %v7680, %v7689
        %v7693 = vmax.f32 %v7681, %v7690
        %v7694 = vmax.f32 %v7682, %v7691
        %7695 = vmatpush.msra.mxu0 0.0
        %7696 = vmatpush.msra.mxu0 0.0
        %7697 = vmatpush.msra.mxu0 0.0
        %7698 = vmatpush.msra.mxu0 0.0
        %7699 = vmatpush.msra.mxu0 0.0
        %7700 = vmatpush.msra.mxu0 0.0
        %7701 = vmatpush.msra.mxu0 0.0
        %7702 = vmatpush.msra.mxu0 0.0
        %7703 = vmatpush.msra.mxu0 0.0
        %7704 = vmatpush.msra.mxu0 0.0
        %7705 = vmatpush.msra.mxu0 0.0
        %7706 = vmatpush.msra.mxu0 0.0
        %7707 = vmatpush.msra.mxu0 0.0
        %7708 = vmatpush.msra.mxu0 %v7694
        %7709 = vmatpush.msra.mxu0 %v7693
        %7710 = vmatpush.msra.mxu0 %v7692
        %7711 = vmatmul.f32.gmra.mxu0 %v7597
        %v7712 = vpop.f32.mrf.mxu0
        %v7713 = vadd.f32 0.0, %v7712
        %7714 = vmatmul.f32.gmra.mxu0 %v7600
        %v7715 = vpop.f32.mrf.mxu0
        %v7716 = vadd.f32 0.0, %v7715
        %7717 = vdwg.mxu0
        %7718 = vst.msk [vmem:[#allocation3 + $0x31] sm:$0xff] %vm387, %v7713
        %7719 = vst.msk [vmem:[#allocation3 + $0x39] sm:$0xf] %vm7626, %v7716
        %v7720 = vld [vmem:[#allocation2 + $0xe1] sm:$0xff]
        %v7721 = vld [vmem:[#allocation2 + $0xe9] sm:$0xff]
        %v7722 = vld [vmem:[#allocation2 + $0xf1] sm:$0xff]
        %v7723 = vld [vmem:[#allocation2 + $0xe2] sm:$0xff]
        %v7724 = vld [vmem:[#allocation2 + $0xea] sm:$0xff]
        %v7725 = vld [vmem:[#allocation2 + $0xf2] sm:$0xff]
        %v7726 = vmax.f32 %v7720, %v7723
        %v7727 = vmax.f32 %v7721, %v7724
        %v7728 = vmax.f32 %v7722, %v7725
        %v7729 = vld [vmem:[#allocation2 + $0x101] sm:$0xff]
        %v7730 = vld [vmem:[#allocation2 + $0x109] sm:$0xff]
        %v7731 = vld [vmem:[#allocation2 + $0x111] sm:$0xff]
        %v7732 = vld [vmem:[#allocation2 + $0x102] sm:$0xff]
        %v7733 = vld [vmem:[#allocation2 + $0x10a] sm:$0xff]
        %v7734 = vld [vmem:[#allocation2 + $0x112] sm:$0xff]
        %v7735 = vmax.f32 %v7729, %v7732
        %v7736 = vmax.f32 %v7730, %v7733
        %v7737 = vmax.f32 %v7731, %v7734
        %v7738 = vmax.f32 %v7726, %v7735
        %v7739 = vmax.f32 %v7727, %v7736
        %v7740 = vmax.f32 %v7728, %v7737
        %7741 = vmatpush.msra.mxu0 0.0
        %7742 = vmatpush.msra.mxu0 0.0
        %7743 = vmatpush.msra.mxu0 0.0
        %7744 = vmatpush.msra.mxu0 0.0
        %7745 = vmatpush.msra.mxu0 0.0
        %7746 = vmatpush.msra.mxu0 0.0
        %7747 = vmatpush.msra.mxu0 0.0
        %7748 = vmatpush.msra.mxu0 0.0
        %7749 = vmatpush.msra.mxu0 0.0
        %7750 = vmatpush.msra.mxu0 0.0
        %7751 = vmatpush.msra.mxu0 0.0
        %7752 = vmatpush.msra.mxu0 0.0
        %7753 = vmatpush.msra.mxu0 0.0
        %7754 = vmatpush.msra.mxu0 %v7740
        %7755 = vmatpush.msra.mxu0 %v7739
        %7756 = vmatpush.msra.mxu0 %v7738
        %7757 = vmatmul.f32.gmra.mxu0 %v7597
        %v7758 = vpop.f32.mrf.mxu0
        %v7759 = vadd.f32 0.0, %v7758
        %7760 = vmatmul.f32.gmra.mxu0 %v7600
        %v7761 = vpop.f32.mrf.mxu0
        %v7762 = vadd.f32 0.0, %v7761
        %7763 = vdwg.mxu0
        %7764 = vst.msk [vmem:[#allocation3 + $0x41] sm:$0xff] %vm387, %v7759
        %7765 = vst.msk [vmem:[#allocation3 + $0x49] sm:$0xf] %vm7626, %v7762
        %v7766 = vld [vmem:[#allocation2 + $0x121] sm:$0xff]
        %v7767 = vld [vmem:[#allocation2 + $0x129] sm:$0xff]
        %v7768 = vld [vmem:[#allocation2 + $0x131] sm:$0xff]
        %v7769 = vld [vmem:[#allocation2 + $0x122] sm:$0xff]
        %v7770 = vld [vmem:[#allocation2 + $0x12a] sm:$0xff]
        %v7771 = vld [vmem:[#allocation2 + $0x132] sm:$0xff]
        %v7772 = vmax.f32 %v7766, %v7769
        %v7773 = vmax.f32 %v7767, %v7770
        %v7774 = vmax.f32 %v7768, %v7771
        %v7775 = vld [vmem:[#allocation2 + $0x141] sm:$0xff]
        %v7776 = vld [vmem:[#allocation2 + $0x149] sm:$0xff]
        %v7777 = vld [vmem:[#allocation2 + $0x151] sm:$0xff]
        %v7778 = vld [vmem:[#allocation2 + $0x142] sm:$0xff]
        %v7779 = vld [vmem:[#allocation2 + $0x14a] sm:$0xff]
        %v7780 = vld [vmem:[#allocation2 + $0x152] sm:$0xff]
        %v7781 = vmax.f32 %v7775, %v7778
        %v7782 = vmax.f32 %v7776, %v7779
        %v7783 = vmax.f32 %v7777, %v7780
        %v7784 = vmax.f32 %v7772, %v7781
        %v7785 = vmax.f32 %v7773, %v7782
        %v7786 = vmax.f32 %v7774, %v7783
        %7787 = vmatpush.msra.mxu0 0.0
        %7788 = vmatpush.msra.mxu0 0.0
        %7789 = vmatpush.msra.mxu0 0.0
        %7790 = vmatpush.msra.mxu0 0.0
        %7791 = vmatpush.msra.mxu0 0.0
        %7792 = vmatpush.msra.mxu0 0.0
        %7793 = vmatpush.msra.mxu0 0.0
        %7794 = vmatpush.msra.mxu0 0.0
        %7795 = vmatpush.msra.mxu0 0.0
        %7796 = vmatpush.msra.mxu0 0.0
        %7797 = vmatpush.msra.mxu0 0.0
        %7798 = vmatpush.msra.mxu0 0.0
        %7799 = vmatpush.msra.mxu0 0.0
        %7800 = vmatpush.msra.mxu0 %v7786
        %7801 = vmatpush.msra.mxu0 %v7785
        %7802 = vmatpush.msra.mxu0 %v7784
        %7803 = vmatmul.f32.gmra.mxu0 %v7597
        %v7804 = vpop.f32.mrf.mxu0
        %v7805 = vadd.f32 0.0, %v7804
        %7806 = vmatmul.f32.gmra.mxu0 %v7600
        %v7807 = vpop.f32.mrf.mxu0
        %v7808 = vadd.f32 0.0, %v7807
        %7809 = vdwg.mxu0
        %7810 = vst.msk [vmem:[#allocation3 + $0x51] sm:$0xff] %vm387, %v7805
        %7811 = vst.msk [vmem:[#allocation3 + $0x59] sm:$0xf] %vm7626, %v7808
        %v7812 = vld [vmem:[#allocation2 + $0x161] sm:$0xff]
        %v7813 = vld [vmem:[#allocation2 + $0x169] sm:$0xff]
        %v7814 = vld [vmem:[#allocation2 + $0x171] sm:$0xff]
        %v7815 = vld [vmem:[#allocation2 + $0x162] sm:$0xff]
        %v7816 = vld [vmem:[#allocation2 + $0x16a] sm:$0xff]
        %v7817 = vld [vmem:[#allocation2 + $0x172] sm:$0xff]
        %v7818 = vmax.f32 %v7812, %v7815
        %v7819 = vmax.f32 %v7813, %v7816
        %v7820 = vmax.f32 %v7814, %v7817
        %v7821 = vld [vmem:[#allocation2 + $0x181] sm:$0xff]
        %v7822 = vld [vmem:[#allocation2 + $0x189] sm:$0xff]
        %v7823 = vld [vmem:[#allocation2 + $0x191] sm:$0xff]
        %v7824 = vld [vmem:[#allocation2 + $0x182] sm:$0xff]
        %v7825 = vld [vmem:[#allocation2 + $0x18a] sm:$0xff]
        %v7826 = vld [vmem:[#allocation2 + $0x192] sm:$0xff]
        %v7827 = vmax.f32 %v7821, %v7824
        %v7828 = vmax.f32 %v7822, %v7825
        %v7829 = vmax.f32 %v7823, %v7826
        %v7830 = vmax.f32 %v7818, %v7827
        %v7831 = vmax.f32 %v7819, %v7828
        %v7832 = vmax.f32 %v7820, %v7829
        %7833 = vmatpush.msra.mxu0 0.0
        %7834 = vmatpush.msra.mxu0 0.0
        %7835 = vmatpush.msra.mxu0 0.0
        %7836 = vmatpush.msra.mxu0 0.0
        %7837 = vmatpush.msra.mxu0 0.0
        %7838 = vmatpush.msra.mxu0 0.0
        %7839 = vmatpush.msra.mxu0 0.0
        %7840 = vmatpush.msra.mxu0 0.0
        %7841 = vmatpush.msra.mxu0 0.0
        %7842 = vmatpush.msra.mxu0 0.0
        %7843 = vmatpush.msra.mxu0 0.0
        %7844 = vmatpush.msra.mxu0 0.0
        %7845 = vmatpush.msra.mxu0 0.0
        %7846 = vmatpush.msra.mxu0 %v7832
        %7847 = vmatpush.msra.mxu0 %v7831
        %7848 = vmatpush.msra.mxu0 %v7830
        %7849 = vmatmul.f32.gmra.mxu0 %v7597
        %v7850 = vpop.f32.mrf.mxu0
        %v7851 = vadd.f32 0.0, %v7850
        %7852 = vmatmul.f32.gmra.mxu0 %v7600
        %v7853 = vpop.f32.mrf.mxu0
        %v7854 = vadd.f32 0.0, %v7853
        %7855 = vdwg.mxu0
        %7856 = vst.msk [vmem:[#allocation3 + $0x61] sm:$0xff] %vm387, %v7851
        %7857 = vst.msk [vmem:[#allocation3 + $0x69] sm:$0xf] %vm7626, %v7854
        %v7858 = vld [vmem:[#allocation2 + $0x1a1] sm:$0xff]
        %v7859 = vld [vmem:[#allocation2 + $0x1a9] sm:$0xff]
        %v7860 = vld [vmem:[#allocation2 + $0x1b1] sm:$0xff]
        %v7861 = vld [vmem:[#allocation2 + $0x1a2] sm:$0xff]
        %v7862 = vld [vmem:[#allocation2 + $0x1aa] sm:$0xff]
        %v7863 = vld [vmem:[#allocation2 + $0x1b2] sm:$0xff]
        %v7864 = vmax.f32 %v7858, %v7861
        %v7865 = vmax.f32 %v7859, %v7862
        %v7866 = vmax.f32 %v7860, %v7863
        %v7867 = vld [vmem:[#allocation2 + $0x1c1] sm:$0xff]
        %v7868 = vld [vmem:[#allocation2 + $0x1c9] sm:$0xff]
        %v7869 = vld [vmem:[#allocation2 + $0x1d1] sm:$0xff]
        %v7870 = vld [vmem:[#allocation2 + $0x1c2] sm:$0xff]
        %v7871 = vld [vmem:[#allocation2 + $0x1ca] sm:$0xff]
        %v7872 = vld [vmem:[#allocation2 + $0x1d2] sm:$0xff]
        %v7873 = vmax.f32 %v7867, %v7870
        %v7874 = vmax.f32 %v7868, %v7871
        %v7875 = vmax.f32 %v7869, %v7872
        %v7876 = vmax.f32 %v7864, %v7873
        %v7877 = vmax.f32 %v7865, %v7874
        %v7878 = vmax.f32 %v7866, %v7875
        %7879 = vmatpush.msra.mxu0 0.0
        %7880 = vmatpush.msra.mxu0 0.0
        %7881 = vmatpush.msra.mxu0 0.0
        %7882 = vmatpush.msra.mxu0 0.0
        %7883 = vmatpush.msra.mxu0 0.0
        %7884 = vmatpush.msra.mxu0 0.0
        %7885 = vmatpush.msra.mxu0 0.0
        %7886 = vmatpush.msra.mxu0 0.0
        %7887 = vmatpush.msra.mxu0 0.0
        %7888 = vmatpush.msra.mxu0 0.0
        %7889 = vmatpush.msra.mxu0 0.0
        %7890 = vmatpush.msra.mxu0 0.0
        %7891 = vmatpush.msra.mxu0 0.0
        %7892 = vmatpush.msra.mxu0 %v7878
        %7893 = vmatpush.msra.mxu0 %v7877
        %7894 = vmatpush.msra.mxu0 %v7876
        %7895 = vmatmul.f32.gmra.mxu0 %v7597
        %v7896 = vpop.f32.mrf.mxu0
        %v7897 = vadd.f32 0.0, %v7896
        %7898 = vmatmul.f32.gmra.mxu0 %v7600
        %v7899 = vpop.f32.mrf.mxu0
        %v7900 = vadd.f32 0.0, %v7899
        %7901 = vdwg.mxu0
        %7902 = vst.msk [vmem:[#allocation3 + $0x71] sm:$0xff] %vm387, %v7897
        %7903 = vst.msk [vmem:[#allocation3 + $0x79] sm:$0xf] %vm7626, %v7900
        %v7904 = vld [vmem:[#allocation2 + $0x1e1] sm:$0xff]
        %v7905 = vld [vmem:[#allocation2 + $0x1e9] sm:$0xff]
        %v7906 = vld [vmem:[#allocation2 + $0x1f1] sm:$0xff]
        %v7907 = vld [vmem:[#allocation2 + $0x1e2] sm:$0xff]
        %v7908 = vld [vmem:[#allocation2 + $0x1ea] sm:$0xff]
        %v7909 = vld [vmem:[#allocation2 + $0x1f2] sm:$0xff]
        %v7910 = vmax.f32 %v7904, %v7907
        %v7911 = vmax.f32 %v7905, %v7908
        %v7912 = vmax.f32 %v7906, %v7909
        %v7913 = vld [vmem:[#allocation2 + $0x201] sm:$0xff]
        %v7914 = vld [vmem:[#allocation2 + $0x209] sm:$0xff]
        %v7915 = vld [vmem:[#allocation2 + $0x211] sm:$0xff]
        %v7916 = vld [vmem:[#allocation2 + $0x202] sm:$0xff]
        %v7917 = vld [vmem:[#allocation2 + $0x20a] sm:$0xff]
        %v7918 = vld [vmem:[#allocation2 + $0x212] sm:$0xff]
        %v7919 = vmax.f32 %v7913, %v7916
        %v7920 = vmax.f32 %v7914, %v7917
        %v7921 = vmax.f32 %v7915, %v7918
        %v7922 = vmax.f32 %v7910, %v7919
        %v7923 = vmax.f32 %v7911, %v7920
        %v7924 = vmax.f32 %v7912, %v7921
        %7925 = vmatpush.msra.mxu0 0.0
        %7926 = vmatpush.msra.mxu0 0.0
        %7927 = vmatpush.msra.mxu0 0.0
        %7928 = vmatpush.msra.mxu0 0.0
        %7929 = vmatpush.msra.mxu0 0.0
        %7930 = vmatpush.msra.mxu0 0.0
        %7931 = vmatpush.msra.mxu0 0.0
        %7932 = vmatpush.msra.mxu0 0.0
        %7933 = vmatpush.msra.mxu0 0.0
        %7934 = vmatpush.msra.mxu0 0.0
        %7935 = vmatpush.msra.mxu0 0.0
        %7936 = vmatpush.msra.mxu0 0.0
        %7937 = vmatpush.msra.mxu0 0.0
        %7938 = vmatpush.msra.mxu0 %v7924
        %7939 = vmatpush.msra.mxu0 %v7923
        %7940 = vmatpush.msra.mxu0 %v7922
        %7941 = vmatmul.f32.gmra.mxu0 %v7597
        %v7942 = vpop.f32.mrf.mxu0
        %v7943 = vadd.f32 0.0, %v7942
        %7944 = vmatmul.f32.gmra.mxu0 %v7600
        %v7945 = vpop.f32.mrf.mxu0
        %v7946 = vadd.f32 0.0, %v7945
        %7947 = vdwg.mxu0
        %7948 = vst.msk [vmem:[#allocation3 + $0x81] sm:$0xff] %vm387, %v7943
        %7949 = vst.msk [vmem:[#allocation3 + $0x89] sm:$0xf] %vm7626, %v7946
        %v7950 = vld [vmem:[#allocation2 + $0x221] sm:$0xff]
        %v7951 = vld [vmem:[#allocation2 + $0x229] sm:$0xff]
        %v7952 = vld [vmem:[#allocation2 + $0x231] sm:$0xff]
        %v7953 = vld [vmem:[#allocation2 + $0x222] sm:$0xff]
        %v7954 = vld [vmem:[#allocation2 + $0x22a] sm:$0xff]
        %v7955 = vld [vmem:[#allocation2 + $0x232] sm:$0xff]
        %v7956 = vmax.f32 %v7950, %v7953
        %v7957 = vmax.f32 %v7951, %v7954
        %v7958 = vmax.f32 %v7952, %v7955
        %v7959 = vld [vmem:[#allocation2 + $0x241] sm:$0xff]
        %v7960 = vld [vmem:[#allocation2 + $0x249] sm:$0xff]
        %v7961 = vld [vmem:[#allocation2 + $0x251] sm:$0xff]
        %v7962 = vld [vmem:[#allocation2 + $0x242] sm:$0xff]
        %v7963 = vld [vmem:[#allocation2 + $0x24a] sm:$0xff]
        %v7964 = vld [vmem:[#allocation2 + $0x252] sm:$0xff]
        %v7965 = vmax.f32 %v7959, %v7962
        %v7966 = vmax.f32 %v7960, %v7963
        %v7967 = vmax.f32 %v7961, %v7964
        %v7968 = vmax.f32 %v7956, %v7965
        %v7969 = vmax.f32 %v7957, %v7966
        %v7970 = vmax.f32 %v7958, %v7967
        %7971 = vmatpush.msra.mxu0 0.0
        %7972 = vmatpush.msra.mxu0 0.0
        %7973 = vmatpush.msra.mxu0 0.0
        %7974 = vmatpush.msra.mxu0 0.0
        %7975 = vmatpush.msra.mxu0 0.0
        %7976 = vmatpush.msra.mxu0 0.0
        %7977 = vmatpush.msra.mxu0 0.0
        %7978 = vmatpush.msra.mxu0 0.0
        %7979 = vmatpush.msra.mxu0 0.0
        %7980 = vmatpush.msra.mxu0 0.0
        %7981 = vmatpush.msra.mxu0 0.0
        %7982 = vmatpush.msra.mxu0 0.0
        %7983 = vmatpush.msra.mxu0 0.0
        %7984 = vmatpush.msra.mxu0 %v7970
        %7985 = vmatpush.msra.mxu0 %v7969
        %7986 = vmatpush.msra.mxu0 %v7968
        %7987 = vmatmul.f32.gmra.mxu0 %v7597
        %v7988 = vpop.f32.mrf.mxu0
        %v7989 = vadd.f32 0.0, %v7988
        %7990 = vmatmul.f32.gmra.mxu0 %v7600
        %v7991 = vpop.f32.mrf.mxu0
        %v7992 = vadd.f32 0.0, %v7991
        %7993 = vdwg.mxu0
        %7994 = vst.msk [vmem:[#allocation3 + $0x91] sm:$0xff] %vm387, %v7989
        %7995 = vst.msk [vmem:[#allocation3 + $0x99] sm:$0xf] %vm7626, %v7992
        %v7996 = vld [vmem:[#allocation2 + $0x261] sm:$0xff]
        %v7997 = vld [vmem:[#allocation2 + $0x269] sm:$0xff]
        %v7998 = vld [vmem:[#allocation2 + $0x271] sm:$0xff]
        %v7999 = vld [vmem:[#allocation2 + $0x262] sm:$0xff]
        %v8000 = vld [vmem:[#allocation2 + $0x26a] sm:$0xff]
        %v8001 = vld [vmem:[#allocation2 + $0x272] sm:$0xff]
        %v8002 = vmax.f32 %v7996, %v7999
        %v8003 = vmax.f32 %v7997, %v8000
        %v8004 = vmax.f32 %v7998, %v8001
        %v8005 = vld [vmem:[#allocation2 + $0x281] sm:$0xff]
        %v8006 = vld [vmem:[#allocation2 + $0x289] sm:$0xff]
        %v8007 = vld [vmem:[#allocation2 + $0x291] sm:$0xff]
        %v8008 = vld [vmem:[#allocation2 + $0x282] sm:$0xff]
        %v8009 = vld [vmem:[#allocation2 + $0x28a] sm:$0xff]
        %v8010 = vld [vmem:[#allocation2 + $0x292] sm:$0xff]
        %v8011 = vmax.f32 %v8005, %v8008
        %v8012 = vmax.f32 %v8006, %v8009
        %v8013 = vmax.f32 %v8007, %v8010
        %v8014 = vmax.f32 %v8002, %v8011
        %v8015 = vmax.f32 %v8003, %v8012
        %v8016 = vmax.f32 %v8004, %v8013
        %8017 = vmatpush.msra.mxu0 0.0
        %8018 = vmatpush.msra.mxu0 0.0
        %8019 = vmatpush.msra.mxu0 0.0
        %8020 = vmatpush.msra.mxu0 0.0
        %8021 = vmatpush.msra.mxu0 0.0
        %8022 = vmatpush.msra.mxu0 0.0
        %8023 = vmatpush.msra.mxu0 0.0
        %8024 = vmatpush.msra.mxu0 0.0
        %8025 = vmatpush.msra.mxu0 0.0
        %8026 = vmatpush.msra.mxu0 0.0
        %8027 = vmatpush.msra.mxu0 0.0
        %8028 = vmatpush.msra.mxu0 0.0
        %8029 = vmatpush.msra.mxu0 0.0
        %8030 = vmatpush.msra.mxu0 %v8016
        %8031 = vmatpush.msra.mxu0 %v8015
        %8032 = vmatpush.msra.mxu0 %v8014
        %8033 = vmatmul.f32.gmra.mxu0 %v7597
        %v8034 = vpop.f32.mrf.mxu0
        %v8035 = vadd.f32 0.0, %v8034
        %8036 = vmatmul.f32.gmra.mxu0 %v7600
        %v8037 = vpop.f32.mrf.mxu0
        %v8038 = vadd.f32 0.0, %v8037
        %8039 = vdwg.mxu0
        %8040 = vst.msk [vmem:[#allocation3 + $0xa1] sm:$0xff] %vm387, %v8035
        %8041 = vst.msk [vmem:[#allocation3 + $0xa9] sm:$0xf] %vm7626, %v8038
        %v8042 = vld [vmem:[#allocation2 + $0x2a1] sm:$0xff]
        %v8043 = vld [vmem:[#allocation2 + $0x2a9] sm:$0xff]
        %v8044 = vld [vmem:[#allocation2 + $0x2b1] sm:$0xff]
        %v8045 = vld [vmem:[#allocation2 + $0x2a2] sm:$0xff]
        %v8046 = vld [vmem:[#allocation2 + $0x2aa] sm:$0xff]
        %v8047 = vld [vmem:[#allocation2 + $0x2b2] sm:$0xff]
        %v8048 = vmax.f32 %v8042, %v8045
        %v8049 = vmax.f32 %v8043, %v8046
        %v8050 = vmax.f32 %v8044, %v8047
        %v8051 = vld [vmem:[#allocation2 + $0x2c1] sm:$0xff]
        %v8052 = vld [vmem:[#allocation2 + $0x2c9] sm:$0xff]
        %v8053 = vld [vmem:[#allocation2 + $0x2d1] sm:$0xff]
        %v8054 = vld [vmem:[#allocation2 + $0x2c2] sm:$0xff]
        %v8055 = vld [vmem:[#allocation2 + $0x2ca] sm:$0xff]
        %v8056 = vld [vmem:[#allocation2 + $0x2d2] sm:$0xff]
        %v8057 = vmax.f32 %v8051, %v8054
        %v8058 = vmax.f32 %v8052, %v8055
        %v8059 = vmax.f32 %v8053, %v8056
        %v8060 = vmax.f32 %v8048, %v8057
        %v8061 = vmax.f32 %v8049, %v8058
        %v8062 = vmax.f32 %v8050, %v8059
        %8063 = vmatpush.msra.mxu0 0.0
        %8064 = vmatpush.msra.mxu0 0.0
        %8065 = vmatpush.msra.mxu0 0.0
        %8066 = vmatpush.msra.mxu0 0.0
        %8067 = vmatpush.msra.mxu0 0.0
        %8068 = vmatpush.msra.mxu0 0.0
        %8069 = vmatpush.msra.mxu0 0.0
        %8070 = vmatpush.msra.mxu0 0.0
        %8071 = vmatpush.msra.mxu0 0.0
        %8072 = vmatpush.msra.mxu0 0.0
        %8073 = vmatpush.msra.mxu0 0.0
        %8074 = vmatpush.msra.mxu0 0.0
        %8075 = vmatpush.msra.mxu0 0.0
        %8076 = vmatpush.msra.mxu0 %v8062
        %8077 = vmatpush.msra.mxu0 %v8061
        %8078 = vmatpush.msra.mxu0 %v8060
        %8079 = vmatmul.f32.gmra.mxu0 %v7597
        %v8080 = vpop.f32.mrf.mxu0
        %v8081 = vadd.f32 0.0, %v8080
        %8082 = vmatmul.f32.gmra.mxu0 %v7600
        %v8083 = vpop.f32.mrf.mxu0
        %v8084 = vadd.f32 0.0, %v8083
        %8085 = vdwg.mxu0
        %8086 = vst.msk [vmem:[#allocation3 + $0xb1] sm:$0xff] %vm387, %v8081
        %8087 = vst.msk [vmem:[#allocation3 + $0xb9] sm:$0xf] %vm7626, %v8084
        %v8088 = vld [vmem:[#allocation2 + $0x2e1] sm:$0xff]
        %v8089 = vld [vmem:[#allocation2 + $0x2e9] sm:$0xff]
        %v8090 = vld [vmem:[#allocation2 + $0x2f1] sm:$0xff]
        %v8091 = vld [vmem:[#allocation2 + $0x2e2] sm:$0xff]
        %v8092 = vld [vmem:[#allocation2 + $0x2ea] sm:$0xff]
        %v8093 = vld [vmem:[#allocation2 + $0x2f2] sm:$0xff]
        %v8094 = vmax.f32 %v8088, %v8091
        %v8095 = vmax.f32 %v8089, %v8092
        %v8096 = vmax.f32 %v8090, %v8093
        %v8097 = vld [vmem:[#allocation2 + $0x301] sm:$0xff]
        %v8098 = vld [vmem:[#allocation2 + $0x309] sm:$0xff]
        %v8099 = vld [vmem:[#allocation2 + $0x311] sm:$0xff]
        %v8100 = vld [vmem:[#allocation2 + $0x302] sm:$0xff]
        %v8101 = vld [vmem:[#allocation2 + $0x30a] sm:$0xff]
        %v8102 = vld [vmem:[#allocation2 + $0x312] sm:$0xff]
        %v8103 = vmax.f32 %v8097, %v8100
        %v8104 = vmax.f32 %v8098, %v8101
        %v8105 = vmax.f32 %v8099, %v8102
        %v8106 = vmax.f32 %v8094, %v8103
        %v8107 = vmax.f32 %v8095, %v8104
        %v8108 = vmax.f32 %v8096, %v8105
        %8109 = vmatpush.msra.mxu0 0.0
        %8110 = vmatpush.msra.mxu0 0.0
        %8111 = vmatpush.msra.mxu0 0.0
        %8112 = vmatpush.msra.mxu0 0.0
        %8113 = vmatpush.msra.mxu0 0.0
        %8114 = vmatpush.msra.mxu0 0.0
        %8115 = vmatpush.msra.mxu0 0.0
        %8116 = vmatpush.msra.mxu0 0.0
        %8117 = vmatpush.msra.mxu0 0.0
        %8118 = vmatpush.msra.mxu0 0.0
        %8119 = vmatpush.msra.mxu0 0.0
        %8120 = vmatpush.msra.mxu0 0.0
        %8121 = vmatpush.msra.mxu0 0.0
        %8122 = vmatpush.msra.mxu0 %v8108
        %8123 = vmatpush.msra.mxu0 %v8107
        %8124 = vmatpush.msra.mxu0 %v8106
        %8125 = vmatmul.f32.gmra.mxu0 %v7597
        %v8126 = vpop.f32.mrf.mxu0
        %v8127 = vadd.f32 0.0, %v8126
        %8128 = vmatmul.f32.gmra.mxu0 %v7600
        %v8129 = vpop.f32.mrf.mxu0
        %v8130 = vadd.f32 0.0, %v8129
        %8131 = vdwg.mxu0
        %8132 = vst.msk [vmem:[#allocation3 + $0xc1] sm:$0xff] %vm387, %v8127
        %8133 = vst.msk [vmem:[#allocation3 + $0xc9] sm:$0xf] %vm7626, %v8130
        %v8134 = vld [vmem:[#allocation3] sm:$0xff]
        %v8135 = vld [vmem:[#allocation3 + $0x8] sm:$0xff]
        %v8136 = vld [vmem:[#allocation3 + $0x10] sm:$0xff]
        %v8137 = vld [vmem:[#allocation3 + $0x18] sm:$0xff]
        %v8138 = vld [vmem:[#allocation3 + $0x20] sm:$0xff]
        %v8139 = vld [vmem:[#allocation3 + $0x28] sm:$0xff]
        %v8140 = vld [vmem:[#allocation3 + $0x30] sm:$0xff]
        %v8141 = vld [vmem:[#allocation3 + $0x38] sm:$0xff]
        %v8142 = vld [vmem:[#allocation3 + $0x40] sm:$0xff]
        %v8143 = vld [vmem:[#allocation3 + $0x48] sm:$0xff]
        %v8144 = vld [vmem:[#allocation3 + $0x50] sm:$0xff]
        %v8145 = vld [vmem:[#allocation3 + $0x58] sm:$0xff]
        %v8146 = vld [vmem:[#allocation3 + $0x60] sm:$0xff]
        %v8147 = vld [vmem:[#allocation3 + $0x68] sm:$0xff]
        %v8148 = vld [vmem:[#allocation3 + $0x70] sm:$0xff]
        %v8149 = vld [vmem:[#allocation3 + $0x78] sm:$0xff]
        %v8150 = vld [vmem:[#allocation3 + $0x80] sm:$0xff]
        %v8151 = vld [vmem:[#allocation3 + $0x88] sm:$0xff]
        %v8152 = vld [vmem:[#allocation3 + $0x90] sm:$0xff]
        %v8153 = vld [vmem:[#allocation3 + $0x98] sm:$0xff]
        %v8154 = vld [vmem:[#allocation3 + $0xa0] sm:$0xff]
        %v8155 = vld [vmem:[#allocation3 + $0xa8] sm:$0xff]
        %v8156 = vld [vmem:[#allocation3 + $0xb0] sm:$0xff]
        %v8157 = vld [vmem:[#allocation3 + $0xb8] sm:$0x3f]
        %v8158 = vld [vmem:[#allocation3 + $0x1] sm:$0xff]
        %v8159 = vld [vmem:[#allocation3 + $0x9] sm:$0xff]
        %v8160 = vld [vmem:[#allocation3 + $0x11] sm:$0xff]
        %v8161 = vld [vmem:[#allocation3 + $0x19] sm:$0xff]
        %v8162 = vld [vmem:[#allocation3 + $0x21] sm:$0xff]
        %v8163 = vld [vmem:[#allocation3 + $0x29] sm:$0xff]
        %v8164 = vld [vmem:[#allocation3 + $0x31] sm:$0xff]
        %v8165 = vld [vmem:[#allocation3 + $0x39] sm:$0xff]
        %v8166 = vld [vmem:[#allocation3 + $0x41] sm:$0xff]
        %v8167 = vld [vmem:[#allocation3 + $0x49] sm:$0xff]
        %v8168 = vld [vmem:[#allocation3 + $0x51] sm:$0xff]
        %v8169 = vld [vmem:[#allocation3 + $0x59] sm:$0xff]
        %v8170 = vld [vmem:[#allocation3 + $0x61] sm:$0xff]
        %v8171 = vld [vmem:[#allocation3 + $0x69] sm:$0xff]
        %v8172 = vld [vmem:[#allocation3 + $0x71] sm:$0xff]
        %v8173 = vld [vmem:[#allocation3 + $0x79] sm:$0xff]
        %v8174 = vld [vmem:[#allocation3 + $0x81] sm:$0xff]
        %v8175 = vld [vmem:[#allocation3 + $0x89] sm:$0xff]
        %v8176 = vld [vmem:[#allocation3 + $0x91] sm:$0xff]
        %v8177 = vld [vmem:[#allocation3 + $0x99] sm:$0xff]
        %v8178 = vld [vmem:[#allocation3 + $0xa1] sm:$0xff]
        %v8179 = vld [vmem:[#allocation3 + $0xa9] sm:$0xff]
        %v8180 = vld [vmem:[#allocation3 + $0xb1] sm:$0xff]
        %v8181 = vld [vmem:[#allocation3 + $0xb9] sm:$0x3f]
        %v8182 = vld [vmem:[#allocation3 + $0x2] sm:$0xff]
        %v8183 = vld [vmem:[#allocation3 + $0xa] sm:$0xff]
        %v8184 = vld [vmem:[#allocation3 + $0x12] sm:$0xff]
        %v8185 = vld [vmem:[#allocation3 + $0x1a] sm:$0xff]
        %v8186 = vld [vmem:[#allocation3 + $0x22] sm:$0xff]
        %v8187 = vld [vmem:[#allocation3 + $0x2a] sm:$0xff]
        %v8188 = vld [vmem:[#allocation3 + $0x32] sm:$0xff]
        %v8189 = vld [vmem:[#allocation3 + $0x3a] sm:$0xff]
        %v8190 = vld [vmem:[#allocation3 + $0x42] sm:$0xff]
        %v8191 = vld [vmem:[#allocation3 + $0x4a] sm:$0xff]
        %v8192 = vld [vmem:[#allocation3 + $0x52] sm:$0xff]
        %v8193 = vld [vmem:[#allocation3 + $0x5a] sm:$0xff]
        %v8194 = vld [vmem:[#allocation3 + $0x62] sm:$0xff]
        %v8195 = vld [vmem:[#allocation3 + $0x6a] sm:$0xff]
        %v8196 = vld [vmem:[#allocation3 + $0x72] sm:$0xff]
        %v8197 = vld [vmem:[#allocation3 + $0x7a] sm:$0xff]
        %v8198 = vld [vmem:[#allocation3 + $0x82] sm:$0xff]
        %v8199 = vld [vmem:[#allocation3 + $0x8a] sm:$0xff]
        %v8200 = vld [vmem:[#allocation3 + $0x92] sm:$0xff]
        %v8201 = vld [vmem:[#allocation3 + $0x9a] sm:$0xff]
        %v8202 = vld [vmem:[#allocation3 + $0xa2] sm:$0xff]
        %v8203 = vld [vmem:[#allocation3 + $0xaa] sm:$0xff]
        %v8204 = vld [vmem:[#allocation3 + $0xb2] sm:$0xff]
        %v8205 = vld [vmem:[#allocation3 + $0xba] sm:$0x3f]
        %v8206 = vld [vmem:[#allocation3 + $0xb8] sm:$0xff]
        %v8207 = vld [vmem:[#allocation3 + $0xc0] sm:$0xff]
        %v8208 = vld [vmem:[#allocation3 + $0xc8] sm:$0x3f]
        %v8209 = vld [vmem:[#allocation3 + $0xb9] sm:$0xff]
        %v8210 = vld [vmem:[#allocation3 + $0xc1] sm:$0xff]
        %v8211 = vld [vmem:[#allocation3 + $0xc9] sm:$0x3f]
        %v8212 = vld [vmem:[#allocation3 + $0xba] sm:$0xff]
        %v8213 = vld [vmem:[#allocation3 + $0xc2] sm:$0xff]
        %v8214 = vld [vmem:[#allocation3 + $0xca] sm:$0x3f]
        %v8215 = vld [vmem:[#allocation3 + $0xc8] sm:$0xff]
        %v8216 = vld [vmem:[#allocation3 + $0xd0] sm:$0xff]
        %v8217 = vld [vmem:[#allocation3 + $0xd8] sm:$0x3f]
        %v8218 = vld [vmem:[#allocation3 + $0xc9] sm:$0xff]
        %v8219 = vld [vmem:[#allocation3 + $0xd1] sm:$0xff]
        %v8220 = vld [vmem:[#allocation3 + $0xd9] sm:$0x3f]
        %v8221 = vld [vmem:[#allocation3 + $0xca] sm:$0xff]
        %v8222 = vld [vmem:[#allocation3 + $0xd2] sm:$0xff]
        %v8223 = vld [vmem:[#allocation3 + $0xda] sm:$0x3f]
        %8248 = vrot.lane.b32.xlu0 %v8158, 16
        %v8249 = vpop.permute.xlu0 %8248
        %8250 = vrot.lane.b32.xlu0 %v8159, 16
        %v8251 = vpop.permute.xlu0 %8250
        %8252 = vrot.lane.b32.xlu0 %v8160, 16
        %v8253 = vpop.permute.xlu0 %8252
        %8254 = vrot.lane.b32.xlu0 %v8161, 16
        %v8255 = vpop.permute.xlu0 %8254
        %8256 = vrot.lane.b32.xlu0 %v8162, 16
        %v8257 = vpop.permute.xlu0 %8256
        %8258 = vrot.lane.b32.xlu0 %v8163, 16
        %v8259 = vpop.permute.xlu0 %8258
        %8260 = vrot.lane.b32.xlu0 %v8164, 16
        %v8261 = vpop.permute.xlu0 %8260
        %8262 = vrot.lane.b32.xlu0 %v8165, 16
        %v8263 = vpop.permute.xlu0 %8262
        %8264 = vrot.lane.b32.xlu0 %v8166, 16
        %v8265 = vpop.permute.xlu0 %8264
        %8266 = vrot.lane.b32.xlu0 %v8167, 16
        %v8267 = vpop.permute.xlu0 %8266
        %8268 = vrot.lane.b32.xlu0 %v8168, 16
        %v8269 = vpop.permute.xlu0 %8268
        %8270 = vrot.lane.b32.xlu0 %v8169, 16
        %v8271 = vpop.permute.xlu0 %8270
        %8272 = vrot.lane.b32.xlu0 %v8170, 16
        %v8273 = vpop.permute.xlu0 %8272
        %8274 = vrot.lane.b32.xlu0 %v8171, 16
        %v8275 = vpop.permute.xlu0 %8274
        %8276 = vrot.lane.b32.xlu0 %v8172, 16
        %v8277 = vpop.permute.xlu0 %8276
        %8278 = vrot.lane.b32.xlu0 %v8173, 16
        %v8279 = vpop.permute.xlu0 %8278
        %8280 = vrot.lane.b32.xlu0 %v8174, 16
        %v8281 = vpop.permute.xlu0 %8280
        %8282 = vrot.lane.b32.xlu0 %v8175, 16
        %v8283 = vpop.permute.xlu0 %8282
        %8284 = vrot.lane.b32.xlu0 %v8176, 16
        %v8285 = vpop.permute.xlu0 %8284
        %8286 = vrot.lane.b32.xlu0 %v8177, 16
        %v8287 = vpop.permute.xlu0 %8286
        %8288 = vrot.lane.b32.xlu0 %v8178, 16
        %v8289 = vpop.permute.xlu0 %8288
        %8290 = vrot.lane.b32.xlu0 %v8179, 16
        %v8291 = vpop.permute.xlu0 %8290
        %8292 = vrot.lane.b32.xlu0 %v8180, 16
        %v8293 = vpop.permute.xlu0 %8292
        %8294 = vrot.lane.b32.xlu0 %v8181, 16
        %v8295 = vpop.permute.xlu0 %8294
        %8344 = vrot.lane.b32.xlu0 %v8182, 32
        %v8345 = vpop.permute.xlu0 %8344
        %8346 = vrot.lane.b32.xlu0 %v8183, 32
        %v8347 = vpop.permute.xlu0 %8346
        %8348 = vrot.lane.b32.xlu0 %v8184, 32
        %v8349 = vpop.permute.xlu0 %8348
        %8350 = vrot.lane.b32.xlu0 %v8185, 32
        %v8351 = vpop.permute.xlu0 %8350
        %8352 = vrot.lane.b32.xlu0 %v8186, 32
        %v8353 = vpop.permute.xlu0 %8352
        %8354 = vrot.lane.b32.xlu0 %v8187, 32
        %v8355 = vpop.permute.xlu0 %8354
        %8356 = vrot.lane.b32.xlu0 %v8188, 32
        %v8357 = vpop.permute.xlu0 %8356
        %8358 = vrot.lane.b32.xlu0 %v8189, 32
        %v8359 = vpop.permute.xlu0 %8358
        %8360 = vrot.lane.b32.xlu0 %v8190, 32
        %v8361 = vpop.permute.xlu0 %8360
        %8362 = vrot.lane.b32.xlu0 %v8191, 32
        %v8363 = vpop.permute.xlu0 %8362
        %8364 = vrot.lane.b32.xlu0 %v8192, 32
        %v8365 = vpop.permute.xlu0 %8364
        %8366 = vrot.lane.b32.xlu0 %v8193, 32
        %v8367 = vpop.permute.xlu0 %8366
        %8368 = vrot.lane.b32.xlu0 %v8194, 32
        %v8369 = vpop.permute.xlu0 %8368
        %8370 = vrot.lane.b32.xlu0 %v8195, 32
        %v8371 = vpop.permute.xlu0 %8370
        %8372 = vrot.lane.b32.xlu0 %v8196, 32
        %v8373 = vpop.permute.xlu0 %8372
        %8374 = vrot.lane.b32.xlu0 %v8197, 32
        %v8375 = vpop.permute.xlu0 %8374
        %8376 = vrot.lane.b32.xlu0 %v8198, 32
        %v8377 = vpop.permute.xlu0 %8376
        %8378 = vrot.lane.b32.xlu0 %v8199, 32
        %v8379 = vpop.permute.xlu0 %8378
        %8380 = vrot.lane.b32.xlu0 %v8200, 32
        %v8381 = vpop.permute.xlu0 %8380
        %8382 = vrot.lane.b32.xlu0 %v8201, 32
        %v8383 = vpop.permute.xlu0 %8382
        %8384 = vrot.lane.b32.xlu0 %v8202, 32
        %v8385 = vpop.permute.xlu0 %8384
        %8386 = vrot.lane.b32.xlu0 %v8203, 32
        %v8387 = vpop.permute.xlu0 %8386
        %8388 = vrot.lane.b32.xlu0 %v8204, 32
        %v8389 = vpop.permute.xlu0 %8388
        %8390 = vrot.lane.b32.xlu0 %v8205, 32
        %v8391 = vpop.permute.xlu0 %8390
        %8440 = vrot.lane.b32.xlu0 %v8136, 48
        %v8441 = vpop.permute.xlu0 %8440
        %8442 = vrot.lane.b32.xlu0 %v8137, 48
        %v8443 = vpop.permute.xlu0 %8442
        %8444 = vrot.lane.b32.xlu0 %v8138, 48
        %v8445 = vpop.permute.xlu0 %8444
        %8446 = vrot.lane.b32.xlu0 %v8139, 48
        %v8447 = vpop.permute.xlu0 %8446
        %8448 = vrot.lane.b32.xlu0 %v8140, 48
        %v8449 = vpop.permute.xlu0 %8448
        %8450 = vrot.lane.b32.xlu0 %v8141, 48
        %v8451 = vpop.permute.xlu0 %8450
        %8452 = vrot.lane.b32.xlu0 %v8142, 48
        %v8453 = vpop.permute.xlu0 %8452
        %8454 = vrot.lane.b32.xlu0 %v8143, 48
        %v8455 = vpop.permute.xlu0 %8454
        %8456 = vrot.lane.b32.xlu0 %v8144, 48
        %v8457 = vpop.permute.xlu0 %8456
        %8458 = vrot.lane.b32.xlu0 %v8145, 48
        %v8459 = vpop.permute.xlu0 %8458
        %8460 = vrot.lane.b32.xlu0 %v8146, 48
        %v8461 = vpop.permute.xlu0 %8460
        %8462 = vrot.lane.b32.xlu0 %v8147, 48
        %v8463 = vpop.permute.xlu0 %8462
        %8464 = vrot.lane.b32.xlu0 %v8148, 48
        %v8465 = vpop.permute.xlu0 %8464
        %8466 = vrot.lane.b32.xlu0 %v8149, 48
        %v8467 = vpop.permute.xlu0 %8466
        %8468 = vrot.lane.b32.xlu0 %v8150, 48
        %v8469 = vpop.permute.xlu0 %8468
        %8470 = vrot.lane.b32.xlu0 %v8151, 48
        %v8471 = vpop.permute.xlu0 %8470
        %8472 = vrot.lane.b32.xlu0 %v8152, 48
        %v8473 = vpop.permute.xlu0 %8472
        %8474 = vrot.lane.b32.xlu0 %v8153, 48
        %v8475 = vpop.permute.xlu0 %8474
        %8476 = vrot.lane.b32.xlu0 %v8154, 48
        %v8477 = vpop.permute.xlu0 %8476
        %8478 = vrot.lane.b32.xlu0 %v8155, 48
        %v8479 = vpop.permute.xlu0 %8478
        %8480 = vrot.lane.b32.xlu0 %v8156, 48
        %v8481 = vpop.permute.xlu0 %8480
        %8482 = vrot.lane.b32.xlu0 %v8206, 48
        %v8483 = vpop.permute.xlu0 %8482
        %8484 = vrot.lane.b32.xlu0 %v8207, 48
        %v8485 = vpop.permute.xlu0 %8484
        %8486 = vrot.lane.b32.xlu0 %v8208, 48
        %v8487 = vpop.permute.xlu0 %8486
        %8515 = vrot.lane.b32.xlu0 %v8160, 64
        %v8516 = vpop.permute.xlu0 %8515
        %8517 = vrot.lane.b32.xlu0 %v8161, 64
        %v8518 = vpop.permute.xlu0 %8517
        %8519 = vrot.lane.b32.xlu0 %v8162, 64
        %v8520 = vpop.permute.xlu0 %8519
        %8521 = vrot.lane.b32.xlu0 %v8163, 64
        %v8522 = vpop.permute.xlu0 %8521
        %8523 = vrot.lane.b32.xlu0 %v8164, 64
        %v8524 = vpop.permute.xlu0 %8523
        %8525 = vrot.lane.b32.xlu0 %v8165, 64
        %v8526 = vpop.permute.xlu0 %8525
        %8527 = vrot.lane.b32.xlu0 %v8166, 64
        %v8528 = vpop.permute.xlu0 %8527
        %8529 = vrot.lane.b32.xlu0 %v8167, 64
        %v8530 = vpop.permute.xlu0 %8529
        %8531 = vrot.lane.b32.xlu0 %v8168, 64
        %v8532 = vpop.permute.xlu0 %8531
        %8533 = vrot.lane.b32.xlu0 %v8169, 64
        %v8534 = vpop.permute.xlu0 %8533
        %8535 = vrot.lane.b32.xlu0 %v8170, 64
        %v8536 = vpop.permute.xlu0 %8535
        %8537 = vrot.lane.b32.xlu0 %v8171, 64
        %v8538 = vpop.permute.xlu0 %8537
        %8539 = vrot.lane.b32.xlu0 %v8172, 64
        %v8540 = vpop.permute.xlu0 %8539
        %8541 = vrot.lane.b32.xlu0 %v8173, 64
        %v8542 = vpop.permute.xlu0 %8541
        %8543 = vrot.lane.b32.xlu0 %v8174, 64
        %v8544 = vpop.permute.xlu0 %8543
        %8545 = vrot.lane.b32.xlu0 %v8175, 64
        %v8546 = vpop.permute.xlu0 %8545
        %8547 = vrot.lane.b32.xlu0 %v8176, 64
        %v8548 = vpop.permute.xlu0 %8547
        %8549 = vrot.lane.b32.xlu0 %v8177, 64
        %v8550 = vpop.permute.xlu0 %8549
        %8551 = vrot.lane.b32.xlu0 %v8178, 64
        %v8552 = vpop.permute.xlu0 %8551
        %8553 = vrot.lane.b32.xlu0 %v8179, 64
        %v8554 = vpop.permute.xlu0 %8553
        %8555 = vrot.lane.b32.xlu0 %v8180, 64
        %v8556 = vpop.permute.xlu0 %8555
        %8557 = vrot.lane.b32.xlu0 %v8209, 64
        %v8558 = vpop.permute.xlu0 %8557
        %8559 = vrot.lane.b32.xlu0 %v8210, 64
        %v8560 = vpop.permute.xlu0 %8559
        %8561 = vrot.lane.b32.xlu0 %v8211, 64
        %v8562 = vpop.permute.xlu0 %8561
        %8590 = vrot.lane.b32.xlu0 %v8184, 80
        %v8591 = vpop.permute.xlu0 %8590
        %8592 = vrot.lane.b32.xlu0 %v8185, 80
        %v8593 = vpop.permute.xlu0 %8592
        %8594 = vrot.lane.b32.xlu0 %v8186, 80
        %v8595 = vpop.permute.xlu0 %8594
        %8596 = vrot.lane.b32.xlu0 %v8187, 80
        %v8597 = vpop.permute.xlu0 %8596
        %8598 = vrot.lane.b32.xlu0 %v8188, 80
        %v8599 = vpop.permute.xlu0 %8598
        %8600 = vrot.lane.b32.xlu0 %v8189, 80
        %v8601 = vpop.permute.xlu0 %8600
        %8602 = vrot.lane.b32.xlu0 %v8190, 80
        %v8603 = vpop.permute.xlu0 %8602
        %8604 = vrot.lane.b32.xlu0 %v8191, 80
        %v8605 = vpop.permute.xlu0 %8604
        %8606 = vrot.lane.b32.xlu0 %v8192, 80
        %v8607 = vpop.permute.xlu0 %8606
        %8608 = vrot.lane.b32.xlu0 %v8193, 80
        %v8609 = vpop.permute.xlu0 %8608
        %8610 = vrot.lane.b32.xlu0 %v8194, 80
        %v8611 = vpop.permute.xlu0 %8610
        %8612 = vrot.lane.b32.xlu0 %v8195, 80
        %v8613 = vpop.permute.xlu0 %8612
        %8614 = vrot.lane.b32.xlu0 %v8196, 80
        %v8615 = vpop.permute.xlu0 %8614
        %8616 = vrot.lane.b32.xlu0 %v8197, 80
        %v8617 = vpop.permute.xlu0 %8616
        %8618 = vrot.lane.b32.xlu0 %v8198, 80
        %v8619 = vpop.permute.xlu0 %8618
        %8620 = vrot.lane.b32.xlu0 %v8199, 80
        %v8621 = vpop.permute.xlu0 %8620
        %8622 = vrot.lane.b32.xlu0 %v8200, 80
        %v8623 = vpop.permute.xlu0 %8622
        %8624 = vrot.lane.b32.xlu0 %v8201, 80
        %v8625 = vpop.permute.xlu0 %8624
        %8626 = vrot.lane.b32.xlu0 %v8202, 80
        %v8627 = vpop.permute.xlu0 %8626
        %8628 = vrot.lane.b32.xlu0 %v8203, 80
        %v8629 = vpop.permute.xlu0 %8628
        %8630 = vrot.lane.b32.xlu0 %v8204, 80
        %v8631 = vpop.permute.xlu0 %8630
        %8632 = vrot.lane.b32.xlu0 %v8212, 80
        %v8633 = vpop.permute.xlu0 %8632
        %8634 = vrot.lane.b32.xlu0 %v8213, 80
        %v8635 = vpop.permute.xlu0 %8634
        %8636 = vrot.lane.b32.xlu0 %v8214, 80
        %v8637 = vpop.permute.xlu0 %8636
        %8665 = vrot.lane.b32.xlu0 %v8138, 96
        %v8666 = vpop.permute.xlu0 %8665
        %8667 = vrot.lane.b32.xlu0 %v8139, 96
        %v8668 = vpop.permute.xlu0 %8667
        %8669 = vrot.lane.b32.xlu0 %v8140, 96
        %v8670 = vpop.permute.xlu0 %8669
        %8671 = vrot.lane.b32.xlu0 %v8141, 96
        %v8672 = vpop.permute.xlu0 %8671
        %8673 = vrot.lane.b32.xlu0 %v8142, 96
        %v8674 = vpop.permute.xlu0 %8673
        %8675 = vrot.lane.b32.xlu0 %v8143, 96
        %v8676 = vpop.permute.xlu0 %8675
        %8677 = vrot.lane.b32.xlu0 %v8144, 96
        %v8678 = vpop.permute.xlu0 %8677
        %8679 = vrot.lane.b32.xlu0 %v8145, 96
        %v8680 = vpop.permute.xlu0 %8679
        %8681 = vrot.lane.b32.xlu0 %v8146, 96
        %v8682 = vpop.permute.xlu0 %8681
        %8683 = vrot.lane.b32.xlu0 %v8147, 96
        %v8684 = vpop.permute.xlu0 %8683
        %8685 = vrot.lane.b32.xlu0 %v8148, 96
        %v8686 = vpop.permute.xlu0 %8685
        %8687 = vrot.lane.b32.xlu0 %v8149, 96
        %v8688 = vpop.permute.xlu0 %8687
        %8689 = vrot.lane.b32.xlu0 %v8150, 96
        %v8690 = vpop.permute.xlu0 %8689
        %8691 = vrot.lane.b32.xlu0 %v8151, 96
        %v8692 = vpop.permute.xlu0 %8691
        %8693 = vrot.lane.b32.xlu0 %v8152, 96
        %v8694 = vpop.permute.xlu0 %8693
        %8695 = vrot.lane.b32.xlu0 %v8153, 96
        %v8696 = vpop.permute.xlu0 %8695
        %8697 = vrot.lane.b32.xlu0 %v8154, 96
        %v8698 = vpop.permute.xlu0 %8697
        %8699 = vrot.lane.b32.xlu0 %v8155, 96
        %v8700 = vpop.permute.xlu0 %8699
        %8701 = vrot.lane.b32.xlu0 %v8156, 96
        %v8702 = vpop.permute.xlu0 %8701
        %8703 = vrot.lane.b32.xlu0 %v8206, 96
        %v8704 = vpop.permute.xlu0 %8703
        %8705 = vrot.lane.b32.xlu0 %v8207, 96
        %v8706 = vpop.permute.xlu0 %8705
        %8707 = vrot.lane.b32.xlu0 %v8215, 96
        %v8708 = vpop.permute.xlu0 %8707
        %8709 = vrot.lane.b32.xlu0 %v8216, 96
        %v8710 = vpop.permute.xlu0 %8709
        %8711 = vrot.lane.b32.xlu0 %v8217, 96
        %v8712 = vpop.permute.xlu0 %8711
        %8740 = vrot.lane.b32.xlu0 %v8162, 112
        %v8741 = vpop.permute.xlu0 %8740
        %8742 = vrot.lane.b32.xlu0 %v8163, 112
        %v8743 = vpop.permute.xlu0 %8742
        %8744 = vrot.lane.b32.xlu0 %v8164, 112
        %v8745 = vpop.permute.xlu0 %8744
        %8746 = vrot.lane.b32.xlu0 %v8165, 112
        %v8747 = vpop.permute.xlu0 %8746
        %8748 = vrot.lane.b32.xlu0 %v8166, 112
        %v8749 = vpop.permute.xlu0 %8748
        %8750 = vrot.lane.b32.xlu0 %v8167, 112
        %v8751 = vpop.permute.xlu0 %8750
        %8752 = vrot.lane.b32.xlu0 %v8168, 112
        %v8753 = vpop.permute.xlu0 %8752
        %8754 = vrot.lane.b32.xlu0 %v8169, 112
        %v8755 = vpop.permute.xlu0 %8754
        %8756 = vrot.lane.b32.xlu0 %v8170, 112
        %v8757 = vpop.permute.xlu0 %8756
        %8758 = vrot.lane.b32.xlu0 %v8171, 112
        %v8759 = vpop.permute.xlu0 %8758
        %8760 = vrot.lane.b32.xlu0 %v8172, 112
        %v8761 = vpop.permute.xlu0 %8760
        %8762 = vrot.lane.b32.xlu0 %v8173, 112
        %v8763 = vpop.permute.xlu0 %8762
        %8764 = vrot.lane.b32.xlu0 %v8174, 112
        %v8765 = vpop.permute.xlu0 %8764
        %8766 = vrot.lane.b32.xlu0 %v8175, 112
        %v8767 = vpop.permute.xlu0 %8766
        %8768 = vrot.lane.b32.xlu0 %v8176, 112
        %v8769 = vpop.permute.xlu0 %8768
        %8770 = vrot.lane.b32.xlu0 %v8177, 112
        %v8771 = vpop.permute.xlu0 %8770
        %8772 = vrot.lane.b32.xlu0 %v8178, 112
        %v8773 = vpop.permute.xlu0 %8772
        %8774 = vrot.lane.b32.xlu0 %v8179, 112
        %v8775 = vpop.permute.xlu0 %8774
        %8776 = vrot.lane.b32.xlu0 %v8180, 112
        %v8777 = vpop.permute.xlu0 %8776
        %8778 = vrot.lane.b32.xlu0 %v8209, 112
        %v8779 = vpop.permute.xlu0 %8778
        %8780 = vrot.lane.b32.xlu0 %v8210, 112
        %v8781 = vpop.permute.xlu0 %8780
        %8782 = vrot.lane.b32.xlu0 %v8218, 112
        %v8783 = vpop.permute.xlu0 %8782
        %8784 = vrot.lane.b32.xlu0 %v8219, 112
        %v8785 = vpop.permute.xlu0 %8784
        %8786 = vrot.lane.b32.xlu0 %v8220, 112
        %v8787 = vpop.permute.xlu0 %8786
        %v8812 = vsel %vm387, %v8134, %v8249
        %v8813 = vsel %vm387, %v8135, %v8251
        %v8814 = vsel %vm387, %v8136, %v8253
        %v8815 = vsel %vm387, %v8137, %v8255
        %v8816 = vsel %vm387, %v8138, %v8257
        %v8817 = vsel %vm387, %v8139, %v8259
        %v8818 = vsel %vm387, %v8140, %v8261
        %v8819 = vsel %vm387, %v8141, %v8263
        %v8820 = vsel %vm387, %v8142, %v8265
        %v8821 = vsel %vm387, %v8143, %v8267
        %v8822 = vsel %vm387, %v8144, %v8269
        %v8823 = vsel %vm387, %v8145, %v8271
        %v8824 = vsel %vm387, %v8146, %v8273
        %v8825 = vsel %vm387, %v8147, %v8275
        %v8826 = vsel %vm387, %v8148, %v8277
        %v8827 = vsel %vm387, %v8149, %v8279
        %v8828 = vsel %vm387, %v8150, %v8281
        %v8829 = vsel %vm387, %v8151, %v8283
        %v8830 = vsel %vm387, %v8152, %v8285
        %v8831 = vsel %vm387, %v8153, %v8287
        %v8832 = vsel %vm387, %v8154, %v8289
        %v8833 = vsel %vm387, %v8155, %v8291
        %v8834 = vsel %vm387, %v8156, %v8293
        %v8835 = vsel %vm387, %v8157, %v8295
        %v8836 = vsel %vm416, %v8812, %v8345
        %v8837 = vsel %vm416, %v8813, %v8347
        %v8838 = vsel %vm416, %v8814, %v8349
        %v8839 = vsel %vm416, %v8815, %v8351
        %v8840 = vsel %vm416, %v8816, %v8353
        %v8841 = vsel %vm416, %v8817, %v8355
        %v8842 = vsel %vm416, %v8818, %v8357
        %v8843 = vsel %vm416, %v8819, %v8359
        %v8844 = vsel %vm416, %v8820, %v8361
        %v8845 = vsel %vm416, %v8821, %v8363
        %v8846 = vsel %vm416, %v8822, %v8365
        %v8847 = vsel %vm416, %v8823, %v8367
        %v8848 = vsel %vm416, %v8824, %v8369
        %v8849 = vsel %vm416, %v8825, %v8371
        %v8850 = vsel %vm416, %v8826, %v8373
        %v8851 = vsel %vm416, %v8827, %v8375
        %v8852 = vsel %vm416, %v8828, %v8377
        %v8853 = vsel %vm416, %v8829, %v8379
        %v8854 = vsel %vm416, %v8830, %v8381
        %v8855 = vsel %vm416, %v8831, %v8383
        %v8856 = vsel %vm416, %v8832, %v8385
        %v8857 = vsel %vm416, %v8833, %v8387
        %v8858 = vsel %vm416, %v8834, %v8389
        %v8859 = vsel %vm416, %v8835, %v8391
        %vm8860 = vcmask 392192
        %v8861 = vsel %vm8860, %v8836, %v8441
        %v8862 = vsel %vm8860, %v8837, %v8443
        %v8863 = vsel %vm8860, %v8838, %v8445
        %v8864 = vsel %vm8860, %v8839, %v8447
        %v8865 = vsel %vm8860, %v8840, %v8449
        %v8866 = vsel %vm8860, %v8841, %v8451
        %v8867 = vsel %vm8860, %v8842, %v8453
        %v8868 = vsel %vm8860, %v8843, %v8455
        %v8869 = vsel %vm8860, %v8844, %v8457
        %v8870 = vsel %vm8860, %v8845, %v8459
        %v8871 = vsel %vm8860, %v8846, %v8461
        %v8872 = vsel %vm8860, %v8847, %v8463
        %v8873 = vsel %vm8860, %v8848, %v8465
        %v8874 = vsel %vm8860, %v8849, %v8467
        %v8875 = vsel %vm8860, %v8850, %v8469
        %v8876 = vsel %vm8860, %v8851, %v8471
        %v8877 = vsel %vm8860, %v8852, %v8473
        %v8878 = vsel %vm8860, %v8853, %v8475
        %v8879 = vsel %vm8860, %v8854, %v8477
        %v8880 = vsel %vm8860, %v8855, %v8479
        %v8881 = vsel %vm8860, %v8856, %v8481
        %v8882 = vsel %vm8860, %v8857, %v8483
        %v8883 = vsel %vm8860, %v8858, %v8485
        %v8884 = vsel %vm8860, %v8859, %v8487
        %v8885 = vsel %vm425, %v8861, %v8516
        %v8886 = vsel %vm425, %v8862, %v8518
        %v8887 = vsel %vm425, %v8863, %v8520
        %v8888 = vsel %vm425, %v8864, %v8522
        %v8889 = vsel %vm425, %v8865, %v8524
        %v8890 = vsel %vm425, %v8866, %v8526
        %v8891 = vsel %vm425, %v8867, %v8528
        %v8892 = vsel %vm425, %v8868, %v8530
        %v8893 = vsel %vm425, %v8869, %v8532
        %v8894 = vsel %vm425, %v8870, %v8534
        %v8895 = vsel %vm425, %v8871, %v8536
        %v8896 = vsel %vm425, %v8872, %v8538
        %v8897 = vsel %vm425, %v8873, %v8540
        %v8898 = vsel %vm425, %v8874, %v8542
        %v8899 = vsel %vm425, %v8875, %v8544
        %v8900 = vsel %vm425, %v8876, %v8546
        %v8901 = vsel %vm425, %v8877, %v8548
        %v8902 = vsel %vm425, %v8878, %v8550
        %v8903 = vsel %vm425, %v8879, %v8552
        %v8904 = vsel %vm425, %v8880, %v8554
        %v8905 = vsel %vm425, %v8881, %v8556
        %v8906 = vsel %vm425, %v8882, %v8558
        %v8907 = vsel %vm425, %v8883, %v8560
        %v8908 = vsel %vm425, %v8884, %v8562
        %vm8909 = vcmask 654336
        %v8910 = vsel %vm8909, %v8885, %v8591
        %v8911 = vsel %vm8909, %v8886, %v8593
        %v8912 = vsel %vm8909, %v8887, %v8595
        %v8913 = vsel %vm8909, %v8888, %v8597
        %v8914 = vsel %vm8909, %v8889, %v8599
        %v8915 = vsel %vm8909, %v8890, %v8601
        %v8916 = vsel %vm8909, %v8891, %v8603
        %v8917 = vsel %vm8909, %v8892, %v8605
        %v8918 = vsel %vm8909, %v8893, %v8607
        %v8919 = vsel %vm8909, %v8894, %v8609
        %v8920 = vsel %vm8909, %v8895, %v8611
        %v8921 = vsel %vm8909, %v8896, %v8613
        %v8922 = vsel %vm8909, %v8897, %v8615
        %v8923 = vsel %vm8909, %v8898, %v8617
        %v8924 = vsel %vm8909, %v8899, %v8619
        %v8925 = vsel %vm8909, %v8900, %v8621
        %v8926 = vsel %vm8909, %v8901, %v8623
        %v8927 = vsel %vm8909, %v8902, %v8625
        %v8928 = vsel %vm8909, %v8903, %v8627
        %v8929 = vsel %vm8909, %v8904, %v8629
        %v8930 = vsel %vm8909, %v8905, %v8631
        %v8931 = vsel %vm8909, %v8906, %v8633
        %v8932 = vsel %vm8909, %v8907, %v8635
        %v8933 = vsel %vm8909, %v8908, %v8637
        %vm8934 = vcmask 785408
        %v8935 = vsel %vm8934, %v8910, %v8666
        %v8936 = vsel %vm8934, %v8911, %v8668
        %v8937 = vsel %vm8934, %v8912, %v8670
        %v8938 = vsel %vm8934, %v8913, %v8672
        %v8939 = vsel %vm8934, %v8914, %v8674
        %v8940 = vsel %vm8934, %v8915, %v8676
        %v8941 = vsel %vm8934, %v8916, %v8678
        %v8942 = vsel %vm8934, %v8917, %v8680
        %v8943 = vsel %vm8934, %v8918, %v8682
        %v8944 = vsel %vm8934, %v8919, %v8684
        %v8945 = vsel %vm8934, %v8920, %v8686
        %v8946 = vsel %vm8934, %v8921, %v8688
        %v8947 = vsel %vm8934, %v8922, %v8690
        %v8948 = vsel %vm8934, %v8923, %v8692
        %v8949 = vsel %vm8934, %v8924, %v8694
        %v8950 = vsel %vm8934, %v8925, %v8696
        %v8951 = vsel %vm8934, %v8926, %v8698
        %v8952 = vsel %vm8934, %v8927, %v8700
        %v8953 = vsel %vm8934, %v8928, %v8702
        %v8954 = vsel %vm8934, %v8929, %v8704
        %v8955 = vsel %vm8934, %v8930, %v8706
        %v8956 = vsel %vm8934, %v8931, %v8708
        %v8957 = vsel %vm8934, %v8932, %v8710
        %v8958 = vsel %vm8934, %v8933, %v8712
        %vm8959 = vcmask 916480
        %v8960 = vsel %vm8959, %v8935, %v8741
        %v8961 = vsel %vm8959, %v8936, %v8743
        %v8962 = vsel %vm8959, %v8937, %v8745
        %v8963 = vsel %vm8959, %v8938, %v8747
        %v8964 = vsel %vm8959, %v8939, %v8749
        %v8965 = vsel %vm8959, %v8940, %v8751
        %v8966 = vsel %vm8959, %v8941, %v8753
        %v8967 = vsel %vm8959, %v8942, %v8755
        %v8968 = vsel %vm8959, %v8943, %v8757
        %v8969 = vsel %vm8959, %v8944, %v8759
        %v8970 = vsel %vm8959, %v8945, %v8761
        %v8971 = vsel %vm8959, %v8946, %v8763
        %v8972 = vsel %vm8959, %v8947, %v8765
        %v8973 = vsel %vm8959, %v8948, %v8767
        %v8974 = vsel %vm8959, %v8949, %v8769
        %v8975 = vsel %vm8959, %v8950, %v8771
        %v8976 = vsel %vm8959, %v8951, %v8773
        %v8977 = vsel %vm8959, %v8952, %v8775
        %v8978 = vsel %vm8959, %v8953, %v8777
        %v8979 = vsel %vm8959, %v8954, %v8779
        %v8980 = vsel %vm8959, %v8955, %v8781
        %v8981 = vsel %vm8959, %v8956, %v8783
        %v8982 = vsel %vm8959, %v8957, %v8785
        %v8983 = vsel %vm8959, %v8958, %v8787
        %v8984 = vpack.c.bf16 %v8961, %v8960
        %v8985 = vpack.c.bf16 %v8187, %v8186
        %v8986 = vpack.c.bf16 %v8963, %v8962
        %v8987 = vpack.c.bf16 %v8189, %v8188
        %v8988 = vpack.c.bf16 %v8965, %v8964
        %v8989 = vpack.c.bf16 %v8191, %v8190
        %v8990 = vpack.c.bf16 %v8967, %v8966
        %v8991 = vpack.c.bf16 %v8193, %v8192
        %v8992 = vpack.c.bf16 %v8969, %v8968
        %v8993 = vpack.c.bf16 %v8195, %v8194
        %v8994 = vpack.c.bf16 %v8971, %v8970
        %v8995 = vpack.c.bf16 %v8197, %v8196
        %v8996 = vpack.c.bf16 %v8973, %v8972
        %v8997 = vpack.c.bf16 %v8199, %v8198
        %v8998 = vpack.c.bf16 %v8975, %v8974
        %v8999 = vpack.c.bf16 %v8201, %v8200
        %v9000 = vpack.c.bf16 %v8977, %v8976
        %v9001 = vpack.c.bf16 %v8203, %v8202
        %v9002 = vpack.c.bf16 %v8979, %v8978
        %v9003 = vpack.c.bf16 %v8212, %v8204
        %v9004 = vpack.c.bf16 %v8981, %v8980
        %v9005 = vpack.c.bf16 %v8221, %v8213
        %v9006 = vpack.c.bf16 %v8983, %v8982
        %v9007 = vpack.c.bf16 %v8223, %v8222
        %v9008 = vld [vmem:[%s3] sm:$0xf]
        %v9009 = vld [vmem:[%s3 + $0x4] sm:$0xf]
        %v9010 = vld [vmem:[%s3 + $0x8] sm:$0xf]
        %v9011 = vld [vmem:[%s3 + $0xc] sm:$0xf]
        %v9012 = vld [vmem:[%s3 + $0x10] sm:$0xf]
        %v9013 = vld [vmem:[%s3 + $0x14] sm:$0xf]
        %v9014 = vld [vmem:[%s3 + $0x18] sm:$0xf]
        %v9015 = vld [vmem:[%s3 + $0x1c] sm:$0xf]
        %v9016 = vld [vmem:[%s3 + $0x20] sm:$0xf]
        %v9017 = vld [vmem:[%s3 + $0x24] sm:$0xf]
        %v9018 = vld [vmem:[%s3 + $0x28] sm:$0xf]
        %v9019 = vld [vmem:[%s3 + $0x2c] sm:$0xf]
        %v9020 = vld [vmem:[%s3 + $0x30] sm:$0xf]
        %v9021 = vld [vmem:[%s3 + $0x34] sm:$0xf]
        %v9022 = vld [vmem:[%s3 + $0x38] sm:$0xf]
        %v9023 = vld [vmem:[%s3 + $0x3c] sm:$0xf]
        %v9024 = vld [vmem:[%s3 + $0x40] sm:$0xf]
        %v9025 = vld [vmem:[%s3 + $0x44] sm:$0xf]
        %v9026 = vld [vmem:[%s4] sm:$0x1]
        %v9028 = vperm.slane %v9026, 0
        %v9048 = vunpack.c.l.b16 %v9008
        %v9049 = vunpack.c.l.b16 %v9009
        %v9050 = vunpack.c.l.b16 %v9010
        %v9051 = vunpack.c.l.b16 %v9011
        %v9052 = vunpack.c.l.b16 %v9012
        %v9053 = vunpack.c.l.b16 %v9013
        %v9054 = vunpack.c.l.b16 %v9014
        %v9055 = vunpack.c.l.b16 %v9015
        %v9056 = vunpack.c.l.b16 %v9016
        %v9057 = vunpack.c.l.b16 %v9017
        %v9058 = vunpack.c.l.b16 %v9018
        %v9059 = vunpack.c.l.b16 %v9019
        %v9060 = vunpack.c.l.b16 %v9020
        %v9061 = vunpack.c.l.b16 %v9021
        %v9062 = vunpack.c.l.b16 %v9022
        %v9063 = vunpack.c.l.b16 %v9023
        %v9064 = vunpack.c.l.b16 %v9024
        %v9065 = vunpack.c.l.b16 %v9025
        %v9066 = vpack.c.b16 %v9049, %v9048
        %v9067 = vpack.c.b16 %v9051, %v9050
        %v9068 = vpack.c.b16 %v9053, %v9052
        %v9069 = vpack.c.b16 %v9055, %v9054
        %v9070 = vpack.c.b16 %v9057, %v9056
        %v9071 = vpack.c.b16 %v9059, %v9058
        %v9072 = vpack.c.b16 %v9061, %v9060
        %v9073 = vpack.c.b16 %v9063, %v9062
        %v9074 = vpack.c.b16 %v9065, %v9064
        %v9085 = vsel %vm387, %v8985, 0
        %v9088 = vsel %vm387, %v8987, 0
        %v9091 = vsel %vm387, %v8989, 0
        %v9094 = vsel %vm387, %v8991, 0
        %v9097 = vsel %vm387, %v8993, 0
        %v9100 = vsel %vm387, %v8995, 0
        %v9103 = vsel %vm387, %v8997, 0
        %v9106 = vsel %vm387, %v8999, 0
        %v9109 = vsel %vm387, %v9001, 0
        %v9112 = vsel %vm387, %v9003, 0
        %v9115 = vsel %vm387, %v9005, 0
        %v9118 = vsel %vm387, %v9007, 0
        %9120 = vmatpush.bf16.msra.mxu0 %v9073
        %9121 = vmatpush.bf16.msra.mxu0 %v9072
        %9122 = vmatpush.bf16.msra.mxu0 %v9071
        %9123 = vmatpush.bf16.msra.mxu0 %v9070
        %9124 = vmatpush.bf16.msra.mxu0 %v9069
        %9125 = vmatpush.bf16.msra.mxu0 %v9068
        %9126 = vmatpush.bf16.msra.mxu0 %v9067
        %9127 = vmatpush.bf16.msra.mxu0 %v9066
        %9128 = vmatmul.bf16.gmra.mxu0 %v8984
        %v9129 = vpop.f32.mrf.mxu0
        %v9130 = vadd.f32 %v9028, %v9129
        %v9131 = vpop.f32.mrf.mxu0
        %v9132 = vadd.f32 %v9028, %v9131
        %9133 = vmatmul.bf16.gmra.mxu0 %v8986
        %v9134 = vpop.f32.mrf.mxu0
        %v9135 = vadd.f32 %v9028, %v9134
        %v9136 = vpop.f32.mrf.mxu0
        %v9137 = vadd.f32 %v9028, %v9136
        %9138 = vmatmul.bf16.gmra.mxu0 %v8988
        %v9139 = vpop.f32.mrf.mxu0
        %v9140 = vadd.f32 %v9028, %v9139
        %v9141 = vpop.f32.mrf.mxu0
        %v9142 = vadd.f32 %v9028, %v9141
        %9143 = vmatmul.bf16.gmra.mxu0 %v8990
        %v9144 = vpop.f32.mrf.mxu0
        %v9145 = vadd.f32 %v9028, %v9144
        %v9146 = vpop.f32.mrf.mxu0
        %v9147 = vadd.f32 %v9028, %v9146
        %9148 = vmatmul.bf16.gmra.mxu0 %v8992
        %v9149 = vpop.f32.mrf.mxu0
        %v9150 = vadd.f32 %v9028, %v9149
        %v9151 = vpop.f32.mrf.mxu0
        %v9152 = vadd.f32 %v9028, %v9151
        %9153 = vmatmul.bf16.gmra.mxu0 %v8994
        %v9154 = vpop.f32.mrf.mxu0
        %v9155 = vadd.f32 %v9028, %v9154
        %v9156 = vpop.f32.mrf.mxu0
        %v9157 = vadd.f32 %v9028, %v9156
        %9158 = vmatmul.bf16.gmra.mxu0 %v8996
        %v9159 = vpop.f32.mrf.mxu0
        %v9160 = vadd.f32 %v9028, %v9159
        %v9161 = vpop.f32.mrf.mxu0
        %v9162 = vadd.f32 %v9028, %v9161
        %9163 = vmatmul.bf16.gmra.mxu0 %v8998
        %v9164 = vpop.f32.mrf.mxu0
        %v9165 = vadd.f32 %v9028, %v9164
        %v9166 = vpop.f32.mrf.mxu0
        %v9167 = vadd.f32 %v9028, %v9166
        %9168 = vmatmul.bf16.gmra.mxu0 %v9000
        %v9169 = vpop.f32.mrf.mxu0
        %v9170 = vadd.f32 %v9028, %v9169
        %v9171 = vpop.f32.mrf.mxu0
        %v9172 = vadd.f32 %v9028, %v9171
        %9173 = vmatmul.bf16.gmra.mxu0 %v9002
        %v9174 = vpop.f32.mrf.mxu0
        %v9175 = vadd.f32 %v9028, %v9174
        %v9176 = vpop.f32.mrf.mxu0
        %v9177 = vadd.f32 %v9028, %v9176
        %9178 = vmatmul.bf16.gmra.mxu0 %v9004
        %v9179 = vpop.f32.mrf.mxu0
        %v9180 = vadd.f32 %v9028, %v9179
        %v9181 = vpop.f32.mrf.mxu0
        %v9182 = vadd.f32 %v9028, %v9181
        %9183 = vmatmul.bf16.gmra.mxu0 %v9006
        %v9184 = vpop.f32.mrf.mxu0
        %v9185 = vadd.f32 %v9028, %v9184
        %v9186 = vpop.f32.mrf.mxu0
        %v9187 = vadd.f32 %v9028, %v9186
        %9188 = vdwg.mxu0
        %9189 = vmatpush.bf16.msra.mxu0 0
        %9190 = vmatpush.bf16.msra.mxu0 0
        %9191 = vmatpush.bf16.msra.mxu0 0
        %9192 = vmatpush.bf16.msra.mxu0 0
        %9193 = vmatpush.bf16.msra.mxu0 0
        %9194 = vmatpush.bf16.msra.mxu0 0
        %9195 = vmatpush.bf16.msra.mxu0 0
        %9196 = vmatpush.bf16.msra.mxu0 %v9074
        %9197 = vmatmul.bf16.gmra.mxu0 %v9085
        %v9198 = vpop.f32.mrf.mxu0
        %v9199 = vadd.f32 %v9130, %v9198
        %v9200 = vpop.f32.mrf.mxu0
        %v9201 = vadd.f32 %v9132, %v9200
        %9202 = vmatmul.bf16.gmra.mxu0 %v9088
        %v9203 = vpop.f32.mrf.mxu0
        %v9204 = vadd.f32 %v9135, %v9203
        %v9205 = vpop.f32.mrf.mxu0
        %v9206 = vadd.f32 %v9137, %v9205
        %9207 = vmatmul.bf16.gmra.mxu0 %v9091
        %v9208 = vpop.f32.mrf.mxu0
        %v9209 = vadd.f32 %v9140, %v9208
        %v9210 = vpop.f32.mrf.mxu0
        %v9211 = vadd.f32 %v9142, %v9210
        %9212 = vmatmul.bf16.gmra.mxu0 %v9094
        %v9213 = vpop.f32.mrf.mxu0
        %v9214 = vadd.f32 %v9145, %v9213
        %v9215 = vpop.f32.mrf.mxu0
        %v9216 = vadd.f32 %v9147, %v9215
        %9217 = vmatmul.bf16.gmra.mxu0 %v9097
        %v9218 = vpop.f32.mrf.mxu0
        %v9219 = vadd.f32 %v9150, %v9218
        %v9220 = vpop.f32.mrf.mxu0
        %v9221 = vadd.f32 %v9152, %v9220
        %9222 = vmatmul.bf16.gmra.mxu0 %v9100
        %v9223 = vpop.f32.mrf.mxu0
        %v9224 = vadd.f32 %v9155, %v9223
        %v9225 = vpop.f32.mrf.mxu0
        %v9226 = vadd.f32 %v9157, %v9225
        %9227 = vmatmul.bf16.gmra.mxu0 %v9103
        %v9228 = vpop.f32.mrf.mxu0
        %v9229 = vadd.f32 %v9160, %v9228
        %v9230 = vpop.f32.mrf.mxu0
        %v9231 = vadd.f32 %v9162, %v9230
        %9232 = vmatmul.bf16.gmra.mxu0 %v9106
        %v9233 = vpop.f32.mrf.mxu0
        %v9234 = vadd.f32 %v9165, %v9233
        %v9235 = vpop.f32.mrf.mxu0
        %v9236 = vadd.f32 %v9167, %v9235
        %9237 = vmatmul.bf16.gmra.mxu0 %v9109
        %v9238 = vpop.f32.mrf.mxu0
        %v9239 = vadd.f32 %v9170, %v9238
        %v9240 = vpop.f32.mrf.mxu0
        %v9241 = vadd.f32 %v9172, %v9240
        %9242 = vmatmul.bf16.gmra.mxu0 %v9112
        %v9243 = vpop.f32.mrf.mxu0
        %v9244 = vadd.f32 %v9175, %v9243
        %v9245 = vpop.f32.mrf.mxu0
        %v9246 = vadd.f32 %v9177, %v9245
        %9247 = vmatmul.bf16.gmra.mxu0 %v9115
        %v9248 = vpop.f32.mrf.mxu0
        %v9249 = vadd.f32 %v9180, %v9248
        %v9250 = vpop.f32.mrf.mxu0
        %v9251 = vadd.f32 %v9182, %v9250
        %9252 = vmatmul.bf16.gmra.mxu0 %v9118
        %v9253 = vpop.f32.mrf.mxu0
        %v9254 = vadd.f32 %v9185, %v9253
        %v9255 = vpop.f32.mrf.mxu0
        %v9256 = vadd.f32 %v9187, %v9255
        %9257 = vdwg.mxu0
        %v9258 = vmax.f32 %v9199, 0.0
        %v9259 = vmax.f32 %v9201, 0.0
        %v9260 = vmax.f32 %v9204, 0.0
        %v9261 = vmax.f32 %v9206, 0.0
        %v9262 = vmax.f32 %v9209, 0.0
        %v9263 = vmax.f32 %v9211, 0.0
        %v9264 = vmax.f32 %v9214, 0.0
        %v9265 = vmax.f32 %v9216, 0.0
        %v9266 = vmax.f32 %v9219, 0.0
        %v9267 = vmax.f32 %v9221, 0.0
        %v9268 = vmax.f32 %v9224, 0.0
        %v9269 = vmax.f32 %v9226, 0.0
        %v9270 = vmax.f32 %v9229, 0.0
        %v9271 = vmax.f32 %v9231, 0.0
        %v9272 = vmax.f32 %v9234, 0.0
        %v9273 = vmax.f32 %v9236, 0.0
        %v9274 = vmax.f32 %v9239, 0.0
        %v9275 = vmax.f32 %v9241, 0.0
        %v9276 = vmax.f32 %v9244, 0.0
        %v9277 = vmax.f32 %v9246, 0.0
        %v9278 = vmax.f32 %v9249, 0.0
        %v9279 = vmax.f32 %v9251, 0.0
        %v9280 = vmax.f32 %v9254, 0.0
        %v9281 = vmax.f32 %v9256, 0.0
        %9282 = vst.msk [vmem:[#allocation4 + $0x11] sm:$0xff] %vm416, %v9258
        %9283 = vst.msk [vmem:[#allocation4 + $0x19] sm:$0xff] %vm416, %v9259
        %9284 = vst.msk [vmem:[#allocation4 + $0x21] sm:$0xff] %vm416, %v9260
        %9285 = vst.msk [vmem:[#allocation4 + $0x29] sm:$0xff] %vm416, %v9261
        %9286 = vst.msk [vmem:[#allocation4 + $0x31] sm:$0xff] %vm416, %v9262
        %9287 = vst.msk [vmem:[#allocation4 + $0x39] sm:$0xff] %vm416, %v9263
        %9288 = vst.msk [vmem:[#allocation4 + $0x41] sm:$0xff] %vm416, %v9264
        %9289 = vst.msk [vmem:[#allocation4 + $0x49] sm:$0xff] %vm416, %v9265
        %9290 = vst.msk [vmem:[#allocation4 + $0x51] sm:$0xff] %vm416, %v9266
        %9291 = vst.msk [vmem:[#allocation4 + $0x59] sm:$0xff] %vm416, %v9267
        %9292 = vst.msk [vmem:[#allocation4 + $0x61] sm:$0xff] %vm416, %v9268
        %9293 = vst.msk [vmem:[#allocation4 + $0x69] sm:$0xff] %vm416, %v9269
        %9294 = vst.msk [vmem:[#allocation4 + $0x71] sm:$0xff] %vm416, %v9270
        %9295 = vst.msk [vmem:[#allocation4 + $0x79] sm:$0xff] %vm416, %v9271
        %9296 = vst.msk [vmem:[#allocation4 + $0x81] sm:$0xff] %vm416, %v9272
        %9297 = vst.msk [vmem:[#allocation4 + $0x89] sm:$0xff] %vm416, %v9273
        %9298 = vst.msk [vmem:[#allocation4 + $0x91] sm:$0xff] %vm416, %v9274
        %9299 = vst.msk [vmem:[#allocation4 + $0x99] sm:$0xff] %vm416, %v9275
        %9300 = vst.msk [vmem:[#allocation4 + $0xa1] sm:$0xff] %vm416, %v9276
        %9301 = vst.msk [vmem:[#allocation4 + $0xa9] sm:$0xff] %vm416, %v9277
        %9302 = vst.msk [vmem:[#allocation4 + $0xb1] sm:$0xff] %vm416, %v9278
        %9303 = vst.msk [vmem:[#allocation4 + $0xb9] sm:$0xff] %vm416, %v9279
        %9304 = vst.msk [vmem:[#allocation4 + $0xc1] sm:$0xff] %vm416, %v9280
        %vm9305 = vcmask 259072
        %9306 = vst.msk [vmem:[#allocation4 + $0xc9] sm:$0x3f] %vm9305, %v9281
        %v9307 = vld [vmem:[#allocation4 + $0x11] sm:$0xff]
        %v9308 = vld [vmem:[#allocation4 + $0x19] sm:$0xf]
        %v9309 = vld [vmem:[#allocation4 + $0x12] sm:$0xff]
        %v9310 = vld [vmem:[#allocation4 + $0x1a] sm:$0xf]
        %v9311 = vmax.f32 %v9307, %v9309
        %v9312 = vmax.f32 %v9308, %v9310
        %v9313 = vld [vmem:[#allocation4 + $0x21] sm:$0xff]
        %v9314 = vld [vmem:[#allocation4 + $0x29] sm:$0xf]
        %v9315 = vld [vmem:[#allocation4 + $0x22] sm:$0xff]
        %v9316 = vld [vmem:[#allocation4 + $0x2a] sm:$0xf]
        %v9317 = vmax.f32 %v9313, %v9315
        %v9318 = vmax.f32 %v9314, %v9316
        %v9319 = vmax.f32 %v9311, %v9317
        %v9320 = vmax.f32 %v9312, %v9318
        %vm9321 = vcmask 97280
        %v9322 = vsel %vm9321, %v7572, 0
        %vm9324 = vcmask 1043456
        %v9326 = vsel %vm9324, %v9320, 0
        %9328 = vmatpush.msra.mxu0 0.0
        %9329 = vmatpush.msra.mxu0 0.0
        %9330 = vmatpush.msra.mxu0 0.0
        %9331 = vmatpush.msra.mxu0 0.0
        %9332 = vmatpush.msra.mxu0 0.0
        %9333 = vmatpush.msra.mxu0 0.0
        %9334 = vmatpush.msra.mxu0 0.0
        %9335 = vmatpush.msra.mxu0 0.0
        %9336 = vmatpush.msra.mxu0 0.0
        %9337 = vmatpush.msra.mxu0 0.0
        %9338 = vmatpush.msra.mxu0 0.0
        %9339 = vmatpush.msra.mxu0 0.0
        %9340 = vmatpush.msra.mxu0 0.0
        %9341 = vmatpush.msra.mxu0 0.0
        %9342 = vmatpush.msra.mxu0 %v9326
        %9343 = vmatpush.msra.mxu0 %v9319
        %9344 = vmatmul.f32.gmra.mxu0 %v9322
        %v9345 = vpop.f32.mrf.mxu0
        %v9346 = vadd.f32 0.0, %v9345
        %9347 = vdwg.mxu0
        %9348 = vst.msk [vmem:[#allocation5 + $0x9] sm:$0x3f] %vm9305, %v9346
        %v9349 = vld [vmem:[#allocation4 + $0x31] sm:$0xff]
        %v9350 = vld [vmem:[#allocation4 + $0x39] sm:$0xf]
        %v9351 = vld [vmem:[#allocation4 + $0x32] sm:$0xff]
        %v9352 = vld [vmem:[#allocation4 + $0x3a] sm:$0xf]
        %v9353 = vmax.f32 %v9349, %v9351
        %v9354 = vmax.f32 %v9350, %v9352
        %v9355 = vld [vmem:[#allocation4 + $0x41] sm:$0xff]
        %v9356 = vld [vmem:[#allocation4 + $0x49] sm:$0xf]
        %v9357 = vld [vmem:[#allocation4 + $0x42] sm:$0xff]
        %v9358 = vld [vmem:[#allocation4 + $0x4a] sm:$0xf]
        %v9359 = vmax.f32 %v9355, %v9357
        %v9360 = vmax.f32 %v9356, %v9358
        %v9361 = vmax.f32 %v9353, %v9359
        %v9362 = vmax.f32 %v9354, %v9360
        %v9364 = vsel %vm9324, %v9362, 0
        %9366 = vmatpush.msra.mxu0 0.0
        %9367 = vmatpush.msra.mxu0 0.0
        %9368 = vmatpush.msra.mxu0 0.0
        %9369 = vmatpush.msra.mxu0 0.0
        %9370 = vmatpush.msra.mxu0 0.0
        %9371 = vmatpush.msra.mxu0 0.0
        %9372 = vmatpush.msra.mxu0 0.0
        %9373 = vmatpush.msra.mxu0 0.0
        %9374 = vmatpush.msra.mxu0 0.0
        %9375 = vmatpush.msra.mxu0 0.0
        %9376 = vmatpush.msra.mxu0 0.0
        %9377 = vmatpush.msra.mxu0 0.0
        %9378 = vmatpush.msra.mxu0 0.0
        %9379 = vmatpush.msra.mxu0 0.0
        %9380 = vmatpush.msra.mxu0 %v9364
        %9381 = vmatpush.msra.mxu0 %v9361
        %9382 = vmatmul.f32.gmra.mxu0 %v9322
        %v9383 = vpop.f32.mrf.mxu0
        %v9384 = vadd.f32 0.0, %v9383
        %9385 = vdwg.mxu0
        %9386 = vst.msk [vmem:[#allocation5 + $0x11] sm:$0x3f] %vm9305, %v9384
        %v9387 = vld [vmem:[#allocation4 + $0x51] sm:$0xff]
        %v9388 = vld [vmem:[#allocation4 + $0x59] sm:$0xf]
        %v9389 = vld [vmem:[#allocation4 + $0x52] sm:$0xff]
        %v9390 = vld [vmem:[#allocation4 + $0x5a] sm:$0xf]
        %v9391 = vmax.f32 %v9387, %v9389
        %v9392 = vmax.f32 %v9388, %v9390
        %v9393 = vld [vmem:[#allocation4 + $0x61] sm:$0xff]
        %v9394 = vld [vmem:[#allocation4 + $0x69] sm:$0xf]
        %v9395 = vld [vmem:[#allocation4 + $0x62] sm:$0xff]
        %v9396 = vld [vmem:[#allocation4 + $0x6a] sm:$0xf]
        %v9397 = vmax.f32 %v9393, %v9395
        %v9398 = vmax.f32 %v9394, %v9396
        %v9399 = vmax.f32 %v9391, %v9397
        %v9400 = vmax.f32 %v9392, %v9398
        %v9402 = vsel %vm9324, %v9400, 0
        %9404 = vmatpush.msra.mxu0 0.0
        %9405 = vmatpush.msra.mxu0 0.0
        %9406 = vmatpush.msra.mxu0 0.0
        %9407 = vmatpush.msra.mxu0 0.0
        %9408 = vmatpush.msra.mxu0 0.0
        %9409 = vmatpush.msra.mxu0 0.0
        %9410 = vmatpush.msra.mxu0 0.0
        %9411 = vmatpush.msra.mxu0 0.0
        %9412 = vmatpush.msra.mxu0 0.0
        %9413 = vmatpush.msra.mxu0 0.0
        %9414 = vmatpush.msra.mxu0 0.0
        %9415 = vmatpush.msra.mxu0 0.0
        %9416 = vmatpush.msra.mxu0 0.0
        %9417 = vmatpush.msra.mxu0 0.0
        %9418 = vmatpush.msra.mxu0 %v9402
        %9419 = vmatpush.msra.mxu0 %v9399
        %9420 = vmatmul.f32.gmra.mxu0 %v9322
        %v9421 = vpop.f32.mrf.mxu0
        %v9422 = vadd.f32 0.0, %v9421
        %9423 = vdwg.mxu0
        %9424 = vst.msk [vmem:[#allocation5 + $0x19] sm:$0x3f] %vm9305, %v9422
        %v9425 = vld [vmem:[#allocation4 + $0x71] sm:$0xff]
        %v9426 = vld [vmem:[#allocation4 + $0x79] sm:$0xf]
        %v9427 = vld [vmem:[#allocation4 + $0x72] sm:$0xff]
        %v9428 = vld [vmem:[#allocation4 + $0x7a] sm:$0xf]
        %v9429 = vmax.f32 %v9425, %v9427
        %v9430 = vmax.f32 %v9426, %v9428
        %v9431 = vld [vmem:[#allocation4 + $0x81] sm:$0xff]
        %v9432 = vld [vmem:[#allocation4 + $0x89] sm:$0xf]
        %v9433 = vld [vmem:[#allocation4 + $0x82] sm:$0xff]
        %v9434 = vld [vmem:[#allocation4 + $0x8a] sm:$0xf]
        %v9435 = vmax.f32 %v9431, %v9433
        %v9436 = vmax.f32 %v9432, %v9434
        %v9437 = vmax.f32 %v9429, %v9435
        %v9438 = vmax.f32 %v9430, %v9436
        %v9440 = vsel %vm9324, %v9438, 0
        %9442 = vmatpush.msra.mxu0 0.0
        %9443 = vmatpush.msra.mxu0 0.0
        %9444 = vmatpush.msra.mxu0 0.0
        %9445 = vmatpush.msra.mxu0 0.0
        %9446 = vmatpush.msra.mxu0 0.0
        %9447 = vmatpush.msra.mxu0 0.0
        %9448 = vmatpush.msra.mxu0 0.0
        %9449 = vmatpush.msra.mxu0 0.0
        %9450 = vmatpush.msra.mxu0 0.0
        %9451 = vmatpush.msra.mxu0 0.0
        %9452 = vmatpush.msra.mxu0 0.0
        %9453 = vmatpush.msra.mxu0 0.0
        %9454 = vmatpush.msra.mxu0 0.0
        %9455 = vmatpush.msra.mxu0 0.0
        %9456 = vmatpush.msra.mxu0 %v9440
        %9457 = vmatpush.msra.mxu0 %v9437
        %9458 = vmatmul.f32.gmra.mxu0 %v9322
        %v9459 = vpop.f32.mrf.mxu0
        %v9460 = vadd.f32 0.0, %v9459
        %9461 = vdwg.mxu0
        %9462 = vst.msk [vmem:[#allocation5 + $0x21] sm:$0x3f] %vm9305, %v9460
        %v9463 = vld [vmem:[#allocation4 + $0x91] sm:$0xff]
        %v9464 = vld [vmem:[#allocation4 + $0x99] sm:$0xf]
        %v9465 = vld [vmem:[#allocation4 + $0x92] sm:$0xff]
        %v9466 = vld [vmem:[#allocation4 + $0x9a] sm:$0xf]
        %v9467 = vmax.f32 %v9463, %v9465
        %v9468 = vmax.f32 %v9464, %v9466
        %v9469 = vld [vmem:[#allocation4 + $0xa1] sm:$0xff]
        %v9470 = vld [vmem:[#allocation4 + $0xa9] sm:$0xf]
        %v9471 = vld [vmem:[#allocation4 + $0xa2] sm:$0xff]
        %v9472 = vld [vmem:[#allocation4 + $0xaa] sm:$0xf]
        %v9473 = vmax.f32 %v9469, %v9471
        %v9474 = vmax.f32 %v9470, %v9472
        %v9475 = vmax.f32 %v9467, %v9473
        %v9476 = vmax.f32 %v9468, %v9474
        %v9478 = vsel %vm9324, %v9476, 0
        %9480 = vmatpush.msra.mxu0 0.0
        %9481 = vmatpush.msra.mxu0 0.0
        %9482 = vmatpush.msra.mxu0 0.0
        %9483 = vmatpush.msra.mxu0 0.0
        %9484 = vmatpush.msra.mxu0 0.0
        %9485 = vmatpush.msra.mxu0 0.0
        %9486 = vmatpush.msra.mxu0 0.0
        %9487 = vmatpush.msra.mxu0 0.0
        %9488 = vmatpush.msra.mxu0 0.0
        %9489 = vmatpush.msra.mxu0 0.0
        %9490 = vmatpush.msra.mxu0 0.0
        %9491 = vmatpush.msra.mxu0 0.0
        %9492 = vmatpush.msra.mxu0 0.0
        %9493 = vmatpush.msra.mxu0 0.0
        %9494 = vmatpush.msra.mxu0 %v9478
        %9495 = vmatpush.msra.mxu0 %v9475
        %9496 = vmatmul.f32.gmra.mxu0 %v9322
        %v9497 = vpop.f32.mrf.mxu0
        %v9498 = vadd.f32 0.0, %v9497
        %9499 = vdwg.mxu0
        %9500 = vst.msk [vmem:[#allocation5 + $0x29] sm:$0x3f] %vm9305, %v9498
        %v9501 = vld [vmem:[#allocation4 + $0xb1] sm:$0xff]
        %v9502 = vld [vmem:[#allocation4 + $0xb9] sm:$0xf]
        %v9503 = vld [vmem:[#allocation4 + $0xb2] sm:$0xff]
        %v9504 = vld [vmem:[#allocation4 + $0xba] sm:$0xf]
        %v9505 = vmax.f32 %v9501, %v9503
        %v9506 = vmax.f32 %v9502, %v9504
        %v9507 = vld [vmem:[#allocation4 + $0xc1] sm:$0xff]
        %v9508 = vld [vmem:[#allocation4 + $0xc9] sm:$0xf]
        %v9509 = vld [vmem:[#allocation4 + $0xc2] sm:$0xff]
        %v9510 = vld [vmem:[#allocation4 + $0xca] sm:$0xf]
        %v9511 = vmax.f32 %v9507, %v9509
        %v9512 = vmax.f32 %v9508, %v9510
        %v9513 = vmax.f32 %v9505, %v9511
        %v9514 = vmax.f32 %v9506, %v9512
        %v9516 = vsel %vm9324, %v9514, 0
        %9518 = vmatpush.msra.mxu0 0.0
        %9519 = vmatpush.msra.mxu0 0.0
        %9520 = vmatpush.msra.mxu0 0.0
        %9521 = vmatpush.msra.mxu0 0.0
        %9522 = vmatpush.msra.mxu0 0.0
        %9523 = vmatpush.msra.mxu0 0.0
        %9524 = vmatpush.msra.mxu0 0.0
        %9525 = vmatpush.msra.mxu0 0.0
        %9526 = vmatpush.msra.mxu0 0.0
        %9527 = vmatpush.msra.mxu0 0.0
        %9528 = vmatpush.msra.mxu0 0.0
        %9529 = vmatpush.msra.mxu0 0.0
        %9530 = vmatpush.msra.mxu0 0.0
        %9531 = vmatpush.msra.mxu0 0.0
        %9532 = vmatpush.msra.mxu0 %v9516
        %9533 = vmatpush.msra.mxu0 %v9513
        %9534 = vmatmul.f32.gmra.mxu0 %v9322
        %v9535 = vpop.f32.mrf.mxu0
        %v9536 = vadd.f32 0.0, %v9535
        %9537 = vdwg.mxu0
        %9538 = vst.msk [vmem:[#allocation5 + $0x31] sm:$0x3f] %vm9305, %v9536
        %v9539 = vld [vmem:[#allocation5] sm:$0xff]
        %v9540 = vld [vmem:[#allocation5 + $0x8] sm:$0xff]
        %v9541 = vld [vmem:[#allocation5 + $0x10] sm:$0xff]
        %v9542 = vld [vmem:[#allocation5 + $0x18] sm:$0xff]
        %v9543 = vld [vmem:[#allocation5 + $0x20] sm:$0xff]
        %v9544 = vld [vmem:[#allocation5 + $0x28] sm:$0x3f]
        %v9545 = vld [vmem:[#allocation5 + $0x1] sm:$0xff]
        %v9546 = vld [vmem:[#allocation5 + $0x9] sm:$0xff]
        %v9547 = vld [vmem:[#allocation5 + $0x11] sm:$0xff]
        %v9548 = vld [vmem:[#allocation5 + $0x19] sm:$0xff]
        %v9549 = vld [vmem:[#allocation5 + $0x21] sm:$0xff]
        %v9550 = vld [vmem:[#allocation5 + $0x29] sm:$0x3f]
        %v9551 = vld [vmem:[#allocation5 + $0x2] sm:$0xff]
        %v9552 = vld [vmem:[#allocation5 + $0xa] sm:$0xff]
        %v9553 = vld [vmem:[#allocation5 + $0x12] sm:$0xff]
        %v9554 = vld [vmem:[#allocation5 + $0x1a] sm:$0xff]
        %v9555 = vld [vmem:[#allocation5 + $0x22] sm:$0xff]
        %v9556 = vld [vmem:[#allocation5 + $0x2a] sm:$0x3f]
        %v9557 = vld [vmem:[#allocation5 + $0x28] sm:$0xff]
        %v9558 = vld [vmem:[#allocation5 + $0x30] sm:$0x3f]
        %v9559 = vld [vmem:[#allocation5 + $0x29] sm:$0xff]
        %v9560 = vld [vmem:[#allocation5 + $0x31] sm:$0x3f]
        %v9561 = vld [vmem:[#allocation5 + $0x2a] sm:$0xff]
        %v9562 = vld [vmem:[#allocation5 + $0x32] sm:$0x3f]
        %v9563 = vld [vmem:[#allocation5 + $0x30] sm:$0xff]
        %v9564 = vld [vmem:[#allocation5 + $0x38] sm:$0x3f]
        %v9565 = vld [vmem:[#allocation5 + $0x31] sm:$0xff]
        %v9566 = vld [vmem:[#allocation5 + $0x39] sm:$0x3f]
        %v9567 = vld [vmem:[#allocation5 + $0x32] sm:$0xff]
        %v9568 = vld [vmem:[#allocation5 + $0x3a] sm:$0x3f]
        %9575 = vrot.lane.b32.xlu0 %v9545, 32
        %v9576 = vpop.permute.xlu0 %9575
        %9577 = vrot.lane.b32.xlu0 %v9546, 32
        %v9578 = vpop.permute.xlu0 %9577
        %9579 = vrot.lane.b32.xlu0 %v9547, 32
        %v9580 = vpop.permute.xlu0 %9579
        %9581 = vrot.lane.b32.xlu0 %v9548, 32
        %v9582 = vpop.permute.xlu0 %9581
        %9583 = vrot.lane.b32.xlu0 %v9549, 32
        %v9584 = vpop.permute.xlu0 %9583
        %9585 = vrot.lane.b32.xlu0 %v9550, 32
        %v9586 = vpop.permute.xlu0 %9585
        %9599 = vrot.lane.b32.xlu0 %v9551, 64
        %v9600 = vpop.permute.xlu0 %9599
        %9601 = vrot.lane.b32.xlu0 %v9552, 64
        %v9602 = vpop.permute.xlu0 %9601
        %9603 = vrot.lane.b32.xlu0 %v9553, 64
        %v9604 = vpop.permute.xlu0 %9603
        %9605 = vrot.lane.b32.xlu0 %v9554, 64
        %v9606 = vpop.permute.xlu0 %9605
        %9607 = vrot.lane.b32.xlu0 %v9555, 64
        %v9608 = vpop.permute.xlu0 %9607
        %9609 = vrot.lane.b32.xlu0 %v9556, 64
        %v9610 = vpop.permute.xlu0 %9609
        %9623 = vrot.lane.b32.xlu0 %v9540, 96
        %v9624 = vpop.permute.xlu0 %9623
        %9625 = vrot.lane.b32.xlu0 %v9541, 96
        %v9626 = vpop.permute.xlu0 %9625
        %9627 = vrot.lane.b32.xlu0 %v9542, 96
        %v9628 = vpop.permute.xlu0 %9627
        %9629 = vrot.lane.b32.xlu0 %v9543, 96
        %v9630 = vpop.permute.xlu0 %9629
        %9631 = vrot.lane.b32.xlu0 %v9557, 96
        %v9632 = vpop.permute.xlu0 %9631
        %9633 = vrot.lane.b32.xlu0 %v9558, 96
        %v9634 = vpop.permute.xlu0 %9633
        %9643 = vrot.lane.b32.xlu0 %v9552, 32
        %v9644 = vpop.permute.xlu0 %9643
        %9645 = vrot.lane.b32.xlu0 %v9553, 32
        %v9646 = vpop.permute.xlu0 %9645
        %9647 = vrot.lane.b32.xlu0 %v9554, 32
        %v9648 = vpop.permute.xlu0 %9647
        %9649 = vrot.lane.b32.xlu0 %v9555, 32
        %v9650 = vpop.permute.xlu0 %9649
        %9651 = vrot.lane.b32.xlu0 %v9561, 32
        %v9652 = vpop.permute.xlu0 %9651
        %9653 = vrot.lane.b32.xlu0 %v9562, 32
        %v9654 = vpop.permute.xlu0 %9653
        %9663 = vrot.lane.b32.xlu0 %v9541, 64
        %v9664 = vpop.permute.xlu0 %9663
        %9665 = vrot.lane.b32.xlu0 %v9542, 64
        %v9666 = vpop.permute.xlu0 %9665
        %9667 = vrot.lane.b32.xlu0 %v9543, 64
        %v9668 = vpop.permute.xlu0 %9667
        %9669 = vrot.lane.b32.xlu0 %v9557, 64
        %v9670 = vpop.permute.xlu0 %9669
        %9671 = vrot.lane.b32.xlu0 %v9563, 64
        %v9672 = vpop.permute.xlu0 %9671
        %9673 = vrot.lane.b32.xlu0 %v9564, 64
        %v9674 = vpop.permute.xlu0 %9673
        %9684 = vrot.lane.b32.xlu0 %v9547, 96
        %v9685 = vpop.permute.xlu0 %9684
        %9686 = vrot.lane.b32.xlu0 %v9548, 96
        %v9687 = vpop.permute.xlu0 %9686
        %9688 = vrot.lane.b32.xlu0 %v9549, 96
        %v9689 = vpop.permute.xlu0 %9688
        %9690 = vrot.lane.b32.xlu0 %v9559, 96
        %v9691 = vpop.permute.xlu0 %9690
        %9692 = vrot.lane.b32.xlu0 %v9565, 96
        %v9693 = vpop.permute.xlu0 %9692
        %9694 = vrot.lane.b32.xlu0 %v9566, 96
        %v9695 = vpop.permute.xlu0 %9694
        %v9702 = vsel %vm416, %v9539, %v9576
        %v9703 = vsel %vm416, %v9540, %v9578
        %v9704 = vsel %vm416, %v9541, %v9580
        %v9705 = vsel %vm416, %v9542, %v9582
        %v9706 = vsel %vm416, %v9543, %v9584
        %v9707 = vsel %vm416, %v9544, %v9586
        %v9708 = vsel %vm425, %v9702, %v9600
        %v9709 = vsel %vm425, %v9703, %v9602
        %v9710 = vsel %vm425, %v9704, %v9604
        %v9711 = vsel %vm425, %v9705, %v9606
        %v9712 = vsel %vm425, %v9706, %v9608
        %v9713 = vsel %vm425, %v9707, %v9610
        %v9714 = vsel %vm8934, %v9708, %v9624
        %v9715 = vsel %vm8934, %v9709, %v9626
        %v9716 = vsel %vm8934, %v9710, %v9628
        %v9717 = vsel %vm8934, %v9711, %v9630
        %v9718 = vsel %vm8934, %v9712, %v9632
        %v9719 = vsel %vm8934, %v9713, %v9634
        %v9720 = vsel %vm416, %v9546, %v9644
        %v9721 = vsel %vm416, %v9547, %v9646
        %v9722 = vsel %vm416, %v9548, %v9648
        %v9723 = vsel %vm416, %v9549, %v9650
        %v9724 = vsel %vm416, %v9559, %v9652
        %v9725 = vsel %vm416, %v9560, %v9654
        %v9726 = vsel %vm425, %v9720, %v9664
        %v9727 = vsel %vm425, %v9721, %v9666
        %v9728 = vsel %vm425, %v9722, %v9668
        %v9729 = vsel %vm425, %v9723, %v9670
        %v9730 = vsel %vm425, %v9724, %v9672
        %v9731 = vsel %vm425, %v9725, %v9674
        %v9732 = vsel %vm8934, %v9726, %v9685
        %v9733 = vsel %vm8934, %v9727, %v9687
        %v9734 = vsel %vm8934, %v9728, %v9689
        %v9735 = vsel %vm8934, %v9729, %v9691
        %v9736 = vsel %vm8934, %v9730, %v9693
        %v9737 = vsel %vm8934, %v9731, %v9695
        %v9738 = vpack.c.bf16 %v9715, %v9714
        %v9739 = vpack.c.bf16 %v9733, %v9732
        %v9740 = vpack.c.bf16 %v9554, %v9553
        %v9741 = vpack.c.bf16 %v9717, %v9716
        %v9742 = vpack.c.bf16 %v9735, %v9734
        %v9743 = vpack.c.bf16 %v9561, %v9555
        %v9744 = vpack.c.bf16 %v9719, %v9718
        %v9745 = vpack.c.bf16 %v9737, %v9736
        %v9746 = vpack.c.bf16 %v9568, %v9567
        %v9747 = vld [vmem:[%s5] sm:$0xf]
        %v9748 = vld [vmem:[%s5 + $0x4] sm:$0xf]
        %v9749 = vld [vmem:[%s5 + $0x8] sm:$0xf]
        %v9750 = vld [vmem:[%s5 + $0xc] sm:$0xf]
        %v9751 = vld [vmem:[%s5 + $0x10] sm:$0xf]
        %v9752 = vld [vmem:[%s5 + $0x14] sm:$0xf]
        %v9753 = vld [vmem:[%s5 + $0x18] sm:$0xf]
        %v9754 = vld [vmem:[%s5 + $0x1c] sm:$0xf]
        %v9755 = vld [vmem:[%s5 + $0x20] sm:$0xf]
        %v9756 = vld [vmem:[%s5 + $0x24] sm:$0xf]
        %v9757 = vld [vmem:[%s5 + $0x28] sm:$0xf]
        %v9758 = vld [vmem:[%s5 + $0x2c] sm:$0xf]
        %v9759 = vld [vmem:[%s5 + $0x30] sm:$0xf]
        %v9760 = vld [vmem:[%s5 + $0x34] sm:$0xf]
        %v9761 = vld [vmem:[%s5 + $0x38] sm:$0xf]
        %v9762 = vld [vmem:[%s5 + $0x3c] sm:$0xf]
        %v9763 = vld [vmem:[%s5 + $0x40] sm:$0xf]
        %v9764 = vld [vmem:[%s5 + $0x44] sm:$0xf]
        %v9765 = vld [vmem:[%s5 + $0x48] sm:$0xf]
        %v9766 = vld [vmem:[%s5 + $0x4c] sm:$0xf]
        %v9767 = vld [vmem:[%s5 + $0x50] sm:$0xf]
        %v9768 = vld [vmem:[%s5 + $0x54] sm:$0xf]
        %v9769 = vld [vmem:[%s5 + $0x58] sm:$0xf]
        %v9770 = vld [vmem:[%s5 + $0x5c] sm:$0xf]
        %v9771 = vld [vmem:[%s5 + $0x60] sm:$0xf]
        %v9772 = vld [vmem:[%s5 + $0x64] sm:$0xf]
        %v9773 = vld [vmem:[%s5 + $0x68] sm:$0xf]
        %v9774 = vld [vmem:[%s5 + $0x6c] sm:$0xf]
        %v9775 = vld [vmem:[%s5 + $0x70] sm:$0xf]
        %v9776 = vld [vmem:[%s5 + $0x74] sm:$0xf]
        %v9777 = vld [vmem:[%s5 + $0x78] sm:$0xf]
        %v9778 = vld [vmem:[%s5 + $0x7c] sm:$0xf]
        %v9779 = vld [vmem:[%s5 + $0x80] sm:$0xf]
        %v9780 = vld [vmem:[%s5 + $0x84] sm:$0xf]
        %v9781 = vld [vmem:[%s5 + $0x88] sm:$0xf]
        %v9782 = vld [vmem:[%s5 + $0x8c] sm:$0xf]
        %v9783 = vld [vmem:[%s6] sm:$0x1]
        %v9785 = vperm.slane %v9783, 0
        %v9823 = vunpack.c.l.b16 %v9747
        %v9824 = vunpack.c.l.b16 %v9748
        %v9825 = vunpack.c.l.b16 %v9749
        %v9826 = vunpack.c.l.b16 %v9750
        %v9827 = vunpack.c.l.b16 %v9751
        %v9828 = vunpack.c.l.b16 %v9752
        %v9829 = vunpack.c.l.b16 %v9753
        %v9830 = vunpack.c.l.b16 %v9754
        %v9831 = vunpack.c.l.b16 %v9755
        %v9832 = vunpack.c.l.b16 %v9756
        %v9833 = vunpack.c.l.b16 %v9757
        %v9834 = vunpack.c.l.b16 %v9758
        %v9835 = vunpack.c.l.b16 %v9759
        %v9836 = vunpack.c.l.b16 %v9760
        %v9837 = vunpack.c.l.b16 %v9761
        %v9838 = vunpack.c.l.b16 %v9762
        %v9839 = vunpack.c.l.b16 %v9763
        %v9840 = vunpack.c.l.b16 %v9764
        %v9841 = vunpack.c.l.b16 %v9765
        %v9842 = vunpack.c.l.b16 %v9766
        %v9843 = vunpack.c.l.b16 %v9767
        %v9844 = vunpack.c.l.b16 %v9768
        %v9845 = vunpack.c.l.b16 %v9769
        %v9846 = vunpack.c.l.b16 %v9770
        %v9847 = vunpack.c.l.b16 %v9771
        %v9848 = vunpack.c.l.b16 %v9772
        %v9849 = vunpack.c.l.b16 %v9773
        %v9850 = vunpack.c.l.b16 %v9774
        %v9851 = vunpack.c.l.b16 %v9775
        %v9852 = vunpack.c.l.b16 %v9776
        %v9853 = vunpack.c.l.b16 %v9777
        %v9854 = vunpack.c.l.b16 %v9778
        %v9855 = vunpack.c.l.b16 %v9779
        %v9856 = vunpack.c.l.b16 %v9780
        %v9857 = vunpack.c.l.b16 %v9781
        %v9858 = vunpack.c.l.b16 %v9782
        %v9859 = vpack.c.b16 %v9824, %v9823
        %v9860 = vpack.c.b16 %v9826, %v9825
        %v9861 = vpack.c.b16 %v9828, %v9827
        %v9862 = vpack.c.b16 %v9830, %v9829
        %v9863 = vpack.c.b16 %v9832, %v9831
        %v9864 = vpack.c.b16 %v9834, %v9833
        %v9865 = vpack.c.b16 %v9836, %v9835
        %v9866 = vpack.c.b16 %v9838, %v9837
        %v9867 = vpack.c.b16 %v9840, %v9839
        %v9868 = vpack.c.b16 %v9842, %v9841
        %v9869 = vpack.c.b16 %v9844, %v9843
        %v9870 = vpack.c.b16 %v9846, %v9845
        %v9871 = vpack.c.b16 %v9848, %v9847
        %v9872 = vpack.c.b16 %v9850, %v9849
        %v9873 = vpack.c.b16 %v9852, %v9851
        %v9874 = vpack.c.b16 %v9854, %v9853
        %v9875 = vpack.c.b16 %v9856, %v9855
        %v9876 = vpack.c.b16 %v9858, %v9857
        %v9896 = vsel %vm416, %v9740, 0
        %v9899 = vsel %vm416, %v9743, 0
        %v9902 = vsel %vm416, %v9746, 0
        %9904 = vmatpush.bf16.msra.mxu0 %v9866
        %9905 = vmatpush.bf16.msra.mxu0 %v9865
        %9906 = vmatpush.bf16.msra.mxu0 %v9864
        %9907 = vmatpush.bf16.msra.mxu0 %v9863
        %9908 = vmatpush.bf16.msra.mxu0 %v9862
        %9909 = vmatpush.bf16.msra.mxu0 %v9861
        %9910 = vmatpush.bf16.msra.mxu0 %v9860
        %9911 = vmatpush.bf16.msra.mxu0 %v9859
        %9912 = vmatmul.bf16.gmra.mxu0 %v9738
        %v9913 = vpop.f32.mrf.mxu0
        %v9914 = vadd.f32 %v9785, %v9913
        %v9915 = vpop.f32.mrf.mxu0
        %v9916 = vadd.f32 %v9785, %v9915
        %9917 = vmatmul.bf16.gmra.mxu0 %v9741
        %v9918 = vpop.f32.mrf.mxu0
        %v9919 = vadd.f32 %v9785, %v9918
        %v9920 = vpop.f32.mrf.mxu0
        %v9921 = vadd.f32 %v9785, %v9920
        %9922 = vmatmul.bf16.gmra.mxu0 %v9744
        %v9923 = vpop.f32.mrf.mxu0
        %v9924 = vadd.f32 %v9785, %v9923
        %v9925 = vpop.f32.mrf.mxu0
        %v9926 = vadd.f32 %v9785, %v9925
        %9927 = vdwg.mxu0
        %9928 = vmatpush.bf16.msra.mxu0 %v9874
        %9929 = vmatpush.bf16.msra.mxu0 %v9873
        %9930 = vmatpush.bf16.msra.mxu0 %v9872
        %9931 = vmatpush.bf16.msra.mxu0 %v9871
        %9932 = vmatpush.bf16.msra.mxu0 %v9870
        %9933 = vmatpush.bf16.msra.mxu0 %v9869
        %9934 = vmatpush.bf16.msra.mxu0 %v9868
        %9935 = vmatpush.bf16.msra.mxu0 %v9867
        %9936 = vmatmul.bf16.gmra.mxu0 %v9739
        %v9937 = vpop.f32.mrf.mxu0
        %v9938 = vadd.f32 %v9914, %v9937
        %v9939 = vpop.f32.mrf.mxu0
        %v9940 = vadd.f32 %v9916, %v9939
        %9941 = vmatmul.bf16.gmra.mxu0 %v9742
        %v9942 = vpop.f32.mrf.mxu0
        %v9943 = vadd.f32 %v9919, %v9942
        %v9944 = vpop.f32.mrf.mxu0
        %v9945 = vadd.f32 %v9921, %v9944
        %9946 = vmatmul.bf16.gmra.mxu0 %v9745
        %v9947 = vpop.f32.mrf.mxu0
        %v9948 = vadd.f32 %v9924, %v9947
        %v9949 = vpop.f32.mrf.mxu0
        %v9950 = vadd.f32 %v9926, %v9949
        %9951 = vdwg.mxu0
        %9952 = vmatpush.bf16.msra.mxu0 0
        %9953 = vmatpush.bf16.msra.mxu0 0
        %9954 = vmatpush.bf16.msra.mxu0 0
        %9955 = vmatpush.bf16.msra.mxu0 0
        %9956 = vmatpush.bf16.msra.mxu0 0
        %9957 = vmatpush.bf16.msra.mxu0 0
        %9958 = vmatpush.bf16.msra.mxu0 %v9876
        %9959 = vmatpush.bf16.msra.mxu0 %v9875
        %9960 = vmatmul.bf16.gmra.mxu0 %v9896
        %v9961 = vpop.f32.mrf.mxu0
        %v9962 = vadd.f32 %v9938, %v9961
        %v9963 = vpop.f32.mrf.mxu0
        %v9964 = vadd.f32 %v9940, %v9963
        %9965 = vmatmul.bf16.gmra.mxu0 %v9899
        %v9966 = vpop.f32.mrf.mxu0
        %v9967 = vadd.f32 %v9943, %v9966
        %v9968 = vpop.f32.mrf.mxu0
        %v9969 = vadd.f32 %v9945, %v9968
        %9970 = vmatmul.bf16.gmra.mxu0 %v9902
        %v9971 = vpop.f32.mrf.mxu0
        %v9972 = vadd.f32 %v9948, %v9971
        %v9973 = vpop.f32.mrf.mxu0
        %v9974 = vadd.f32 %v9950, %v9973
        %9975 = vdwg.mxu0
        %v9976 = vmax.f32 %v9962, 0.0
        %v9977 = vmax.f32 %v9964, 0.0
        %v9978 = vmax.f32 %v9967, 0.0
        %v9979 = vmax.f32 %v9969, 0.0
        %v9980 = vmax.f32 %v9972, 0.0
        %v9981 = vmax.f32 %v9974, 0.0
        %9982 = vst.msk [vmem:[#allocation6 + $0x9] sm:$0xff] %vm425, %v9976
        %9983 = vst.msk [vmem:[#allocation6 + $0x11] sm:$0xff] %vm425, %v9977
        %9984 = vst.msk [vmem:[#allocation6 + $0x19] sm:$0xff] %vm425, %v9978
        %9985 = vst.msk [vmem:[#allocation6 + $0x21] sm:$0xff] %vm425, %v9979
        %9986 = vst.msk [vmem:[#allocation6 + $0x29] sm:$0xff] %vm425, %v9980
        %vm9987 = vcmask 521216
        %9988 = vst.msk [vmem:[#allocation6 + $0x31] sm:$0x3f] %vm9987, %v9981
        %v9989 = vld [vmem:[#allocation6 + $0x9] sm:$0x3f]
        %v9990 = vld [vmem:[#allocation6 + $0xa] sm:$0x3f]
        %v9991 = vmax.f32 %v9989, %v9990
        %v9992 = vld [vmem:[#allocation6 + $0x11] sm:$0x3f]
        %v9993 = vld [vmem:[#allocation6 + $0x12] sm:$0x3f]
        %v9994 = vmax.f32 %v9992, %v9993
        %v9995 = vmax.f32 %v9991, %v9994
        %v9997 = vrot.slane %v9995, 2
        %9998 = vrot.lane.b32.xlu0 %v9997, 64
        %v9999 = vpop.permute.xlu0 %9998
        %v10001 = vrot.slane %v9995, 4
        %v10002 = vsel %vm425, %v9995, %v9999
        %v10004 = vrot.slane %v10001, 7
        %vm10005 = vcmask 1040384
        %v10006 = vsel %vm10005, %v10002, %v10004
        %v10008 = vlaneseq
        %vm10009 = vcmp.ge.s32.totalorder %v10008, 0
        %vm10010 = vcmp.lt.s32.totalorder %v10008, 192
        %vm10011 = vmand %vm10009, %vm10010
        %10012 = vst.msk [vmem:[#allocation7] ss:$4 sm:$0x3] %vm10011, %v10006
        %v10013 = vld [vmem:[#allocation6 + $0x19] sm:$0x3f]
        %v10014 = vld [vmem:[#allocation6 + $0x1a] sm:$0x3f]
        %v10015 = vmax.f32 %v10013, %v10014
        %v10016 = vld [vmem:[#allocation6 + $0x21] sm:$0x3f]
        %v10017 = vld [vmem:[#allocation6 + $0x22] sm:$0x3f]
        %v10018 = vmax.f32 %v10016, %v10017
        %v10019 = vmax.f32 %v10015, %v10018
        %v10021 = vrot.slane %v10019, 2
        %10022 = vrot.lane.b32.xlu0 %v10021, 64
        %v10023 = vpop.permute.xlu0 %10022
        %v10025 = vrot.slane %v10019, 4
        %v10026 = vsel %vm425, %v10019, %v10023
        %v10028 = vrot.slane %v10025, 7
        %v10029 = vsel %vm10005, %v10026, %v10028
        %s10031 = scalar_lea.vmem [#allocation7], 1
        %10032 = vst.msk [vmem:[%s10031] ss:$4 sm:$0x3] %vm10011, %v10029
        %v10033 = vld [vmem:[#allocation6 + $0x29] sm:$0x3f]
        %v10034 = vld [vmem:[#allocation6 + $0x2a] sm:$0x3f]
        %v10035 = vmax.f32 %v10033, %v10034
        %v10036 = vld [vmem:[#allocation6 + $0x31] sm:$0x3f]
        %v10037 = vld [vmem:[#allocation6 + $0x32] sm:$0x3f]
        %v10038 = vmax.f32 %v10036, %v10037
        %v10039 = vmax.f32 %v10035, %v10038
        %v10041 = vrot.slane %v10039, 2
        %10042 = vrot.lane.b32.xlu0 %v10041, 64
        %v10043 = vpop.permute.xlu0 %10042
        %v10045 = vrot.slane %v10039, 4
        %v10046 = vsel %vm425, %v10039, %v10043
        %v10048 = vrot.slane %v10045, 7
        %v10049 = vsel %vm10005, %v10046, %v10048
        %s10051 = scalar_lea.vmem [#allocation7], 2
        %10052 = vst.msk [vmem:[%s10051] ss:$4 sm:$0x3] %vm10011, %v10049
        %v10053 = vld [vmem:[#allocation7] ss:$4 sm:$0x3]
        %v10055 = vperm.slane %v10053, 0
        %v10056 = vperm.slane %v10053, 1
        %v10059 = vpack.c.bf16 %v10055, %v10055
        %v10060 = vpack.c.bf16 %v10056, %v10056
        %v10061 = vld [vmem:[%s7] sm:$0xff]
        %v10062 = vld [vmem:[%s7 + $0x8] sm:$0xff]
        %v10063 = vld [vmem:[%s7 + $0x10] sm:$0xff]
        %v10064 = vld [vmem:[%s7 + $0x18] sm:$0xff]
        %v10065 = vld [vmem:[%s7 + $0x20] sm:$0xff]
        %v10066 = vld [vmem:[%s7 + $0x28] sm:$0xff]
        %v10067 = vld [vmem:[%s7 + $0x30] sm:$0xff]
        %v10068 = vld [vmem:[%s7 + $0x38] sm:$0xff]
        %v10069 = vld [vmem:[%s7 + $0x40] sm:$0xff]
        %v10070 = vld [vmem:[%s7 + $0x48] sm:$0xff]
        %v10071 = vld [vmem:[%s7 + $0x50] sm:$0xff]
        %v10072 = vld [vmem:[%s7 + $0x58] sm:$0xff]
        %v10073 = vld [vmem:[%s7 + $0x60] sm:$0xff]
        %v10074 = vld [vmem:[%s7 + $0x68] sm:$0xff]
        %v10075 = vld [vmem:[%s7 + $0x70] sm:$0xff]
        %v10076 = vld [vmem:[%s7 + $0x78] sm:$0xff]
        %v10077 = vld [vmem:[%s7 + $0x80] sm:$0xff]
        %v10078 = vld [vmem:[%s7 + $0x88] sm:$0xff]
        %v10079 = vld [vmem:[%s7 + $0x90] sm:$0xff]
        %v10080 = vld [vmem:[%s7 + $0x98] sm:$0xff]
        %v10081 = vld [vmem:[%s7 + $0xa0] sm:$0xff]
        %v10082 = vld [vmem:[%s7 + $0xa8] sm:$0xff]
        %v10083 = vld [vmem:[%s7 + $0xb0] sm:$0xff]
        %v10084 = vld [vmem:[%s7 + $0xb8] sm:$0xff]
        %v10085 = vld [vmem:[%s10031] ss:$4 sm:$0x3]
        %v10087 = vperm.slane %v10085, 0
        %v10088 = vperm.slane %v10085, 1
        %v10091 = vpack.c.bf16 %v10087, %v10087
        %v10092 = vpack.c.bf16 %v10088, %v10088
        %v10093 = vld [vmem:[%s7 + $0xc0] sm:$0xff]
        %v10094 = vld [vmem:[%s7 + $0xc8] sm:$0xff]
        %v10095 = vld [vmem:[%s7 + $0xd0] sm:$0xff]
        %v10096 = vld [vmem:[%s7 + $0xd8] sm:$0xff]
        %v10097 = vld [vmem:[%s7 + $0xe0] sm:$0xff]
        %v10098 = vld [vmem:[%s7 + $0xe8] sm:$0xff]
        %v10099 = vld [vmem:[%s7 + $0xf0] sm:$0xff]
        %v10100 = vld [vmem:[%s7 + $0xf8] sm:$0xff]
        %v10101 = vld [vmem:[%s7 + $0x100] sm:$0xff]
        %v10102 = vld [vmem:[%s7 + $0x108] sm:$0xff]
        %v10103 = vld [vmem:[%s7 + $0x110] sm:$0xff]
        %v10104 = vld [vmem:[%s7 + $0x118] sm:$0xff]
        %v10105 = vld [vmem:[%s7 + $0x120] sm:$0xff]
        %v10106 = vld [vmem:[%s7 + $0x128] sm:$0xff]
        %v10107 = vld [vmem:[%s7 + $0x130] sm:$0xff]
        %v10108 = vld [vmem:[%s7 + $0x138] sm:$0xff]
        %v10109 = vld [vmem:[%s7 + $0x140] sm:$0xff]
        %v10110 = vld [vmem:[%s7 + $0x148] sm:$0xff]
        %v10111 = vld [vmem:[%s7 + $0x150] sm:$0xff]
        %v10112 = vld [vmem:[%s7 + $0x158] sm:$0xff]
        %v10113 = vld [vmem:[%s7 + $0x160] sm:$0xff]
        %v10114 = vld [vmem:[%s7 + $0x168] sm:$0xff]
        %v10115 = vld [vmem:[%s7 + $0x170] sm:$0xff]
        %v10116 = vld [vmem:[%s7 + $0x178] sm:$0xff]
        %v10141 = vunpack.c.l.b16 %v10093
        %v10142 = vunpack.c.h.b16 %v10093
        %v10143 = vunpack.c.l.b16 %v10094
        %v10144 = vunpack.c.h.b16 %v10094
        %v10145 = vunpack.c.l.b16 %v10095
        %v10146 = vunpack.c.h.b16 %v10095
        %v10147 = vunpack.c.l.b16 %v10096
        %v10148 = vunpack.c.h.b16 %v10096
        %v10149 = vunpack.c.l.b16 %v10097
        %v10150 = vunpack.c.h.b16 %v10097
        %v10151 = vunpack.c.l.b16 %v10098
        %v10152 = vunpack.c.h.b16 %v10098
        %v10153 = vunpack.c.l.b16 %v10099
        %v10154 = vunpack.c.h.b16 %v10099
        %v10155 = vunpack.c.l.b16 %v10100
        %v10156 = vunpack.c.h.b16 %v10100
        %v10157 = vunpack.c.l.b16 %v10101
        %v10158 = vunpack.c.h.b16 %v10101
        %v10159 = vunpack.c.l.b16 %v10102
        %v10160 = vunpack.c.h.b16 %v10102
        %v10161 = vunpack.c.l.b16 %v10103
        %v10162 = vunpack.c.h.b16 %v10103
        %v10163 = vunpack.c.l.b16 %v10104
        %v10164 = vunpack.c.h.b16 %v10104
        %v10165 = vunpack.c.l.b16 %v10105
        %v10166 = vunpack.c.h.b16 %v10105
        %v10167 = vunpack.c.l.b16 %v10106
        %v10168 = vunpack.c.h.b16 %v10106
        %v10169 = vunpack.c.l.b16 %v10107
        %v10170 = vunpack.c.h.b16 %v10107
        %v10171 = vunpack.c.l.b16 %v10108
        %v10172 = vunpack.c.h.b16 %v10108
        %v10173 = vunpack.c.l.b16 %v10109
        %v10174 = vunpack.c.h.b16 %v10109
        %v10175 = vunpack.c.l.b16 %v10110
        %v10176 = vunpack.c.h.b16 %v10110
        %v10177 = vunpack.c.l.b16 %v10111
        %v10178 = vunpack.c.h.b16 %v10111
        %v10179 = vunpack.c.l.b16 %v10112
        %v10180 = vunpack.c.h.b16 %v10112
        %v10181 = vunpack.c.l.b16 %v10113
        %v10182 = vunpack.c.h.b16 %v10113
        %v10183 = vunpack.c.l.b16 %v10114
        %v10184 = vunpack.c.h.b16 %v10114
        %v10185 = vunpack.c.l.b16 %v10115
        %v10186 = vunpack.c.h.b16 %v10115
        %v10187 = vunpack.c.l.b16 %v10116
        %v10188 = vunpack.c.h.b16 %v10116
        %v10189 = vpack.c.b16 %v10143, %v10141
        %v10190 = vpack.c.b16 %v10144, %v10142
        %v10191 = vpack.c.b16 %v10147, %v10145
        %v10192 = vpack.c.b16 %v10148, %v10146
        %v10193 = vpack.c.b16 %v10151, %v10149
        %v10194 = vpack.c.b16 %v10152, %v10150
        %v10195 = vpack.c.b16 %v10155, %v10153
        %v10196 = vpack.c.b16 %v10156, %v10154
        %v10197 = vpack.c.b16 %v10159, %v10157
        %v10198 = vpack.c.b16 %v10160, %v10158
        %v10199 = vpack.c.b16 %v10163, %v10161
        %v10200 = vpack.c.b16 %v10164, %v10162
        %v10201 = vpack.c.b16 %v10167, %v10165
        %v10202 = vpack.c.b16 %v10168, %v10166
        %v10203 = vpack.c.b16 %v10171, %v10169
        %v10204 = vpack.c.b16 %v10172, %v10170
        %v10205 = vpack.c.b16 %v10175, %v10173
        %v10206 = vpack.c.b16 %v10176, %v10174
        %v10207 = vpack.c.b16 %v10179, %v10177
        %v10208 = vpack.c.b16 %v10180, %v10178
        %v10209 = vpack.c.b16 %v10183, %v10181
        %v10210 = vpack.c.b16 %v10184, %v10182
        %v10211 = vpack.c.b16 %v10187, %v10185
        %v10212 = vpack.c.b16 %v10188, %v10186
        %v10238 = vsel %vm425, %v10092, 0
        %10240 = vmatpush.bf16.msra.mxu0 %v10203
        %10241 = vmatpush.bf16.msra.mxu0 %v10201
        %10242 = vmatpush.bf16.msra.mxu0 %v10199
        %10243 = vmatpush.bf16.msra.mxu0 %v10197
        %10244 = vmatpush.bf16.msra.mxu0 %v10195
        %10245 = vmatpush.bf16.msra.mxu0 %v10193
        %10246 = vmatpush.bf16.msra.mxu0 %v10191
        %10247 = vmatpush.bf16.msra.mxu0 %v10189
        %10248 = vmatmul.bf16.gmra.mxu0 %v10091
        %v10249 = vpop.f32.mrf.mxu0
        %v10250 = vadd.f32 0.0, %v10249
        %v10251 = vpop.f32.mrf.mxu0
        %10252 = vdwg.mxu0
        %10253 = vmatpush.bf16.msra.mxu0 0
        %10254 = vmatpush.bf16.msra.mxu0 0
        %10255 = vmatpush.bf16.msra.mxu0 0
        %10256 = vmatpush.bf16.msra.mxu0 0
        %10257 = vmatpush.bf16.msra.mxu0 %v10211
        %10258 = vmatpush.bf16.msra.mxu0 %v10209
        %10259 = vmatpush.bf16.msra.mxu0 %v10207
        %10260 = vmatpush.bf16.msra.mxu0 %v10205
        %10261 = vmatmul.bf16.gmra.mxu0 %v10238
        %v10262 = vpop.f32.mrf.mxu0
        %v10263 = vadd.f32 %v10250, %v10262
        %v10264 = vpop.f32.mrf.mxu0
        %10265 = vdwg.mxu0
        %10266 = vmatpush.bf16.msra.mxu0 %v10204
        %10267 = vmatpush.bf16.msra.mxu0 %v10202
        %10268 = vmatpush.bf16.msra.mxu0 %v10200
        %10269 = vmatpush.bf16.msra.mxu0 %v10198
        %10270 = vmatpush.bf16.msra.mxu0 %v10196
        %10271 = vmatpush.bf16.msra.mxu0 %v10194
        %10272 = vmatpush.bf16.msra.mxu0 %v10192
        %10273 = vmatpush.bf16.msra.mxu0 %v10190
        %10274 = vmatmul.bf16.gmra.mxu0 %v10091
        %v10275 = vpop.f32.mrf.mxu0
        %v10276 = vadd.f32 0.0, %v10275
        %v10277 = vpop.f32.mrf.mxu0
        %10278 = vdwg.mxu0
        %10279 = vmatpush.bf16.msra.mxu0 0
        %10280 = vmatpush.bf16.msra.mxu0 0
        %10281 = vmatpush.bf16.msra.mxu0 0
        %10282 = vmatpush.bf16.msra.mxu0 0
        %10283 = vmatpush.bf16.msra.mxu0 %v10212
        %10284 = vmatpush.bf16.msra.mxu0 %v10210
        %10285 = vmatpush.bf16.msra.mxu0 %v10208
        %10286 = vmatpush.bf16.msra.mxu0 %v10206
        %10287 = vmatmul.bf16.gmra.mxu0 %v10238
        %v10288 = vpop.f32.mrf.mxu0
        %v10289 = vadd.f32 %v10276, %v10288
        %v10290 = vpop.f32.mrf.mxu0
        %10291 = vdwg.mxu0
        %v10316 = vunpack.c.l.b16 %v10061
        %v10317 = vunpack.c.h.b16 %v10061
        %v10318 = vunpack.c.l.b16 %v10062
        %v10319 = vunpack.c.h.b16 %v10062
        %v10320 = vunpack.c.l.b16 %v10063
        %v10321 = vunpack.c.h.b16 %v10063
        %v10322 = vunpack.c.l.b16 %v10064
        %v10323 = vunpack.c.h.b16 %v10064
        %v10324 = vunpack.c.l.b16 %v10065
        %v10325 = vunpack.c.h.b16 %v10065
        %v10326 = vunpack.c.l.b16 %v10066
        %v10327 = vunpack.c.h.b16 %v10066
        %v10328 = vunpack.c.l.b16 %v10067
        %v10329 = vunpack.c.h.b16 %v10067
        %v10330 = vunpack.c.l.b16 %v10068
        %v10331 = vunpack.c.h.b16 %v10068
        %v10332 = vunpack.c.l.b16 %v10069
        %v10333 = vunpack.c.h.b16 %v10069
        %v10334 = vunpack.c.l.b16 %v10070
        %v10335 = vunpack.c.h.b16 %v10070
        %v10336 = vunpack.c.l.b16 %v10071
        %v10337 = vunpack.c.h.b16 %v10071
        %v10338 = vunpack.c.l.b16 %v10072
        %v10339 = vunpack.c.h.b16 %v10072
        %v10340 = vunpack.c.l.b16 %v10073
        %v10341 = vunpack.c.h.b16 %v10073
        %v10342 = vunpack.c.l.b16 %v10074
        %v10343 = vunpack.c.h.b16 %v10074
        %v10344 = vunpack.c.l.b16 %v10075
        %v10345 = vunpack.c.h.b16 %v10075
        %v10346 = vunpack.c.l.b16 %v10076
        %v10347 = vunpack.c.h.b16 %v10076
        %v10348 = vunpack.c.l.b16 %v10077
        %v10349 = vunpack.c.h.b16 %v10077
        %v10350 = vunpack.c.l.b16 %v10078
        %v10351 = vunpack.c.h.b16 %v10078
        %v10352 = vunpack.c.l.b16 %v10079
        %v10353 = vunpack.c.h.b16 %v10079
        %v10354 = vunpack.c.l.b16 %v10080
        %v10355 = vunpack.c.h.b16 %v10080
        %v10356 = vunpack.c.l.b16 %v10081
        %v10357 = vunpack.c.h.b16 %v10081
        %v10358 = vunpack.c.l.b16 %v10082
        %v10359 = vunpack.c.h.b16 %v10082
        %v10360 = vunpack.c.l.b16 %v10083
        %v10361 = vunpack.c.h.b16 %v10083
        %v10362 = vunpack.c.l.b16 %v10084
        %v10363 = vunpack.c.h.b16 %v10084
        %v10364 = vpack.c.b16 %v10318, %v10316
        %v10365 = vpack.c.b16 %v10319, %v10317
        %v10366 = vpack.c.b16 %v10322, %v10320
        %v10367 = vpack.c.b16 %v10323, %v10321
        %v10368 = vpack.c.b16 %v10326, %v10324
        %v10369 = vpack.c.b16 %v10327, %v10325
        %v10370 = vpack.c.b16 %v10330, %v10328
        %v10371 = vpack.c.b16 %v10331, %v10329
        %v10372 = vpack.c.b16 %v10334, %v10332
        %v10373 = vpack.c.b16 %v10335, %v10333
        %v10374 = vpack.c.b16 %v10338, %v10336
        %v10375 = vpack.c.b16 %v10339, %v10337
        %v10376 = vpack.c.b16 %v10342, %v10340
        %v10377 = vpack.c.b16 %v10343, %v10341
        %v10378 = vpack.c.b16 %v10346, %v10344
        %v10379 = vpack.c.b16 %v10347, %v10345
        %v10380 = vpack.c.b16 %v10350, %v10348
        %v10381 = vpack.c.b16 %v10351, %v10349
        %v10382 = vpack.c.b16 %v10354, %v10352
        %v10383 = vpack.c.b16 %v10355, %v10353
        %v10384 = vpack.c.b16 %v10358, %v10356
        %v10385 = vpack.c.b16 %v10359, %v10357
        %v10386 = vpack.c.b16 %v10362, %v10360
        %v10387 = vpack.c.b16 %v10363, %v10361
        %v10413 = vsel %vm425, %v10060, 0
        %10415 = vmatpush.bf16.msra.mxu0 %v10378
        %10416 = vmatpush.bf16.msra.mxu0 %v10376
        %10417 = vmatpush.bf16.msra.mxu0 %v10374
        %10418 = vmatpush.bf16.msra.mxu0 %v10372
        %10419 = vmatpush.bf16.msra.mxu0 %v10370
        %10420 = vmatpush.bf16.msra.mxu0 %v10368
        %10421 = vmatpush.bf16.msra.mxu0 %v10366
        %10422 = vmatpush.bf16.msra.mxu0 %v10364
        %10423 = vmatmul.bf16.gmra.mxu0 %v10059
        %v10424 = vpop.f32.mrf.mxu0
        %v10425 = vadd.f32 %v10263, %v10424
        %v10426 = vpop.f32.mrf.mxu0
        %10427 = vdwg.mxu0
        %10428 = vmatpush.bf16.msra.mxu0 0
        %10429 = vmatpush.bf16.msra.mxu0 0
        %10430 = vmatpush.bf16.msra.mxu0 0
        %10431 = vmatpush.bf16.msra.mxu0 0
        %10432 = vmatpush.bf16.msra.mxu0 %v10386
        %10433 = vmatpush.bf16.msra.mxu0 %v10384
        %10434 = vmatpush.bf16.msra.mxu0 %v10382
        %10435 = vmatpush.bf16.msra.mxu0 %v10380
        %10436 = vmatmul.bf16.gmra.mxu0 %v10413
        %v10437 = vpop.f32.mrf.mxu0
        %v10438 = vadd.f32 %v10425, %v10437
        %v10439 = vpop.f32.mrf.mxu0
        %10440 = vdwg.mxu0
        %10441 = vmatpush.bf16.msra.mxu0 %v10379
        %10442 = vmatpush.bf16.msra.mxu0 %v10377
        %10443 = vmatpush.bf16.msra.mxu0 %v10375
        %10444 = vmatpush.bf16.msra.mxu0 %v10373
        %10445 = vmatpush.bf16.msra.mxu0 %v10371
        %10446 = vmatpush.bf16.msra.mxu0 %v10369
        %10447 = vmatpush.bf16.msra.mxu0 %v10367
        %10448 = vmatpush.bf16.msra.mxu0 %v10365
        %10449 = vmatmul.bf16.gmra.mxu0 %v10059
        %v10450 = vpop.f32.mrf.mxu0
        %v10451 = vadd.f32 %v10289, %v10450
        %v10452 = vpop.f32.mrf.mxu0
        %10453 = vdwg.mxu0
        %10454 = vmatpush.bf16.msra.mxu0 0
        %10455 = vmatpush.bf16.msra.mxu0 0
        %10456 = vmatpush.bf16.msra.mxu0 0
        %10457 = vmatpush.bf16.msra.mxu0 0
        %10458 = vmatpush.bf16.msra.mxu0 %v10387
        %10459 = vmatpush.bf16.msra.mxu0 %v10385
        %10460 = vmatpush.bf16.msra.mxu0 %v10383
        %10461 = vmatpush.bf16.msra.mxu0 %v10381
        %10462 = vmatmul.bf16.gmra.mxu0 %v10413
        %v10463 = vpop.f32.mrf.mxu0
        %v10464 = vadd.f32 %v10451, %v10463
        %v10465 = vpop.f32.mrf.mxu0
        %10466 = vdwg.mxu0
        %v10467 = vld [vmem:[%s10051] ss:$4 sm:$0x3]
        %v10469 = vperm.slane %v10467, 0
        %v10470 = vperm.slane %v10467, 1
        %v10473 = vpack.c.bf16 %v10469, %v10469
        %v10474 = vpack.c.bf16 %v10470, %v10470
        %v10475 = vld [vmem:[%s7 + $0x180] sm:$0xff]
        %v10476 = vld [vmem:[%s7 + $0x188] sm:$0xff]
        %v10477 = vld [vmem:[%s7 + $0x190] sm:$0xff]
        %v10478 = vld [vmem:[%s7 + $0x198] sm:$0xff]
        %v10479 = vld [vmem:[%s7 + $0x1a0] sm:$0xff]
        %v10480 = vld [vmem:[%s7 + $0x1a8] sm:$0xff]
        %v10481 = vld [vmem:[%s7 + $0x1b0] sm:$0xff]
        %v10482 = vld [vmem:[%s7 + $0x1b8] sm:$0xff]
        %v10483 = vld [vmem:[%s7 + $0x1c0] sm:$0xff]
        %v10484 = vld [vmem:[%s7 + $0x1c8] sm:$0xff]
        %v10485 = vld [vmem:[%s7 + $0x1d0] sm:$0xff]
        %v10486 = vld [vmem:[%s7 + $0x1d8] sm:$0xff]
        %v10487 = vld [vmem:[%s7 + $0x1e0] sm:$0xff]
        %v10488 = vld [vmem:[%s7 + $0x1e8] sm:$0xff]
        %v10489 = vld [vmem:[%s7 + $0x1f0] sm:$0xff]
        %v10490 = vld [vmem:[%s7 + $0x1f8] sm:$0xff]
        %v10491 = vld [vmem:[%s7 + $0x200] sm:$0xff]
        %v10492 = vld [vmem:[%s7 + $0x208] sm:$0xff]
        %v10493 = vld [vmem:[%s7 + $0x210] sm:$0xff]
        %v10494 = vld [vmem:[%s7 + $0x218] sm:$0xff]
        %v10495 = vld [vmem:[%s7 + $0x220] sm:$0xff]
        %v10496 = vld [vmem:[%s7 + $0x228] sm:$0xff]
        %v10497 = vld [vmem:[%s7 + $0x230] sm:$0xff]
        %v10498 = vld [vmem:[%s7 + $0x238] sm:$0xff]
        %v10523 = vunpack.c.l.b16 %v10475
        %v10524 = vunpack.c.h.b16 %v10475
        %v10525 = vunpack.c.l.b16 %v10476
        %v10526 = vunpack.c.h.b16 %v10476
        %v10527 = vunpack.c.l.b16 %v10477
        %v10528 = vunpack.c.h.b16 %v10477
        %v10529 = vunpack.c.l.b16 %v10478
        %v10530 = vunpack.c.h.b16 %v10478
        %v10531 = vunpack.c.l.b16 %v10479
        %v10532 = vunpack.c.h.b16 %v10479
        %v10533 = vunpack.c.l.b16 %v10480
        %v10534 = vunpack.c.h.b16 %v10480
        %v10535 = vunpack.c.l.b16 %v10481
        %v10536 = vunpack.c.h.b16 %v10481
        %v10537 = vunpack.c.l.b16 %v10482
        %v10538 = vunpack.c.h.b16 %v10482
        %v10539 = vunpack.c.l.b16 %v10483
        %v10540 = vunpack.c.h.b16 %v10483
        %v10541 = vunpack.c.l.b16 %v10484
        %v10542 = vunpack.c.h.b16 %v10484
        %v10543 = vunpack.c.l.b16 %v10485
        %v10544 = vunpack.c.h.b16 %v10485
        %v10545 = vunpack.c.l.b16 %v10486
        %v10546 = vunpack.c.h.b16 %v10486
        %v10547 = vunpack.c.l.b16 %v10487
        %v10548 = vunpack.c.h.b16 %v10487
        %v10549 = vunpack.c.l.b16 %v10488
        %v10550 = vunpack.c.h.b16 %v10488
        %v10551 = vunpack.c.l.b16 %v10489
        %v10552 = vunpack.c.h.b16 %v10489
        %v10553 = vunpack.c.l.b16 %v10490
        %v10554 = vunpack.c.h.b16 %v10490
        %v10555 = vunpack.c.l.b16 %v10491
        %v10556 = vunpack.c.h.b16 %v10491
        %v10557 = vunpack.c.l.b16 %v10492
        %v10558 = vunpack.c.h.b16 %v10492
        %v10559 = vunpack.c.l.b16 %v10493
        %v10560 = vunpack.c.h.b16 %v10493
        %v10561 = vunpack.c.l.b16 %v10494
        %v10562 = vunpack.c.h.b16 %v10494
        %v10563 = vunpack.c.l.b16 %v10495
        %v10564 = vunpack.c.h.b16 %v10495
        %v10565 = vunpack.c.l.b16 %v10496
        %v10566 = vunpack.c.h.b16 %v10496
        %v10567 = vunpack.c.l.b16 %v10497
        %v10568 = vunpack.c.h.b16 %v10497
        %v10569 = vunpack.c.l.b16 %v10498
        %v10570 = vunpack.c.h.b16 %v10498
        %v10571 = vpack.c.b16 %v10525, %v10523
        %v10572 = vpack.c.b16 %v10526, %v10524
        %v10573 = vpack.c.b16 %v10529, %v10527
        %v10574 = vpack.c.b16 %v10530, %v10528
        %v10575 = vpack.c.b16 %v10533, %v10531
        %v10576 = vpack.c.b16 %v10534, %v10532
        %v10577 = vpack.c.b16 %v10537, %v10535
        %v10578 = vpack.c.b16 %v10538, %v10536
        %v10579 = vpack.c.b16 %v10541, %v10539
        %v10580 = vpack.c.b16 %v10542, %v10540
        %v10581 = vpack.c.b16 %v10545, %v10543
        %v10582 = vpack.c.b16 %v10546, %v10544
        %v10583 = vpack.c.b16 %v10549, %v10547
        %v10584 = vpack.c.b16 %v10550, %v10548
        %v10585 = vpack.c.b16 %v10553, %v10551
        %v10586 = vpack.c.b16 %v10554, %v10552
        %v10587 = vpack.c.b16 %v10557, %v10555
        %v10588 = vpack.c.b16 %v10558, %v10556
        %v10589 = vpack.c.b16 %v10561, %v10559
        %v10590 = vpack.c.b16 %v10562, %v10560
        %v10591 = vpack.c.b16 %v10565, %v10563
        %v10592 = vpack.c.b16 %v10566, %v10564
        %v10593 = vpack.c.b16 %v10569, %v10567
        %v10594 = vpack.c.b16 %v10570, %v10568
        %v10620 = vsel %vm425, %v10474, 0
        %10622 = vmatpush.bf16.msra.mxu0 %v10585
        %10623 = vmatpush.bf16.msra.mxu0 %v10583
        %10624 = vmatpush.bf16.msra.mxu0 %v10581
        %10625 = vmatpush.bf16.msra.mxu0 %v10579
        %10626 = vmatpush.bf16.msra.mxu0 %v10577
        %10627 = vmatpush.bf16.msra.mxu0 %v10575
        %10628 = vmatpush.bf16.msra.mxu0 %v10573
        %10629 = vmatpush.bf16.msra.mxu0 %v10571
        %10630 = vmatmul.bf16.gmra.mxu0 %v10473
        %v10631 = vpop.f32.mrf.mxu0
        %v10632 = vadd.f32 0.0, %v10631
        %v10633 = vpop.f32.mrf.mxu0
        %10634 = vdwg.mxu0
        %10635 = vmatpush.bf16.msra.mxu0 0
        %10636 = vmatpush.bf16.msra.mxu0 0
        %10637 = vmatpush.bf16.msra.mxu0 0
        %10638 = vmatpush.bf16.msra.mxu0 0
        %10639 = vmatpush.bf16.msra.mxu0 %v10593
        %10640 = vmatpush.bf16.msra.mxu0 %v10591
        %10641 = vmatpush.bf16.msra.mxu0 %v10589
        %10642 = vmatpush.bf16.msra.mxu0 %v10587
        %10643 = vmatmul.bf16.gmra.mxu0 %v10620
        %v10644 = vpop.f32.mrf.mxu0
        %v10645 = vadd.f32 %v10632, %v10644
        %v10646 = vpop.f32.mrf.mxu0
        %10647 = vdwg.mxu0
        %10648 = vmatpush.bf16.msra.mxu0 %v10586
        %10649 = vmatpush.bf16.msra.mxu0 %v10584
        %10650 = vmatpush.bf16.msra.mxu0 %v10582
        %10651 = vmatpush.bf16.msra.mxu0 %v10580
        %10652 = vmatpush.bf16.msra.mxu0 %v10578
        %10653 = vmatpush.bf16.msra.mxu0 %v10576
        %10654 = vmatpush.bf16.msra.mxu0 %v10574
        %10655 = vmatpush.bf16.msra.mxu0 %v10572
        %10656 = vmatmul.bf16.gmra.mxu0 %v10473
        %v10657 = vpop.f32.mrf.mxu0
        %v10658 = vadd.f32 0.0, %v10657
        %v10659 = vpop.f32.mrf.mxu0
        %10660 = vdwg.mxu0
        %10661 = vmatpush.bf16.msra.mxu0 0
        %10662 = vmatpush.bf16.msra.mxu0 0
        %10663 = vmatpush.bf16.msra.mxu0 0
        %10664 = vmatpush.bf16.msra.mxu0 0
        %10665 = vmatpush.bf16.msra.mxu0 %v10594
        %10666 = vmatpush.bf16.msra.mxu0 %v10592
        %10667 = vmatpush.bf16.msra.mxu0 %v10590
        %10668 = vmatpush.bf16.msra.mxu0 %v10588
        %10669 = vmatmul.bf16.gmra.mxu0 %v10620
        %v10670 = vpop.f32.mrf.mxu0
        %v10671 = vadd.f32 %v10658, %v10670
        %v10672 = vpop.f32.mrf.mxu0
        %10673 = vdwg.mxu0
        %v10674 = vadd.f32 %v10438, %v10645
        %v10675 = vadd.f32 %v10464, %v10671
        %v10676 = vld [vmem:[%s8] sm:$0x3]
        %v10678 = vperm.slane %v10676, 0
        %v10679 = vperm.slane %v10676, 1
        %v10682 = vadd.f32 %v10674, %v10678
        %v10683 = vadd.f32 %v10675, %v10679
        %v10684 = vmax.f32 %v10682, 0.0
        %v10685 = vmax.f32 %v10683, 0.0
        %v10686 = vpack.c.bf16 %v10684, %v10684
        %v10687 = vpack.c.bf16 %v10685, %v10685
        %v10688 = vld [vmem:[%s9] sm:$0xf]
        %v10689 = vld [vmem:[%s9 + $0x4] sm:$0xf]
        %v10690 = vld [vmem:[%s9 + $0x8] sm:$0xf]
        %v10691 = vld [vmem:[%s9 + $0xc] sm:$0xf]
        %v10692 = vld [vmem:[%s9 + $0x10] sm:$0xf]
        %v10693 = vld [vmem:[%s9 + $0x14] sm:$0xf]
        %v10694 = vld [vmem:[%s9 + $0x18] sm:$0xf]
        %v10695 = vld [vmem:[%s9 + $0x1c] sm:$0xf]
        %v10696 = vld [vmem:[%s9 + $0x20] sm:$0xf]
        %v10697 = vld [vmem:[%s9 + $0x24] sm:$0xf]
        %v10698 = vld [vmem:[%s9 + $0x28] sm:$0xf]
        %v10699 = vld [vmem:[%s9 + $0x2c] sm:$0xf]
        %v10700 = vld [vmem:[%s9 + $0x30] sm:$0xf]
        %v10701 = vld [vmem:[%s9 + $0x34] sm:$0xf]
        %v10702 = vld [vmem:[%s9 + $0x38] sm:$0xf]
        %v10703 = vld [vmem:[%s9 + $0x3c] sm:$0xf]
        %v10704 = vld [vmem:[%s9 + $0x40] sm:$0xf]
        %v10705 = vld [vmem:[%s9 + $0x44] sm:$0xf]
        %v10706 = vld [vmem:[%s9 + $0x48] sm:$0xf]
        %v10707 = vld [vmem:[%s9 + $0x4c] sm:$0xf]
        %v10708 = vld [vmem:[%s9 + $0x50] sm:$0xf]
        %v10709 = vld [vmem:[%s9 + $0x54] sm:$0xf]
        %v10710 = vld [vmem:[%s9 + $0x58] sm:$0xf]
        %v10711 = vld [vmem:[%s9 + $0x5c] sm:$0xf]
        %v10712 = vld [vmem:[%s9 + $0x60] sm:$0xf]
        %v10713 = vld [vmem:[%s9 + $0x64] sm:$0xf]
        %v10714 = vld [vmem:[%s9 + $0x68] sm:$0xf]
        %v10715 = vld [vmem:[%s9 + $0x6c] sm:$0xf]
        %v10716 = vld [vmem:[%s9 + $0x70] sm:$0xf]
        %v10717 = vld [vmem:[%s9 + $0x74] sm:$0xf]
        %v10718 = vld [vmem:[%s9 + $0x78] sm:$0xf]
        %v10719 = vld [vmem:[%s9 + $0x7c] sm:$0xf]
        %v10720 = vld [vmem:[%s10] sm:$0x1]
        %v10753 = vunpack.c.l.b16 %v10688
        %v10754 = vunpack.c.l.b16 %v10689
        %v10755 = vunpack.c.l.b16 %v10690
        %v10756 = vunpack.c.l.b16 %v10691
        %v10757 = vunpack.c.l.b16 %v10692
        %v10758 = vunpack.c.l.b16 %v10693
        %v10759 = vunpack.c.l.b16 %v10694
        %v10760 = vunpack.c.l.b16 %v10695
        %v10761 = vunpack.c.l.b16 %v10696
        %v10762 = vunpack.c.l.b16 %v10697
        %v10763 = vunpack.c.l.b16 %v10698
        %v10764 = vunpack.c.l.b16 %v10699
        %v10765 = vunpack.c.l.b16 %v10700
        %v10766 = vunpack.c.l.b16 %v10701
        %v10767 = vunpack.c.l.b16 %v10702
        %v10768 = vunpack.c.l.b16 %v10703
        %v10769 = vunpack.c.l.b16 %v10704
        %v10770 = vunpack.c.l.b16 %v10705
        %v10771 = vunpack.c.l.b16 %v10706
        %v10772 = vunpack.c.l.b16 %v10707
        %v10773 = vunpack.c.l.b16 %v10708
        %v10774 = vunpack.c.l.b16 %v10709
        %v10775 = vunpack.c.l.b16 %v10710
        %v10776 = vunpack.c.l.b16 %v10711
        %v10777 = vunpack.c.l.b16 %v10712
        %v10778 = vunpack.c.l.b16 %v10713
        %v10779 = vunpack.c.l.b16 %v10714
        %v10780 = vunpack.c.l.b16 %v10715
        %v10781 = vunpack.c.l.b16 %v10716
        %v10782 = vunpack.c.l.b16 %v10717
        %v10783 = vunpack.c.l.b16 %v10718
        %v10784 = vunpack.c.l.b16 %v10719
        %v10785 = vpack.c.b16 %v10754, %v10753
        %v10786 = vpack.c.b16 %v10756, %v10755
        %v10787 = vpack.c.b16 %v10758, %v10757
        %v10788 = vpack.c.b16 %v10760, %v10759
        %v10789 = vpack.c.b16 %v10762, %v10761
        %v10790 = vpack.c.b16 %v10764, %v10763
        %v10791 = vpack.c.b16 %v10766, %v10765
        %v10792 = vpack.c.b16 %v10768, %v10767
        %v10793 = vpack.c.b16 %v10770, %v10769
        %v10794 = vpack.c.b16 %v10772, %v10771
        %v10795 = vpack.c.b16 %v10774, %v10773
        %v10796 = vpack.c.b16 %v10776, %v10775
        %v10797 = vpack.c.b16 %v10778, %v10777
        %v10798 = vpack.c.b16 %v10780, %v10779
        %v10799 = vpack.c.b16 %v10782, %v10781
        %v10800 = vpack.c.b16 %v10784, %v10783
        %10817 = vmatpush.bf16.msra.mxu0 %v10792
        %10818 = vmatpush.bf16.msra.mxu0 %v10791
        %10819 = vmatpush.bf16.msra.mxu0 %v10790
        %10820 = vmatpush.bf16.msra.mxu0 %v10789
        %10821 = vmatpush.bf16.msra.mxu0 %v10788
        %10822 = vmatpush.bf16.msra.mxu0 %v10787
        %10823 = vmatpush.bf16.msra.mxu0 %v10786
        %10824 = vmatpush.bf16.msra.mxu0 %v10785
        %10825 = vmatmul.bf16.gmra.mxu0 %v10686
        %v10826 = vpop.f32.mrf.mxu0
        %v10827 = vadd.f32 %v10720, %v10826
        %v10828 = vpop.f32.mrf.mxu0
        %10829 = vdwg.mxu0
        %10830 = vmatpush.bf16.msra.mxu0 %v10800
        %10831 = vmatpush.bf16.msra.mxu0 %v10799
        %10832 = vmatpush.bf16.msra.mxu0 %v10798
        %10833 = vmatpush.bf16.msra.mxu0 %v10797
        %10834 = vmatpush.bf16.msra.mxu0 %v10796
        %10835 = vmatpush.bf16.msra.mxu0 %v10795
        %10836 = vmatpush.bf16.msra.mxu0 %v10794
        %10837 = vmatpush.bf16.msra.mxu0 %v10793
        %10838 = vmatmul.bf16.gmra.mxu0 %v10687
        %v10839 = vpop.f32.mrf.mxu0
        %v10840 = vadd.f32 %v10827, %v10839
        %v10841 = vpop.f32.mrf.mxu0
        %10842 = vdwg.mxu0
        %vm10843 = vcmask 73728
        %v10844 = vsel %vm10843, %v10840, -inf
        %10845 = vmax.xlane.f32.xlu0 %v10844
        %v10846 = vpop.xlane.xlu0 %10845
        %v10847 = vsub.f32 %v10840, %v10846
        %v10848 = vmul.f32 %v10847, 1.442695
        %v10849 = vpow.pop %v10848
        %v10850 = vsel %vm10843, %v10849, 0.0
        %10851 = vadd.xlane.f32.xlu0 %v10850
        %v10852 = vpop.xlane.xlu0 %10851
        %v10853 = vrcp.pop %v10852
        %v10854 = vmul.f32 %v10852, %v10853
        %v10855 = vsub.f32 1.0, %v10854
        %v10856 = vmul.f32 %v10853, %v10855
        %v10857 = vadd.f32 %v10853, %v10856
        %vm10858 = vweird.f32 %v10852
        %vm10859 = vweird.f32 %v10853
        %vm10860 = vmor %vm10858, %vm10859
        %v10861 = vsel %vm10860, %v10853, %v10857
        %v10862 = vand.u32 2147483647, %v10852
        %vm10863 = vcmp.eq.f32.partialorder %v10862, 8.507059e+37
        %v10864 = vand.u32 %v10852, 2147483648
        %v10865 = vor.u32 1.1754944e-38, %v10864
        %v10866 = vsel %vm10863, %v10865, %v10861
        %v10867 = vmul.f32 %v10849, %v10866
        %10868 = vst.msk [vmem:[%s379] sm:$0x1] %vm10843, %v10867
        %s10869 = sand.u32 %s269, 1
        %s10870 = scalar_lea.sflag [#allocation9], %s10869
        %s10871 = sand.u32 %s269, 1
        %s10872 = scalar_lea.vmem [#allocation8], %s10871
        // Predicated region
        $region65: #{net_forward.1} parent=63 // pred_check
          %p10873 = pneg %p279
        $region66: #{net_forward.1} parent=63 // pred_check_branch
          %10875 = sbr.rel (%p10873) target = $region68
        $region67: #{net_forward.1} parent=63 // pred_region
          %10877 = vsyncadd %s10870, 0
          %s10878 = scalar_lea.hbm %s11, %s25
          %s10880 = sshll.u32 %s10872, 4
          %s10881 = int_to_ptr.vmem [resolvable:$true] %s10880
          %s10882 = sshll.u32 %s10878, 4
          %s10883 = int_to_ptr.hbm [resolvable:$true] %s10882
          %10885 = dma.vmem_to_hbm [thread:$0]  %s10881, 16, %s10883, %s10870
        $region68: #{net_forward.1} parent=63 // pred_fallthru
          _
      $region64: #{net_forward.1} parent=5 // pred_fallthru
        _
      %p10886 = scmp.le.s32.totalorder 2, %s20
      // Predicated region
      $region69: #{net_forward.1} parent=5 // pred_check
        %p10887 = pneg %p10886
      $region70: #{net_forward.1} parent=5 // pred_check_branch
        %10889 = sbr.rel (%p10887) target = $region72
      $region71: #{net_forward.1} parent=5 // pred_region
        %s10890 = ssub.s32 %s20, 2
        // Predicated region
        $region73: #{net_forward.1} parent=71 // pred_check
          %p10891 = pneg %p285
        $region74: #{net_forward.1} parent=71 // pred_check_branch
          %10893 = sbr.rel (%p10891) target = $region76
        $region75: #{net_forward.1} parent=71 // pred_region
          %s10894 = sand.u32 %s270, 1
          %s10895 = scalar_lea.sflag [#allocation9], %s10894
          %s10896 = sand.u32 %s270, 1
          %s10897 = scalar_lea.vmem [#allocation8], %s10896
          %10899 = dma.done %s10895, 16
        $region76: #{net_forward.1} parent=71 // pred_fallthru
          _
      $region72: #{net_forward.1} parent=5 // pred_fallthru
        _
    $region6: #{net_forward.1} parent=1 // loop_footer
      %s24 = sadd.s32 1, %s20
    $region7: #{net_forward.1} parent=1 // loop_footer_branch
      %19 = sbr.rel target = $region3
    $region8: #{net_forward.1} parent=1 // loop_exit
      _
    %10900 = vsyncpa [#allocation9], 1
    %s10901 = scalar_lea.sflag [#allocation9], 1
    %10902 = vsyncpa %s10901, 1

</llo_original>
